<compile_context>
chip_gen: v5e
topology: v5e:2x2
jax: 0.10.0
libtpu: 0.0.40
codegen_flags: <defaults>
</compile_context>

<pallas_src>
import functools
import math

import jax
import jax.numpy as jnp
from jax.experimental import pallas as pl
from jax.experimental.pallas import tpu as pltpu


# ----------------------------- in-kernel helpers -----------------------------

def _layernorm(x, g, b, eps=1e-5):
    mu = jnp.mean(x, axis=-1, keepdims=True)
    var = jnp.mean((x - mu) ** 2, axis=-1, keepdims=True)
    return (x - mu) * jax.lax.rsqrt(var + eps) * g + b


def _gelu_tanh(x):
    # matches the module's GELU: 0.5*x*(1+tanh(sqrt(2/pi)*(x+0.044715*x^3)))
    return 0.5 * x * (1.0 + jnp.tanh(jnp.sqrt(2.0 / jnp.pi) * (x + 0.044715 * x ** 3)))


# ------------------------------- Pallas kernel --------------------------------

def vit_kernel(patches_ref, pe_w_ref, pe_b_ref, cls_ref, pos_ref,
               ln1g_ref, ln1b_ref, wqkv_ref, wo_ref, bo_ref,
               ln2g_ref, ln2b_ref, w1_ref, b1_ref, w2_ref, b2_ref,
               out_ref, qkv_ref, of_ref, *, bt, n_tok, heads, head_dim):
    """One (batch block, depth step) per grid point.

    out_ref's block index depends only on the batch-block index, so the
    (Bt*N, D) token slab is a VMEM-resident carry across the whole depth loop.
    """
    d = pl.program_id(1)
    H, Hd = heads, head_dim
    inner = H * Hd
    N = n_tok
    bf16 = jnp.bfloat16

    # --- depth step 0: patch embed + cls + sincos pos-emb, direct slice stores ---
    @pl.when(d == 0)
    def _embed():
        p = patches_ref[...].astype(bf16)                          # (Bt*Np, Pd)
        n_patch = patches_ref.shape[0] // bt
        emb = jnp.dot(p, pe_w_ref[...],
                      preferred_element_type=jnp.float32) + pe_b_ref[...]
        cls_row = cls_ref[...] + pos_ref[0:1, :]                   # (1, D)
        pos_patch = pos_ref[1:, :]                                 # (Np, D)
        for b in range(bt):
            r0 = b * N
            out_ref[r0:r0 + 1, :] = cls_row
            out_ref[r0 + 1:r0 + N, :] = (
                emb[b * n_patch:(b + 1) * n_patch, :] + pos_patch)

    x = out_ref[...]                                               # (Bt*N, D) f32 carry

    # --- PreNorm + multi-head self-attention ---
    xn = _layernorm(x, ln1g_ref[0], ln1b_ref[0])
    # single fused QKV matmul; Hd**-0.5 folded into the Q columns at pack time
    qkv_ref[...] = jnp.dot(xn.astype(bf16), wqkv_ref[0],
                           preferred_element_type=jnp.float32)     # (Bt*N, 3*inner)

    for b in range(bt):                                            # attention per (b, h)
        r0 = b * N
        for h in range(H):
            c0 = h * Hd
            q = qkv_ref[r0:r0 + N, c0:c0 + Hd].astype(bf16)
            k = qkv_ref[r0:r0 + N, inner + c0:inner + c0 + Hd].astype(bf16)
            v = qkv_ref[r0:r0 + N, 2 * inner + c0:2 * inner + c0 + Hd].astype(bf16)
            s = jax.lax.dot_general(q, k, (((1,), (1,)), ((), ())),
                                    preferred_element_type=jnp.float32)   # (N, N)
            s = s - jnp.max(s, axis=-1, keepdims=True)
            e = jnp.exp(s)
            p_att = e * pl.reciprocal(jnp.sum(e, axis=-1, keepdims=True),
                                      approx=True)
            of_ref[r0:r0 + N, c0:c0 + Hd] = jnp.dot(
                p_att.astype(bf16), v, preferred_element_type=jnp.float32)

    proj = jnp.dot(of_ref[...].astype(bf16), wo_ref[0],
                   preferred_element_type=jnp.float32) + bo_ref[0]  # (Bt*N, D)
    x = x + proj

    # --- PreNorm + MLP (GELU-tanh) ---
    xn2 = _layernorm(x, ln2g_ref[0], ln2b_ref[0])
    h1 = _gelu_tanh(jnp.dot(xn2.astype(bf16), w1_ref[0],
                            preferred_element_type=jnp.float32) + b1_ref[0])
    h2 = jnp.dot(h1.astype(bf16), w2_ref[0],
                 preferred_element_type=jnp.float32) + b2_ref[0]
    out_ref[...] = x + h2


# --------------------------------- wrapper ------------------------------------

def vit_trunk(patches_flat, pe_w, pe_b, cls_tok, pos, stacked, *,
              batch, block_batch, n_tok, heads, head_dim):
    BN, Pd = patches_flat.shape                                    # (B*Np, Pd)
    D = pe_w.shape[1]
    Np = BN // batch
    depth = stacked["ln1_g"].shape[0]
    inner = heads * head_dim
    Bt = block_batch
    assert batch % Bt == 0
    assert (Bt * n_tok) % 8 == 0, "token block rows must be sublane-aligned"

    order = ["ln1_g", "ln1_b", "wqkv", "wo", "bo",
             "ln2_g", "ln2_b", "w1", "b1", "w2", "b2"]

    in_specs = ([pl.BlockSpec((Bt * Np, Pd), lambda b, d: (b, 0)),
                 pl.BlockSpec(pe_w.shape, lambda b, d: (0, 0)),
                 pl.BlockSpec(pe_b.shape, lambda b, d: (0, 0)),
                 pl.BlockSpec(cls_tok.shape, lambda b, d: (0, 0)),
                 pl.BlockSpec(pos.shape, lambda b, d: (0, 0))]
                + [pl.BlockSpec((1,) + stacked[k].shape[1:],
                                lambda b, d: (d, 0, 0)) for k in order])

    return pl.pallas_call(
        functools.partial(vit_kernel, bt=Bt, n_tok=n_tok,
                          heads=heads, head_dim=head_dim),
        out_shape=jax.ShapeDtypeStruct((batch * n_tok, D), jnp.float32),
        grid=(batch // Bt, depth),                                 # depth innermost (carry)
        in_specs=in_specs,
        out_specs=pl.BlockSpec((Bt * n_tok, D), lambda b, d: (b, 0)),
        scratch_shapes=[pltpu.VMEM((Bt * n_tok, 3 * inner), jnp.float32),
                        pltpu.VMEM((Bt * n_tok, inner), jnp.float32)],
        compiler_params=pltpu.CompilerParams(
            # batch axis has 2 blocks -> can shard across v7x's 2 TCs
            dimension_semantics=("parallel", "arbitrary"),
            vmem_limit_bytes=32 * 1024 * 1024),
    )(patches_flat, pe_w, pe_b, cls_tok, pos, *[stacked[k] for k in order])


# ------------------------------ model pieces ----------------------------------

def sincos_pos_emb(num_positions, dim):
    position = jnp.arange(num_positions, dtype=jnp.float32)[:, None]
    div_term = jnp.exp(jnp.arange(0, dim, 2, dtype=jnp.float32)
                       * -(math.log(10000.0) / float(dim)))
    pe = jnp.zeros((num_positions, dim), jnp.float32)
    pe = pe.at[:, 0::2].set(jnp.sin(position * div_term))
    pe = pe.at[:, 1::2].set(jnp.cos(position * div_term))
    return pe                                                      # (N, D)


def extract_patches(img, p1, p2):
    # 'b c (h p1) (w p2) -> b (h w) (p1 p2 c)'
    B, C, H, W = img.shape
    h, w = H // p1, W // p2
    x = img.reshape(B, C, h, p1, w, p2)
    x = jnp.transpose(x, (0, 2, 4, 3, 5, 1))                       # b h w p1 p2 c
    return x.reshape(B, h * w, p1 * p2 * C)


def init_params(key, *, patch_dim, dim, depth, heads, dim_head, mlp_dim):
    inner = heads * dim_head
    keys = jax.random.split(key, 3 + depth)
    s = 0.02
    params = {
        "pe_w": jax.random.normal(keys[0], (patch_dim, dim), jnp.float32) * s,
        "pe_b": jax.random.normal(keys[1], (1, dim), jnp.float32) * s,
        "cls": jax.random.normal(keys[2], (1, dim), jnp.float32),
        "layers": [],
    }
    for l in range(depth):
        lk = jax.random.split(keys[3 + l], 8)
        layer = (
            jnp.ones((1, dim), jnp.float32),                       # ln1 gamma
            jnp.zeros((1, dim), jnp.float32),                      # ln1 beta
            jax.random.normal(lk[0], (dim, inner), jnp.float32) * s,   # Wq
            jax.random.normal(lk[1], (dim, inner), jnp.float32) * s,   # Wk
            jax.random.normal(lk[2], (dim, inner), jnp.float32) * s,   # Wv
            jax.random.normal(lk[3], (inner, dim), jnp.float32) * s,   # Wo
            jax.random.normal(lk[4], (1, dim), jnp.float32) * s,       # bo
            jnp.ones((1, dim), jnp.float32),                       # ln2 gamma
            jnp.zeros((1, dim), jnp.float32),                      # ln2 beta
            jax.random.normal(lk[5], (dim, mlp_dim), jnp.float32) * s, # W1
            jax.random.normal(lk[6], (1, mlp_dim), jnp.float32) * s,   # b1
            jax.random.normal(lk[7], (mlp_dim, dim), jnp.float32) * s, # W2
            jnp.zeros((1, dim), jnp.float32),                      # b2
        )
        params["layers"].append(layer)
    return params


def pack_params(params, heads, dim_head):
    """Depth-stack per-layer params; fuse QKV (scale folded into Q); bf16 weights."""
    scale = dim_head ** -0.5
    names = ["ln1_g", "ln1_b", "wqkv", "wo", "bo",
             "ln2_g", "ln2_b", "w1", "b1", "w2", "b2"]
    acc = {k: [] for k in names}
    for (g1, b1n, wq, wk, wv, wo, bo, g2, b2n, w1, bb1, w2, bb2) in params["layers"]:
        acc["ln1_g"].append(g1); acc["ln1_b"].append(b1n)
        acc["wqkv"].append(jnp.concatenate([wq * scale, wk, wv],
                                           axis=-1).astype(jnp.bfloat16))  # (D, 3*inner)
        acc["wo"].append(wo.astype(jnp.bfloat16))                           # (inner, D)
        acc["bo"].append(bo)
        acc["ln2_g"].append(g2); acc["ln2_b"].append(b2n)
        acc["w1"].append(w1.astype(jnp.bfloat16)); acc["b1"].append(bb1)
        acc["w2"].append(w2.astype(jnp.bfloat16)); acc["b2"].append(bb2)
    return {k: jnp.stack(v, axis=0) for k, v in acc.items()}


def vit_forward(img, params, *, patch_size, heads, dim_head, block_batch, pool="cls"):
    patches = extract_patches(img, patch_size, patch_size)        # (B, Np, Pd)
    B, Np, Pd = patches.shape
    D = params["pe_w"].shape[1]
    N = Np + 1
    pos = sincos_pos_emb(N, D)
    stacked = pack_params(params, heads, dim_head)
    tokens_flat = vit_trunk(patches.reshape(B * Np, Pd),
                            params["pe_w"].astype(jnp.bfloat16),
                            params["pe_b"], params["cls"], pos, stacked,
                            batch=B, block_batch=block_batch, n_tok=N,
                            heads=heads, head_dim=dim_head)        # (B*N, D)
    tokens = tokens_flat.reshape(B, N, D)
    # emb_dropout / dropout = 0.0 -> identity; with_mlp_head=False -> no head
    return jnp.mean(tokens, axis=1) if pool == "mean" else tokens[:, 0]


# -------------------------- pure-JAX reference (check) -------------------------

def vit_reference(img, params, *, patch_size, heads, dim_head, pool="cls"):
    patches = extract_patches(img, patch_size, patch_size)
    emb = patches @ params["pe_w"] + params["pe_b"]
    B, Np, D = emb.shape
    pos = sincos_pos_emb(Np + 1, D)
    cls = jnp.broadcast_to(params["cls"][None], (B, 1, D))
    x = jnp.concatenate([cls, emb], axis=1) + pos[None]
    for (g1, b1n, wq, wk, wv, wo, bo, g2, b2n, w1, bb1, w2, bb2) in params["layers"]:
        xn = _layernorm(x, g1, b1n)
        q, k, v = xn @ wq, xn @ wk, xn @ wv
        N = x.shape[1]
        qh = q.reshape(B, N, heads, dim_head).transpose(0, 2, 1, 3)
        kh = k.reshape(B, N, heads, dim_head).transpose(0, 2, 1, 3)
        vh = v.reshape(B, N, heads, dim_head).transpose(0, 2, 1, 3)
        dots = jnp.einsum("bhnd,bhmd->bhnm", qh, kh) * (dim_head ** -0.5)
        attn = jax.nn.softmax(dots, axis=-1)
        o = jnp.einsum("bhnm,bhmd->bhnd", attn, vh)
        o = o.transpose(0, 2, 1, 3).reshape(B, N, heads * dim_head)
        x = x + (o @ wo + bo)
        xn2 = _layernorm(x, g2, b2n)
        h = _gelu_tanh(xn2 @ w1 + bb1)
        x = x + (h @ w2 + bb2)
    return jnp.mean(x, axis=1) if pool == "mean" else x[:, 0]


# ----------------------------------- main --------------------------------------

if __name__ == "__main__":
    # Small, lane-dense ViT config: image 16x16, patch 4, channels 4
    # -> 16 patches, N = 17, D = 128.  B = 16 with Bt = 8 per grid step gives
    # token blocks of 136 rows (8-aligned, >= 128-row MXU occupancy) and 2 grid
    # points on the "parallel" batch axis.
    B, C, IMG, PATCH = 16, 4, 16, 16 // 4 * 1                      # PATCH = 4
    PATCH = 4
    DIM, DEPTH, HEADS, DIM_HEAD, MLP_DIM = 128, 3, 4, 32, 256
    PATCH_DIM = C * PATCH * PATCH                                  # 64
    BLOCK_BATCH = 8

    key = jax.random.PRNGKey(0)
    k_img, k_par = jax.random.split(key)
    img = jax.random.normal(k_img, (B, C, IMG, IMG), jnp.float32)

    params = init_params(k_par, patch_dim=PATCH_DIM, dim=DIM, depth=DEPTH,
                         heads=HEADS, dim_head=DIM_HEAD, mlp_dim=MLP_DIM)

    out = vit_forward(img, params, patch_size=PATCH, heads=HEADS,
                      dim_head=DIM_HEAD, block_batch=BLOCK_BATCH, pool="cls")
    out = jax.block_until_ready(out)

    ref = vit_reference(img, params, patch_size=PATCH, heads=HEADS,
                        dim_head=DIM_HEAD, pool="cls")
    assert out.shape == (B, DIM), out.shape
    # bf16 matmul operands + approx reciprocal -> relaxed tolerance vs f32 ref.
    assert jnp.allclose(out, ref, atol=3e-2, rtol=3e-2), \
        float(jnp.max(jnp.abs(out - ref)))

    print("KERNEL_OK")
</pallas_src>

<mosaic_0001>
module attributes {stable_mosaic.version = 11 : i64} {
  func.func @vit_kernel(%arg0: i32, %arg1: i32, %arg2: memref<128x64xf32, #tpu.memory_space<vmem>>, %arg3: memref<64x128xbf16, #tpu.memory_space<vmem>>, %arg4: memref<1x128xf32, #tpu.memory_space<vmem>>, %arg5: memref<1x128xf32, #tpu.memory_space<vmem>>, %arg6: memref<17x128xf32, #tpu.memory_space<vmem>>, %arg7: memref<1x1x128xf32, #tpu.memory_space<vmem>>, %arg8: memref<1x1x128xf32, #tpu.memory_space<vmem>>, %arg9: memref<1x128x384xbf16, #tpu.memory_space<vmem>>, %arg10: memref<1x128x128xbf16, #tpu.memory_space<vmem>>, %arg11: memref<1x1x128xf32, #tpu.memory_space<vmem>>, %arg12: memref<1x1x128xf32, #tpu.memory_space<vmem>>, %arg13: memref<1x1x128xf32, #tpu.memory_space<vmem>>, %arg14: memref<1x128x256xbf16, #tpu.memory_space<vmem>>, %arg15: memref<1x1x256xf32, #tpu.memory_space<vmem>>, %arg16: memref<1x256x128xbf16, #tpu.memory_space<vmem>>, %arg17: memref<1x1x128xf32, #tpu.memory_space<vmem>>, %arg18: memref<136x128xf32, #tpu.memory_space<vmem>>, %arg19: memref<136x384xf32, #tpu.memory_space<vmem>>, %arg20: memref<136x128xf32, #tpu.memory_space<vmem>>) attributes {dimension_semantics = [#tpu.dimension_semantics<parallel>, #tpu.dimension_semantics<arbitrary>], iteration_bounds = array<i64: 2, 3>, scalar_prefetch = 0 : i64, scratch_operands = 2 : i64, tpu.core_type = #tpu.core_type<tc>, window_params = [{transform_indices = @transform_0, window_bounds = array<i64: 128, 64>}, {pipeline_mode = #tpu.pipeline_mode<synchronous>, transform_indices = @transform_1, window_bounds = array<i64: 64, 128>}, {pipeline_mode = #tpu.pipeline_mode<synchronous>, transform_indices = @transform_2, window_bounds = array<i64: 1, 128>}, {pipeline_mode = #tpu.pipeline_mode<synchronous>, transform_indices = @transform_3, window_bounds = array<i64: 1, 128>}, {pipeline_mode = #tpu.pipeline_mode<synchronous>, transform_indices = @transform_4, window_bounds = array<i64: 17, 128>}, {transform_indices = @transform_5, window_bounds = array<i64: 1, 1, 128>}, {transform_indices = @transform_6, window_bounds = array<i64: 1, 1, 128>}, {transform_indices = @transform_7, window_bounds = array<i64: 1, 128, 384>}, {transform_indices = @transform_8, window_bounds = array<i64: 1, 128, 128>}, {transform_indices = @transform_9, window_bounds = array<i64: 1, 1, 128>}, {transform_indices = @transform_10, window_bounds = array<i64: 1, 1, 128>}, {transform_indices = @transform_11, window_bounds = array<i64: 1, 1, 128>}, {transform_indices = @transform_12, window_bounds = array<i64: 1, 128, 256>}, {transform_indices = @transform_13, window_bounds = array<i64: 1, 1, 256>}, {transform_indices = @transform_14, window_bounds = array<i64: 1, 256, 128>}, {transform_indices = @transform_15, window_bounds = array<i64: 1, 1, 128>}, {transform_indices = @transform_16, window_bounds = array<i64: 136, 128>}]} {
    %c0_i32 = arith.constant 0 : i32
    %0 = arith.cmpi eq, %arg1, %c0_i32 : i32
    %1 = arith.extui %0 : i1 to i32
    %c0_i32_0 = arith.constant 0 : i32
    %2 = arith.cmpi ne, %1, %c0_i32_0 : i32
    scf.if %2 {
      %c0_424 = arith.constant 0 : index
      %c0_425 = arith.constant 0 : index
      %743 = vector.load %arg2[%c0_424, %c0_425] : memref<128x64xf32, #tpu.memory_space<vmem>>, vector<128x64xf32>
      %744 = arith.truncf %743 : vector<128x64xf32> to vector<128x64xbf16>
      %c0_426 = arith.constant 0 : index
      %c0_427 = arith.constant 0 : index
      %745 = vector.load %arg3[%c0_426, %c0_427] : memref<64x128xbf16, #tpu.memory_space<vmem>>, vector<64x128xbf16>
      %cst_428 = arith.constant dense<0.000000e+00> : vector<128x128xf32>
      %746 = tpu.matmul %744, %745, %cst_428 {dimension_numbers = #tpu.dot_dimension_numbers<[1], [0], [0], [1], [0, 0, 1, 1], [], []>} : vector<128x64xbf16>, vector<64x128xbf16>, vector<128x128xf32> -> vector<128x128xf32>
      %c0_429 = arith.constant 0 : index
      %c0_430 = arith.constant 0 : index
      %747 = vector.load %arg4[%c0_429, %c0_430] : memref<1x128xf32, #tpu.memory_space<vmem>>, vector<1x128xf32>
      %748 = vector.broadcast %747 : vector<1x128xf32> to vector<128x128xf32>
      %749 = arith.addf %746, %748 : vector<128x128xf32>
      %c0_431 = arith.constant 0 : index
      %c0_432 = arith.constant 0 : index
      %750 = vector.load %arg5[%c0_431, %c0_432] : memref<1x128xf32, #tpu.memory_space<vmem>>, vector<1x128xf32>
      %c0_433 = arith.constant 0 : index
      %c0_434 = arith.constant 0 : index
      %751 = vector.load %arg6[%c0_433, %c0_434] : memref<17x128xf32, #tpu.memory_space<vmem>>, vector<1x128xf32>
      %752 = arith.addf %750, %751 : vector<1x128xf32>
      %c1 = arith.constant 1 : index
      %c0_435 = arith.constant 0 : index
      %753 = vector.load %arg6[%c1, %c0_435] : memref<17x128xf32, #tpu.memory_space<vmem>>, vector<16x128xf32>
      %c0_436 = arith.constant 0 : index
      %c0_437 = arith.constant 0 : index
      %754 = vector.load %arg18[%c0_436, %c0_437] : memref<136x128xf32, #tpu.memory_space<vmem>>, vector<1x128xf32>
      tpu.vector_store %arg18[%c0_436, %c0_437], %752 {strides = array<i32>} : memref<136x128xf32, #tpu.memory_space<vmem>>, vector<1x128xf32>,
      %755 = vector.extract_strided_slice %749 {offsets = [0, 0], sizes = [16, 128], strides = [1, 1]} : vector<128x128xf32> to vector<16x128xf32>
      %756 = arith.addf %755, %753 : vector<16x128xf32>
      %c1_438 = arith.constant 1 : index
      %c0_439 = arith.constant 0 : index
      %757 = vector.load %arg18[%c1_438, %c0_439] : memref<136x128xf32, #tpu.memory_space<vmem>>, vector<16x128xf32>
      tpu.vector_store %arg18[%c1_438, %c0_439], %756 {strides = array<i32>} : memref<136x128xf32, #tpu.memory_space<vmem>>, vector<16x128xf32>,
      %c17_440 = arith.constant 17 : index
      %c0_441 = arith.constant 0 : index
      %758 = vector.load %arg18[%c17_440, %c0_441] : memref<136x128xf32, #tpu.memory_space<vmem>>, vector<1x128xf32>
      tpu.vector_store %arg18[%c17_440, %c0_441], %752 {strides = array<i32>} : memref<136x128xf32, #tpu.memory_space<vmem>>, vector<1x128xf32>,
      %759 = vector.extract_strided_slice %749 {offsets = [16, 0], sizes = [16, 128], strides = [1, 1]} : vector<128x128xf32> to vector<16x128xf32>
      %760 = arith.addf %759, %753 : vector<16x128xf32>
      %c18 = arith.constant 18 : index
      %c0_442 = arith.constant 0 : index
      %761 = vector.load %arg18[%c18, %c0_442] : memref<136x128xf32, #tpu.memory_space<vmem>>, vector<16x128xf32>
      tpu.vector_store %arg18[%c18, %c0_442], %760 {strides = array<i32>} : memref<136x128xf32, #tpu.memory_space<vmem>>, vector<16x128xf32>,
      %c34_443 = arith.constant 34 : index
      %c0_444 = arith.constant 0 : index
      %762 = vector.load %arg18[%c34_443, %c0_444] : memref<136x128xf32, #tpu.memory_space<vmem>>, vector<1x128xf32>
      tpu.vector_store %arg18[%c34_443, %c0_444], %752 {strides = array<i32>} : memref<136x128xf32, #tpu.memory_space<vmem>>, vector<1x128xf32>,
      %763 = vector.extract_strided_slice %749 {offsets = [32, 0], sizes = [16, 128], strides = [1, 1]} : vector<128x128xf32> to vector<16x128xf32>
      %764 = arith.addf %763, %753 : vector<16x128xf32>
      %c35 = arith.constant 35 : index
      %c0_445 = arith.constant 0 : index
      %765 = vector.load %arg18[%c35, %c0_445] : memref<136x128xf32, #tpu.memory_space<vmem>>, vector<16x128xf32>
      tpu.vector_store %arg18[%c35, %c0_445], %764 {strides = array<i32>} : memref<136x128xf32, #tpu.memory_space<vmem>>, vector<16x128xf32>,
      %c51_446 = arith.constant 51 : index
      %c0_447 = arith.constant 0 : index
      %766 = vector.load %arg18[%c51_446, %c0_447] : memref<136x128xf32, #tpu.memory_space<vmem>>, vector<1x128xf32>
      tpu.vector_store %arg18[%c51_446, %c0_447], %752 {strides = array<i32>} : memref<136x128xf32, #tpu.memory_space<vmem>>, vector<1x128xf32>,
      %767 = vector.extract_strided_slice %749 {offsets = [48, 0], sizes = [16, 128], strides = [1, 1]} : vector<128x128xf32> to vector<16x128xf32>
      %768 = arith.addf %767, %753 : vector<16x128xf32>
      %c52 = arith.constant 52 : index
      %c0_448 = arith.constant 0 : index
      %769 = vector.load %arg18[%c52, %c0_448] : memref<136x128xf32, #tpu.memory_space<vmem>>, vector<16x128xf32>
      tpu.vector_store %arg18[%c52, %c0_448], %768 {strides = array<i32>} : memref<136x128xf32, #tpu.memory_space<vmem>>, vector<16x128xf32>,
      %c68_449 = arith.constant 68 : index
      %c0_450 = arith.constant 0 : index
      %770 = vector.load %arg18[%c68_449, %c0_450] : memref<136x128xf32, #tpu.memory_space<vmem>>, vector<1x128xf32>
      tpu.vector_store %arg18[%c68_449, %c0_450], %752 {strides = array<i32>} : memref<136x128xf32, #tpu.memory_space<vmem>>, vector<1x128xf32>,
      %771 = vector.extract_strided_slice %749 {offsets = [64, 0], sizes = [16, 128], strides = [1, 1]} : vector<128x128xf32> to vector<16x128xf32>
      %772 = arith.addf %771, %753 : vector<16x128xf32>
      %c69 = arith.constant 69 : index
      %c0_451 = arith.constant 0 : index
      %773 = vector.load %arg18[%c69, %c0_451] : memref<136x128xf32, #tpu.memory_space<vmem>>, vector<16x128xf32>
      tpu.vector_store %arg18[%c69, %c0_451], %772 {strides = array<i32>} : memref<136x128xf32, #tpu.memory_space<vmem>>, vector<16x128xf32>,
      %c85_452 = arith.constant 85 : index
      %c0_453 = arith.constant 0 : index
      %774 = vector.load %arg18[%c85_452, %c0_453] : memref<136x128xf32, #tpu.memory_space<vmem>>, vector<1x128xf32>
      tpu.vector_store %arg18[%c85_452, %c0_453], %752 {strides = array<i32>} : memref<136x128xf32, #tpu.memory_space<vmem>>, vector<1x128xf32>,
      %775 = vector.extract_strided_slice %749 {offsets = [80, 0], sizes = [16, 128], strides = [1, 1]} : vector<128x128xf32> to vector<16x128xf32>
      %776 = arith.addf %775, %753 : vector<16x128xf32>
      %c86 = arith.constant 86 : index
      %c0_454 = arith.constant 0 : index
      %777 = vector.load %arg18[%c86, %c0_454] : memref<136x128xf32, #tpu.memory_space<vmem>>, vector<16x128xf32>
      tpu.vector_store %arg18[%c86, %c0_454], %776 {strides = array<i32>} : memref<136x128xf32, #tpu.memory_space<vmem>>, vector<16x128xf32>,
      %c102_455 = arith.constant 102 : index
      %c0_456 = arith.constant 0 : index
      %778 = vector.load %arg18[%c102_455, %c0_456] : memref<136x128xf32, #tpu.memory_space<vmem>>, vector<1x128xf32>
      tpu.vector_store %arg18[%c102_455, %c0_456], %752 {strides = array<i32>} : memref<136x128xf32, #tpu.memory_space<vmem>>, vector<1x128xf32>,
      %779 = vector.extract_strided_slice %749 {offsets = [96, 0], sizes = [16, 128], strides = [1, 1]} : vector<128x128xf32> to vector<16x128xf32>
      %780 = arith.addf %779, %753 : vector<16x128xf32>
      %c103 = arith.constant 103 : index
      %c0_457 = arith.constant 0 : index
      %781 = vector.load %arg18[%c103, %c0_457] : memref<136x128xf32, #tpu.memory_space<vmem>>, vector<16x128xf32>
      tpu.vector_store %arg18[%c103, %c0_457], %780 {strides = array<i32>} : memref<136x128xf32, #tpu.memory_space<vmem>>, vector<16x128xf32>,
      %c119_458 = arith.constant 119 : index
      %c0_459 = arith.constant 0 : index
      %782 = vector.load %arg18[%c119_458, %c0_459] : memref<136x128xf32, #tpu.memory_space<vmem>>, vector<1x128xf32>
      tpu.vector_store %arg18[%c119_458, %c0_459], %752 {strides = array<i32>} : memref<136x128xf32, #tpu.memory_space<vmem>>, vector<1x128xf32>,
      %783 = vector.extract_strided_slice %749 {offsets = [112, 0], sizes = [16, 128], strides = [1, 1]} : vector<128x128xf32> to vector<16x128xf32>
      %784 = arith.addf %783, %753 : vector<16x128xf32>
      %c120 = arith.constant 120 : index
      %c0_460 = arith.constant 0 : index
      %785 = vector.load %arg18[%c120, %c0_460] : memref<136x128xf32, #tpu.memory_space<vmem>>, vector<16x128xf32>
      tpu.vector_store %arg18[%c120, %c0_460], %784 {strides = array<i32>} : memref<136x128xf32, #tpu.memory_space<vmem>>, vector<16x128xf32>,
    } else {
    }
    %c0 = arith.constant 0 : index
    %c0_1 = arith.constant 0 : index
    %3 = vector.load %arg18[%c0, %c0_1] : memref<136x128xf32, #tpu.memory_space<vmem>>, vector<136x128xf32>
    %c0_2 = arith.constant 0 : index
    %c0_3 = arith.constant 0 : index
    %c0_4 = arith.constant 0 : index
    %4 = vector.load %arg7[%c0_2, %c0_3, %c0_4] : memref<1x1x128xf32, #tpu.memory_space<vmem>>, vector<1x1x128xf32>
    %5 = vector.shape_cast %4 : vector<1x1x128xf32> to vector<1x128xf32>
    %c0_5 = arith.constant 0 : index
    %c0_6 = arith.constant 0 : index
    %c0_7 = arith.constant 0 : index
    %6 = vector.load %arg8[%c0_5, %c0_6, %c0_7] : memref<1x1x128xf32, #tpu.memory_space<vmem>>, vector<1x1x128xf32>
    %7 = vector.shape_cast %6 : vector<1x1x128xf32> to vector<1x128xf32>
    %cst = arith.constant dense<0.000000e+00> : vector<136xf32>
    %8 = vector.multi_reduction <add>, %3, %cst [1] : vector<136x128xf32> to vector<136xf32>
    %9 = vector.shape_cast %8 : vector<136xf32> to vector<136x1xf32>
    %cst_8 = arith.constant 1.280000e+02 : f32
    %10 = vector.broadcast %cst_8 : f32 to vector<136x1xf32>
    %11 = arith.divf %9, %10 : vector<136x1xf32>
    %12 = vector.broadcast %11 : vector<136x1xf32> to vector<136x128xf32>
    %13 = arith.subf %3, %12 : vector<136x128xf32>
    %14 = arith.mulf %13, %13 : vector<136x128xf32>
    %cst_9 = arith.constant dense<0.000000e+00> : vector<136xf32>
    %15 = vector.multi_reduction <add>, %14, %cst_9 [1] : vector<136x128xf32> to vector<136xf32>
    %16 = vector.shape_cast %15 : vector<136xf32> to vector<136x1xf32>
    %cst_10 = arith.constant 1.280000e+02 : f32
    %17 = vector.broadcast %cst_10 : f32 to vector<136x1xf32>
    %18 = arith.divf %16, %17 : vector<136x1xf32>
    %19 = vector.broadcast %11 : vector<136x1xf32> to vector<136x128xf32>
    %20 = arith.subf %3, %19 : vector<136x128xf32>
    %cst_11 = arith.constant 9.99999974E-6 : f32
    %21 = vector.broadcast %cst_11 : f32 to vector<136x1xf32>
    %22 = arith.addf %18, %21 : vector<136x1xf32>
    %23 = math.rsqrt %22 : vector<136x1xf32>
    %24 = vector.broadcast %23 : vector<136x1xf32> to vector<136x128xf32>
    %25 = arith.mulf %20, %24 : vector<136x128xf32>
    %26 = vector.broadcast %5 : vector<1x128xf32> to vector<136x128xf32>
    %27 = arith.mulf %25, %26 : vector<136x128xf32>
    %28 = vector.broadcast %7 : vector<1x128xf32> to vector<136x128xf32>
    %29 = arith.addf %27, %28 : vector<136x128xf32>
    %30 = arith.truncf %29 : vector<136x128xf32> to vector<136x128xbf16>
    %c0_12 = arith.constant 0 : index
    %c0_13 = arith.constant 0 : index
    %c0_14 = arith.constant 0 : index
    %31 = vector.load %arg9[%c0_12, %c0_13, %c0_14] : memref<1x128x384xbf16, #tpu.memory_space<vmem>>, vector<1x128x384xbf16>
    %32 = vector.shape_cast %31 : vector<1x128x384xbf16> to vector<128x384xbf16>
    %cst_15 = arith.constant dense<0.000000e+00> : vector<136x384xf32>
    %33 = tpu.matmul %30, %32, %cst_15 {dimension_numbers = #tpu.dot_dimension_numbers<[1], [0], [0], [1], [0, 0, 1, 1], [], []>} : vector<136x128xbf16>, vector<128x384xbf16>, vector<136x384xf32> -> vector<136x384xf32>
    %c0_16 = arith.constant 0 : index
    %c0_17 = arith.constant 0 : index
    %34 = vector.load %arg19[%c0_16, %c0_17] : memref<136x384xf32, #tpu.memory_space<vmem>>, vector<136x384xf32>
    tpu.vector_store %arg19[%c0_16, %c0_17], %33 {strides = array<i32>} : memref<136x384xf32, #tpu.memory_space<vmem>>, vector<136x384xf32>,
    %c0_18 = arith.constant 0 : index
    %c0_19 = arith.constant 0 : index
    %35 = vector.load %arg19[%c0_18, %c0_19] : memref<136x384xf32, #tpu.memory_space<vmem>>, vector<17x32xf32>
    %36 = arith.truncf %35 : vector<17x32xf32> to vector<17x32xbf16>
    %c0_20 = arith.constant 0 : index
    %c128 = arith.constant 128 : index
    %37 = vector.load %arg19[%c0_20, %c128] : memref<136x384xf32, #tpu.memory_space<vmem>>, vector<17x32xf32>
    %38 = arith.truncf %37 : vector<17x32xf32> to vector<17x32xbf16>
    %c0_21 = arith.constant 0 : index
    %c256 = arith.constant 256 : index
    %39 = vector.load %arg19[%c0_21, %c256] : memref<136x384xf32, #tpu.memory_space<vmem>>, vector<17x32xf32>
    %40 = arith.truncf %39 : vector<17x32xf32> to vector<17x32xbf16>
    %cst_22 = arith.constant dense<0.000000e+00> : vector<17x17xf32>
    %41 = tpu.matmul %36, %38, %cst_22 {dimension_numbers = #tpu.dot_dimension_numbers<[1], [1], [0], [0], [0, 0, 1, 0], [], []>} : vector<17x32xbf16>, vector<17x32xbf16>, vector<17x17xf32> -> vector<17x17xf32>
    %cst_23 = arith.constant dense<0xFF800000> : vector<17xf32>
    %42 = vector.multi_reduction <maximumf>, %41, %cst_23 [1] : vector<17x17xf32> to vector<17xf32>
    %43 = vector.shape_cast %42 : vector<17xf32> to vector<17x1xf32>
    %44 = vector.broadcast %43 : vector<17x1xf32> to vector<17x17xf32>
    %45 = arith.subf %41, %44 : vector<17x17xf32>
    %46 = math.exp %45 : vector<17x17xf32>
    %cst_24 = arith.constant dense<0.000000e+00> : vector<17xf32>
    %47 = vector.multi_reduction <add>, %46, %cst_24 [1] : vector<17x17xf32> to vector<17xf32>
    %48 = vector.shape_cast %47 : vector<17xf32> to vector<17x1xf32>
    %49 = tpu.reciprocal %48 {approx = true} : vector<17x1xf32> -> vector<17x1xf32>
    %50 = vector.broadcast %49 : vector<17x1xf32> to vector<17x17xf32>
    %51 = arith.mulf %46, %50 : vector<17x17xf32>
    %52 = arith.truncf %51 : vector<17x17xf32> to vector<17x17xbf16>
    %cst_25 = arith.constant dense<0.000000e+00> : vector<17x32xf32>
    %53 = tpu.matmul %52, %40, %cst_25 {dimension_numbers = #tpu.dot_dimension_numbers<[1], [0], [0], [1], [0, 0, 1, 1], [], []>} : vector<17x17xbf16>, vector<17x32xbf16>, vector<17x32xf32> -> vector<17x32xf32>
    %c0_26 = arith.constant 0 : index
    %c0_27 = arith.constant 0 : index
    %54 = vector.load %arg20[%c0_26, %c0_27] : memref<136x128xf32, #tpu.memory_space<vmem>>, vector<17x32xf32>
    tpu.vector_store %arg20[%c0_26, %c0_27], %53 {strides = array<i32>} : memref<136x128xf32, #tpu.memory_space<vmem>>, vector<17x32xf32>,
    %c0_28 = arith.constant 0 : index
    %c32 = arith.constant 32 : index
    %55 = vector.load %arg19[%c0_28, %c32] : memref<136x384xf32, #tpu.memory_space<vmem>>, vector<17x32xf32>
    %56 = arith.truncf %55 : vector<17x32xf32> to vector<17x32xbf16>
    %c0_29 = arith.constant 0 : index
    %c160 = arith.constant 160 : index
    %57 = vector.load %arg19[%c0_29, %c160] : memref<136x384xf32, #tpu.memory_space<vmem>>, vector<17x32xf32>
    %58 = arith.truncf %57 : vector<17x32xf32> to vector<17x32xbf16>
    %c0_30 = arith.constant 0 : index
    %c288 = arith.constant 288 : index
    %59 = vector.load %arg19[%c0_30, %c288] : memref<136x384xf32, #tpu.memory_space<vmem>>, vector<17x32xf32>
    %60 = arith.truncf %59 : vector<17x32xf32> to vector<17x32xbf16>
    %cst_31 = arith.constant dense<0.000000e+00> : vector<17x17xf32>
    %61 = tpu.matmul %56, %58, %cst_31 {dimension_numbers = #tpu.dot_dimension_numbers<[1], [1], [0], [0], [0, 0, 1, 0], [], []>} : vector<17x32xbf16>, vector<17x32xbf16>, vector<17x17xf32> -> vector<17x17xf32>
    %cst_32 = arith.constant dense<0xFF800000> : vector<17xf32>
    %62 = vector.multi_reduction <maximumf>, %61, %cst_32 [1] : vector<17x17xf32> to vector<17xf32>
    %63 = vector.shape_cast %62 : vector<17xf32> to vector<17x1xf32>
    %64 = vector.broadcast %63 : vector<17x1xf32> to vector<17x17xf32>
    %65 = arith.subf %61, %64 : vector<17x17xf32>
    %66 = math.exp %65 : vector<17x17xf32>
    %cst_33 = arith.constant dense<0.000000e+00> : vector<17xf32>
    %67 = vector.multi_reduction <add>, %66, %cst_33 [1] : vector<17x17xf32> to vector<17xf32>
    %68 = vector.shape_cast %67 : vector<17xf32> to vector<17x1xf32>
    %69 = tpu.reciprocal %68 {approx = true} : vector<17x1xf32> -> vector<17x1xf32>
    %70 = vector.broadcast %69 : vector<17x1xf32> to vector<17x17xf32>
    %71 = arith.mulf %66, %70 : vector<17x17xf32>
    %72 = arith.truncf %71 : vector<17x17xf32> to vector<17x17xbf16>
    %cst_34 = arith.constant dense<0.000000e+00> : vector<17x32xf32>
    %73 = tpu.matmul %72, %60, %cst_34 {dimension_numbers = #tpu.dot_dimension_numbers<[1], [0], [0], [1], [0, 0, 1, 1], [], []>} : vector<17x17xbf16>, vector<17x32xbf16>, vector<17x32xf32> -> vector<17x32xf32>
    %c0_35 = arith.constant 0 : index
    %c32_36 = arith.constant 32 : index
    %74 = vector.load %arg20[%c0_35, %c32_36] : memref<136x128xf32, #tpu.memory_space<vmem>>, vector<17x32xf32>
    tpu.vector_store %arg20[%c0_35, %c32_36], %73 {strides = array<i32>} : memref<136x128xf32, #tpu.memory_space<vmem>>, vector<17x32xf32>,
    %c0_37 = arith.constant 0 : index
    %c64 = arith.constant 64 : index
    %75 = vector.load %arg19[%c0_37, %c64] : memref<136x384xf32, #tpu.memory_space<vmem>>, vector<17x32xf32>
    %76 = arith.truncf %75 : vector<17x32xf32> to vector<17x32xbf16>
    %c0_38 = arith.constant 0 : index
    %c192 = arith.constant 192 : index
    %77 = vector.load %arg19[%c0_38, %c192] : memref<136x384xf32, #tpu.memory_space<vmem>>, vector<17x32xf32>
    %78 = arith.truncf %77 : vector<17x32xf32> to vector<17x32xbf16>
    %c0_39 = arith.constant 0 : index
    %c320 = arith.constant 320 : index
    %79 = vector.load %arg19[%c0_39, %c320] : memref<136x384xf32, #tpu.memory_space<vmem>>, vector<17x32xf32>
    %80 = arith.truncf %79 : vector<17x32xf32> to vector<17x32xbf16>
    %cst_40 = arith.constant dense<0.000000e+00> : vector<17x17xf32>
    %81 = tpu.matmul %76, %78, %cst_40 {dimension_numbers = #tpu.dot_dimension_numbers<[1], [1], [0], [0], [0, 0, 1, 0], [], []>} : vector<17x32xbf16>, vector<17x32xbf16>, vector<17x17xf32> -> vector<17x17xf32>
    %cst_41 = arith.constant dense<0xFF800000> : vector<17xf32>
    %82 = vector.multi_reduction <maximumf>, %81, %cst_41 [1] : vector<17x17xf32> to vector<17xf32>
    %83 = vector.shape_cast %82 : vector<17xf32> to vector<17x1xf32>
    %84 = vector.broadcast %83 : vector<17x1xf32> to vector<17x17xf32>
    %85 = arith.subf %81, %84 : vector<17x17xf32>
    %86 = math.exp %85 : vector<17x17xf32>
    %cst_42 = arith.constant dense<0.000000e+00> : vector<17xf32>
    %87 = vector.multi_reduction <add>, %86, %cst_42 [1] : vector<17x17xf32> to vector<17xf32>
    %88 = vector.shape_cast %87 : vector<17xf32> to vector<17x1xf32>
    %89 = tpu.reciprocal %88 {approx = true} : vector<17x1xf32> -> vector<17x1xf32>
    %90 = vector.broadcast %89 : vector<17x1xf32> to vector<17x17xf32>
    %91 = arith.mulf %86, %90 : vector<17x17xf32>
    %92 = arith.truncf %91 : vector<17x17xf32> to vector<17x17xbf16>
    %cst_43 = arith.constant dense<0.000000e+00> : vector<17x32xf32>
    %93 = tpu.matmul %92, %80, %cst_43 {dimension_numbers = #tpu.dot_dimension_numbers<[1], [0], [0], [1], [0, 0, 1, 1], [], []>} : vector<17x17xbf16>, vector<17x32xbf16>, vector<17x32xf32> -> vector<17x32xf32>
    %c0_44 = arith.constant 0 : index
    %c64_45 = arith.constant 64 : index
    %94 = vector.load %arg20[%c0_44, %c64_45] : memref<136x128xf32, #tpu.memory_space<vmem>>, vector<17x32xf32>
    tpu.vector_store %arg20[%c0_44, %c64_45], %93 {strides = array<i32>} : memref<136x128xf32, #tpu.memory_space<vmem>>, vector<17x32xf32>,
    %c0_46 = arith.constant 0 : index
    %c96 = arith.constant 96 : index
    %95 = vector.load %arg19[%c0_46, %c96] : memref<136x384xf32, #tpu.memory_space<vmem>>, vector<17x32xf32>
    %96 = arith.truncf %95 : vector<17x32xf32> to vector<17x32xbf16>
    %c0_47 = arith.constant 0 : index
    %c224 = arith.constant 224 : index
    %97 = vector.load %arg19[%c0_47, %c224] : memref<136x384xf32, #tpu.memory_space<vmem>>, vector<17x32xf32>
    %98 = arith.truncf %97 : vector<17x32xf32> to vector<17x32xbf16>
    %c0_48 = arith.constant 0 : index
    %c352 = arith.constant 352 : index
    %99 = vector.load %arg19[%c0_48, %c352] : memref<136x384xf32, #tpu.memory_space<vmem>>, vector<17x32xf32>
    %100 = arith.truncf %99 : vector<17x32xf32> to vector<17x32xbf16>
    %cst_49 = arith.constant dense<0.000000e+00> : vector<17x17xf32>
    %101 = tpu.matmul %96, %98, %cst_49 {dimension_numbers = #tpu.dot_dimension_numbers<[1], [1], [0], [0], [0, 0, 1, 0], [], []>} : vector<17x32xbf16>, vector<17x32xbf16>, vector<17x17xf32> -> vector<17x17xf32>
    %cst_50 = arith.constant dense<0xFF800000> : vector<17xf32>
    %102 = vector.multi_reduction <maximumf>, %101, %cst_50 [1] : vector<17x17xf32> to vector<17xf32>
    %103 = vector.shape_cast %102 : vector<17xf32> to vector<17x1xf32>
    %104 = vector.broadcast %103 : vector<17x1xf32> to vector<17x17xf32>
    %105 = arith.subf %101, %104 : vector<17x17xf32>
    %106 = math.exp %105 : vector<17x17xf32>
    %cst_51 = arith.constant dense<0.000000e+00> : vector<17xf32>
    %107 = vector.multi_reduction <add>, %106, %cst_51 [1] : vector<17x17xf32> to vector<17xf32>
    %108 = vector.shape_cast %107 : vector<17xf32> to vector<17x1xf32>
    %109 = tpu.reciprocal %108 {approx = true} : vector<17x1xf32> -> vector<17x1xf32>
    %110 = vector.broadcast %109 : vector<17x1xf32> to vector<17x17xf32>
    %111 = arith.mulf %106, %110 : vector<17x17xf32>
    %112 = arith.truncf %111 : vector<17x17xf32> to vector<17x17xbf16>
    %cst_52 = arith.constant dense<0.000000e+00> : vector<17x32xf32>
    %113 = tpu.matmul %112, %100, %cst_52 {dimension_numbers = #tpu.dot_dimension_numbers<[1], [0], [0], [1], [0, 0, 1, 1], [], []>} : vector<17x17xbf16>, vector<17x32xbf16>, vector<17x32xf32> -> vector<17x32xf32>
    %c0_53 = arith.constant 0 : index
    %c96_54 = arith.constant 96 : index
    %114 = vector.load %arg20[%c0_53, %c96_54] : memref<136x128xf32, #tpu.memory_space<vmem>>, vector<17x32xf32>
    tpu.vector_store %arg20[%c0_53, %c96_54], %113 {strides = array<i32>} : memref<136x128xf32, #tpu.memory_space<vmem>>, vector<17x32xf32>,
    %c17 = arith.constant 17 : index
    %c0_55 = arith.constant 0 : index
    %115 = vector.load %arg19[%c17, %c0_55] : memref<136x384xf32, #tpu.memory_space<vmem>>, vector<17x32xf32>
    %116 = arith.truncf %115 : vector<17x32xf32> to vector<17x32xbf16>
    %c17_56 = arith.constant 17 : index
    %c128_57 = arith.constant 128 : index
    %117 = vector.load %arg19[%c17_56, %c128_57] : memref<136x384xf32, #tpu.memory_space<vmem>>, vector<17x32xf32>
    %118 = arith.truncf %117 : vector<17x32xf32> to vector<17x32xbf16>
    %c17_58 = arith.constant 17 : index
    %c256_59 = arith.constant 256 : index
    %119 = vector.load %arg19[%c17_58, %c256_59] : memref<136x384xf32, #tpu.memory_space<vmem>>, vector<17x32xf32>
    %120 = arith.truncf %119 : vector<17x32xf32> to vector<17x32xbf16>
    %cst_60 = arith.constant dense<0.000000e+00> : vector<17x17xf32>
    %121 = tpu.matmul %116, %118, %cst_60 {dimension_numbers = #tpu.dot_dimension_numbers<[1], [1], [0], [0], [0, 0, 1, 0], [], []>} : vector<17x32xbf16>, vector<17x32xbf16>, vector<17x17xf32> -> vector<17x17xf32>
    %cst_61 = arith.constant dense<0xFF800000> : vector<17xf32>
    %122 = vector.multi_reduction <maximumf>, %121, %cst_61 [1] : vector<17x17xf32> to vector<17xf32>
    %123 = vector.shape_cast %122 : vector<17xf32> to vector<17x1xf32>
    %124 = vector.broadcast %123 : vector<17x1xf32> to vector<17x17xf32>
    %125 = arith.subf %121, %124 : vector<17x17xf32>
    %126 = math.exp %125 : vector<17x17xf32>
    %cst_62 = arith.constant dense<0.000000e+00> : vector<17xf32>
    %127 = vector.multi_reduction <add>, %126, %cst_62 [1] : vector<17x17xf32> to vector<17xf32>
    %128 = vector.shape_cast %127 : vector<17xf32> to vector<17x1xf32>
    %129 = tpu.reciprocal %128 {approx = true} : vector<17x1xf32> -> vector<17x1xf32>
    %130 = vector.broadcast %129 : vector<17x1xf32> to vector<17x17xf32>
    %131 = arith.mulf %126, %130 : vector<17x17xf32>
    %132 = arith.truncf %131 : vector<17x17xf32> to vector<17x17xbf16>
    %cst_63 = arith.constant dense<0.000000e+00> : vector<17x32xf32>
    %133 = tpu.matmul %132, %120, %cst_63 {dimension_numbers = #tpu.dot_dimension_numbers<[1], [0], [0], [1], [0, 0, 1, 1], [], []>} : vector<17x17xbf16>, vector<17x32xbf16>, vector<17x32xf32> -> vector<17x32xf32>
    %c17_64 = arith.constant 17 : index
    %c0_65 = arith.constant 0 : index
    %134 = vector.load %arg20[%c17_64, %c0_65] : memref<136x128xf32, #tpu.memory_space<vmem>>, vector<17x32xf32>
    tpu.vector_store %arg20[%c17_64, %c0_65], %133 {strides = array<i32>} : memref<136x128xf32, #tpu.memory_space<vmem>>, vector<17x32xf32>,
    %c17_66 = arith.constant 17 : index
    %c32_67 = arith.constant 32 : index
    %135 = vector.load %arg19[%c17_66, %c32_67] : memref<136x384xf32, #tpu.memory_space<vmem>>, vector<17x32xf32>
    %136 = arith.truncf %135 : vector<17x32xf32> to vector<17x32xbf16>
    %c17_68 = arith.constant 17 : index
    %c160_69 = arith.constant 160 : index
    %137 = vector.load %arg19[%c17_68, %c160_69] : memref<136x384xf32, #tpu.memory_space<vmem>>, vector<17x32xf32>
    %138 = arith.truncf %137 : vector<17x32xf32> to vector<17x32xbf16>
    %c17_70 = arith.constant 17 : index
    %c288_71 = arith.constant 288 : index
    %139 = vector.load %arg19[%c17_70, %c288_71] : memref<136x384xf32, #tpu.memory_space<vmem>>, vector<17x32xf32>
    %140 = arith.truncf %139 : vector<17x32xf32> to vector<17x32xbf16>
    %cst_72 = arith.constant dense<0.000000e+00> : vector<17x17xf32>
    %141 = tpu.matmul %136, %138, %cst_72 {dimension_numbers = #tpu.dot_dimension_numbers<[1], [1], [0], [0], [0, 0, 1, 0], [], []>} : vector<17x32xbf16>, vector<17x32xbf16>, vector<17x17xf32> -> vector<17x17xf32>
    %cst_73 = arith.constant dense<0xFF800000> : vector<17xf32>
    %142 = vector.multi_reduction <maximumf>, %141, %cst_73 [1] : vector<17x17xf32> to vector<17xf32>
    %143 = vector.shape_cast %142 : vector<17xf32> to vector<17x1xf32>
    %144 = vector.broadcast %143 : vector<17x1xf32> to vector<17x17xf32>
    %145 = arith.subf %141, %144 : vector<17x17xf32>
    %146 = math.exp %145 : vector<17x17xf32>
    %cst_74 = arith.constant dense<0.000000e+00> : vector<17xf32>
    %147 = vector.multi_reduction <add>, %146, %cst_74 [1] : vector<17x17xf32> to vector<17xf32>
    %148 = vector.shape_cast %147 : vector<17xf32> to vector<17x1xf32>
    %149 = tpu.reciprocal %148 {approx = true} : vector<17x1xf32> -> vector<17x1xf32>
    %150 = vector.broadcast %149 : vector<17x1xf32> to vector<17x17xf32>
    %151 = arith.mulf %146, %150 : vector<17x17xf32>
    %152 = arith.truncf %151 : vector<17x17xf32> to vector<17x17xbf16>
    %cst_75 = arith.constant dense<0.000000e+00> : vector<17x32xf32>
    %153 = tpu.matmul %152, %140, %cst_75 {dimension_numbers = #tpu.dot_dimension_numbers<[1], [0], [0], [1], [0, 0, 1, 1], [], []>} : vector<17x17xbf16>, vector<17x32xbf16>, vector<17x32xf32> -> vector<17x32xf32>
    %c17_76 = arith.constant 17 : index
    %c32_77 = arith.constant 32 : index
    %154 = vector.load %arg20[%c17_76, %c32_77] : memref<136x128xf32, #tpu.memory_space<vmem>>, vector<17x32xf32>
    tpu.vector_store %arg20[%c17_76, %c32_77], %153 {strides = array<i32>} : memref<136x128xf32, #tpu.memory_space<vmem>>, vector<17x32xf32>,
    %c17_78 = arith.constant 17 : index
    %c64_79 = arith.constant 64 : index
    %155 = vector.load %arg19[%c17_78, %c64_79] : memref<136x384xf32, #tpu.memory_space<vmem>>, vector<17x32xf32>
    %156 = arith.truncf %155 : vector<17x32xf32> to vector<17x32xbf16>
    %c17_80 = arith.constant 17 : index
    %c192_81 = arith.constant 192 : index
    %157 = vector.load %arg19[%c17_80, %c192_81] : memref<136x384xf32, #tpu.memory_space<vmem>>, vector<17x32xf32>
    %158 = arith.truncf %157 : vector<17x32xf32> to vector<17x32xbf16>
    %c17_82 = arith.constant 17 : index
    %c320_83 = arith.constant 320 : index
    %159 = vector.load %arg19[%c17_82, %c320_83] : memref<136x384xf32, #tpu.memory_space<vmem>>, vector<17x32xf32>
    %160 = arith.truncf %159 : vector<17x32xf32> to vector<17x32xbf16>
    %cst_84 = arith.constant dense<0.000000e+00> : vector<17x17xf32>
    %161 = tpu.matmul %156, %158, %cst_84 {dimension_numbers = #tpu.dot_dimension_numbers<[1], [1], [0], [0], [0, 0, 1, 0], [], []>} : vector<17x32xbf16>, vector<17x32xbf16>, vector<17x17xf32> -> vector<17x17xf32>
    %cst_85 = arith.constant dense<0xFF800000> : vector<17xf32>
    %162 = vector.multi_reduction <maximumf>, %161, %cst_85 [1] : vector<17x17xf32> to vector<17xf32>
    %163 = vector.shape_cast %162 : vector<17xf32> to vector<17x1xf32>
    %164 = vector.broadcast %163 : vector<17x1xf32> to vector<17x17xf32>
    %165 = arith.subf %161, %164 : vector<17x17xf32>
    %166 = math.exp %165 : vector<17x17xf32>
    %cst_86 = arith.constant dense<0.000000e+00> : vector<17xf32>
    %167 = vector.multi_reduction <add>, %166, %cst_86 [1] : vector<17x17xf32> to vector<17xf32>
    %168 = vector.shape_cast %167 : vector<17xf32> to vector<17x1xf32>
    %169 = tpu.reciprocal %168 {approx = true} : vector<17x1xf32> -> vector<17x1xf32>
    %170 = vector.broadcast %169 : vector<17x1xf32> to vector<17x17xf32>
    %171 = arith.mulf %166, %170 : vector<17x17xf32>
    %172 = arith.truncf %171 : vector<17x17xf32> to vector<17x17xbf16>
    %cst_87 = arith.constant dense<0.000000e+00> : vector<17x32xf32>
    %173 = tpu.matmul %172, %160, %cst_87 {dimension_numbers = #tpu.dot_dimension_numbers<[1], [0], [0], [1], [0, 0, 1, 1], [], []>} : vector<17x17xbf16>, vector<17x32xbf16>, vector<17x32xf32> -> vector<17x32xf32>
    %c17_88 = arith.constant 17 : index
    %c64_89 = arith.constant 64 : index
    %174 = vector.load %arg20[%c17_88, %c64_89] : memref<136x128xf32, #tpu.memory_space<vmem>>, vector<17x32xf32>
    tpu.vector_store %arg20[%c17_88, %c64_89], %173 {strides = array<i32>} : memref<136x128xf32, #tpu.memory_space<vmem>>, vector<17x32xf32>,
    %c17_90 = arith.constant 17 : index
    %c96_91 = arith.constant 96 : index
    %175 = vector.load %arg19[%c17_90, %c96_91] : memref<136x384xf32, #tpu.memory_space<vmem>>, vector<17x32xf32>
    %176 = arith.truncf %175 : vector<17x32xf32> to vector<17x32xbf16>
    %c17_92 = arith.constant 17 : index
    %c224_93 = arith.constant 224 : index
    %177 = vector.load %arg19[%c17_92, %c224_93] : memref<136x384xf32, #tpu.memory_space<vmem>>, vector<17x32xf32>
    %178 = arith.truncf %177 : vector<17x32xf32> to vector<17x32xbf16>
    %c17_94 = arith.constant 17 : index
    %c352_95 = arith.constant 352 : index
    %179 = vector.load %arg19[%c17_94, %c352_95] : memref<136x384xf32, #tpu.memory_space<vmem>>, vector<17x32xf32>
    %180 = arith.truncf %179 : vector<17x32xf32> to vector<17x32xbf16>
    %cst_96 = arith.constant dense<0.000000e+00> : vector<17x17xf32>
    %181 = tpu.matmul %176, %178, %cst_96 {dimension_numbers = #tpu.dot_dimension_numbers<[1], [1], [0], [0], [0, 0, 1, 0], [], []>} : vector<17x32xbf16>, vector<17x32xbf16>, vector<17x17xf32> -> vector<17x17xf32>
    %cst_97 = arith.constant dense<0xFF800000> : vector<17xf32>
    %182 = vector.multi_reduction <maximumf>, %181, %cst_97 [1] : vector<17x17xf32> to vector<17xf32>
    %183 = vector.shape_cast %182 : vector<17xf32> to vector<17x1xf32>
    %184 = vector.broadcast %183 : vector<17x1xf32> to vector<17x17xf32>
    %185 = arith.subf %181, %184 : vector<17x17xf32>
    %186 = math.exp %185 : vector<17x17xf32>
    %cst_98 = arith.constant dense<0.000000e+00> : vector<17xf32>
    %187 = vector.multi_reduction <add>, %186, %cst_98 [1] : vector<17x17xf32> to vector<17xf32>
    %188 = vector.shape_cast %187 : vector<17xf32> to vector<17x1xf32>
    %189 = tpu.reciprocal %188 {approx = true} : vector<17x1xf32> -> vector<17x1xf32>
    %190 = vector.broadcast %189 : vector<17x1xf32> to vector<17x17xf32>
    %191 = arith.mulf %186, %190 : vector<17x17xf32>
    %192 = arith.truncf %191 : vector<17x17xf32> to vector<17x17xbf16>
    %cst_99 = arith.constant dense<0.000000e+00> : vector<17x32xf32>
    %193 = tpu.matmul %192, %180, %cst_99 {dimension_numbers = #tpu.dot_dimension_numbers<[1], [0], [0], [1], [0, 0, 1, 1], [], []>} : vector<17x17xbf16>, vector<17x32xbf16>, vector<17x32xf32> -> vector<17x32xf32>
    %c17_100 = arith.constant 17 : index
    %c96_101 = arith.constant 96 : index
    %194 = vector.load %arg20[%c17_100, %c96_101] : memref<136x128xf32, #tpu.memory_space<vmem>>, vector<17x32xf32>
    tpu.vector_store %arg20[%c17_100, %c96_101], %193 {strides = array<i32>} : memref<136x128xf32, #tpu.memory_space<vmem>>, vector<17x32xf32>,
    %c34 = arith.constant 34 : index
    %c0_102 = arith.constant 0 : index
    %195 = vector.load %arg19[%c34, %c0_102] : memref<136x384xf32, #tpu.memory_space<vmem>>, vector<17x32xf32>
    %196 = arith.truncf %195 : vector<17x32xf32> to vector<17x32xbf16>
    %c34_103 = arith.constant 34 : index
    %c128_104 = arith.constant 128 : index
    %197 = vector.load %arg19[%c34_103, %c128_104] : memref<136x384xf32, #tpu.memory_space<vmem>>, vector<17x32xf32>
    %198 = arith.truncf %197 : vector<17x32xf32> to vector<17x32xbf16>
    %c34_105 = arith.constant 34 : index
    %c256_106 = arith.constant 256 : index
    %199 = vector.load %arg19[%c34_105, %c256_106] : memref<136x384xf32, #tpu.memory_space<vmem>>, vector<17x32xf32>
    %200 = arith.truncf %199 : vector<17x32xf32> to vector<17x32xbf16>
    %cst_107 = arith.constant dense<0.000000e+00> : vector<17x17xf32>
    %201 = tpu.matmul %196, %198, %cst_107 {dimension_numbers = #tpu.dot_dimension_numbers<[1], [1], [0], [0], [0, 0, 1, 0], [], []>} : vector<17x32xbf16>, vector<17x32xbf16>, vector<17x17xf32> -> vector<17x17xf32>
    %cst_108 = arith.constant dense<0xFF800000> : vector<17xf32>
    %202 = vector.multi_reduction <maximumf>, %201, %cst_108 [1] : vector<17x17xf32> to vector<17xf32>
    %203 = vector.shape_cast %202 : vector<17xf32> to vector<17x1xf32>
    %204 = vector.broadcast %203 : vector<17x1xf32> to vector<17x17xf32>
    %205 = arith.subf %201, %204 : vector<17x17xf32>
    %206 = math.exp %205 : vector<17x17xf32>
    %cst_109 = arith.constant dense<0.000000e+00> : vector<17xf32>
    %207 = vector.multi_reduction <add>, %206, %cst_109 [1] : vector<17x17xf32> to vector<17xf32>
    %208 = vector.shape_cast %207 : vector<17xf32> to vector<17x1xf32>
    %209 = tpu.reciprocal %208 {approx = true} : vector<17x1xf32> -> vector<17x1xf32>
    %210 = vector.broadcast %209 : vector<17x1xf32> to vector<17x17xf32>
    %211 = arith.mulf %206, %210 : vector<17x17xf32>
    %212 = arith.truncf %211 : vector<17x17xf32> to vector<17x17xbf16>
    %cst_110 = arith.constant dense<0.000000e+00> : vector<17x32xf32>
    %213 = tpu.matmul %212, %200, %cst_110 {dimension_numbers = #tpu.dot_dimension_numbers<[1], [0], [0], [1], [0, 0, 1, 1], [], []>} : vector<17x17xbf16>, vector<17x32xbf16>, vector<17x32xf32> -> vector<17x32xf32>
    %c34_111 = arith.constant 34 : index
    %c0_112 = arith.constant 0 : index
    %214 = vector.load %arg20[%c34_111, %c0_112] : memref<136x128xf32, #tpu.memory_space<vmem>>, vector<17x32xf32>
    tpu.vector_store %arg20[%c34_111, %c0_112], %213 {strides = array<i32>} : memref<136x128xf32, #tpu.memory_space<vmem>>, vector<17x32xf32>,
    %c34_113 = arith.constant 34 : index
    %c32_114 = arith.constant 32 : index
    %215 = vector.load %arg19[%c34_113, %c32_114] : memref<136x384xf32, #tpu.memory_space<vmem>>, vector<17x32xf32>
    %216 = arith.truncf %215 : vector<17x32xf32> to vector<17x32xbf16>
    %c34_115 = arith.constant 34 : index
    %c160_116 = arith.constant 160 : index
    %217 = vector.load %arg19[%c34_115, %c160_116] : memref<136x384xf32, #tpu.memory_space<vmem>>, vector<17x32xf32>
    %218 = arith.truncf %217 : vector<17x32xf32> to vector<17x32xbf16>
    %c34_117 = arith.constant 34 : index
    %c288_118 = arith.constant 288 : index
    %219 = vector.load %arg19[%c34_117, %c288_118] : memref<136x384xf32, #tpu.memory_space<vmem>>, vector<17x32xf32>
    %220 = arith.truncf %219 : vector<17x32xf32> to vector<17x32xbf16>
    %cst_119 = arith.constant dense<0.000000e+00> : vector<17x17xf32>
    %221 = tpu.matmul %216, %218, %cst_119 {dimension_numbers = #tpu.dot_dimension_numbers<[1], [1], [0], [0], [0, 0, 1, 0], [], []>} : vector<17x32xbf16>, vector<17x32xbf16>, vector<17x17xf32> -> vector<17x17xf32>
    %cst_120 = arith.constant dense<0xFF800000> : vector<17xf32>
    %222 = vector.multi_reduction <maximumf>, %221, %cst_120 [1] : vector<17x17xf32> to vector<17xf32>
    %223 = vector.shape_cast %222 : vector<17xf32> to vector<17x1xf32>
    %224 = vector.broadcast %223 : vector<17x1xf32> to vector<17x17xf32>
    %225 = arith.subf %221, %224 : vector<17x17xf32>
    %226 = math.exp %225 : vector<17x17xf32>
    %cst_121 = arith.constant dense<0.000000e+00> : vector<17xf32>
    %227 = vector.multi_reduction <add>, %226, %cst_121 [1] : vector<17x17xf32> to vector<17xf32>
    %228 = vector.shape_cast %227 : vector<17xf32> to vector<17x1xf32>
    %229 = tpu.reciprocal %228 {approx = true} : vector<17x1xf32> -> vector<17x1xf32>
    %230 = vector.broadcast %229 : vector<17x1xf32> to vector<17x17xf32>
    %231 = arith.mulf %226, %230 : vector<17x17xf32>
    %232 = arith.truncf %231 : vector<17x17xf32> to vector<17x17xbf16>
    %cst_122 = arith.constant dense<0.000000e+00> : vector<17x32xf32>
    %233 = tpu.matmul %232, %220, %cst_122 {dimension_numbers = #tpu.dot_dimension_numbers<[1], [0], [0], [1], [0, 0, 1, 1], [], []>} : vector<17x17xbf16>, vector<17x32xbf16>, vector<17x32xf32> -> vector<17x32xf32>
    %c34_123 = arith.constant 34 : index
    %c32_124 = arith.constant 32 : index
    %234 = vector.load %arg20[%c34_123, %c32_124] : memref<136x128xf32, #tpu.memory_space<vmem>>, vector<17x32xf32>
    tpu.vector_store %arg20[%c34_123, %c32_124], %233 {strides = array<i32>} : memref<136x128xf32, #tpu.memory_space<vmem>>, vector<17x32xf32>,
    %c34_125 = arith.constant 34 : index
    %c64_126 = arith.constant 64 : index
    %235 = vector.load %arg19[%c34_125, %c64_126] : memref<136x384xf32, #tpu.memory_space<vmem>>, vector<17x32xf32>
    %236 = arith.truncf %235 : vector<17x32xf32> to vector<17x32xbf16>
    %c34_127 = arith.constant 34 : index
    %c192_128 = arith.constant 192 : index
    %237 = vector.load %arg19[%c34_127, %c192_128] : memref<136x384xf32, #tpu.memory_space<vmem>>, vector<17x32xf32>
    %238 = arith.truncf %237 : vector<17x32xf32> to vector<17x32xbf16>
    %c34_129 = arith.constant 34 : index
    %c320_130 = arith.constant 320 : index
    %239 = vector.load %arg19[%c34_129, %c320_130] : memref<136x384xf32, #tpu.memory_space<vmem>>, vector<17x32xf32>
    %240 = arith.truncf %239 : vector<17x32xf32> to vector<17x32xbf16>
    %cst_131 = arith.constant dense<0.000000e+00> : vector<17x17xf32>
    %241 = tpu.matmul %236, %238, %cst_131 {dimension_numbers = #tpu.dot_dimension_numbers<[1], [1], [0], [0], [0, 0, 1, 0], [], []>} : vector<17x32xbf16>, vector<17x32xbf16>, vector<17x17xf32> -> vector<17x17xf32>
    %cst_132 = arith.constant dense<0xFF800000> : vector<17xf32>
    %242 = vector.multi_reduction <maximumf>, %241, %cst_132 [1] : vector<17x17xf32> to vector<17xf32>
    %243 = vector.shape_cast %242 : vector<17xf32> to vector<17x1xf32>
    %244 = vector.broadcast %243 : vector<17x1xf32> to vector<17x17xf32>
    %245 = arith.subf %241, %244 : vector<17x17xf32>
    %246 = math.exp %245 : vector<17x17xf32>
    %cst_133 = arith.constant dense<0.000000e+00> : vector<17xf32>
    %247 = vector.multi_reduction <add>, %246, %cst_133 [1] : vector<17x17xf32> to vector<17xf32>
    %248 = vector.shape_cast %247 : vector<17xf32> to vector<17x1xf32>
    %249 = tpu.reciprocal %248 {approx = true} : vector<17x1xf32> -> vector<17x1xf32>
    %250 = vector.broadcast %249 : vector<17x1xf32> to vector<17x17xf32>
    %251 = arith.mulf %246, %250 : vector<17x17xf32>
    %252 = arith.truncf %251 : vector<17x17xf32> to vector<17x17xbf16>
    %cst_134 = arith.constant dense<0.000000e+00> : vector<17x32xf32>
    %253 = tpu.matmul %252, %240, %cst_134 {dimension_numbers = #tpu.dot_dimension_numbers<[1], [0], [0], [1], [0, 0, 1, 1], [], []>} : vector<17x17xbf16>, vector<17x32xbf16>, vector<17x32xf32> -> vector<17x32xf32>
    %c34_135 = arith.constant 34 : index
    %c64_136 = arith.constant 64 : index
    %254 = vector.load %arg20[%c34_135, %c64_136] : memref<136x128xf32, #tpu.memory_space<vmem>>, vector<17x32xf32>
    tpu.vector_store %arg20[%c34_135, %c64_136], %253 {strides = array<i32>} : memref<136x128xf32, #tpu.memory_space<vmem>>, vector<17x32xf32>,
    %c34_137 = arith.constant 34 : index
    %c96_138 = arith.constant 96 : index
    %255 = vector.load %arg19[%c34_137, %c96_138] : memref<136x384xf32, #tpu.memory_space<vmem>>, vector<17x32xf32>
    %256 = arith.truncf %255 : vector<17x32xf32> to vector<17x32xbf16>
    %c34_139 = arith.constant 34 : index
    %c224_140 = arith.constant 224 : index
    %257 = vector.load %arg19[%c34_139, %c224_140] : memref<136x384xf32, #tpu.memory_space<vmem>>, vector<17x32xf32>
    %258 = arith.truncf %257 : vector<17x32xf32> to vector<17x32xbf16>
    %c34_141 = arith.constant 34 : index
    %c352_142 = arith.constant 352 : index
    %259 = vector.load %arg19[%c34_141, %c352_142] : memref<136x384xf32, #tpu.memory_space<vmem>>, vector<17x32xf32>
    %260 = arith.truncf %259 : vector<17x32xf32> to vector<17x32xbf16>
    %cst_143 = arith.constant dense<0.000000e+00> : vector<17x17xf32>
    %261 = tpu.matmul %256, %258, %cst_143 {dimension_numbers = #tpu.dot_dimension_numbers<[1], [1], [0], [0], [0, 0, 1, 0], [], []>} : vector<17x32xbf16>, vector<17x32xbf16>, vector<17x17xf32> -> vector<17x17xf32>
    %cst_144 = arith.constant dense<0xFF800000> : vector<17xf32>
    %262 = vector.multi_reduction <maximumf>, %261, %cst_144 [1] : vector<17x17xf32> to vector<17xf32>
    %263 = vector.shape_cast %262 : vector<17xf32> to vector<17x1xf32>
    %264 = vector.broadcast %263 : vector<17x1xf32> to vector<17x17xf32>
    %265 = arith.subf %261, %264 : vector<17x17xf32>
    %266 = math.exp %265 : vector<17x17xf32>
    %cst_145 = arith.constant dense<0.000000e+00> : vector<17xf32>
    %267 = vector.multi_reduction <add>, %266, %cst_145 [1] : vector<17x17xf32> to vector<17xf32>
    %268 = vector.shape_cast %267 : vector<17xf32> to vector<17x1xf32>
    %269 = tpu.reciprocal %268 {approx = true} : vector<17x1xf32> -> vector<17x1xf32>
    %270 = vector.broadcast %269 : vector<17x1xf32> to vector<17x17xf32>
    %271 = arith.mulf %266, %270 : vector<17x17xf32>
    %272 = arith.truncf %271 : vector<17x17xf32> to vector<17x17xbf16>
    %cst_146 = arith.constant dense<0.000000e+00> : vector<17x32xf32>
    %273 = tpu.matmul %272, %260, %cst_146 {dimension_numbers = #tpu.dot_dimension_numbers<[1], [0], [0], [1], [0, 0, 1, 1], [], []>} : vector<17x17xbf16>, vector<17x32xbf16>, vector<17x32xf32> -> vector<17x32xf32>
    %c34_147 = arith.constant 34 : index
    %c96_148 = arith.constant 96 : index
    %274 = vector.load %arg20[%c34_147, %c96_148] : memref<136x128xf32, #tpu.memory_space<vmem>>, vector<17x32xf32>
    tpu.vector_store %arg20[%c34_147, %c96_148], %273 {strides = array<i32>} : memref<136x128xf32, #tpu.memory_space<vmem>>, vector<17x32xf32>,
    %c51 = arith.constant 51 : index
    %c0_149 = arith.constant 0 : index
    %275 = vector.load %arg19[%c51, %c0_149] : memref<136x384xf32, #tpu.memory_space<vmem>>, vector<17x32xf32>
    %276 = arith.truncf %275 : vector<17x32xf32> to vector<17x32xbf16>
    %c51_150 = arith.constant 51 : index
    %c128_151 = arith.constant 128 : index
    %277 = vector.load %arg19[%c51_150, %c128_151] : memref<136x384xf32, #tpu.memory_space<vmem>>, vector<17x32xf32>
    %278 = arith.truncf %277 : vector<17x32xf32> to vector<17x32xbf16>
    %c51_152 = arith.constant 51 : index
    %c256_153 = arith.constant 256 : index
    %279 = vector.load %arg19[%c51_152, %c256_153] : memref<136x384xf32, #tpu.memory_space<vmem>>, vector<17x32xf32>
    %280 = arith.truncf %279 : vector<17x32xf32> to vector<17x32xbf16>
    %cst_154 = arith.constant dense<0.000000e+00> : vector<17x17xf32>
    %281 = tpu.matmul %276, %278, %cst_154 {dimension_numbers = #tpu.dot_dimension_numbers<[1], [1], [0], [0], [0, 0, 1, 0], [], []>} : vector<17x32xbf16>, vector<17x32xbf16>, vector<17x17xf32> -> vector<17x17xf32>
    %cst_155 = arith.constant dense<0xFF800000> : vector<17xf32>
    %282 = vector.multi_reduction <maximumf>, %281, %cst_155 [1] : vector<17x17xf32> to vector<17xf32>
    %283 = vector.shape_cast %282 : vector<17xf32> to vector<17x1xf32>
    %284 = vector.broadcast %283 : vector<17x1xf32> to vector<17x17xf32>
    %285 = arith.subf %281, %284 : vector<17x17xf32>
    %286 = math.exp %285 : vector<17x17xf32>
    %cst_156 = arith.constant dense<0.000000e+00> : vector<17xf32>
    %287 = vector.multi_reduction <add>, %286, %cst_156 [1] : vector<17x17xf32> to vector<17xf32>
    %288 = vector.shape_cast %287 : vector<17xf32> to vector<17x1xf32>
    %289 = tpu.reciprocal %288 {approx = true} : vector<17x1xf32> -> vector<17x1xf32>
    %290 = vector.broadcast %289 : vector<17x1xf32> to vector<17x17xf32>
    %291 = arith.mulf %286, %290 : vector<17x17xf32>
    %292 = arith.truncf %291 : vector<17x17xf32> to vector<17x17xbf16>
    %cst_157 = arith.constant dense<0.000000e+00> : vector<17x32xf32>
    %293 = tpu.matmul %292, %280, %cst_157 {dimension_numbers = #tpu.dot_dimension_numbers<[1], [0], [0], [1], [0, 0, 1, 1], [], []>} : vector<17x17xbf16>, vector<17x32xbf16>, vector<17x32xf32> -> vector<17x32xf32>
    %c51_158 = arith.constant 51 : index
    %c0_159 = arith.constant 0 : index
    %294 = vector.load %arg20[%c51_158, %c0_159] : memref<136x128xf32, #tpu.memory_space<vmem>>, vector<17x32xf32>
    tpu.vector_store %arg20[%c51_158, %c0_159], %293 {strides = array<i32>} : memref<136x128xf32, #tpu.memory_space<vmem>>, vector<17x32xf32>,
    %c51_160 = arith.constant 51 : index
    %c32_161 = arith.constant 32 : index
    %295 = vector.load %arg19[%c51_160, %c32_161] : memref<136x384xf32, #tpu.memory_space<vmem>>, vector<17x32xf32>
    %296 = arith.truncf %295 : vector<17x32xf32> to vector<17x32xbf16>
    %c51_162 = arith.constant 51 : index
    %c160_163 = arith.constant 160 : index
    %297 = vector.load %arg19[%c51_162, %c160_163] : memref<136x384xf32, #tpu.memory_space<vmem>>, vector<17x32xf32>
    %298 = arith.truncf %297 : vector<17x32xf32> to vector<17x32xbf16>
    %c51_164 = arith.constant 51 : index
    %c288_165 = arith.constant 288 : index
    %299 = vector.load %arg19[%c51_164, %c288_165] : memref<136x384xf32, #tpu.memory_space<vmem>>, vector<17x32xf32>
    %300 = arith.truncf %299 : vector<17x32xf32> to vector<17x32xbf16>
    %cst_166 = arith.constant dense<0.000000e+00> : vector<17x17xf32>
    %301 = tpu.matmul %296, %298, %cst_166 {dimension_numbers = #tpu.dot_dimension_numbers<[1], [1], [0], [0], [0, 0, 1, 0], [], []>} : vector<17x32xbf16>, vector<17x32xbf16>, vector<17x17xf32> -> vector<17x17xf32>
    %cst_167 = arith.constant dense<0xFF800000> : vector<17xf32>
    %302 = vector.multi_reduction <maximumf>, %301, %cst_167 [1] : vector<17x17xf32> to vector<17xf32>
    %303 = vector.shape_cast %302 : vector<17xf32> to vector<17x1xf32>
    %304 = vector.broadcast %303 : vector<17x1xf32> to vector<17x17xf32>
    %305 = arith.subf %301, %304 : vector<17x17xf32>
    %306 = math.exp %305 : vector<17x17xf32>
    %cst_168 = arith.constant dense<0.000000e+00> : vector<17xf32>
    %307 = vector.multi_reduction <add>, %306, %cst_168 [1] : vector<17x17xf32> to vector<17xf32>
    %308 = vector.shape_cast %307 : vector<17xf32> to vector<17x1xf32>
    %309 = tpu.reciprocal %308 {approx = true} : vector<17x1xf32> -> vector<17x1xf32>
    %310 = vector.broadcast %309 : vector<17x1xf32> to vector<17x17xf32>
    %311 = arith.mulf %306, %310 : vector<17x17xf32>
    %312 = arith.truncf %311 : vector<17x17xf32> to vector<17x17xbf16>
    %cst_169 = arith.constant dense<0.000000e+00> : vector<17x32xf32>
    %313 = tpu.matmul %312, %300, %cst_169 {dimension_numbers = #tpu.dot_dimension_numbers<[1], [0], [0], [1], [0, 0, 1, 1], [], []>} : vector<17x17xbf16>, vector<17x32xbf16>, vector<17x32xf32> -> vector<17x32xf32>
    %c51_170 = arith.constant 51 : index
    %c32_171 = arith.constant 32 : index
    %314 = vector.load %arg20[%c51_170, %c32_171] : memref<136x128xf32, #tpu.memory_space<vmem>>, vector<17x32xf32>
    tpu.vector_store %arg20[%c51_170, %c32_171], %313 {strides = array<i32>} : memref<136x128xf32, #tpu.memory_space<vmem>>, vector<17x32xf32>,
    %c51_172 = arith.constant 51 : index
    %c64_173 = arith.constant 64 : index
    %315 = vector.load %arg19[%c51_172, %c64_173] : memref<136x384xf32, #tpu.memory_space<vmem>>, vector<17x32xf32>
    %316 = arith.truncf %315 : vector<17x32xf32> to vector<17x32xbf16>
    %c51_174 = arith.constant 51 : index
    %c192_175 = arith.constant 192 : index
    %317 = vector.load %arg19[%c51_174, %c192_175] : memref<136x384xf32, #tpu.memory_space<vmem>>, vector<17x32xf32>
    %318 = arith.truncf %317 : vector<17x32xf32> to vector<17x32xbf16>
    %c51_176 = arith.constant 51 : index
    %c320_177 = arith.constant 320 : index
    %319 = vector.load %arg19[%c51_176, %c320_177] : memref<136x384xf32, #tpu.memory_space<vmem>>, vector<17x32xf32>
    %320 = arith.truncf %319 : vector<17x32xf32> to vector<17x32xbf16>
    %cst_178 = arith.constant dense<0.000000e+00> : vector<17x17xf32>
    %321 = tpu.matmul %316, %318, %cst_178 {dimension_numbers = #tpu.dot_dimension_numbers<[1], [1], [0], [0], [0, 0, 1, 0], [], []>} : vector<17x32xbf16>, vector<17x32xbf16>, vector<17x17xf32> -> vector<17x17xf32>
    %cst_179 = arith.constant dense<0xFF800000> : vector<17xf32>
    %322 = vector.multi_reduction <maximumf>, %321, %cst_179 [1] : vector<17x17xf32> to vector<17xf32>
    %323 = vector.shape_cast %322 : vector<17xf32> to vector<17x1xf32>
    %324 = vector.broadcast %323 : vector<17x1xf32> to vector<17x17xf32>
    %325 = arith.subf %321, %324 : vector<17x17xf32>
    %326 = math.exp %325 : vector<17x17xf32>
    %cst_180 = arith.constant dense<0.000000e+00> : vector<17xf32>
    %327 = vector.multi_reduction <add>, %326, %cst_180 [1] : vector<17x17xf32> to vector<17xf32>
    %328 = vector.shape_cast %327 : vector<17xf32> to vector<17x1xf32>
    %329 = tpu.reciprocal %328 {approx = true} : vector<17x1xf32> -> vector<17x1xf32>
    %330 = vector.broadcast %329 : vector<17x1xf32> to vector<17x17xf32>
    %331 = arith.mulf %326, %330 : vector<17x17xf32>
    %332 = arith.truncf %331 : vector<17x17xf32> to vector<17x17xbf16>
    %cst_181 = arith.constant dense<0.000000e+00> : vector<17x32xf32>
    %333 = tpu.matmul %332, %320, %cst_181 {dimension_numbers = #tpu.dot_dimension_numbers<[1], [0], [0], [1], [0, 0, 1, 1], [], []>} : vector<17x17xbf16>, vector<17x32xbf16>, vector<17x32xf32> -> vector<17x32xf32>
    %c51_182 = arith.constant 51 : index
    %c64_183 = arith.constant 64 : index
    %334 = vector.load %arg20[%c51_182, %c64_183] : memref<136x128xf32, #tpu.memory_space<vmem>>, vector<17x32xf32>
    tpu.vector_store %arg20[%c51_182, %c64_183], %333 {strides = array<i32>} : memref<136x128xf32, #tpu.memory_space<vmem>>, vector<17x32xf32>,
    %c51_184 = arith.constant 51 : index
    %c96_185 = arith.constant 96 : index
    %335 = vector.load %arg19[%c51_184, %c96_185] : memref<136x384xf32, #tpu.memory_space<vmem>>, vector<17x32xf32>
    %336 = arith.truncf %335 : vector<17x32xf32> to vector<17x32xbf16>
    %c51_186 = arith.constant 51 : index
    %c224_187 = arith.constant 224 : index
    %337 = vector.load %arg19[%c51_186, %c224_187] : memref<136x384xf32, #tpu.memory_space<vmem>>, vector<17x32xf32>
    %338 = arith.truncf %337 : vector<17x32xf32> to vector<17x32xbf16>
    %c51_188 = arith.constant 51 : index
    %c352_189 = arith.constant 352 : index
    %339 = vector.load %arg19[%c51_188, %c352_189] : memref<136x384xf32, #tpu.memory_space<vmem>>, vector<17x32xf32>
    %340 = arith.truncf %339 : vector<17x32xf32> to vector<17x32xbf16>
    %cst_190 = arith.constant dense<0.000000e+00> : vector<17x17xf32>
    %341 = tpu.matmul %336, %338, %cst_190 {dimension_numbers = #tpu.dot_dimension_numbers<[1], [1], [0], [0], [0, 0, 1, 0], [], []>} : vector<17x32xbf16>, vector<17x32xbf16>, vector<17x17xf32> -> vector<17x17xf32>
    %cst_191 = arith.constant dense<0xFF800000> : vector<17xf32>
    %342 = vector.multi_reduction <maximumf>, %341, %cst_191 [1] : vector<17x17xf32> to vector<17xf32>
    %343 = vector.shape_cast %342 : vector<17xf32> to vector<17x1xf32>
    %344 = vector.broadcast %343 : vector<17x1xf32> to vector<17x17xf32>
    %345 = arith.subf %341, %344 : vector<17x17xf32>
    %346 = math.exp %345 : vector<17x17xf32>
    %cst_192 = arith.constant dense<0.000000e+00> : vector<17xf32>
    %347 = vector.multi_reduction <add>, %346, %cst_192 [1] : vector<17x17xf32> to vector<17xf32>
    %348 = vector.shape_cast %347 : vector<17xf32> to vector<17x1xf32>
    %349 = tpu.reciprocal %348 {approx = true} : vector<17x1xf32> -> vector<17x1xf32>
    %350 = vector.broadcast %349 : vector<17x1xf32> to vector<17x17xf32>
    %351 = arith.mulf %346, %350 : vector<17x17xf32>
    %352 = arith.truncf %351 : vector<17x17xf32> to vector<17x17xbf16>
    %cst_193 = arith.constant dense<0.000000e+00> : vector<17x32xf32>
    %353 = tpu.matmul %352, %340, %cst_193 {dimension_numbers = #tpu.dot_dimension_numbers<[1], [0], [0], [1], [0, 0, 1, 1], [], []>} : vector<17x17xbf16>, vector<17x32xbf16>, vector<17x32xf32> -> vector<17x32xf32>
    %c51_194 = arith.constant 51 : index
    %c96_195 = arith.constant 96 : index
    %354 = vector.load %arg20[%c51_194, %c96_195] : memref<136x128xf32, #tpu.memory_space<vmem>>, vector<17x32xf32>
    tpu.vector_store %arg20[%c51_194, %c96_195], %353 {strides = array<i32>} : memref<136x128xf32, #tpu.memory_space<vmem>>, vector<17x32xf32>,
    %c68 = arith.constant 68 : index
    %c0_196 = arith.constant 0 : index
    %355 = vector.load %arg19[%c68, %c0_196] : memref<136x384xf32, #tpu.memory_space<vmem>>, vector<17x32xf32>
    %356 = arith.truncf %355 : vector<17x32xf32> to vector<17x32xbf16>
    %c68_197 = arith.constant 68 : index
    %c128_198 = arith.constant 128 : index
    %357 = vector.load %arg19[%c68_197, %c128_198] : memref<136x384xf32, #tpu.memory_space<vmem>>, vector<17x32xf32>
    %358 = arith.truncf %357 : vector<17x32xf32> to vector<17x32xbf16>
    %c68_199 = arith.constant 68 : index
    %c256_200 = arith.constant 256 : index
    %359 = vector.load %arg19[%c68_199, %c256_200] : memref<136x384xf32, #tpu.memory_space<vmem>>, vector<17x32xf32>
    %360 = arith.truncf %359 : vector<17x32xf32> to vector<17x32xbf16>
    %cst_201 = arith.constant dense<0.000000e+00> : vector<17x17xf32>
    %361 = tpu.matmul %356, %358, %cst_201 {dimension_numbers = #tpu.dot_dimension_numbers<[1], [1], [0], [0], [0, 0, 1, 0], [], []>} : vector<17x32xbf16>, vector<17x32xbf16>, vector<17x17xf32> -> vector<17x17xf32>
    %cst_202 = arith.constant dense<0xFF800000> : vector<17xf32>
    %362 = vector.multi_reduction <maximumf>, %361, %cst_202 [1] : vector<17x17xf32> to vector<17xf32>
    %363 = vector.shape_cast %362 : vector<17xf32> to vector<17x1xf32>
    %364 = vector.broadcast %363 : vector<17x1xf32> to vector<17x17xf32>
    %365 = arith.subf %361, %364 : vector<17x17xf32>
    %366 = math.exp %365 : vector<17x17xf32>
    %cst_203 = arith.constant dense<0.000000e+00> : vector<17xf32>
    %367 = vector.multi_reduction <add>, %366, %cst_203 [1] : vector<17x17xf32> to vector<17xf32>
    %368 = vector.shape_cast %367 : vector<17xf32> to vector<17x1xf32>
    %369 = tpu.reciprocal %368 {approx = true} : vector<17x1xf32> -> vector<17x1xf32>
    %370 = vector.broadcast %369 : vector<17x1xf32> to vector<17x17xf32>
    %371 = arith.mulf %366, %370 : vector<17x17xf32>
    %372 = arith.truncf %371 : vector<17x17xf32> to vector<17x17xbf16>
    %cst_204 = arith.constant dense<0.000000e+00> : vector<17x32xf32>
    %373 = tpu.matmul %372, %360, %cst_204 {dimension_numbers = #tpu.dot_dimension_numbers<[1], [0], [0], [1], [0, 0, 1, 1], [], []>} : vector<17x17xbf16>, vector<17x32xbf16>, vector<17x32xf32> -> vector<17x32xf32>
    %c68_205 = arith.constant 68 : index
    %c0_206 = arith.constant 0 : index
    %374 = vector.load %arg20[%c68_205, %c0_206] : memref<136x128xf32, #tpu.memory_space<vmem>>, vector<17x32xf32>
    tpu.vector_store %arg20[%c68_205, %c0_206], %373 {strides = array<i32>} : memref<136x128xf32, #tpu.memory_space<vmem>>, vector<17x32xf32>,
    %c68_207 = arith.constant 68 : index
    %c32_208 = arith.constant 32 : index
    %375 = vector.load %arg19[%c68_207, %c32_208] : memref<136x384xf32, #tpu.memory_space<vmem>>, vector<17x32xf32>
    %376 = arith.truncf %375 : vector<17x32xf32> to vector<17x32xbf16>
    %c68_209 = arith.constant 68 : index
    %c160_210 = arith.constant 160 : index
    %377 = vector.load %arg19[%c68_209, %c160_210] : memref<136x384xf32, #tpu.memory_space<vmem>>, vector<17x32xf32>
    %378 = arith.truncf %377 : vector<17x32xf32> to vector<17x32xbf16>
    %c68_211 = arith.constant 68 : index
    %c288_212 = arith.constant 288 : index
    %379 = vector.load %arg19[%c68_211, %c288_212] : memref<136x384xf32, #tpu.memory_space<vmem>>, vector<17x32xf32>
    %380 = arith.truncf %379 : vector<17x32xf32> to vector<17x32xbf16>
    %cst_213 = arith.constant dense<0.000000e+00> : vector<17x17xf32>
    %381 = tpu.matmul %376, %378, %cst_213 {dimension_numbers = #tpu.dot_dimension_numbers<[1], [1], [0], [0], [0, 0, 1, 0], [], []>} : vector<17x32xbf16>, vector<17x32xbf16>, vector<17x17xf32> -> vector<17x17xf32>
    %cst_214 = arith.constant dense<0xFF800000> : vector<17xf32>
    %382 = vector.multi_reduction <maximumf>, %381, %cst_214 [1] : vector<17x17xf32> to vector<17xf32>
    %383 = vector.shape_cast %382 : vector<17xf32> to vector<17x1xf32>
    %384 = vector.broadcast %383 : vector<17x1xf32> to vector<17x17xf32>
    %385 = arith.subf %381, %384 : vector<17x17xf32>
    %386 = math.exp %385 : vector<17x17xf32>
    %cst_215 = arith.constant dense<0.000000e+00> : vector<17xf32>
    %387 = vector.multi_reduction <add>, %386, %cst_215 [1] : vector<17x17xf32> to vector<17xf32>
    %388 = vector.shape_cast %387 : vector<17xf32> to vector<17x1xf32>
    %389 = tpu.reciprocal %388 {approx = true} : vector<17x1xf32> -> vector<17x1xf32>
    %390 = vector.broadcast %389 : vector<17x1xf32> to vector<17x17xf32>
    %391 = arith.mulf %386, %390 : vector<17x17xf32>
    %392 = arith.truncf %391 : vector<17x17xf32> to vector<17x17xbf16>
    %cst_216 = arith.constant dense<0.000000e+00> : vector<17x32xf32>
    %393 = tpu.matmul %392, %380, %cst_216 {dimension_numbers = #tpu.dot_dimension_numbers<[1], [0], [0], [1], [0, 0, 1, 1], [], []>} : vector<17x17xbf16>, vector<17x32xbf16>, vector<17x32xf32> -> vector<17x32xf32>
    %c68_217 = arith.constant 68 : index
    %c32_218 = arith.constant 32 : index
    %394 = vector.load %arg20[%c68_217, %c32_218] : memref<136x128xf32, #tpu.memory_space<vmem>>, vector<17x32xf32>
    tpu.vector_store %arg20[%c68_217, %c32_218], %393 {strides = array<i32>} : memref<136x128xf32, #tpu.memory_space<vmem>>, vector<17x32xf32>,
    %c68_219 = arith.constant 68 : index
    %c64_220 = arith.constant 64 : index
    %395 = vector.load %arg19[%c68_219, %c64_220] : memref<136x384xf32, #tpu.memory_space<vmem>>, vector<17x32xf32>
    %396 = arith.truncf %395 : vector<17x32xf32> to vector<17x32xbf16>
    %c68_221 = arith.constant 68 : index
    %c192_222 = arith.constant 192 : index
    %397 = vector.load %arg19[%c68_221, %c192_222] : memref<136x384xf32, #tpu.memory_space<vmem>>, vector<17x32xf32>
    %398 = arith.truncf %397 : vector<17x32xf32> to vector<17x32xbf16>
    %c68_223 = arith.constant 68 : index
    %c320_224 = arith.constant 320 : index
    %399 = vector.load %arg19[%c68_223, %c320_224] : memref<136x384xf32, #tpu.memory_space<vmem>>, vector<17x32xf32>
    %400 = arith.truncf %399 : vector<17x32xf32> to vector<17x32xbf16>
    %cst_225 = arith.constant dense<0.000000e+00> : vector<17x17xf32>
    %401 = tpu.matmul %396, %398, %cst_225 {dimension_numbers = #tpu.dot_dimension_numbers<[1], [1], [0], [0], [0, 0, 1, 0], [], []>} : vector<17x32xbf16>, vector<17x32xbf16>, vector<17x17xf32> -> vector<17x17xf32>
    %cst_226 = arith.constant dense<0xFF800000> : vector<17xf32>
    %402 = vector.multi_reduction <maximumf>, %401, %cst_226 [1] : vector<17x17xf32> to vector<17xf32>
    %403 = vector.shape_cast %402 : vector<17xf32> to vector<17x1xf32>
    %404 = vector.broadcast %403 : vector<17x1xf32> to vector<17x17xf32>
    %405 = arith.subf %401, %404 : vector<17x17xf32>
    %406 = math.exp %405 : vector<17x17xf32>
    %cst_227 = arith.constant dense<0.000000e+00> : vector<17xf32>
    %407 = vector.multi_reduction <add>, %406, %cst_227 [1] : vector<17x17xf32> to vector<17xf32>
    %408 = vector.shape_cast %407 : vector<17xf32> to vector<17x1xf32>
    %409 = tpu.reciprocal %408 {approx = true} : vector<17x1xf32> -> vector<17x1xf32>
    %410 = vector.broadcast %409 : vector<17x1xf32> to vector<17x17xf32>
    %411 = arith.mulf %406, %410 : vector<17x17xf32>
    %412 = arith.truncf %411 : vector<17x17xf32> to vector<17x17xbf16>
    %cst_228 = arith.constant dense<0.000000e+00> : vector<17x32xf32>
    %413 = tpu.matmul %412, %400, %cst_228 {dimension_numbers = #tpu.dot_dimension_numbers<[1], [0], [0], [1], [0, 0, 1, 1], [], []>} : vector<17x17xbf16>, vector<17x32xbf16>, vector<17x32xf32> -> vector<17x32xf32>
    %c68_229 = arith.constant 68 : index
    %c64_230 = arith.constant 64 : index
    %414 = vector.load %arg20[%c68_229, %c64_230] : memref<136x128xf32, #tpu.memory_space<vmem>>, vector<17x32xf32>
    tpu.vector_store %arg20[%c68_229, %c64_230], %413 {strides = array<i32>} : memref<136x128xf32, #tpu.memory_space<vmem>>, vector<17x32xf32>,
    %c68_231 = arith.constant 68 : index
    %c96_232 = arith.constant 96 : index
    %415 = vector.load %arg19[%c68_231, %c96_232] : memref<136x384xf32, #tpu.memory_space<vmem>>, vector<17x32xf32>
    %416 = arith.truncf %415 : vector<17x32xf32> to vector<17x32xbf16>
    %c68_233 = arith.constant 68 : index
    %c224_234 = arith.constant 224 : index
    %417 = vector.load %arg19[%c68_233, %c224_234] : memref<136x384xf32, #tpu.memory_space<vmem>>, vector<17x32xf32>
    %418 = arith.truncf %417 : vector<17x32xf32> to vector<17x32xbf16>
    %c68_235 = arith.constant 68 : index
    %c352_236 = arith.constant 352 : index
    %419 = vector.load %arg19[%c68_235, %c352_236] : memref<136x384xf32, #tpu.memory_space<vmem>>, vector<17x32xf32>
    %420 = arith.truncf %419 : vector<17x32xf32> to vector<17x32xbf16>
    %cst_237 = arith.constant dense<0.000000e+00> : vector<17x17xf32>
    %421 = tpu.matmul %416, %418, %cst_237 {dimension_numbers = #tpu.dot_dimension_numbers<[1], [1], [0], [0], [0, 0, 1, 0], [], []>} : vector<17x32xbf16>, vector<17x32xbf16>, vector<17x17xf32> -> vector<17x17xf32>
    %cst_238 = arith.constant dense<0xFF800000> : vector<17xf32>
    %422 = vector.multi_reduction <maximumf>, %421, %cst_238 [1] : vector<17x17xf32> to vector<17xf32>
    %423 = vector.shape_cast %422 : vector<17xf32> to vector<17x1xf32>
    %424 = vector.broadcast %423 : vector<17x1xf32> to vector<17x17xf32>
    %425 = arith.subf %421, %424 : vector<17x17xf32>
    %426 = math.exp %425 : vector<17x17xf32>
    %cst_239 = arith.constant dense<0.000000e+00> : vector<17xf32>
    %427 = vector.multi_reduction <add>, %426, %cst_239 [1] : vector<17x17xf32> to vector<17xf32>
    %428 = vector.shape_cast %427 : vector<17xf32> to vector<17x1xf32>
    %429 = tpu.reciprocal %428 {approx = true} : vector<17x1xf32> -> vector<17x1xf32>
    %430 = vector.broadcast %429 : vector<17x1xf32> to vector<17x17xf32>
    %431 = arith.mulf %426, %430 : vector<17x17xf32>
    %432 = arith.truncf %431 : vector<17x17xf32> to vector<17x17xbf16>
    %cst_240 = arith.constant dense<0.000000e+00> : vector<17x32xf32>
    %433 = tpu.matmul %432, %420, %cst_240 {dimension_numbers = #tpu.dot_dimension_numbers<[1], [0], [0], [1], [0, 0, 1, 1], [], []>} : vector<17x17xbf16>, vector<17x32xbf16>, vector<17x32xf32> -> vector<17x32xf32>
    %c68_241 = arith.constant 68 : index
    %c96_242 = arith.constant 96 : index
    %434 = vector.load %arg20[%c68_241, %c96_242] : memref<136x128xf32, #tpu.memory_space<vmem>>, vector<17x32xf32>
    tpu.vector_store %arg20[%c68_241, %c96_242], %433 {strides = array<i32>} : memref<136x128xf32, #tpu.memory_space<vmem>>, vector<17x32xf32>,
    %c85 = arith.constant 85 : index
    %c0_243 = arith.constant 0 : index
    %435 = vector.load %arg19[%c85, %c0_243] : memref<136x384xf32, #tpu.memory_space<vmem>>, vector<17x32xf32>
    %436 = arith.truncf %435 : vector<17x32xf32> to vector<17x32xbf16>
    %c85_244 = arith.constant 85 : index
    %c128_245 = arith.constant 128 : index
    %437 = vector.load %arg19[%c85_244, %c128_245] : memref<136x384xf32, #tpu.memory_space<vmem>>, vector<17x32xf32>
    %438 = arith.truncf %437 : vector<17x32xf32> to vector<17x32xbf16>
    %c85_246 = arith.constant 85 : index
    %c256_247 = arith.constant 256 : index
    %439 = vector.load %arg19[%c85_246, %c256_247] : memref<136x384xf32, #tpu.memory_space<vmem>>, vector<17x32xf32>
    %440 = arith.truncf %439 : vector<17x32xf32> to vector<17x32xbf16>
    %cst_248 = arith.constant dense<0.000000e+00> : vector<17x17xf32>
    %441 = tpu.matmul %436, %438, %cst_248 {dimension_numbers = #tpu.dot_dimension_numbers<[1], [1], [0], [0], [0, 0, 1, 0], [], []>} : vector<17x32xbf16>, vector<17x32xbf16>, vector<17x17xf32> -> vector<17x17xf32>
    %cst_249 = arith.constant dense<0xFF800000> : vector<17xf32>
    %442 = vector.multi_reduction <maximumf>, %441, %cst_249 [1] : vector<17x17xf32> to vector<17xf32>
    %443 = vector.shape_cast %442 : vector<17xf32> to vector<17x1xf32>
    %444 = vector.broadcast %443 : vector<17x1xf32> to vector<17x17xf32>
    %445 = arith.subf %441, %444 : vector<17x17xf32>
    %446 = math.exp %445 : vector<17x17xf32>
    %cst_250 = arith.constant dense<0.000000e+00> : vector<17xf32>
    %447 = vector.multi_reduction <add>, %446, %cst_250 [1] : vector<17x17xf32> to vector<17xf32>
    %448 = vector.shape_cast %447 : vector<17xf32> to vector<17x1xf32>
    %449 = tpu.reciprocal %448 {approx = true} : vector<17x1xf32> -> vector<17x1xf32>
    %450 = vector.broadcast %449 : vector<17x1xf32> to vector<17x17xf32>
    %451 = arith.mulf %446, %450 : vector<17x17xf32>
    %452 = arith.truncf %451 : vector<17x17xf32> to vector<17x17xbf16>
    %cst_251 = arith.constant dense<0.000000e+00> : vector<17x32xf32>
    %453 = tpu.matmul %452, %440, %cst_251 {dimension_numbers = #tpu.dot_dimension_numbers<[1], [0], [0], [1], [0, 0, 1, 1], [], []>} : vector<17x17xbf16>, vector<17x32xbf16>, vector<17x32xf32> -> vector<17x32xf32>
    %c85_252 = arith.constant 85 : index
    %c0_253 = arith.constant 0 : index
    %454 = vector.load %arg20[%c85_252, %c0_253] : memref<136x128xf32, #tpu.memory_space<vmem>>, vector<17x32xf32>
    tpu.vector_store %arg20[%c85_252, %c0_253], %453 {strides = array<i32>} : memref<136x128xf32, #tpu.memory_space<vmem>>, vector<17x32xf32>,
    %c85_254 = arith.constant 85 : index
    %c32_255 = arith.constant 32 : index
    %455 = vector.load %arg19[%c85_254, %c32_255] : memref<136x384xf32, #tpu.memory_space<vmem>>, vector<17x32xf32>
    %456 = arith.truncf %455 : vector<17x32xf32> to vector<17x32xbf16>
    %c85_256 = arith.constant 85 : index
    %c160_257 = arith.constant 160 : index
    %457 = vector.load %arg19[%c85_256, %c160_257] : memref<136x384xf32, #tpu.memory_space<vmem>>, vector<17x32xf32>
    %458 = arith.truncf %457 : vector<17x32xf32> to vector<17x32xbf16>
    %c85_258 = arith.constant 85 : index
    %c288_259 = arith.constant 288 : index
    %459 = vector.load %arg19[%c85_258, %c288_259] : memref<136x384xf32, #tpu.memory_space<vmem>>, vector<17x32xf32>
    %460 = arith.truncf %459 : vector<17x32xf32> to vector<17x32xbf16>
    %cst_260 = arith.constant dense<0.000000e+00> : vector<17x17xf32>
    %461 = tpu.matmul %456, %458, %cst_260 {dimension_numbers = #tpu.dot_dimension_numbers<[1], [1], [0], [0], [0, 0, 1, 0], [], []>} : vector<17x32xbf16>, vector<17x32xbf16>, vector<17x17xf32> -> vector<17x17xf32>
    %cst_261 = arith.constant dense<0xFF800000> : vector<17xf32>
    %462 = vector.multi_reduction <maximumf>, %461, %cst_261 [1] : vector<17x17xf32> to vector<17xf32>
    %463 = vector.shape_cast %462 : vector<17xf32> to vector<17x1xf32>
    %464 = vector.broadcast %463 : vector<17x1xf32> to vector<17x17xf32>
    %465 = arith.subf %461, %464 : vector<17x17xf32>
    %466 = math.exp %465 : vector<17x17xf32>
    %cst_262 = arith.constant dense<0.000000e+00> : vector<17xf32>
    %467 = vector.multi_reduction <add>, %466, %cst_262 [1] : vector<17x17xf32> to vector<17xf32>
    %468 = vector.shape_cast %467 : vector<17xf32> to vector<17x1xf32>
    %469 = tpu.reciprocal %468 {approx = true} : vector<17x1xf32> -> vector<17x1xf32>
    %470 = vector.broadcast %469 : vector<17x1xf32> to vector<17x17xf32>
    %471 = arith.mulf %466, %470 : vector<17x17xf32>
    %472 = arith.truncf %471 : vector<17x17xf32> to vector<17x17xbf16>
    %cst_263 = arith.constant dense<0.000000e+00> : vector<17x32xf32>
    %473 = tpu.matmul %472, %460, %cst_263 {dimension_numbers = #tpu.dot_dimension_numbers<[1], [0], [0], [1], [0, 0, 1, 1], [], []>} : vector<17x17xbf16>, vector<17x32xbf16>, vector<17x32xf32> -> vector<17x32xf32>
    %c85_264 = arith.constant 85 : index
    %c32_265 = arith.constant 32 : index
    %474 = vector.load %arg20[%c85_264, %c32_265] : memref<136x128xf32, #tpu.memory_space<vmem>>, vector<17x32xf32>
    tpu.vector_store %arg20[%c85_264, %c32_265], %473 {strides = array<i32>} : memref<136x128xf32, #tpu.memory_space<vmem>>, vector<17x32xf32>,
    %c85_266 = arith.constant 85 : index
    %c64_267 = arith.constant 64 : index
    %475 = vector.load %arg19[%c85_266, %c64_267] : memref<136x384xf32, #tpu.memory_space<vmem>>, vector<17x32xf32>
    %476 = arith.truncf %475 : vector<17x32xf32> to vector<17x32xbf16>
    %c85_268 = arith.constant 85 : index
    %c192_269 = arith.constant 192 : index
    %477 = vector.load %arg19[%c85_268, %c192_269] : memref<136x384xf32, #tpu.memory_space<vmem>>, vector<17x32xf32>
    %478 = arith.truncf %477 : vector<17x32xf32> to vector<17x32xbf16>
    %c85_270 = arith.constant 85 : index
    %c320_271 = arith.constant 320 : index
    %479 = vector.load %arg19[%c85_270, %c320_271] : memref<136x384xf32, #tpu.memory_space<vmem>>, vector<17x32xf32>
    %480 = arith.truncf %479 : vector<17x32xf32> to vector<17x32xbf16>
    %cst_272 = arith.constant dense<0.000000e+00> : vector<17x17xf32>
    %481 = tpu.matmul %476, %478, %cst_272 {dimension_numbers = #tpu.dot_dimension_numbers<[1], [1], [0], [0], [0, 0, 1, 0], [], []>} : vector<17x32xbf16>, vector<17x32xbf16>, vector<17x17xf32> -> vector<17x17xf32>
    %cst_273 = arith.constant dense<0xFF800000> : vector<17xf32>
    %482 = vector.multi_reduction <maximumf>, %481, %cst_273 [1] : vector<17x17xf32> to vector<17xf32>
    %483 = vector.shape_cast %482 : vector<17xf32> to vector<17x1xf32>
    %484 = vector.broadcast %483 : vector<17x1xf32> to vector<17x17xf32>
    %485 = arith.subf %481, %484 : vector<17x17xf32>
    %486 = math.exp %485 : vector<17x17xf32>
    %cst_274 = arith.constant dense<0.000000e+00> : vector<17xf32>
    %487 = vector.multi_reduction <add>, %486, %cst_274 [1] : vector<17x17xf32> to vector<17xf32>
    %488 = vector.shape_cast %487 : vector<17xf32> to vector<17x1xf32>
    %489 = tpu.reciprocal %488 {approx = true} : vector<17x1xf32> -> vector<17x1xf32>
    %490 = vector.broadcast %489 : vector<17x1xf32> to vector<17x17xf32>
    %491 = arith.mulf %486, %490 : vector<17x17xf32>
    %492 = arith.truncf %491 : vector<17x17xf32> to vector<17x17xbf16>
    %cst_275 = arith.constant dense<0.000000e+00> : vector<17x32xf32>
    %493 = tpu.matmul %492, %480, %cst_275 {dimension_numbers = #tpu.dot_dimension_numbers<[1], [0], [0], [1], [0, 0, 1, 1], [], []>} : vector<17x17xbf16>, vector<17x32xbf16>, vector<17x32xf32> -> vector<17x32xf32>
    %c85_276 = arith.constant 85 : index
    %c64_277 = arith.constant 64 : index
    %494 = vector.load %arg20[%c85_276, %c64_277] : memref<136x128xf32, #tpu.memory_space<vmem>>, vector<17x32xf32>
    tpu.vector_store %arg20[%c85_276, %c64_277], %493 {strides = array<i32>} : memref<136x128xf32, #tpu.memory_space<vmem>>, vector<17x32xf32>,
    %c85_278 = arith.constant 85 : index
    %c96_279 = arith.constant 96 : index
    %495 = vector.load %arg19[%c85_278, %c96_279] : memref<136x384xf32, #tpu.memory_space<vmem>>, vector<17x32xf32>
    %496 = arith.truncf %495 : vector<17x32xf32> to vector<17x32xbf16>
    %c85_280 = arith.constant 85 : index
    %c224_281 = arith.constant 224 : index
    %497 = vector.load %arg19[%c85_280, %c224_281] : memref<136x384xf32, #tpu.memory_space<vmem>>, vector<17x32xf32>
    %498 = arith.truncf %497 : vector<17x32xf32> to vector<17x32xbf16>
    %c85_282 = arith.constant 85 : index
    %c352_283 = arith.constant 352 : index
    %499 = vector.load %arg19[%c85_282, %c352_283] : memref<136x384xf32, #tpu.memory_space<vmem>>, vector<17x32xf32>
    %500 = arith.truncf %499 : vector<17x32xf32> to vector<17x32xbf16>
    %cst_284 = arith.constant dense<0.000000e+00> : vector<17x17xf32>
    %501 = tpu.matmul %496, %498, %cst_284 {dimension_numbers = #tpu.dot_dimension_numbers<[1], [1], [0], [0], [0, 0, 1, 0], [], []>} : vector<17x32xbf16>, vector<17x32xbf16>, vector<17x17xf32> -> vector<17x17xf32>
    %cst_285 = arith.constant dense<0xFF800000> : vector<17xf32>
    %502 = vector.multi_reduction <maximumf>, %501, %cst_285 [1] : vector<17x17xf32> to vector<17xf32>
    %503 = vector.shape_cast %502 : vector<17xf32> to vector<17x1xf32>
    %504 = vector.broadcast %503 : vector<17x1xf32> to vector<17x17xf32>
    %505 = arith.subf %501, %504 : vector<17x17xf32>
    %506 = math.exp %505 : vector<17x17xf32>
    %cst_286 = arith.constant dense<0.000000e+00> : vector<17xf32>
    %507 = vector.multi_reduction <add>, %506, %cst_286 [1] : vector<17x17xf32> to vector<17xf32>
    %508 = vector.shape_cast %507 : vector<17xf32> to vector<17x1xf32>
    %509 = tpu.reciprocal %508 {approx = true} : vector<17x1xf32> -> vector<17x1xf32>
    %510 = vector.broadcast %509 : vector<17x1xf32> to vector<17x17xf32>
    %511 = arith.mulf %506, %510 : vector<17x17xf32>
    %512 = arith.truncf %511 : vector<17x17xf32> to vector<17x17xbf16>
    %cst_287 = arith.constant dense<0.000000e+00> : vector<17x32xf32>
    %513 = tpu.matmul %512, %500, %cst_287 {dimension_numbers = #tpu.dot_dimension_numbers<[1], [0], [0], [1], [0, 0, 1, 1], [], []>} : vector<17x17xbf16>, vector<17x32xbf16>, vector<17x32xf32> -> vector<17x32xf32>
    %c85_288 = arith.constant 85 : index
    %c96_289 = arith.constant 96 : index
    %514 = vector.load %arg20[%c85_288, %c96_289] : memref<136x128xf32, #tpu.memory_space<vmem>>, vector<17x32xf32>
    tpu.vector_store %arg20[%c85_288, %c96_289], %513 {strides = array<i32>} : memref<136x128xf32, #tpu.memory_space<vmem>>, vector<17x32xf32>,
    %c102 = arith.constant 102 : index
    %c0_290 = arith.constant 0 : index
    %515 = vector.load %arg19[%c102, %c0_290] : memref<136x384xf32, #tpu.memory_space<vmem>>, vector<17x32xf32>
    %516 = arith.truncf %515 : vector<17x32xf32> to vector<17x32xbf16>
    %c102_291 = arith.constant 102 : index
    %c128_292 = arith.constant 128 : index
    %517 = vector.load %arg19[%c102_291, %c128_292] : memref<136x384xf32, #tpu.memory_space<vmem>>, vector<17x32xf32>
    %518 = arith.truncf %517 : vector<17x32xf32> to vector<17x32xbf16>
    %c102_293 = arith.constant 102 : index
    %c256_294 = arith.constant 256 : index
    %519 = vector.load %arg19[%c102_293, %c256_294] : memref<136x384xf32, #tpu.memory_space<vmem>>, vector<17x32xf32>
    %520 = arith.truncf %519 : vector<17x32xf32> to vector<17x32xbf16>
    %cst_295 = arith.constant dense<0.000000e+00> : vector<17x17xf32>
    %521 = tpu.matmul %516, %518, %cst_295 {dimension_numbers = #tpu.dot_dimension_numbers<[1], [1], [0], [0], [0, 0, 1, 0], [], []>} : vector<17x32xbf16>, vector<17x32xbf16>, vector<17x17xf32> -> vector<17x17xf32>
    %cst_296 = arith.constant dense<0xFF800000> : vector<17xf32>
    %522 = vector.multi_reduction <maximumf>, %521, %cst_296 [1] : vector<17x17xf32> to vector<17xf32>
    %523 = vector.shape_cast %522 : vector<17xf32> to vector<17x1xf32>
    %524 = vector.broadcast %523 : vector<17x1xf32> to vector<17x17xf32>
    %525 = arith.subf %521, %524 : vector<17x17xf32>
    %526 = math.exp %525 : vector<17x17xf32>
    %cst_297 = arith.constant dense<0.000000e+00> : vector<17xf32>
    %527 = vector.multi_reduction <add>, %526, %cst_297 [1] : vector<17x17xf32> to vector<17xf32>
    %528 = vector.shape_cast %527 : vector<17xf32> to vector<17x1xf32>
    %529 = tpu.reciprocal %528 {approx = true} : vector<17x1xf32> -> vector<17x1xf32>
    %530 = vector.broadcast %529 : vector<17x1xf32> to vector<17x17xf32>
    %531 = arith.mulf %526, %530 : vector<17x17xf32>
    %532 = arith.truncf %531 : vector<17x17xf32> to vector<17x17xbf16>
    %cst_298 = arith.constant dense<0.000000e+00> : vector<17x32xf32>
    %533 = tpu.matmul %532, %520, %cst_298 {dimension_numbers = #tpu.dot_dimension_numbers<[1], [0], [0], [1], [0, 0, 1, 1], [], []>} : vector<17x17xbf16>, vector<17x32xbf16>, vector<17x32xf32> -> vector<17x32xf32>
    %c102_299 = arith.constant 102 : index
    %c0_300 = arith.constant 0 : index
    %534 = vector.load %arg20[%c102_299, %c0_300] : memref<136x128xf32, #tpu.memory_space<vmem>>, vector<17x32xf32>
    tpu.vector_store %arg20[%c102_299, %c0_300], %533 {strides = array<i32>} : memref<136x128xf32, #tpu.memory_space<vmem>>, vector<17x32xf32>,
    %c102_301 = arith.constant 102 : index
    %c32_302 = arith.constant 32 : index
    %535 = vector.load %arg19[%c102_301, %c32_302] : memref<136x384xf32, #tpu.memory_space<vmem>>, vector<17x32xf32>
    %536 = arith.truncf %535 : vector<17x32xf32> to vector<17x32xbf16>
    %c102_303 = arith.constant 102 : index
    %c160_304 = arith.constant 160 : index
    %537 = vector.load %arg19[%c102_303, %c160_304] : memref<136x384xf32, #tpu.memory_space<vmem>>, vector<17x32xf32>
    %538 = arith.truncf %537 : vector<17x32xf32> to vector<17x32xbf16>
    %c102_305 = arith.constant 102 : index
    %c288_306 = arith.constant 288 : index
    %539 = vector.load %arg19[%c102_305, %c288_306] : memref<136x384xf32, #tpu.memory_space<vmem>>, vector<17x32xf32>
    %540 = arith.truncf %539 : vector<17x32xf32> to vector<17x32xbf16>
    %cst_307 = arith.constant dense<0.000000e+00> : vector<17x17xf32>
    %541 = tpu.matmul %536, %538, %cst_307 {dimension_numbers = #tpu.dot_dimension_numbers<[1], [1], [0], [0], [0, 0, 1, 0], [], []>} : vector<17x32xbf16>, vector<17x32xbf16>, vector<17x17xf32> -> vector<17x17xf32>
    %cst_308 = arith.constant dense<0xFF800000> : vector<17xf32>
    %542 = vector.multi_reduction <maximumf>, %541, %cst_308 [1] : vector<17x17xf32> to vector<17xf32>
    %543 = vector.shape_cast %542 : vector<17xf32> to vector<17x1xf32>
    %544 = vector.broadcast %543 : vector<17x1xf32> to vector<17x17xf32>
    %545 = arith.subf %541, %544 : vector<17x17xf32>
    %546 = math.exp %545 : vector<17x17xf32>
    %cst_309 = arith.constant dense<0.000000e+00> : vector<17xf32>
    %547 = vector.multi_reduction <add>, %546, %cst_309 [1] : vector<17x17xf32> to vector<17xf32>
    %548 = vector.shape_cast %547 : vector<17xf32> to vector<17x1xf32>
    %549 = tpu.reciprocal %548 {approx = true} : vector<17x1xf32> -> vector<17x1xf32>
    %550 = vector.broadcast %549 : vector<17x1xf32> to vector<17x17xf32>
    %551 = arith.mulf %546, %550 : vector<17x17xf32>
    %552 = arith.truncf %551 : vector<17x17xf32> to vector<17x17xbf16>
    %cst_310 = arith.constant dense<0.000000e+00> : vector<17x32xf32>
    %553 = tpu.matmul %552, %540, %cst_310 {dimension_numbers = #tpu.dot_dimension_numbers<[1], [0], [0], [1], [0, 0, 1, 1], [], []>} : vector<17x17xbf16>, vector<17x32xbf16>, vector<17x32xf32> -> vector<17x32xf32>
    %c102_311 = arith.constant 102 : index
    %c32_312 = arith.constant 32 : index
    %554 = vector.load %arg20[%c102_311, %c32_312] : memref<136x128xf32, #tpu.memory_space<vmem>>, vector<17x32xf32>
    tpu.vector_store %arg20[%c102_311, %c32_312], %553 {strides = array<i32>} : memref<136x128xf32, #tpu.memory_space<vmem>>, vector<17x32xf32>,
    %c102_313 = arith.constant 102 : index
    %c64_314 = arith.constant 64 : index
    %555 = vector.load %arg19[%c102_313, %c64_314] : memref<136x384xf32, #tpu.memory_space<vmem>>, vector<17x32xf32>
    %556 = arith.truncf %555 : vector<17x32xf32> to vector<17x32xbf16>
    %c102_315 = arith.constant 102 : index
    %c192_316 = arith.constant 192 : index
    %557 = vector.load %arg19[%c102_315, %c192_316] : memref<136x384xf32, #tpu.memory_space<vmem>>, vector<17x32xf32>
    %558 = arith.truncf %557 : vector<17x32xf32> to vector<17x32xbf16>
    %c102_317 = arith.constant 102 : index
    %c320_318 = arith.constant 320 : index
    %559 = vector.load %arg19[%c102_317, %c320_318] : memref<136x384xf32, #tpu.memory_space<vmem>>, vector<17x32xf32>
    %560 = arith.truncf %559 : vector<17x32xf32> to vector<17x32xbf16>
    %cst_319 = arith.constant dense<0.000000e+00> : vector<17x17xf32>
    %561 = tpu.matmul %556, %558, %cst_319 {dimension_numbers = #tpu.dot_dimension_numbers<[1], [1], [0], [0], [0, 0, 1, 0], [], []>} : vector<17x32xbf16>, vector<17x32xbf16>, vector<17x17xf32> -> vector<17x17xf32>
    %cst_320 = arith.constant dense<0xFF800000> : vector<17xf32>
    %562 = vector.multi_reduction <maximumf>, %561, %cst_320 [1] : vector<17x17xf32> to vector<17xf32>
    %563 = vector.shape_cast %562 : vector<17xf32> to vector<17x1xf32>
    %564 = vector.broadcast %563 : vector<17x1xf32> to vector<17x17xf32>
    %565 = arith.subf %561, %564 : vector<17x17xf32>
    %566 = math.exp %565 : vector<17x17xf32>
    %cst_321 = arith.constant dense<0.000000e+00> : vector<17xf32>
    %567 = vector.multi_reduction <add>, %566, %cst_321 [1] : vector<17x17xf32> to vector<17xf32>
    %568 = vector.shape_cast %567 : vector<17xf32> to vector<17x1xf32>
    %569 = tpu.reciprocal %568 {approx = true} : vector<17x1xf32> -> vector<17x1xf32>
    %570 = vector.broadcast %569 : vector<17x1xf32> to vector<17x17xf32>
    %571 = arith.mulf %566, %570 : vector<17x17xf32>
    %572 = arith.truncf %571 : vector<17x17xf32> to vector<17x17xbf16>
    %cst_322 = arith.constant dense<0.000000e+00> : vector<17x32xf32>
    %573 = tpu.matmul %572, %560, %cst_322 {dimension_numbers = #tpu.dot_dimension_numbers<[1], [0], [0], [1], [0, 0, 1, 1], [], []>} : vector<17x17xbf16>, vector<17x32xbf16>, vector<17x32xf32> -> vector<17x32xf32>
    %c102_323 = arith.constant 102 : index
    %c64_324 = arith.constant 64 : index
    %574 = vector.load %arg20[%c102_323, %c64_324] : memref<136x128xf32, #tpu.memory_space<vmem>>, vector<17x32xf32>
    tpu.vector_store %arg20[%c102_323, %c64_324], %573 {strides = array<i32>} : memref<136x128xf32, #tpu.memory_space<vmem>>, vector<17x32xf32>,
    %c102_325 = arith.constant 102 : index
    %c96_326 = arith.constant 96 : index
    %575 = vector.load %arg19[%c102_325, %c96_326] : memref<136x384xf32, #tpu.memory_space<vmem>>, vector<17x32xf32>
    %576 = arith.truncf %575 : vector<17x32xf32> to vector<17x32xbf16>
    %c102_327 = arith.constant 102 : index
    %c224_328 = arith.constant 224 : index
    %577 = vector.load %arg19[%c102_327, %c224_328] : memref<136x384xf32, #tpu.memory_space<vmem>>, vector<17x32xf32>
    %578 = arith.truncf %577 : vector<17x32xf32> to vector<17x32xbf16>
    %c102_329 = arith.constant 102 : index
    %c352_330 = arith.constant 352 : index
    %579 = vector.load %arg19[%c102_329, %c352_330] : memref<136x384xf32, #tpu.memory_space<vmem>>, vector<17x32xf32>
    %580 = arith.truncf %579 : vector<17x32xf32> to vector<17x32xbf16>
    %cst_331 = arith.constant dense<0.000000e+00> : vector<17x17xf32>
    %581 = tpu.matmul %576, %578, %cst_331 {dimension_numbers = #tpu.dot_dimension_numbers<[1], [1], [0], [0], [0, 0, 1, 0], [], []>} : vector<17x32xbf16>, vector<17x32xbf16>, vector<17x17xf32> -> vector<17x17xf32>
    %cst_332 = arith.constant dense<0xFF800000> : vector<17xf32>
    %582 = vector.multi_reduction <maximumf>, %581, %cst_332 [1] : vector<17x17xf32> to vector<17xf32>
    %583 = vector.shape_cast %582 : vector<17xf32> to vector<17x1xf32>
    %584 = vector.broadcast %583 : vector<17x1xf32> to vector<17x17xf32>
    %585 = arith.subf %581, %584 : vector<17x17xf32>
    %586 = math.exp %585 : vector<17x17xf32>
    %cst_333 = arith.constant dense<0.000000e+00> : vector<17xf32>
    %587 = vector.multi_reduction <add>, %586, %cst_333 [1] : vector<17x17xf32> to vector<17xf32>
    %588 = vector.shape_cast %587 : vector<17xf32> to vector<17x1xf32>
    %589 = tpu.reciprocal %588 {approx = true} : vector<17x1xf32> -> vector<17x1xf32>
    %590 = vector.broadcast %589 : vector<17x1xf32> to vector<17x17xf32>
    %591 = arith.mulf %586, %590 : vector<17x17xf32>
    %592 = arith.truncf %591 : vector<17x17xf32> to vector<17x17xbf16>
    %cst_334 = arith.constant dense<0.000000e+00> : vector<17x32xf32>
    %593 = tpu.matmul %592, %580, %cst_334 {dimension_numbers = #tpu.dot_dimension_numbers<[1], [0], [0], [1], [0, 0, 1, 1], [], []>} : vector<17x17xbf16>, vector<17x32xbf16>, vector<17x32xf32> -> vector<17x32xf32>
    %c102_335 = arith.constant 102 : index
    %c96_336 = arith.constant 96 : index
    %594 = vector.load %arg20[%c102_335, %c96_336] : memref<136x128xf32, #tpu.memory_space<vmem>>, vector<17x32xf32>
    tpu.vector_store %arg20[%c102_335, %c96_336], %593 {strides = array<i32>} : memref<136x128xf32, #tpu.memory_space<vmem>>, vector<17x32xf32>,
    %c119 = arith.constant 119 : index
    %c0_337 = arith.constant 0 : index
    %595 = vector.load %arg19[%c119, %c0_337] : memref<136x384xf32, #tpu.memory_space<vmem>>, vector<17x32xf32>
    %596 = arith.truncf %595 : vector<17x32xf32> to vector<17x32xbf16>
    %c119_338 = arith.constant 119 : index
    %c128_339 = arith.constant 128 : index
    %597 = vector.load %arg19[%c119_338, %c128_339] : memref<136x384xf32, #tpu.memory_space<vmem>>, vector<17x32xf32>
    %598 = arith.truncf %597 : vector<17x32xf32> to vector<17x32xbf16>
    %c119_340 = arith.constant 119 : index
    %c256_341 = arith.constant 256 : index
    %599 = vector.load %arg19[%c119_340, %c256_341] : memref<136x384xf32, #tpu.memory_space<vmem>>, vector<17x32xf32>
    %600 = arith.truncf %599 : vector<17x32xf32> to vector<17x32xbf16>
    %cst_342 = arith.constant dense<0.000000e+00> : vector<17x17xf32>
    %601 = tpu.matmul %596, %598, %cst_342 {dimension_numbers = #tpu.dot_dimension_numbers<[1], [1], [0], [0], [0, 0, 1, 0], [], []>} : vector<17x32xbf16>, vector<17x32xbf16>, vector<17x17xf32> -> vector<17x17xf32>
    %cst_343 = arith.constant dense<0xFF800000> : vector<17xf32>
    %602 = vector.multi_reduction <maximumf>, %601, %cst_343 [1] : vector<17x17xf32> to vector<17xf32>
    %603 = vector.shape_cast %602 : vector<17xf32> to vector<17x1xf32>
    %604 = vector.broadcast %603 : vector<17x1xf32> to vector<17x17xf32>
    %605 = arith.subf %601, %604 : vector<17x17xf32>
    %606 = math.exp %605 : vector<17x17xf32>
    %cst_344 = arith.constant dense<0.000000e+00> : vector<17xf32>
    %607 = vector.multi_reduction <add>, %606, %cst_344 [1] : vector<17x17xf32> to vector<17xf32>
    %608 = vector.shape_cast %607 : vector<17xf32> to vector<17x1xf32>
    %609 = tpu.reciprocal %608 {approx = true} : vector<17x1xf32> -> vector<17x1xf32>
    %610 = vector.broadcast %609 : vector<17x1xf32> to vector<17x17xf32>
    %611 = arith.mulf %606, %610 : vector<17x17xf32>
    %612 = arith.truncf %611 : vector<17x17xf32> to vector<17x17xbf16>
    %cst_345 = arith.constant dense<0.000000e+00> : vector<17x32xf32>
    %613 = tpu.matmul %612, %600, %cst_345 {dimension_numbers = #tpu.dot_dimension_numbers<[1], [0], [0], [1], [0, 0, 1, 1], [], []>} : vector<17x17xbf16>, vector<17x32xbf16>, vector<17x32xf32> -> vector<17x32xf32>
    %c119_346 = arith.constant 119 : index
    %c0_347 = arith.constant 0 : index
    %614 = vector.load %arg20[%c119_346, %c0_347] : memref<136x128xf32, #tpu.memory_space<vmem>>, vector<17x32xf32>
    tpu.vector_store %arg20[%c119_346, %c0_347], %613 {strides = array<i32>} : memref<136x128xf32, #tpu.memory_space<vmem>>, vector<17x32xf32>,
    %c119_348 = arith.constant 119 : index
    %c32_349 = arith.constant 32 : index
    %615 = vector.load %arg19[%c119_348, %c32_349] : memref<136x384xf32, #tpu.memory_space<vmem>>, vector<17x32xf32>
    %616 = arith.truncf %615 : vector<17x32xf32> to vector<17x32xbf16>
    %c119_350 = arith.constant 119 : index
    %c160_351 = arith.constant 160 : index
    %617 = vector.load %arg19[%c119_350, %c160_351] : memref<136x384xf32, #tpu.memory_space<vmem>>, vector<17x32xf32>
    %618 = arith.truncf %617 : vector<17x32xf32> to vector<17x32xbf16>
    %c119_352 = arith.constant 119 : index
    %c288_353 = arith.constant 288 : index
    %619 = vector.load %arg19[%c119_352, %c288_353] : memref<136x384xf32, #tpu.memory_space<vmem>>, vector<17x32xf32>
    %620 = arith.truncf %619 : vector<17x32xf32> to vector<17x32xbf16>
    %cst_354 = arith.constant dense<0.000000e+00> : vector<17x17xf32>
    %621 = tpu.matmul %616, %618, %cst_354 {dimension_numbers = #tpu.dot_dimension_numbers<[1], [1], [0], [0], [0, 0, 1, 0], [], []>} : vector<17x32xbf16>, vector<17x32xbf16>, vector<17x17xf32> -> vector<17x17xf32>
    %cst_355 = arith.constant dense<0xFF800000> : vector<17xf32>
    %622 = vector.multi_reduction <maximumf>, %621, %cst_355 [1] : vector<17x17xf32> to vector<17xf32>
    %623 = vector.shape_cast %622 : vector<17xf32> to vector<17x1xf32>
    %624 = vector.broadcast %623 : vector<17x1xf32> to vector<17x17xf32>
    %625 = arith.subf %621, %624 : vector<17x17xf32>
    %626 = math.exp %625 : vector<17x17xf32>
    %cst_356 = arith.constant dense<0.000000e+00> : vector<17xf32>
    %627 = vector.multi_reduction <add>, %626, %cst_356 [1] : vector<17x17xf32> to vector<17xf32>
    %628 = vector.shape_cast %627 : vector<17xf32> to vector<17x1xf32>
    %629 = tpu.reciprocal %628 {approx = true} : vector<17x1xf32> -> vector<17x1xf32>
    %630 = vector.broadcast %629 : vector<17x1xf32> to vector<17x17xf32>
    %631 = arith.mulf %626, %630 : vector<17x17xf32>
    %632 = arith.truncf %631 : vector<17x17xf32> to vector<17x17xbf16>
    %cst_357 = arith.constant dense<0.000000e+00> : vector<17x32xf32>
    %633 = tpu.matmul %632, %620, %cst_357 {dimension_numbers = #tpu.dot_dimension_numbers<[1], [0], [0], [1], [0, 0, 1, 1], [], []>} : vector<17x17xbf16>, vector<17x32xbf16>, vector<17x32xf32> -> vector<17x32xf32>
    %c119_358 = arith.constant 119 : index
    %c32_359 = arith.constant 32 : index
    %634 = vector.load %arg20[%c119_358, %c32_359] : memref<136x128xf32, #tpu.memory_space<vmem>>, vector<17x32xf32>
    tpu.vector_store %arg20[%c119_358, %c32_359], %633 {strides = array<i32>} : memref<136x128xf32, #tpu.memory_space<vmem>>, vector<17x32xf32>,
    %c119_360 = arith.constant 119 : index
    %c64_361 = arith.constant 64 : index
    %635 = vector.load %arg19[%c119_360, %c64_361] : memref<136x384xf32, #tpu.memory_space<vmem>>, vector<17x32xf32>
    %636 = arith.truncf %635 : vector<17x32xf32> to vector<17x32xbf16>
    %c119_362 = arith.constant 119 : index
    %c192_363 = arith.constant 192 : index
    %637 = vector.load %arg19[%c119_362, %c192_363] : memref<136x384xf32, #tpu.memory_space<vmem>>, vector<17x32xf32>
    %638 = arith.truncf %637 : vector<17x32xf32> to vector<17x32xbf16>
    %c119_364 = arith.constant 119 : index
    %c320_365 = arith.constant 320 : index
    %639 = vector.load %arg19[%c119_364, %c320_365] : memref<136x384xf32, #tpu.memory_space<vmem>>, vector<17x32xf32>
    %640 = arith.truncf %639 : vector<17x32xf32> to vector<17x32xbf16>
    %cst_366 = arith.constant dense<0.000000e+00> : vector<17x17xf32>
    %641 = tpu.matmul %636, %638, %cst_366 {dimension_numbers = #tpu.dot_dimension_numbers<[1], [1], [0], [0], [0, 0, 1, 0], [], []>} : vector<17x32xbf16>, vector<17x32xbf16>, vector<17x17xf32> -> vector<17x17xf32>
    %cst_367 = arith.constant dense<0xFF800000> : vector<17xf32>
    %642 = vector.multi_reduction <maximumf>, %641, %cst_367 [1] : vector<17x17xf32> to vector<17xf32>
    %643 = vector.shape_cast %642 : vector<17xf32> to vector<17x1xf32>
    %644 = vector.broadcast %643 : vector<17x1xf32> to vector<17x17xf32>
    %645 = arith.subf %641, %644 : vector<17x17xf32>
    %646 = math.exp %645 : vector<17x17xf32>
    %cst_368 = arith.constant dense<0.000000e+00> : vector<17xf32>
    %647 = vector.multi_reduction <add>, %646, %cst_368 [1] : vector<17x17xf32> to vector<17xf32>
    %648 = vector.shape_cast %647 : vector<17xf32> to vector<17x1xf32>
    %649 = tpu.reciprocal %648 {approx = true} : vector<17x1xf32> -> vector<17x1xf32>
    %650 = vector.broadcast %649 : vector<17x1xf32> to vector<17x17xf32>
    %651 = arith.mulf %646, %650 : vector<17x17xf32>
    %652 = arith.truncf %651 : vector<17x17xf32> to vector<17x17xbf16>
    %cst_369 = arith.constant dense<0.000000e+00> : vector<17x32xf32>
    %653 = tpu.matmul %652, %640, %cst_369 {dimension_numbers = #tpu.dot_dimension_numbers<[1], [0], [0], [1], [0, 0, 1, 1], [], []>} : vector<17x17xbf16>, vector<17x32xbf16>, vector<17x32xf32> -> vector<17x32xf32>
    %c119_370 = arith.constant 119 : index
    %c64_371 = arith.constant 64 : index
    %654 = vector.load %arg20[%c119_370, %c64_371] : memref<136x128xf32, #tpu.memory_space<vmem>>, vector<17x32xf32>
    tpu.vector_store %arg20[%c119_370, %c64_371], %653 {strides = array<i32>} : memref<136x128xf32, #tpu.memory_space<vmem>>, vector<17x32xf32>,
    %c119_372 = arith.constant 119 : index
    %c96_373 = arith.constant 96 : index
    %655 = vector.load %arg19[%c119_372, %c96_373] : memref<136x384xf32, #tpu.memory_space<vmem>>, vector<17x32xf32>
    %656 = arith.truncf %655 : vector<17x32xf32> to vector<17x32xbf16>
    %c119_374 = arith.constant 119 : index
    %c224_375 = arith.constant 224 : index
    %657 = vector.load %arg19[%c119_374, %c224_375] : memref<136x384xf32, #tpu.memory_space<vmem>>, vector<17x32xf32>
    %658 = arith.truncf %657 : vector<17x32xf32> to vector<17x32xbf16>
    %c119_376 = arith.constant 119 : index
    %c352_377 = arith.constant 352 : index
    %659 = vector.load %arg19[%c119_376, %c352_377] : memref<136x384xf32, #tpu.memory_space<vmem>>, vector<17x32xf32>
    %660 = arith.truncf %659 : vector<17x32xf32> to vector<17x32xbf16>
    %cst_378 = arith.constant dense<0.000000e+00> : vector<17x17xf32>
    %661 = tpu.matmul %656, %658, %cst_378 {dimension_numbers = #tpu.dot_dimension_numbers<[1], [1], [0], [0], [0, 0, 1, 0], [], []>} : vector<17x32xbf16>, vector<17x32xbf16>, vector<17x17xf32> -> vector<17x17xf32>
    %cst_379 = arith.constant dense<0xFF800000> : vector<17xf32>
    %662 = vector.multi_reduction <maximumf>, %661, %cst_379 [1] : vector<17x17xf32> to vector<17xf32>
    %663 = vector.shape_cast %662 : vector<17xf32> to vector<17x1xf32>
    %664 = vector.broadcast %663 : vector<17x1xf32> to vector<17x17xf32>
    %665 = arith.subf %661, %664 : vector<17x17xf32>
    %666 = math.exp %665 : vector<17x17xf32>
    %cst_380 = arith.constant dense<0.000000e+00> : vector<17xf32>
    %667 = vector.multi_reduction <add>, %666, %cst_380 [1] : vector<17x17xf32> to vector<17xf32>
    %668 = vector.shape_cast %667 : vector<17xf32> to vector<17x1xf32>
    %669 = tpu.reciprocal %668 {approx = true} : vector<17x1xf32> -> vector<17x1xf32>
    %670 = vector.broadcast %669 : vector<17x1xf32> to vector<17x17xf32>
    %671 = arith.mulf %666, %670 : vector<17x17xf32>
    %672 = arith.truncf %671 : vector<17x17xf32> to vector<17x17xbf16>
    %cst_381 = arith.constant dense<0.000000e+00> : vector<17x32xf32>
    %673 = tpu.matmul %672, %660, %cst_381 {dimension_numbers = #tpu.dot_dimension_numbers<[1], [0], [0], [1], [0, 0, 1, 1], [], []>} : vector<17x17xbf16>, vector<17x32xbf16>, vector<17x32xf32> -> vector<17x32xf32>
    %c119_382 = arith.constant 119 : index
    %c96_383 = arith.constant 96 : index
    %674 = vector.load %arg20[%c119_382, %c96_383] : memref<136x128xf32, #tpu.memory_space<vmem>>, vector<17x32xf32>
    tpu.vector_store %arg20[%c119_382, %c96_383], %673 {strides = array<i32>} : memref<136x128xf32, #tpu.memory_space<vmem>>, vector<17x32xf32>,
    %c0_384 = arith.constant 0 : index
    %c0_385 = arith.constant 0 : index
    %675 = vector.load %arg20[%c0_384, %c0_385] : memref<136x128xf32, #tpu.memory_space<vmem>>, vector<136x128xf32>
    %676 = arith.truncf %675 : vector<136x128xf32> to vector<136x128xbf16>
    %c0_386 = arith.constant 0 : index
    %c0_387 = arith.constant 0 : index
    %c0_388 = arith.constant 0 : index
    %677 = vector.load %arg10[%c0_386, %c0_387, %c0_388] : memref<1x128x128xbf16, #tpu.memory_space<vmem>>, vector<1x128x128xbf16>
    %678 = vector.shape_cast %677 : vector<1x128x128xbf16> to vector<128x128xbf16>
    %cst_389 = arith.constant dense<0.000000e+00> : vector<136x128xf32>
    %679 = tpu.matmul %676, %678, %cst_389 {dimension_numbers = #tpu.dot_dimension_numbers<[1], [0], [0], [1], [0, 0, 1, 1], [], []>} : vector<136x128xbf16>, vector<128x128xbf16>, vector<136x128xf32> -> vector<136x128xf32>
    %c0_390 = arith.constant 0 : index
    %c0_391 = arith.constant 0 : index
    %c0_392 = arith.constant 0 : index
    %680 = vector.load %arg11[%c0_390, %c0_391, %c0_392] : memref<1x1x128xf32, #tpu.memory_space<vmem>>, vector<1x1x128xf32>
    %681 = vector.shape_cast %680 : vector<1x1x128xf32> to vector<1x128xf32>
    %682 = vector.broadcast %681 : vector<1x128xf32> to vector<136x128xf32>
    %683 = arith.addf %679, %682 : vector<136x128xf32>
    %684 = arith.addf %3, %683 : vector<136x128xf32>
    %c0_393 = arith.constant 0 : index
    %c0_394 = arith.constant 0 : index
    %c0_395 = arith.constant 0 : index
    %685 = vector.load %arg12[%c0_393, %c0_394, %c0_395] : memref<1x1x128xf32, #tpu.memory_space<vmem>>, vector<1x1x128xf32>
    %686 = vector.shape_cast %685 : vector<1x1x128xf32> to vector<1x128xf32>
    %c0_396 = arith.constant 0 : index
    %c0_397 = arith.constant 0 : index
    %c0_398 = arith.constant 0 : index
    %687 = vector.load %arg13[%c0_396, %c0_397, %c0_398] : memref<1x1x128xf32, #tpu.memory_space<vmem>>, vector<1x1x128xf32>
    %688 = vector.shape_cast %687 : vector<1x1x128xf32> to vector<1x128xf32>
    %cst_399 = arith.constant dense<0.000000e+00> : vector<136xf32>
    %689 = vector.multi_reduction <add>, %684, %cst_399 [1] : vector<136x128xf32> to vector<136xf32>
    %690 = vector.shape_cast %689 : vector<136xf32> to vector<136x1xf32>
    %cst_400 = arith.constant 1.280000e+02 : f32
    %691 = vector.broadcast %cst_400 : f32 to vector<136x1xf32>
    %692 = arith.divf %690, %691 : vector<136x1xf32>
    %693 = vector.broadcast %692 : vector<136x1xf32> to vector<136x128xf32>
    %694 = arith.subf %684, %693 : vector<136x128xf32>
    %695 = arith.mulf %694, %694 : vector<136x128xf32>
    %cst_401 = arith.constant dense<0.000000e+00> : vector<136xf32>
    %696 = vector.multi_reduction <add>, %695, %cst_401 [1] : vector<136x128xf32> to vector<136xf32>
    %697 = vector.shape_cast %696 : vector<136xf32> to vector<136x1xf32>
    %cst_402 = arith.constant 1.280000e+02 : f32
    %698 = vector.broadcast %cst_402 : f32 to vector<136x1xf32>
    %699 = arith.divf %697, %698 : vector<136x1xf32>
    %700 = vector.broadcast %692 : vector<136x1xf32> to vector<136x128xf32>
    %701 = arith.subf %684, %700 : vector<136x128xf32>
    %cst_403 = arith.constant 9.99999974E-6 : f32
    %702 = vector.broadcast %cst_403 : f32 to vector<136x1xf32>
    %703 = arith.addf %699, %702 : vector<136x1xf32>
    %704 = math.rsqrt %703 : vector<136x1xf32>
    %705 = vector.broadcast %704 : vector<136x1xf32> to vector<136x128xf32>
    %706 = arith.mulf %701, %705 : vector<136x128xf32>
    %707 = vector.broadcast %686 : vector<1x128xf32> to vector<136x128xf32>
    %708 = arith.mulf %706, %707 : vector<136x128xf32>
    %709 = vector.broadcast %688 : vector<1x128xf32> to vector<136x128xf32>
    %710 = arith.addf %708, %709 : vector<136x128xf32>
    %711 = arith.truncf %710 : vector<136x128xf32> to vector<136x128xbf16>
    %c0_404 = arith.constant 0 : index
    %c0_405 = arith.constant 0 : index
    %c0_406 = arith.constant 0 : index
    %712 = vector.load %arg14[%c0_404, %c0_405, %c0_406] : memref<1x128x256xbf16, #tpu.memory_space<vmem>>, vector<1x128x256xbf16>
    %713 = vector.shape_cast %712 : vector<1x128x256xbf16> to vector<128x256xbf16>
    %cst_407 = arith.constant dense<0.000000e+00> : vector<136x256xf32>
    %714 = tpu.matmul %711, %713, %cst_407 {dimension_numbers = #tpu.dot_dimension_numbers<[1], [0], [0], [1], [0, 0, 1, 1], [], []>} : vector<136x128xbf16>, vector<128x256xbf16>, vector<136x256xf32> -> vector<136x256xf32>
    %c0_408 = arith.constant 0 : index
    %c0_409 = arith.constant 0 : index
    %c0_410 = arith.constant 0 : index
    %715 = vector.load %arg15[%c0_408, %c0_409, %c0_410] : memref<1x1x256xf32, #tpu.memory_space<vmem>>, vector<1x1x256xf32>
    %716 = vector.shape_cast %715 : vector<1x1x256xf32> to vector<1x256xf32>
    %717 = vector.broadcast %716 : vector<1x256xf32> to vector<136x256xf32>
    %718 = arith.addf %714, %717 : vector<136x256xf32>
    %cst_411 = arith.constant 5.000000e-01 : f32
    %719 = vector.broadcast %cst_411 : f32 to vector<136x256xf32>
    %720 = arith.mulf %719, %718 : vector<136x256xf32>
    %cst_412 = arith.constant 0.636619746 : f32
    %721 = math.sqrt %cst_412 : f32
    %722 = arith.mulf %718, %718 : vector<136x256xf32>
    %723 = arith.mulf %718, %722 : vector<136x256xf32>
    %cst_413 = arith.constant 4.471500e-02 : f32
    %724 = vector.broadcast %cst_413 : f32 to vector<136x256xf32>
    %725 = arith.mulf %724, %723 : vector<136x256xf32>
    %726 = arith.addf %718, %725 : vector<136x256xf32>
    %727 = vector.broadcast %721 : f32 to vector<136x256xf32>
    %728 = arith.mulf %727, %726 : vector<136x256xf32>
    %729 = math.tanh %728 : vector<136x256xf32>
    %cst_414 = arith.constant 1.000000e+00 : f32
    %730 = vector.broadcast %cst_414 : f32 to vector<136x256xf32>
    %731 = arith.addf %730, %729 : vector<136x256xf32>
    %732 = arith.mulf %720, %731 : vector<136x256xf32>
    %733 = arith.truncf %732 : vector<136x256xf32> to vector<136x256xbf16>
    %c0_415 = arith.constant 0 : index
    %c0_416 = arith.constant 0 : index
    %c0_417 = arith.constant 0 : index
    %734 = vector.load %arg16[%c0_415, %c0_416, %c0_417] : memref<1x256x128xbf16, #tpu.memory_space<vmem>>, vector<1x256x128xbf16>
    %735 = vector.shape_cast %734 : vector<1x256x128xbf16> to vector<256x128xbf16>
    %cst_418 = arith.constant dense<0.000000e+00> : vector<136x128xf32>
    %736 = tpu.matmul %733, %735, %cst_418 {dimension_numbers = #tpu.dot_dimension_numbers<[1], [0], [0], [1], [0, 0, 1, 1], [], []>} : vector<136x256xbf16>, vector<256x128xbf16>, vector<136x128xf32> -> vector<136x128xf32>
    %c0_419 = arith.constant 0 : index
    %c0_420 = arith.constant 0 : index
    %c0_421 = arith.constant 0 : index
    %737 = vector.load %arg17[%c0_419, %c0_420, %c0_421] : memref<1x1x128xf32, #tpu.memory_space<vmem>>, vector<1x1x128xf32>
    %738 = vector.shape_cast %737 : vector<1x1x128xf32> to vector<1x128xf32>
    %739 = vector.broadcast %738 : vector<1x128xf32> to vector<136x128xf32>
    %740 = arith.addf %736, %739 : vector<136x128xf32>
    %741 = arith.addf %684, %740 : vector<136x128xf32>
    %c0_422 = arith.constant 0 : index
    %c0_423 = arith.constant 0 : index
    %742 = vector.load %arg18[%c0_422, %c0_423] : memref<136x128xf32, #tpu.memory_space<vmem>>, vector<136x128xf32>
    tpu.vector_store %arg18[%c0_422, %c0_423], %741 {strides = array<i32>} : memref<136x128xf32, #tpu.memory_space<vmem>>, vector<136x128xf32>,
    return
  }
  func.func @transform_0(%arg0: i32, %arg1: i32) -> (i32, i32) {
    %c0_i32 = arith.constant 0 : i32
    %c0_i32_0 = arith.constant 0 : i32
    return %arg0, %c0_i32 : i32, i32
  }
  func.func @transform_1(%arg0: i32, %arg1: i32) -> (i32, i32) {
    %c0_i32 = arith.constant 0 : i32
    %c0_i32_0 = arith.constant 0 : i32
    %c0_i32_1 = arith.constant 0 : i32
    return %c0_i32, %c0_i32_0 : i32, i32
  }
  func.func @transform_2(%arg0: i32, %arg1: i32) -> (i32, i32) {
    %c0_i32 = arith.constant 0 : i32
    %c0_i32_0 = arith.constant 0 : i32
    %c0_i32_1 = arith.constant 0 : i32
    return %c0_i32, %c0_i32_0 : i32, i32
  }
  func.func @transform_3(%arg0: i32, %arg1: i32) -> (i32, i32) {
    %c0_i32 = arith.constant 0 : i32
    %c0_i32_0 = arith.constant 0 : i32
    %c0_i32_1 = arith.constant 0 : i32
    return %c0_i32, %c0_i32_0 : i32, i32
  }
  func.func @transform_4(%arg0: i32, %arg1: i32) -> (i32, i32) {
    %c0_i32 = arith.constant 0 : i32
    %c0_i32_0 = arith.constant 0 : i32
    %c0_i32_1 = arith.constant 0 : i32
    return %c0_i32, %c0_i32_0 : i32, i32
  }
  func.func @transform_5(%arg0: i32, %arg1: i32) -> (i32, i32, i32) {
    %c0_i32 = arith.constant 0 : i32
    %c0_i32_0 = arith.constant 0 : i32
    %c0_i32_1 = arith.constant 0 : i32
    return %arg1, %c0_i32, %c0_i32_0 : i32, i32, i32
  }
  func.func @transform_6(%arg0: i32, %arg1: i32) -> (i32, i32, i32) {
    %c0_i32 = arith.constant 0 : i32
    %c0_i32_0 = arith.constant 0 : i32
    %c0_i32_1 = arith.constant 0 : i32
    return %arg1, %c0_i32, %c0_i32_0 : i32, i32, i32
  }
  func.func @transform_7(%arg0: i32, %arg1: i32) -> (i32, i32, i32) {
    %c0_i32 = arith.constant 0 : i32
    %c0_i32_0 = arith.constant 0 : i32
    %c0_i32_1 = arith.constant 0 : i32
    return %arg1, %c0_i32, %c0_i32_0 : i32, i32, i32
  }
  func.func @transform_8(%arg0: i32, %arg1: i32) -> (i32, i32, i32) {
    %c0_i32 = arith.constant 0 : i32
    %c0_i32_0 = arith.constant 0 : i32
    %c0_i32_1 = arith.constant 0 : i32
    return %arg1, %c0_i32, %c0_i32_0 : i32, i32, i32
  }
  func.func @transform_9(%arg0: i32, %arg1: i32) -> (i32, i32, i32) {
    %c0_i32 = arith.constant 0 : i32
    %c0_i32_0 = arith.constant 0 : i32
    %c0_i32_1 = arith.constant 0 : i32
    return %arg1, %c0_i32, %c0_i32_0 : i32, i32, i32
  }
  func.func @transform_10(%arg0: i32, %arg1: i32) -> (i32, i32, i32) {
    %c0_i32 = arith.constant 0 : i32
    %c0_i32_0 = arith.constant 0 : i32
    %c0_i32_1 = arith.constant 0 : i32
    return %arg1, %c0_i32, %c0_i32_0 : i32, i32, i32
  }
  func.func @transform_11(%arg0: i32, %arg1: i32) -> (i32, i32, i32) {
    %c0_i32 = arith.constant 0 : i32
    %c0_i32_0 = arith.constant 0 : i32
    %c0_i32_1 = arith.constant 0 : i32
    return %arg1, %c0_i32, %c0_i32_0 : i32, i32, i32
  }
  func.func @transform_12(%arg0: i32, %arg1: i32) -> (i32, i32, i32) {
    %c0_i32 = arith.constant 0 : i32
    %c0_i32_0 = arith.constant 0 : i32
    %c0_i32_1 = arith.constant 0 : i32
    return %arg1, %c0_i32, %c0_i32_0 : i32, i32, i32
  }
  func.func @transform_13(%arg0: i32, %arg1: i32) -> (i32, i32, i32) {
    %c0_i32 = arith.constant 0 : i32
    %c0_i32_0 = arith.constant 0 : i32
    %c0_i32_1 = arith.constant 0 : i32
    return %arg1, %c0_i32, %c0_i32_0 : i32, i32, i32
  }
  func.func @transform_14(%arg0: i32, %arg1: i32) -> (i32, i32, i32) {
    %c0_i32 = arith.constant 0 : i32
    %c0_i32_0 = arith.constant 0 : i32
    %c0_i32_1 = arith.constant 0 : i32
    return %arg1, %c0_i32, %c0_i32_0 : i32, i32, i32
  }
  func.func @transform_15(%arg0: i32, %arg1: i32) -> (i32, i32, i32) {
    %c0_i32 = arith.constant 0 : i32
    %c0_i32_0 = arith.constant 0 : i32
    %c0_i32_1 = arith.constant 0 : i32
    return %arg1, %c0_i32, %c0_i32_0 : i32, i32, i32
  }
  func.func @transform_16(%arg0: i32, %arg1: i32) -> (i32, i32) {
    %c0_i32 = arith.constant 0 : i32
    %c0_i32_0 = arith.constant 0 : i32
    return %arg0, %c0_i32 : i32, i32
  }
}

</mosaic_0001>

<llo_original>
// kernel: tpu_custom_call.1
$region0: #{tpu_custom_call.1}
  #allocation0 [shape = 'u32[]', space=smem, size = 0x4, offset = 0x4, fixed_abs, tag = 'smem constant byte address 0x4 - core index']
  #allocation1 [shape = 'u32[72,128]{1,0:T(1,128)}', space=vmem, size = 0x9000, scoped, tag = 'internal scratch']
  #allocation2 [shape = 'f32[136,384]{1,0:T(8,128)}', space=vmem, size = 0x33000, scoped, tag = 'scratch operand']
  #allocation3 [shape = 'f32[136,128]{1,0:T(8,128)}', space=vmem, size = 0x11000, scoped, tag = 'scratch operand']
  %s0 = inlined_call_operand.vmem [shape: f32[256,64], index: 0, kind: input, shape index: {}]
  %s1 = inlined_call_operand.hbm [shape: bf16[64,128], index: 1, kind: input, shape index: {}]
  %s2 = inlined_call_operand.vmem [shape: f32[1,128], index: 2, kind: input, shape index: {}]
  %s3 = inlined_call_operand.vmem [shape: f32[1,128], index: 3, kind: input, shape index: {}]
  %s4 = inlined_call_operand.hbm [shape: f32[17,128], index: 4, kind: input, shape index: {}]
  %s5 = inlined_call_operand.vmem [shape: f32[3,1,128], index: 5, kind: input, shape index: {}]
  %s6 = inlined_call_operand.hbm [shape: f32[3,1,128], index: 6, kind: input, shape index: {}]
  %s7 = inlined_call_operand.hbm [shape: bf16[3,128,384], index: 7, kind: input, shape index: {}]
  %s8 = inlined_call_operand.hbm [shape: bf16[3,128,128], index: 8, kind: input, shape index: {}]
  %s9 = inlined_call_operand.hbm [shape: f32[3,1,128], index: 9, kind: input, shape index: {}]
  %s10 = inlined_call_operand.hbm [shape: f32[3,1,128], index: 10, kind: input, shape index: {}]
  %s11 = inlined_call_operand.hbm [shape: f32[3,1,128], index: 11, kind: input, shape index: {}]
  %s12 = inlined_call_operand.vmem [shape: bf16[3,128,256], index: 12, kind: input, shape index: {}]
  %s13 = inlined_call_operand.vmem [shape: f32[3,1,256], index: 13, kind: input, shape index: {}]
  %s14 = inlined_call_operand.hbm [shape: bf16[3,256,128], index: 14, kind: input, shape index: {}]
  %s15 = inlined_call_operand.vmem [shape: f32[3,1,128], index: 15, kind: input, shape index: {}]
  %s16 = inlined_call_operand.hbm [shape: f32[272,128], index: 16, kind: output, shape index: {}]
  %s17 = sld [smem:[#allocation0]]
  $region137: #{tpu_custom_call.1} parent=0
    _
  %s19 = ssub.s32 1, %s17
  %s20 = scalar_select 0, %s19, %s17
  $region1: #{tpu_custom_call.1} parent=0
    #allocation4 [shape = 'u8[16384]{0}', space=vmem, size = 0x4000, scoped, tag = 'input window, operand 1, single buffered']
    #allocation5 [shape = 's32[2]{0}', space=sflag, size = 0x8, scoped, tag = 'scoped memory for tpu_custom_call.1']
    #allocation6 [shape = 's32[2]{0}', space=sflag, size = 0x8, scoped, tag = 'scoped memory for tpu_custom_call.1']
    #allocation7 [shape = 'u8[12288]{0}', space=vmem, size = 0x3000, scoped, tag = 'input window, operand 4, single buffered']
    #allocation8 [shape = 's32[1]{0}', space=sflag, size = 0x4, scoped, tag = 'scoped memory for tpu_custom_call.1']
    #allocation9 [shape = 'u8[1024]{0}', space=vmem, size = 0x400, scoped, tag = 'input window, operand 6']
    #allocation10 [shape = 'u8[196608]{0}', space=vmem, size = 0x30000, scoped, tag = 'input window, operand 7']
    #allocation11 [shape = 'u8[65536]{0}', space=vmem, size = 0x10000, scoped, tag = 'input window, operand 8']
    #allocation12 [shape = 'u8[1024]{0}', space=vmem, size = 0x400, scoped, tag = 'input window, operand 9']
    #allocation13 [shape = 'u8[1024]{0}', space=vmem, size = 0x400, scoped, tag = 'input window, operand 10']
    #allocation14 [shape = 'u8[1024]{0}', space=vmem, size = 0x400, scoped, tag = 'input window, operand 11']
    #allocation15 [shape = 'u8[131072]{0}', space=vmem, size = 0x20000, scoped, tag = 'input window, operand 14']
    #allocation16 [shape = 'u8[139264]{0}', space=vmem, size = 0x22000, scoped, tag = 'output window, operand 0']
    %21 = vsyncpa [#allocation5], 0
    %22 = vsyncpa [#allocation8], 0
    %23 = vsyncpa [#allocation6], 0
    %s24 = scalar_lea.sflag [#allocation6], 1
    %25 = vsyncpa %s24, 0
    loop: start=0, step=1, limit=8
    $region2: #{tpu_custom_call.1} parent=1 // loop_pre_header
      _
    $region3: #{tpu_custom_call.1} parent=1 // loop_header
      %s27 = sphi 0, %s31
      %p28 = scmp.ge.s32.totalorder %s27, 8
      %s34 = sphi 0, %s46
      %s35 = sphi 0, %s42
      %s36 = sphi 0, %s34
      %s37 = sphi 0, %s35
      %s38 = sphi 0, %s36
      %s39 = sphi 0, %s37
      %s49 = sphi 0, %s51
      %s52 = sphi 0, %s49
      %s53 = sphi 0, %s52
      %s69 = sphi 0, %s53
      %s73 = sphi 0, %s73
      %s75 = sphi 0, %s73
      %s76 = sphi 0, %s75
      %s90 = sphi 0, %s76
      %s94 = sphi 0, %s94
      %s96 = sphi 0, %s94
      %s97 = sphi 0, %s96
      %s111 = sphi 0, %s97
      %s115 = sphi 0, %s115
      %s117 = sphi 0, %s115
      %s118 = sphi 0, %s117
      %s132 = sphi 0, %s118
      %s136 = sphi 0, %s136
      %s138 = sphi 0, %s136
      %s139 = sphi 0, %s138
      %s153 = sphi 0, %s139
      %s159 = sphi 0, %s161
      %s162 = sphi 0, %s159
      %s163 = sphi 0, %s162
      %s179 = sphi 0, %s163
      %s185 = sphi 0, %s187
      %s188 = sphi 0, %s185
      %s189 = sphi 0, %s188
      %s205 = sphi 0, %s189
      %s211 = sphi 0, %s213
      %s214 = sphi 0, %s211
      %s215 = sphi 0, %s214
      %s231 = sphi 0, %s215
      %s237 = sphi 0, %s239
      %s240 = sphi 0, %s237
      %s241 = sphi 0, %s240
      %s257 = sphi 0, %s241
      %s263 = sphi 0, %s265
      %s266 = sphi 0, %s263
      %s267 = sphi 0, %s266
      %s283 = sphi 0, %s267
      %s289 = sphi 0, %s291
      %s292 = sphi 0, %s289
      %s293 = sphi 0, %s292
      %s309 = sphi 0, %s293
      %s315 = sphi 0, %s317
      %s318 = sphi 0, %s315
      %s319 = sphi 0, %s318
      %s335 = sphi 0, %s319
      %s341 = sphi 0, %s343
      %s344 = sphi 0, %s341
      %s345 = sphi 0, %s344
      %s361 = sphi 0, %s345
      %s367 = sphi 0, %s369
      %s370 = sphi 0, %s367
      %s371 = sphi 0, %s370
      %s387 = sphi 0, %s371
      %s393 = sphi 0, %s395
      %s396 = sphi 0, %s393
      %s397 = sphi 0, %s396
      %s413 = sphi 0, %s397
      %s419 = sphi 0, %s421
      %s422 = sphi 0, %s419
      %s423 = sphi 0, %s422
      %s439 = sphi 0, %s423
      %s445 = sphi 0, %s447
      %s448 = sphi 0, %s445
      %s449 = sphi 0, %s448
      %s465 = sphi 0, %s449
    $region4: #{tpu_custom_call.1} parent=1 // loop_header_branch
      %30 = sbr.rel (%p28) target = $region8
    $region5: #{tpu_custom_call.1} parent=1 // loop_body
      %s32 = ssub.s32 %s27, 1
      %s33 = ssub.s32 %s27, 2
      %s40 = sadd.s32 1, %s35
      %p41 = scmp.ge.s32.totalorder %s40, 3
      %s42 = scalar_select %p41, 0, %s40
      %s43 = sadd.s32 1, %s34
      %s44 = scalar_select %p41, %s43, %s34
      %p45 = scmp.ge.s32.totalorder %s44, 2
      %s46 = scalar_select %p45, 0, %s44
      %s47 = ssub.s32 %s34, %s46
      %p48 = scmp.eq.s32.totalorder %s47, 0
      %s50 = sadd.s32 %s49, 1
      %s51 = scalar_select %p48, %s49, %s50
      %p54 = pneg %p48
      %p55 = scmp.eq.s32.totalorder %s27, 5
      %p56 = por %p54, %p55
      %p57 = scmp.ne.s32.totalorder %s49, %s52
      %p58 = scmp.eq.s32.totalorder %s27, 0
      %p59 = por %p57, %p58
      %p60 = scmp.ne.s32.totalorder %s49, %s52
      %p61 = scmp.eq.s32.totalorder %s32, 5
      %p62 = por %p60, %p61
      %p63 = scmp.ne.s32.totalorder %s52, %s53
      %p64 = scmp.eq.s32.totalorder %s32, 0
      %p65 = por %p63, %p64
      %p66 = scmp.ne.s32.totalorder %s52, %s53
      %p67 = scmp.eq.s32.totalorder %s33, 5
      %p68 = por %p66, %p67
      %p70 = scmp.ne.s32.totalorder %s53, %s69
      %p71 = scmp.eq.s32.totalorder %s33, 0
      %p72 = por %p70, %p71
      %s74 = sadd.s32 %s73, 1
      %p77 = scmp.eq.s32.totalorder %s27, 5
      %p78 = scmp.ne.s32.totalorder %s73, %s75
      %p79 = scmp.eq.s32.totalorder %s27, 0
      %p80 = por %p78, %p79
      %p81 = scmp.ne.s32.totalorder %s73, %s75
      %p82 = scmp.eq.s32.totalorder %s32, 5
      %p83 = por %p81, %p82
      %p84 = scmp.ne.s32.totalorder %s75, %s76
      %p85 = scmp.eq.s32.totalorder %s32, 0
      %p86 = por %p84, %p85
      %p87 = scmp.ne.s32.totalorder %s75, %s76
      %p88 = scmp.eq.s32.totalorder %s33, 5
      %p89 = por %p87, %p88
      %p91 = scmp.ne.s32.totalorder %s76, %s90
      %p92 = scmp.eq.s32.totalorder %s33, 0
      %p93 = por %p91, %p92
      %s95 = sadd.s32 %s94, 1
      %p98 = scmp.eq.s32.totalorder %s27, 5
      %p99 = scmp.ne.s32.totalorder %s94, %s96
      %p100 = scmp.eq.s32.totalorder %s27, 0
      %p101 = por %p99, %p100
      %p102 = scmp.ne.s32.totalorder %s94, %s96
      %p103 = scmp.eq.s32.totalorder %s32, 5
      %p104 = por %p102, %p103
      %p105 = scmp.ne.s32.totalorder %s96, %s97
      %p106 = scmp.eq.s32.totalorder %s32, 0
      %p107 = por %p105, %p106
      %p108 = scmp.ne.s32.totalorder %s96, %s97
      %p109 = scmp.eq.s32.totalorder %s33, 5
      %p110 = por %p108, %p109
      %p112 = scmp.ne.s32.totalorder %s97, %s111
      %p113 = scmp.eq.s32.totalorder %s33, 0
      %p114 = por %p112, %p113
      %s116 = sadd.s32 %s115, 1
      %p119 = scmp.eq.s32.totalorder %s27, 5
      %p120 = scmp.ne.s32.totalorder %s115, %s117
      %p121 = scmp.eq.s32.totalorder %s27, 0
      %p122 = por %p120, %p121
      %p123 = scmp.ne.s32.totalorder %s115, %s117
      %p124 = scmp.eq.s32.totalorder %s32, 5
      %p125 = por %p123, %p124
      %p126 = scmp.ne.s32.totalorder %s117, %s118
      %p127 = scmp.eq.s32.totalorder %s32, 0
      %p128 = por %p126, %p127
      %p129 = scmp.ne.s32.totalorder %s117, %s118
      %p130 = scmp.eq.s32.totalorder %s33, 5
      %p131 = por %p129, %p130
      %p133 = scmp.ne.s32.totalorder %s118, %s132
      %p134 = scmp.eq.s32.totalorder %s33, 0
      %p135 = por %p133, %p134
      %s137 = sadd.s32 %s136, 1
      %p140 = scmp.eq.s32.totalorder %s27, 5
      %p141 = scmp.ne.s32.totalorder %s136, %s138
      %p142 = scmp.eq.s32.totalorder %s27, 0
      %p143 = por %p141, %p142
      %p144 = scmp.ne.s32.totalorder %s136, %s138
      %p145 = scmp.eq.s32.totalorder %s32, 5
      %p146 = por %p144, %p145
      %p147 = scmp.ne.s32.totalorder %s138, %s139
      %p148 = scmp.eq.s32.totalorder %s32, 0
      %p149 = por %p147, %p148
      %p150 = scmp.ne.s32.totalorder %s138, %s139
      %p151 = scmp.eq.s32.totalorder %s33, 5
      %p152 = por %p150, %p151
      %p154 = scmp.ne.s32.totalorder %s139, %s153
      %p155 = scmp.eq.s32.totalorder %s33, 0
      %p156 = por %p154, %p155
      %s157 = ssub.s32 %s35, %s42
      %p158 = scmp.eq.s32.totalorder %s157, 0
      %s160 = sadd.s32 %s159, 1
      %s161 = scalar_select %p158, %s159, %s160
      %p164 = pneg %p158
      %p165 = scmp.eq.s32.totalorder %s27, 5
      %p166 = por %p164, %p165
      %p167 = scmp.ne.s32.totalorder %s159, %s162
      %p168 = scmp.eq.s32.totalorder %s27, 0
      %p169 = por %p167, %p168
      %p170 = scmp.ne.s32.totalorder %s159, %s162
      %p171 = scmp.eq.s32.totalorder %s32, 5
      %p172 = por %p170, %p171
      %p173 = scmp.ne.s32.totalorder %s162, %s163
      %p174 = scmp.eq.s32.totalorder %s32, 0
      %p175 = por %p173, %p174
      %p176 = scmp.ne.s32.totalorder %s162, %s163
      %p177 = scmp.eq.s32.totalorder %s33, 5
      %p178 = por %p176, %p177
      %p180 = scmp.ne.s32.totalorder %s163, %s179
      %p181 = scmp.eq.s32.totalorder %s33, 0
      %p182 = por %p180, %p181
      %s183 = ssub.s32 %s35, %s42
      %p184 = scmp.eq.s32.totalorder %s183, 0
      %s186 = sadd.s32 %s185, 1
      %s187 = scalar_select %p184, %s185, %s186
      %p190 = pneg %p184
      %p191 = scmp.eq.s32.totalorder %s27, 5
      %p192 = por %p190, %p191
      %p193 = scmp.ne.s32.totalorder %s185, %s188
      %p194 = scmp.eq.s32.totalorder %s27, 0
      %p195 = por %p193, %p194
      %p196 = scmp.ne.s32.totalorder %s185, %s188
      %p197 = scmp.eq.s32.totalorder %s32, 5
      %p198 = por %p196, %p197
      %p199 = scmp.ne.s32.totalorder %s188, %s189
      %p200 = scmp.eq.s32.totalorder %s32, 0
      %p201 = por %p199, %p200
      %p202 = scmp.ne.s32.totalorder %s188, %s189
      %p203 = scmp.eq.s32.totalorder %s33, 5
      %p204 = por %p202, %p203
      %p206 = scmp.ne.s32.totalorder %s189, %s205
      %p207 = scmp.eq.s32.totalorder %s33, 0
      %p208 = por %p206, %p207
      %s209 = ssub.s32 %s35, %s42
      %p210 = scmp.eq.s32.totalorder %s209, 0
      %s212 = sadd.s32 %s211, 1
      %s213 = scalar_select %p210, %s211, %s212
      %p216 = pneg %p210
      %p217 = scmp.eq.s32.totalorder %s27, 5
      %p218 = por %p216, %p217
      %p219 = scmp.ne.s32.totalorder %s211, %s214
      %p220 = scmp.eq.s32.totalorder %s27, 0
      %p221 = por %p219, %p220
      %p222 = scmp.ne.s32.totalorder %s211, %s214
      %p223 = scmp.eq.s32.totalorder %s32, 5
      %p224 = por %p222, %p223
      %p225 = scmp.ne.s32.totalorder %s214, %s215
      %p226 = scmp.eq.s32.totalorder %s32, 0
      %p227 = por %p225, %p226
      %p228 = scmp.ne.s32.totalorder %s214, %s215
      %p229 = scmp.eq.s32.totalorder %s33, 5
      %p230 = por %p228, %p229
      %p232 = scmp.ne.s32.totalorder %s215, %s231
      %p233 = scmp.eq.s32.totalorder %s33, 0
      %p234 = por %p232, %p233
      %s235 = ssub.s32 %s35, %s42
      %p236 = scmp.eq.s32.totalorder %s235, 0
      %s238 = sadd.s32 %s237, 1
      %s239 = scalar_select %p236, %s237, %s238
      %p242 = pneg %p236
      %p243 = scmp.eq.s32.totalorder %s27, 5
      %p244 = por %p242, %p243
      %p245 = scmp.ne.s32.totalorder %s237, %s240
      %p246 = scmp.eq.s32.totalorder %s27, 0
      %p247 = por %p245, %p246
      %p248 = scmp.ne.s32.totalorder %s237, %s240
      %p249 = scmp.eq.s32.totalorder %s32, 5
      %p250 = por %p248, %p249
      %p251 = scmp.ne.s32.totalorder %s240, %s241
      %p252 = scmp.eq.s32.totalorder %s32, 0
      %p253 = por %p251, %p252
      %p254 = scmp.ne.s32.totalorder %s240, %s241
      %p255 = scmp.eq.s32.totalorder %s33, 5
      %p256 = por %p254, %p255
      %p258 = scmp.ne.s32.totalorder %s241, %s257
      %p259 = scmp.eq.s32.totalorder %s33, 0
      %p260 = por %p258, %p259
      %s261 = ssub.s32 %s35, %s42
      %p262 = scmp.eq.s32.totalorder %s261, 0
      %s264 = sadd.s32 %s263, 1
      %s265 = scalar_select %p262, %s263, %s264
      %p268 = pneg %p262
      %p269 = scmp.eq.s32.totalorder %s27, 5
      %p270 = por %p268, %p269
      %p271 = scmp.ne.s32.totalorder %s263, %s266
      %p272 = scmp.eq.s32.totalorder %s27, 0
      %p273 = por %p271, %p272
      %p274 = scmp.ne.s32.totalorder %s263, %s266
      %p275 = scmp.eq.s32.totalorder %s32, 5
      %p276 = por %p274, %p275
      %p277 = scmp.ne.s32.totalorder %s266, %s267
      %p278 = scmp.eq.s32.totalorder %s32, 0
      %p279 = por %p277, %p278
      %p280 = scmp.ne.s32.totalorder %s266, %s267
      %p281 = scmp.eq.s32.totalorder %s33, 5
      %p282 = por %p280, %p281
      %p284 = scmp.ne.s32.totalorder %s267, %s283
      %p285 = scmp.eq.s32.totalorder %s33, 0
      %p286 = por %p284, %p285
      %s287 = ssub.s32 %s35, %s42
      %p288 = scmp.eq.s32.totalorder %s287, 0
      %s290 = sadd.s32 %s289, 1
      %s291 = scalar_select %p288, %s289, %s290
      %p294 = pneg %p288
      %p295 = scmp.eq.s32.totalorder %s27, 5
      %p296 = por %p294, %p295
      %p297 = scmp.ne.s32.totalorder %s289, %s292
      %p298 = scmp.eq.s32.totalorder %s27, 0
      %p299 = por %p297, %p298
      %p300 = scmp.ne.s32.totalorder %s289, %s292
      %p301 = scmp.eq.s32.totalorder %s32, 5
      %p302 = por %p300, %p301
      %p303 = scmp.ne.s32.totalorder %s292, %s293
      %p304 = scmp.eq.s32.totalorder %s32, 0
      %p305 = por %p303, %p304
      %p306 = scmp.ne.s32.totalorder %s292, %s293
      %p307 = scmp.eq.s32.totalorder %s33, 5
      %p308 = por %p306, %p307
      %p310 = scmp.ne.s32.totalorder %s293, %s309
      %p311 = scmp.eq.s32.totalorder %s33, 0
      %p312 = por %p310, %p311
      %s313 = ssub.s32 %s35, %s42
      %p314 = scmp.eq.s32.totalorder %s313, 0
      %s316 = sadd.s32 %s315, 1
      %s317 = scalar_select %p314, %s315, %s316
      %p320 = pneg %p314
      %p321 = scmp.eq.s32.totalorder %s27, 5
      %p322 = por %p320, %p321
      %p323 = scmp.ne.s32.totalorder %s315, %s318
      %p324 = scmp.eq.s32.totalorder %s27, 0
      %p325 = por %p323, %p324
      %p326 = scmp.ne.s32.totalorder %s315, %s318
      %p327 = scmp.eq.s32.totalorder %s32, 5
      %p328 = por %p326, %p327
      %p329 = scmp.ne.s32.totalorder %s318, %s319
      %p330 = scmp.eq.s32.totalorder %s32, 0
      %p331 = por %p329, %p330
      %p332 = scmp.ne.s32.totalorder %s318, %s319
      %p333 = scmp.eq.s32.totalorder %s33, 5
      %p334 = por %p332, %p333
      %p336 = scmp.ne.s32.totalorder %s319, %s335
      %p337 = scmp.eq.s32.totalorder %s33, 0
      %p338 = por %p336, %p337
      %s339 = ssub.s32 %s35, %s42
      %p340 = scmp.eq.s32.totalorder %s339, 0
      %s342 = sadd.s32 %s341, 1
      %s343 = scalar_select %p340, %s341, %s342
      %p346 = pneg %p340
      %p347 = scmp.eq.s32.totalorder %s27, 5
      %p348 = por %p346, %p347
      %p349 = scmp.ne.s32.totalorder %s341, %s344
      %p350 = scmp.eq.s32.totalorder %s27, 0
      %p351 = por %p349, %p350
      %p352 = scmp.ne.s32.totalorder %s341, %s344
      %p353 = scmp.eq.s32.totalorder %s32, 5
      %p354 = por %p352, %p353
      %p355 = scmp.ne.s32.totalorder %s344, %s345
      %p356 = scmp.eq.s32.totalorder %s32, 0
      %p357 = por %p355, %p356
      %p358 = scmp.ne.s32.totalorder %s344, %s345
      %p359 = scmp.eq.s32.totalorder %s33, 5
      %p360 = por %p358, %p359
      %p362 = scmp.ne.s32.totalorder %s345, %s361
      %p363 = scmp.eq.s32.totalorder %s33, 0
      %p364 = por %p362, %p363
      %s365 = ssub.s32 %s35, %s42
      %p366 = scmp.eq.s32.totalorder %s365, 0
      %s368 = sadd.s32 %s367, 1
      %s369 = scalar_select %p366, %s367, %s368
      %p372 = pneg %p366
      %p373 = scmp.eq.s32.totalorder %s27, 5
      %p374 = por %p372, %p373
      %p375 = scmp.ne.s32.totalorder %s367, %s370
      %p376 = scmp.eq.s32.totalorder %s27, 0
      %p377 = por %p375, %p376
      %p378 = scmp.ne.s32.totalorder %s367, %s370
      %p379 = scmp.eq.s32.totalorder %s32, 5
      %p380 = por %p378, %p379
      %p381 = scmp.ne.s32.totalorder %s370, %s371
      %p382 = scmp.eq.s32.totalorder %s32, 0
      %p383 = por %p381, %p382
      %p384 = scmp.ne.s32.totalorder %s370, %s371
      %p385 = scmp.eq.s32.totalorder %s33, 5
      %p386 = por %p384, %p385
      %p388 = scmp.ne.s32.totalorder %s371, %s387
      %p389 = scmp.eq.s32.totalorder %s33, 0
      %p390 = por %p388, %p389
      %s391 = ssub.s32 %s35, %s42
      %p392 = scmp.eq.s32.totalorder %s391, 0
      %s394 = sadd.s32 %s393, 1
      %s395 = scalar_select %p392, %s393, %s394
      %p398 = pneg %p392
      %p399 = scmp.eq.s32.totalorder %s27, 5
      %p400 = por %p398, %p399
      %p401 = scmp.ne.s32.totalorder %s393, %s396
      %p402 = scmp.eq.s32.totalorder %s27, 0
      %p403 = por %p401, %p402
      %p404 = scmp.ne.s32.totalorder %s393, %s396
      %p405 = scmp.eq.s32.totalorder %s32, 5
      %p406 = por %p404, %p405
      %p407 = scmp.ne.s32.totalorder %s396, %s397
      %p408 = scmp.eq.s32.totalorder %s32, 0
      %p409 = por %p407, %p408
      %p410 = scmp.ne.s32.totalorder %s396, %s397
      %p411 = scmp.eq.s32.totalorder %s33, 5
      %p412 = por %p410, %p411
      %p414 = scmp.ne.s32.totalorder %s397, %s413
      %p415 = scmp.eq.s32.totalorder %s33, 0
      %p416 = por %p414, %p415
      %s417 = ssub.s32 %s35, %s42
      %p418 = scmp.eq.s32.totalorder %s417, 0
      %s420 = sadd.s32 %s419, 1
      %s421 = scalar_select %p418, %s419, %s420
      %p424 = pneg %p418
      %p425 = scmp.eq.s32.totalorder %s27, 5
      %p426 = por %p424, %p425
      %p427 = scmp.ne.s32.totalorder %s419, %s422
      %p428 = scmp.eq.s32.totalorder %s27, 0
      %p429 = por %p427, %p428
      %p430 = scmp.ne.s32.totalorder %s419, %s422
      %p431 = scmp.eq.s32.totalorder %s32, 5
      %p432 = por %p430, %p431
      %p433 = scmp.ne.s32.totalorder %s422, %s423
      %p434 = scmp.eq.s32.totalorder %s32, 0
      %p435 = por %p433, %p434
      %p436 = scmp.ne.s32.totalorder %s422, %s423
      %p437 = scmp.eq.s32.totalorder %s33, 5
      %p438 = por %p436, %p437
      %p440 = scmp.ne.s32.totalorder %s423, %s439
      %p441 = scmp.eq.s32.totalorder %s33, 0
      %p442 = por %p440, %p441
      %s443 = ssub.s32 %s34, %s46
      %p444 = scmp.eq.s32.totalorder %s443, 0
      %s446 = sadd.s32 %s445, 1
      %s447 = scalar_select %p444, %s445, %s446
      %p450 = pneg %p444
      %p451 = scmp.eq.s32.totalorder %s27, 5
      %p452 = por %p450, %p451
      %p453 = scmp.ne.s32.totalorder %s445, %s448
      %p454 = scmp.eq.s32.totalorder %s27, 0
      %p455 = por %p453, %p454
      %p456 = scmp.ne.s32.totalorder %s445, %s448
      %p457 = scmp.eq.s32.totalorder %s32, 5
      %p458 = por %p456, %p457
      %p459 = scmp.ne.s32.totalorder %s448, %s449
      %p460 = scmp.eq.s32.totalorder %s32, 0
      %p461 = por %p459, %p460
      %p462 = scmp.ne.s32.totalorder %s448, %s449
      %p463 = scmp.eq.s32.totalorder %s33, 5
      %p464 = por %p462, %p463
      %p466 = scmp.ne.s32.totalorder %s449, %s465
      %p467 = scmp.eq.s32.totalorder %s33, 0
      %p468 = por %p466, %p467
      %p469 = scmp.le.s32.totalorder 1, %s27
      %p470 = scmp.lt.s32.totalorder %s27, 7
      %p471 = pnand %p469, %p470
      %p472 = pneg %p471
      // Predicated region
      $region9: #{tpu_custom_call.1} parent=5 // pred_check
        _
      $region10: #{tpu_custom_call.1} parent=5 // pred_check_branch
        %474 = sbr.rel (%p471) target = $region12
      $region11: #{tpu_custom_call.1} parent=5 // pred_region
        %s475 = ssub.s32 %s27, 1
        // Predicated region
        $region13: #{tpu_custom_call.1} parent=11 // pred_check
          %p476 = pneg %p86
        $region14: #{tpu_custom_call.1} parent=11 // pred_check_branch
          %478 = sbr.rel (%p476) target = $region16
        $region15: #{tpu_custom_call.1} parent=11 // pred_region
          %480 = vsyncadd [#allocation5], 0
          %s481 = sshll.u32 %s1, 4
          %s482 = int_to_ptr.hbm [resolvable:$true] %s481
          %s483 = sshll.u32 [#allocation4], 4
          %s484 = int_to_ptr.vmem [resolvable:$true] %s483
          %489 = dma.hbm_to_vmem [thread:$0]  %s482, 512, %s484, [#allocation5], 64, 64, 4
        $region16: #{tpu_custom_call.1} parent=11 // pred_fallthru
          _
        // Predicated region
        $region17: #{tpu_custom_call.1} parent=11 // pred_check
          %p490 = pneg %p107
        $region18: #{tpu_custom_call.1} parent=11 // pred_check_branch
          %492 = sbr.rel (%p490) target = $region20
        $region19: #{tpu_custom_call.1} parent=11 // pred_region
          _
        $region20: #{tpu_custom_call.1} parent=11 // pred_fallthru
          _
        // Predicated region
        $region21: #{tpu_custom_call.1} parent=11 // pred_check
          %p493 = pneg %p128
        $region22: #{tpu_custom_call.1} parent=11 // pred_check_branch
          %495 = sbr.rel (%p493) target = $region24
        $region23: #{tpu_custom_call.1} parent=11 // pred_region
          _
        $region24: #{tpu_custom_call.1} parent=11 // pred_fallthru
          _
        // Predicated region
        $region25: #{tpu_custom_call.1} parent=11 // pred_check
          %p496 = pneg %p149
        $region26: #{tpu_custom_call.1} parent=11 // pred_check_branch
          %498 = sbr.rel (%p496) target = $region28
        $region27: #{tpu_custom_call.1} parent=11 // pred_region
          %500 = vsyncadd [#allocation8], 0
          %s501 = sshll.u32 %s4, 4
          %s502 = int_to_ptr.hbm [resolvable:$true] %s501
          %s503 = sshll.u32 [#allocation7], 4
          %s504 = int_to_ptr.vmem [resolvable:$true] %s503
          %509 = dma.hbm_to_vmem [thread:$0]  %s502, 384, %s504, [#allocation8], 128, 128, 8
        $region28: #{tpu_custom_call.1} parent=11 // pred_fallthru
          _
      $region12: #{tpu_custom_call.1} parent=5 // pred_fallthru
        _
      %p510 = scmp.lt.s32.totalorder %s27, 6
      // Predicated region
      $region29: #{tpu_custom_call.1} parent=5 // pred_check
        %p511 = pneg %p510
      $region30: #{tpu_custom_call.1} parent=5 // pred_check_branch
        %513 = sbr.rel (%p511) target = $region32
      $region31: #{tpu_custom_call.1} parent=5 // pred_region
        // Predicated region
        $region33: #{tpu_custom_call.1} parent=31 // pred_check
          %p514 = pneg %p59
        $region34: #{tpu_custom_call.1} parent=31 // pred_check_branch
          %516 = sbr.rel (%p514) target = $region36
        $region35: #{tpu_custom_call.1} parent=31 // pred_region
          %s517 = smul.u32 16, %s34
          %p518 = scmp.lt.s32.totalorder %s517, 31
          %s519 = scalar_select %p518, %s517, 31
          %s520 = smul.addr %s519, 8
          %s521 = scalar_lea.vmem %s0, %s520
          %s522 = smul.u32 16, %s34
        $region36: #{tpu_custom_call.1} parent=31 // pred_fallthru
          _
        // Predicated region
        $region37: #{tpu_custom_call.1} parent=31 // pred_check
          %p523 = pneg %p169
        $region38: #{tpu_custom_call.1} parent=31 // pred_check_branch
          %525 = sbr.rel (%p523) target = $region40
        $region39: #{tpu_custom_call.1} parent=31 // pred_region
          %p526 = scmp.lt.s32.totalorder %s35, 2
          %s527 = scalar_select %p526, %s35, 2
          %s528 = scalar_lea.vmem %s5, %s527
        $region40: #{tpu_custom_call.1} parent=31 // pred_fallthru
          _
        // Predicated region
        $region41: #{tpu_custom_call.1} parent=31 // pred_check
          %p529 = pneg %p195
        $region42: #{tpu_custom_call.1} parent=31 // pred_check_branch
          %531 = sbr.rel (%p529) target = $region44
        $region43: #{tpu_custom_call.1} parent=31 // pred_region
          %s532 = sand.u32 %s27, 1
          %s533 = scalar_lea.sflag [#allocation5], %s532
          %s534 = sand.u32 %s185, 1
          %s535 = scalar_lea.vmem [#allocation9], %s534
          %537 = vsyncadd %s533, 0
          %s538 = scalar_lea.hbm %s6, %s35
          %s540 = sshll.u32 %s538, 4
          %s541 = int_to_ptr.hbm [resolvable:$true] %s540
          %s542 = sshll.u32 %s535, 4
          %s543 = int_to_ptr.vmem [resolvable:$true] %s542
          %545 = dma.hbm_to_vmem [thread:$0]  %s541, 16, %s543, %s533
        $region44: #{tpu_custom_call.1} parent=31 // pred_fallthru
          _
        // Predicated region
        $region45: #{tpu_custom_call.1} parent=31 // pred_check
          %p546 = pneg %p221
        $region46: #{tpu_custom_call.1} parent=31 // pred_check_branch
          %548 = sbr.rel (%p546) target = $region48
        $region47: #{tpu_custom_call.1} parent=31 // pred_region
          %s549 = sand.u32 %s27, 1
          %s550 = scalar_lea.sflag [#allocation5], %s549
          %s551 = sand.u32 %s211, 1
          %s552 = smul.addr %s551, 192
          %s553 = scalar_lea.vmem [#allocation10], %s552
          %555 = vsyncadd %s550, 0
          %s556 = smul.addr %s35, 48
          %s557 = smul.addr %s556, 4
          %s558 = scalar_lea.hbm %s7, %s557
          %s559 = sshll.u32 %s558, 4
          %s560 = int_to_ptr.hbm [resolvable:$true] %s559
          %s561 = sshll.u32 %s553, 4
          %s562 = int_to_ptr.vmem [resolvable:$true] %s561
          %567 = dma.hbm_to_vmem [thread:$0]  %s560, 3072, %s562, %s550, 192, 192, 12
        $region48: #{tpu_custom_call.1} parent=31 // pred_fallthru
          _
        // Predicated region
        $region49: #{tpu_custom_call.1} parent=31 // pred_check
          %p568 = pneg %p247
        $region50: #{tpu_custom_call.1} parent=31 // pred_check_branch
          %570 = sbr.rel (%p568) target = $region52
        $region51: #{tpu_custom_call.1} parent=31 // pred_region
          %s571 = sand.u32 %s27, 1
          %s572 = scalar_lea.sflag [#allocation5], %s571
          %s573 = sand.u32 %s237, 1
          %s574 = smul.addr %s573, 64
          %s575 = scalar_lea.vmem [#allocation11], %s574
          %577 = vsyncadd %s572, 0
          %s578 = smul.addr %s35, 16
          %s579 = smul.addr %s578, 4
          %s580 = scalar_lea.hbm %s8, %s579
          %s581 = sshll.u32 %s580, 4
          %s582 = int_to_ptr.hbm [resolvable:$true] %s581
          %s583 = sshll.u32 %s575, 4
          %s584 = int_to_ptr.vmem [resolvable:$true] %s583
          %589 = dma.hbm_to_vmem [thread:$0]  %s582, 1024, %s584, %s572, 64, 64, 4
        $region52: #{tpu_custom_call.1} parent=31 // pred_fallthru
          _
        // Predicated region
        $region53: #{tpu_custom_call.1} parent=31 // pred_check
          %p590 = pneg %p273
        $region54: #{tpu_custom_call.1} parent=31 // pred_check_branch
          %592 = sbr.rel (%p590) target = $region56
        $region55: #{tpu_custom_call.1} parent=31 // pred_region
          %s593 = sand.u32 %s27, 1
          %s594 = scalar_lea.sflag [#allocation5], %s593
          %s595 = sand.u32 %s263, 1
          %s596 = scalar_lea.vmem [#allocation12], %s595
          %598 = vsyncadd %s594, 0
          %s599 = scalar_lea.hbm %s9, %s35
          %s601 = sshll.u32 %s599, 4
          %s602 = int_to_ptr.hbm [resolvable:$true] %s601
          %s603 = sshll.u32 %s596, 4
          %s604 = int_to_ptr.vmem [resolvable:$true] %s603
          %606 = dma.hbm_to_vmem [thread:$0]  %s602, 16, %s604, %s594
        $region56: #{tpu_custom_call.1} parent=31 // pred_fallthru
          _
        // Predicated region
        $region57: #{tpu_custom_call.1} parent=31 // pred_check
          %p607 = pneg %p299
        $region58: #{tpu_custom_call.1} parent=31 // pred_check_branch
          %609 = sbr.rel (%p607) target = $region60
        $region59: #{tpu_custom_call.1} parent=31 // pred_region
          %s610 = sand.u32 %s27, 1
          %s611 = scalar_lea.sflag [#allocation5], %s610
          %s612 = sand.u32 %s289, 1
          %s613 = scalar_lea.vmem [#allocation13], %s612
          %615 = vsyncadd %s611, 0
          %s616 = scalar_lea.hbm %s10, %s35
          %s618 = sshll.u32 %s616, 4
          %s619 = int_to_ptr.hbm [resolvable:$true] %s618
          %s620 = sshll.u32 %s613, 4
          %s621 = int_to_ptr.vmem [resolvable:$true] %s620
          %623 = dma.hbm_to_vmem [thread:$0]  %s619, 16, %s621, %s611
        $region60: #{tpu_custom_call.1} parent=31 // pred_fallthru
          _
        // Predicated region
        $region61: #{tpu_custom_call.1} parent=31 // pred_check
          %p624 = pneg %p325
        $region62: #{tpu_custom_call.1} parent=31 // pred_check_branch
          %626 = sbr.rel (%p624) target = $region64
        $region63: #{tpu_custom_call.1} parent=31 // pred_region
          %s627 = sand.u32 %s27, 1
          %s628 = scalar_lea.sflag [#allocation5], %s627
          %s629 = sand.u32 %s315, 1
          %s630 = scalar_lea.vmem [#allocation14], %s629
          %632 = vsyncadd %s628, 0
          %s633 = scalar_lea.hbm %s11, %s35
          %s635 = sshll.u32 %s633, 4
          %s636 = int_to_ptr.hbm [resolvable:$true] %s635
          %s637 = sshll.u32 %s630, 4
          %s638 = int_to_ptr.vmem [resolvable:$true] %s637
          %640 = dma.hbm_to_vmem [thread:$0]  %s636, 16, %s638, %s628
        $region64: #{tpu_custom_call.1} parent=31 // pred_fallthru
          _
        // Predicated region
        $region65: #{tpu_custom_call.1} parent=31 // pred_check
          %p641 = pneg %p351
        $region66: #{tpu_custom_call.1} parent=31 // pred_check_branch
          %643 = sbr.rel (%p641) target = $region68
        $region67: #{tpu_custom_call.1} parent=31 // pred_region
          %p644 = scmp.lt.s32.totalorder %s35, 2
          %s645 = scalar_select %p644, %s35, 2
          %s646 = smul.addr %s645, 32
          %s647 = smul.addr %s646, 4
          %s648 = scalar_lea.vmem %s12, %s647
        $region68: #{tpu_custom_call.1} parent=31 // pred_fallthru
          _
        // Predicated region
        $region69: #{tpu_custom_call.1} parent=31 // pred_check
          %p649 = pneg %p377
        $region70: #{tpu_custom_call.1} parent=31 // pred_check_branch
          %651 = sbr.rel (%p649) target = $region72
        $region71: #{tpu_custom_call.1} parent=31 // pred_region
          %p652 = scmp.lt.s32.totalorder %s35, 2
          %s653 = scalar_select %p652, %s35, 2
          %s654 = smul.addr %s653, 2
          %s655 = scalar_lea.vmem %s13, %s654
        $region72: #{tpu_custom_call.1} parent=31 // pred_fallthru
          _
        // Predicated region
        $region73: #{tpu_custom_call.1} parent=31 // pred_check
          %p656 = pneg %p403
        $region74: #{tpu_custom_call.1} parent=31 // pred_check_branch
          %658 = sbr.rel (%p656) target = $region76
        $region75: #{tpu_custom_call.1} parent=31 // pred_region
          %s659 = sand.u32 %s27, 1
          %s660 = scalar_lea.sflag [#allocation5], %s659
          %s661 = sand.u32 %s393, 1
          %s662 = smul.addr %s661, 128
          %s663 = scalar_lea.vmem [#allocation15], %s662
          %665 = vsyncadd %s660, 0
          %s666 = smul.addr %s35, 32
          %s667 = smul.addr %s666, 4
          %s668 = scalar_lea.hbm %s14, %s667
          %s669 = sshll.u32 %s668, 4
          %s670 = int_to_ptr.hbm [resolvable:$true] %s669
          %s671 = sshll.u32 %s663, 4
          %s672 = int_to_ptr.vmem [resolvable:$true] %s671
          %677 = dma.hbm_to_vmem [thread:$0]  %s670, 2048, %s672, %s660, 64, 64, 4
        $region76: #{tpu_custom_call.1} parent=31 // pred_fallthru
          _
        // Predicated region
        $region77: #{tpu_custom_call.1} parent=31 // pred_check
          %p678 = pneg %p429
        $region78: #{tpu_custom_call.1} parent=31 // pred_check_branch
          %680 = sbr.rel (%p678) target = $region80
        $region79: #{tpu_custom_call.1} parent=31 // pred_region
          %p681 = scmp.lt.s32.totalorder %s35, 2
          %s682 = scalar_select %p681, %s35, 2
          %s683 = scalar_lea.vmem %s15, %s682
        $region80: #{tpu_custom_call.1} parent=31 // pred_fallthru
          _
      $region32: #{tpu_custom_call.1} parent=5 // pred_fallthru
        _
      %p684 = scmp.le.s32.totalorder 1, %s27
      %p685 = scmp.lt.s32.totalorder %s27, 7
      %p686 = pnand %p684, %p685
      %p687 = pneg %p686
      // Predicated region
      $region81: #{tpu_custom_call.1} parent=5 // pred_check
        _
      $region82: #{tpu_custom_call.1} parent=5 // pred_check_branch
        %689 = sbr.rel (%p686) target = $region84
      $region83: #{tpu_custom_call.1} parent=5 // pred_region
        %s690 = ssub.s32 %s27, 1
        // Predicated region
        $region85: #{tpu_custom_call.1} parent=83 // pred_check
          %p691 = pneg %p86
        $region86: #{tpu_custom_call.1} parent=83 // pred_check_branch
          %693 = sbr.rel (%p691) target = $region88
        $region87: #{tpu_custom_call.1} parent=83 // pred_region
          %695 = dma.done [#allocation5], 512
        $region88: #{tpu_custom_call.1} parent=83 // pred_fallthru
          _
        // Predicated region
        $region89: #{tpu_custom_call.1} parent=83 // pred_check
          %p696 = pneg %p149
        $region90: #{tpu_custom_call.1} parent=83 // pred_check_branch
          %698 = sbr.rel (%p696) target = $region92
        $region91: #{tpu_custom_call.1} parent=83 // pred_region
          %700 = dma.done [#allocation8], 384
        $region92: #{tpu_custom_call.1} parent=83 // pred_fallthru
          _
        %s701 = sand.u32 %s32, 1
        %s702 = scalar_lea.sflag [#allocation5], %s701
        %s703 = sand.u32 %s188, 1
        %s704 = scalar_lea.vmem [#allocation9], %s703
        // Predicated region
        $region93: #{tpu_custom_call.1} parent=83 // pred_check
          %p705 = pneg %p201
        $region94: #{tpu_custom_call.1} parent=83 // pred_check_branch
          %707 = sbr.rel (%p705) target = $region96
        $region95: #{tpu_custom_call.1} parent=83 // pred_region
          %709 = dma.done %s702, 16
        $region96: #{tpu_custom_call.1} parent=83 // pred_fallthru
          _
        %s710 = sand.u32 %s32, 1
        %s711 = scalar_lea.sflag [#allocation5], %s710
        %s712 = sand.u32 %s214, 1
        %s713 = smul.addr %s712, 192
        %s714 = scalar_lea.vmem [#allocation10], %s713
        // Predicated region
        $region97: #{tpu_custom_call.1} parent=83 // pred_check
          %p715 = pneg %p227
        $region98: #{tpu_custom_call.1} parent=83 // pred_check_branch
          %717 = sbr.rel (%p715) target = $region100
        $region99: #{tpu_custom_call.1} parent=83 // pred_region
          %719 = dma.done %s711, 3072
        $region100: #{tpu_custom_call.1} parent=83 // pred_fallthru
          _
        %s720 = sand.u32 %s32, 1
        %s721 = scalar_lea.sflag [#allocation5], %s720
        %s722 = sand.u32 %s240, 1
        %s723 = smul.addr %s722, 64
        %s724 = scalar_lea.vmem [#allocation11], %s723
        // Predicated region
        $region101: #{tpu_custom_call.1} parent=83 // pred_check
          %p725 = pneg %p253
        $region102: #{tpu_custom_call.1} parent=83 // pred_check_branch
          %727 = sbr.rel (%p725) target = $region104
        $region103: #{tpu_custom_call.1} parent=83 // pred_region
          %729 = dma.done %s721, 1024
        $region104: #{tpu_custom_call.1} parent=83 // pred_fallthru
          _
        %s730 = sand.u32 %s32, 1
        %s731 = scalar_lea.sflag [#allocation5], %s730
        %s732 = sand.u32 %s266, 1
        %s733 = scalar_lea.vmem [#allocation12], %s732
        // Predicated region
        $region105: #{tpu_custom_call.1} parent=83 // pred_check
          %p734 = pneg %p279
        $region106: #{tpu_custom_call.1} parent=83 // pred_check_branch
          %736 = sbr.rel (%p734) target = $region108
        $region107: #{tpu_custom_call.1} parent=83 // pred_region
          %738 = dma.done %s731, 16
        $region108: #{tpu_custom_call.1} parent=83 // pred_fallthru
          _
        %s739 = sand.u32 %s32, 1
        %s740 = scalar_lea.sflag [#allocation5], %s739
        %s741 = sand.u32 %s292, 1
        %s742 = scalar_lea.vmem [#allocation13], %s741
        // Predicated region
        $region109: #{tpu_custom_call.1} parent=83 // pred_check
          %p743 = pneg %p305
        $region110: #{tpu_custom_call.1} parent=83 // pred_check_branch
          %745 = sbr.rel (%p743) target = $region112
        $region111: #{tpu_custom_call.1} parent=83 // pred_region
          %747 = dma.done %s740, 16
        $region112: #{tpu_custom_call.1} parent=83 // pred_fallthru
          _
        %s748 = sand.u32 %s32, 1
        %s749 = scalar_lea.sflag [#allocation5], %s748
        %s750 = sand.u32 %s318, 1
        %s751 = scalar_lea.vmem [#allocation14], %s750
        // Predicated region
        $region113: #{tpu_custom_call.1} parent=83 // pred_check
          %p752 = pneg %p331
        $region114: #{tpu_custom_call.1} parent=83 // pred_check_branch
          %754 = sbr.rel (%p752) target = $region116
        $region115: #{tpu_custom_call.1} parent=83 // pred_region
          %756 = dma.done %s749, 16
        $region116: #{tpu_custom_call.1} parent=83 // pred_fallthru
          _
        %s757 = sand.u32 %s32, 1
        %s758 = scalar_lea.sflag [#allocation5], %s757
        %s759 = sand.u32 %s396, 1
        %s760 = smul.addr %s759, 128
        %s761 = scalar_lea.vmem [#allocation15], %s760
        // Predicated region
        $region117: #{tpu_custom_call.1} parent=83 // pred_check
          %p762 = pneg %p409
        $region118: #{tpu_custom_call.1} parent=83 // pred_check_branch
          %764 = sbr.rel (%p762) target = $region120
        $region119: #{tpu_custom_call.1} parent=83 // pred_region
          %766 = dma.done %s758, 2048
        $region120: #{tpu_custom_call.1} parent=83 // pred_fallthru
          _
        %s767 = smul.u32 16, %s36
        %p768 = scmp.lt.s32.totalorder %s767, 31
        %s769 = scalar_select %p768, %s767, 31
        %s770 = smul.addr %s769, 8
        %s771 = scalar_lea.vmem %s0, %s770
        %p772 = pneg %p65
        %p773 = pneg %p62
        %p774 = pneg %p86
        %p775 = pneg %p83
        %p776 = pneg %p107
        %p777 = pneg %p104
        %p778 = pneg %p128
        %p779 = pneg %p125
        %p780 = pneg %p149
        %p781 = pneg %p146
        %p782 = scmp.lt.s32.totalorder %s37, 2
        %s783 = scalar_select %p782, %s37, 2
        %s784 = scalar_lea.vmem %s5, %s783
        %p785 = pneg %p175
        %p786 = pneg %p172
        %s787 = sand.u32 %s32, 1
        %s788 = scalar_lea.sflag [#allocation5], %s787
        %s789 = sand.u32 %s188, 1
        %s790 = scalar_lea.vmem [#allocation9], %s789
        %p791 = pneg %p201
        %p792 = pneg %p198
        %s793 = sand.u32 %s32, 1
        %s794 = scalar_lea.sflag [#allocation5], %s793
        %s795 = sand.u32 %s214, 1
        %s796 = smul.addr %s795, 192
        %s797 = scalar_lea.vmem [#allocation10], %s796
        %p798 = pneg %p227
        %p799 = pneg %p224
        %s800 = sand.u32 %s32, 1
        %s801 = scalar_lea.sflag [#allocation5], %s800
        %s802 = sand.u32 %s240, 1
        %s803 = smul.addr %s802, 64
        %s804 = scalar_lea.vmem [#allocation11], %s803
        %p805 = pneg %p253
        %p806 = pneg %p250
        %s807 = sand.u32 %s32, 1
        %s808 = scalar_lea.sflag [#allocation5], %s807
        %s809 = sand.u32 %s266, 1
        %s810 = scalar_lea.vmem [#allocation12], %s809
        %p811 = pneg %p279
        %p812 = pneg %p276
        %s813 = sand.u32 %s32, 1
        %s814 = scalar_lea.sflag [#allocation5], %s813
        %s815 = sand.u32 %s292, 1
        %s816 = scalar_lea.vmem [#allocation13], %s815
        %p817 = pneg %p305
        %p818 = pneg %p302
        %s819 = sand.u32 %s32, 1
        %s820 = scalar_lea.sflag [#allocation5], %s819
        %s821 = sand.u32 %s318, 1
        %s822 = scalar_lea.vmem [#allocation14], %s821
        %p823 = pneg %p331
        %p824 = pneg %p328
        %p825 = scmp.lt.s32.totalorder %s37, 2
        %s826 = scalar_select %p825, %s37, 2
        %s827 = smul.addr %s826, 32
        %s828 = smul.addr %s827, 4
        %s829 = scalar_lea.vmem %s12, %s828
        %p830 = pneg %p357
        %p831 = pneg %p354
        %p832 = scmp.lt.s32.totalorder %s37, 2
        %s833 = scalar_select %p832, %s37, 2
        %s834 = smul.addr %s833, 2
        %s835 = scalar_lea.vmem %s13, %s834
        %p836 = pneg %p383
        %p837 = pneg %p380
        %s838 = sand.u32 %s32, 1
        %s839 = scalar_lea.sflag [#allocation5], %s838
        %s840 = sand.u32 %s396, 1
        %s841 = smul.addr %s840, 128
        %s842 = scalar_lea.vmem [#allocation15], %s841
        %p843 = pneg %p409
        %p844 = pneg %p406
        %p845 = scmp.lt.s32.totalorder %s37, 2
        %s846 = scalar_select %p845, %s37, 2
        %s847 = scalar_lea.vmem %s15, %s846
        %p848 = pneg %p435
        %p849 = pneg %p432
        %p850 = pneg %p461
        %p851 = pneg %p458
        %s852 = sand.u32 %s448, 1
        %s853 = scalar_lea.sflag [#allocation6], %s852
        %s854 = sand.u32 %s448, 1
        %s855 = smul.addr %s854, 136
        %s856 = scalar_lea.vmem [#allocation16], %s855
        %s857 = smul.u32 16, %s36
        %p858 = scmp.lt.s32.totalorder %s857, 31
        %s859 = scalar_select %p858, %s857, 31
        %s860 = smul.addr %s859, 8
        %s861 = scalar_lea.vmem %s0, %s860
        %s862 = smul.u32 16, %s36
        %p863 = scmp.lt.s32.totalorder %s37, 2
        %s864 = scalar_select %p863, %s37, 2
        %s865 = scalar_lea.vmem %s5, %s864
        %p866 = scmp.lt.s32.totalorder %s37, 2
        %s867 = scalar_select %p866, %s37, 2
        %s868 = smul.addr %s867, 32
        %s869 = smul.addr %s868, 4
        %s870 = scalar_lea.vmem %s12, %s869
        %p871 = scmp.lt.s32.totalorder %s37, 2
        %s872 = scalar_select %p871, %s37, 2
        %s873 = smul.addr %s872, 2
        %s874 = scalar_lea.vmem %s13, %s873
        %p875 = scmp.lt.s32.totalorder %s37, 2
        %s876 = scalar_select %p875, %s37, 2
        %s877 = scalar_lea.vmem %s15, %s876
        %s878 = smul.u32 17, %s36
        %p880 = scmp.eq.s32.totalorder %s37, 0
        // Predicated region
        $region121: #{tpu_custom_call.1} parent=83 // pred_check
          %p881 = pneg %p880
        $region122: #{tpu_custom_call.1} parent=83 // pred_check_branch
          %883 = sbr.rel (%p881) target = $region124
        $region123: #{tpu_custom_call.1} parent=83 // pred_region
          %v884 = vld [vmem:[%s861] sm:$0xff]
          %v885 = vld [vmem:[%s861 + $0x8] sm:$0xff]
          %v886 = vld [vmem:[%s861 + $0x10] sm:$0xff]
          %v887 = vld [vmem:[%s861 + $0x18] sm:$0xff]
          %v888 = vld [vmem:[%s861 + $0x20] sm:$0xff]
          %v889 = vld [vmem:[%s861 + $0x28] sm:$0xff]
          %v890 = vld [vmem:[%s861 + $0x30] sm:$0xff]
          %v891 = vld [vmem:[%s861 + $0x38] sm:$0xff]
          %v892 = vld [vmem:[%s861 + $0x40] sm:$0xff]
          %v893 = vld [vmem:[%s861 + $0x48] sm:$0xff]
          %v894 = vld [vmem:[%s861 + $0x50] sm:$0xff]
          %v895 = vld [vmem:[%s861 + $0x58] sm:$0xff]
          %v896 = vld [vmem:[%s861 + $0x60] sm:$0xff]
          %v897 = vld [vmem:[%s861 + $0x68] sm:$0xff]
          %v898 = vld [vmem:[%s861 + $0x70] sm:$0xff]
          %v899 = vld [vmem:[%s861 + $0x78] sm:$0xff]
          %v900 = vpack.c.bf16 %v885, %v884
          %v901 = vpack.c.bf16 %v887, %v886
          %v902 = vpack.c.bf16 %v889, %v888
          %v903 = vpack.c.bf16 %v891, %v890
          %v904 = vpack.c.bf16 %v893, %v892
          %v905 = vpack.c.bf16 %v895, %v894
          %v906 = vpack.c.bf16 %v897, %v896
          %v907 = vpack.c.bf16 %v899, %v898
          %v908 = vld [vmem:[#allocation4] sm:$0xf]
          %v909 = vld [vmem:[#allocation4 + $0x4] sm:$0xf]
          %v910 = vld [vmem:[#allocation4 + $0x8] sm:$0xf]
          %v911 = vld [vmem:[#allocation4 + $0xc] sm:$0xf]
          %v912 = vld [vmem:[#allocation4 + $0x10] sm:$0xf]
          %v913 = vld [vmem:[#allocation4 + $0x14] sm:$0xf]
          %v914 = vld [vmem:[#allocation4 + $0x18] sm:$0xf]
          %v915 = vld [vmem:[#allocation4 + $0x1c] sm:$0xf]
          %v916 = vld [vmem:[%s2] sm:$0x1]
          %v918 = vperm.slane %v916, 0
          %v928 = vunpack.c.l.b16 %v908
          %v929 = vunpack.c.l.b16 %v909
          %v930 = vunpack.c.l.b16 %v910
          %v931 = vunpack.c.l.b16 %v911
          %v932 = vunpack.c.l.b16 %v912
          %v933 = vunpack.c.l.b16 %v913
          %v934 = vunpack.c.l.b16 %v914
          %v935 = vunpack.c.l.b16 %v915
          %v936 = vpack.c.b16 %v929, %v928
          %v937 = vpack.c.b16 %v931, %v930
          %v938 = vpack.c.b16 %v933, %v932
          %v939 = vpack.c.b16 %v935, %v934
          %vm944 = vcmask 523264
          %v946 = vsel %vm944, %v900, 0
          %v949 = vsel %vm944, %v901, 0
          %v952 = vsel %vm944, %v902, 0
          %v955 = vsel %vm944, %v903, 0
          %v958 = vsel %vm944, %v904, 0
          %v961 = vsel %vm944, %v905, 0
          %v964 = vsel %vm944, %v906, 0
          %v967 = vsel %vm944, %v907, 0
          %969 = vmatpush.bf16.msra.mxu0 0
          %970 = vmatpush.bf16.msra.mxu0 0
          %971 = vmatpush.bf16.msra.mxu0 0
          %972 = vmatpush.bf16.msra.mxu0 0
          %973 = vmatpush.bf16.msra.mxu0 %v939
          %974 = vmatpush.bf16.msra.mxu0 %v938
          %975 = vmatpush.bf16.msra.mxu0 %v937
          %976 = vmatpush.bf16.msra.mxu0 %v936
          %977 = vmatmul.bf16.gmra.mxu0 %v946
          %v978 = vpop.f32.mrf.mxu0
          %v979 = vadd.f32 %v918, %v978
          %v980 = vpop.f32.mrf.mxu0
          %v981 = vadd.f32 %v918, %v980
          %982 = vmatmul.bf16.gmra.mxu0 %v949
          %v983 = vpop.f32.mrf.mxu0
          %v984 = vadd.f32 %v918, %v983
          %v985 = vpop.f32.mrf.mxu0
          %v986 = vadd.f32 %v918, %v985
          %987 = vmatmul.bf16.gmra.mxu0 %v952
          %v988 = vpop.f32.mrf.mxu0
          %v989 = vadd.f32 %v918, %v988
          %v990 = vpop.f32.mrf.mxu0
          %v991 = vadd.f32 %v918, %v990
          %992 = vmatmul.bf16.gmra.mxu0 %v955
          %v993 = vpop.f32.mrf.mxu0
          %v994 = vadd.f32 %v918, %v993
          %v995 = vpop.f32.mrf.mxu0
          %v996 = vadd.f32 %v918, %v995
          %997 = vmatmul.bf16.gmra.mxu0 %v958
          %v998 = vpop.f32.mrf.mxu0
          %v999 = vadd.f32 %v918, %v998
          %v1000 = vpop.f32.mrf.mxu0
          %v1001 = vadd.f32 %v918, %v1000
          %1002 = vmatmul.bf16.gmra.mxu0 %v961
          %v1003 = vpop.f32.mrf.mxu0
          %v1004 = vadd.f32 %v918, %v1003
          %v1005 = vpop.f32.mrf.mxu0
          %v1006 = vadd.f32 %v918, %v1005
          %1007 = vmatmul.bf16.gmra.mxu0 %v964
          %v1008 = vpop.f32.mrf.mxu0
          %v1009 = vadd.f32 %v918, %v1008
          %v1010 = vpop.f32.mrf.mxu0
          %v1011 = vadd.f32 %v918, %v1010
          %1012 = vmatmul.bf16.gmra.mxu0 %v967
          %v1013 = vpop.f32.mrf.mxu0
          %v1014 = vadd.f32 %v918, %v1013
          %v1015 = vpop.f32.mrf.mxu0
          %v1016 = vadd.f32 %v918, %v1015
          %1017 = vdwg.mxu0
          %v1018 = vld [vmem:[%s3] sm:$0x1]
          %v1019 = vld [vmem:[#allocation7] sm:$0x1]
          %v1020 = vadd.f32 %v1018, %v1019
          %v1021 = vld [vmem:[#allocation7 + $0x1] sm:$0xff]
          %v1022 = vld [vmem:[#allocation7 + $0x9] sm:$0xff]
          %1023 = vst [vmem:[%s856] sm:$0x1] %v1020
          %v1024 = vadd.f32 %v979, %v1021
          %v1025 = vadd.f32 %v981, %v1022
          %1026 = vst [vmem:[%s856 + $0x1] sm:$0xff] %v1024
          %1027 = vst [vmem:[%s856 + $0x9] sm:$0xff] %v1025
          %1028 = vst [vmem:[%s856 + $0x11] sm:$0x1] %v1020
          %v1029 = vadd.f32 %v984, %v1021
          %v1030 = vadd.f32 %v986, %v1022
          %1031 = vst [vmem:[%s856 + $0x12] sm:$0xff] %v1029
          %1032 = vst [vmem:[%s856 + $0x1a] sm:$0xff] %v1030
          %1033 = vst [vmem:[%s856 + $0x22] sm:$0x1] %v1020
          %v1034 = vadd.f32 %v989, %v1021
          %v1035 = vadd.f32 %v991, %v1022
          %1036 = vst [vmem:[%s856 + $0x23] sm:$0xff] %v1034
          %1037 = vst [vmem:[%s856 + $0x2b] sm:$0xff] %v1035
          %1038 = vst [vmem:[%s856 + $0x33] sm:$0x1] %v1020
          %v1039 = vadd.f32 %v994, %v1021
          %v1040 = vadd.f32 %v996, %v1022
          %1041 = vst [vmem:[%s856 + $0x34] sm:$0xff] %v1039
          %1042 = vst [vmem:[%s856 + $0x3c] sm:$0xff] %v1040
          %1043 = vst [vmem:[%s856 + $0x44] sm:$0x1] %v1020
          %v1044 = vadd.f32 %v999, %v1021
          %v1045 = vadd.f32 %v1001, %v1022
          %1046 = vst [vmem:[%s856 + $0x45] sm:$0xff] %v1044
          %1047 = vst [vmem:[%s856 + $0x4d] sm:$0xff] %v1045
          %1048 = vst [vmem:[%s856 + $0x55] sm:$0x1] %v1020
          %v1049 = vadd.f32 %v1004, %v1021
          %v1050 = vadd.f32 %v1006, %v1022
          %1051 = vst [vmem:[%s856 + $0x56] sm:$0xff] %v1049
          %1052 = vst [vmem:[%s856 + $0x5e] sm:$0xff] %v1050
          %1053 = vst [vmem:[%s856 + $0x66] sm:$0x1] %v1020
          %v1054 = vadd.f32 %v1009, %v1021
          %v1055 = vadd.f32 %v1011, %v1022
          %1056 = vst [vmem:[%s856 + $0x67] sm:$0xff] %v1054
          %1057 = vst [vmem:[%s856 + $0x6f] sm:$0xff] %v1055
          %1058 = vst [vmem:[%s856 + $0x77] sm:$0x1] %v1020
          %v1059 = vadd.f32 %v1014, %v1021
          %v1060 = vadd.f32 %v1016, %v1022
          %1061 = vst [vmem:[%s856 + $0x78] sm:$0xff] %v1059
          %1062 = vst [vmem:[%s856 + $0x80] sm:$0xff] %v1060
        $region124: #{tpu_custom_call.1} parent=83 // pred_fallthru
          _
        %v1063 = vld [vmem:[%s856] sm:$0xff]
        %v1064 = vld [vmem:[%s856 + $0x8] sm:$0xff]
        %v1065 = vld [vmem:[%s856 + $0x10] sm:$0xff]
        %v1066 = vld [vmem:[%s856 + $0x18] sm:$0xff]
        %v1067 = vld [vmem:[%s856 + $0x20] sm:$0xff]
        %v1068 = vld [vmem:[%s856 + $0x28] sm:$0xff]
        %v1069 = vld [vmem:[%s856 + $0x30] sm:$0xff]
        %v1070 = vld [vmem:[%s856 + $0x38] sm:$0xff]
        %v1071 = vld [vmem:[%s856 + $0x40] sm:$0xff]
        %v1072 = vld [vmem:[%s856 + $0x48] sm:$0xff]
        %v1073 = vld [vmem:[%s856 + $0x50] sm:$0xff]
        %v1074 = vld [vmem:[%s856 + $0x58] sm:$0xff]
        %v1075 = vld [vmem:[%s856 + $0x60] sm:$0xff]
        %v1076 = vld [vmem:[%s856 + $0x68] sm:$0xff]
        %v1077 = vld [vmem:[%s856 + $0x70] sm:$0xff]
        %v1078 = vld [vmem:[%s856 + $0x78] sm:$0xff]
        %v1079 = vld [vmem:[%s856 + $0x80] sm:$0xff]
        %v1080 = vld [vmem:[%s865] sm:$0x1]
        %v1081 = vld [vmem:[%s704] sm:$0x1]
        %1082 = vadd.xlane.f32.xlu0 %v1063
        %v1083 = vpop.xlane.xlu0 %1082
        %1084 = vadd.xlane.f32.xlu0 %v1064
        %v1085 = vpop.xlane.xlu0 %1084
        %1086 = vadd.xlane.f32.xlu0 %v1065
        %v1087 = vpop.xlane.xlu0 %1086
        %1088 = vadd.xlane.f32.xlu0 %v1066
        %v1089 = vpop.xlane.xlu0 %1088
        %1090 = vadd.xlane.f32.xlu0 %v1067
        %v1091 = vpop.xlane.xlu0 %1090
        %1092 = vadd.xlane.f32.xlu0 %v1068
        %v1093 = vpop.xlane.xlu0 %1092
        %1094 = vadd.xlane.f32.xlu0 %v1069
        %v1095 = vpop.xlane.xlu0 %1094
        %1096 = vadd.xlane.f32.xlu0 %v1070
        %v1097 = vpop.xlane.xlu0 %1096
        %1098 = vadd.xlane.f32.xlu0 %v1071
        %v1099 = vpop.xlane.xlu0 %1098
        %1100 = vadd.xlane.f32.xlu0 %v1072
        %v1101 = vpop.xlane.xlu0 %1100
        %1102 = vadd.xlane.f32.xlu0 %v1073
        %v1103 = vpop.xlane.xlu0 %1102
        %1104 = vadd.xlane.f32.xlu0 %v1074
        %v1105 = vpop.xlane.xlu0 %1104
        %1106 = vadd.xlane.f32.xlu0 %v1075
        %v1107 = vpop.xlane.xlu0 %1106
        %1108 = vadd.xlane.f32.xlu0 %v1076
        %v1109 = vpop.xlane.xlu0 %1108
        %1110 = vadd.xlane.f32.xlu0 %v1077
        %v1111 = vpop.xlane.xlu0 %1110
        %1112 = vadd.xlane.f32.xlu0 %v1078
        %v1113 = vpop.xlane.xlu0 %1112
        %1114 = vadd.xlane.f32.xlu0 %v1079
        %v1115 = vpop.xlane.xlu0 %1114
        %v1116 = vrcp.pop 128.0
        %v1117 = vmul.f32 128.0, %v1116
        %v1118 = vsub.f32 1.0, %v1117
        %v1119 = vmul.f32 %v1116, %v1118
        %v1120 = vadd.f32 %v1116, %v1119
        %vm1121 = vweird.f32 %v1116
        %v1122 = vsel %vm1121, %v1116, %v1120
        %v1123 = vmul.f32 %v1083, %v1122
        %v1124 = vmul.f32 %v1085, %v1122
        %v1125 = vmul.f32 %v1087, %v1122
        %v1126 = vmul.f32 %v1089, %v1122
        %v1127 = vmul.f32 %v1091, %v1122
        %v1128 = vmul.f32 %v1093, %v1122
        %v1129 = vmul.f32 %v1095, %v1122
        %v1130 = vmul.f32 %v1097, %v1122
        %v1131 = vmul.f32 %v1099, %v1122
        %v1132 = vmul.f32 %v1101, %v1122
        %v1133 = vmul.f32 %v1103, %v1122
        %v1134 = vmul.f32 %v1105, %v1122
        %v1135 = vmul.f32 %v1107, %v1122
        %v1136 = vmul.f32 %v1109, %v1122
        %v1137 = vmul.f32 %v1111, %v1122
        %v1138 = vmul.f32 %v1113, %v1122
        %v1139 = vmul.f32 %v1115, %v1122
        %v1140 = vsub.f32 %v1063, %v1123
        %v1141 = vsub.f32 %v1064, %v1124
        %v1142 = vsub.f32 %v1065, %v1125
        %v1143 = vsub.f32 %v1066, %v1126
        %v1144 = vsub.f32 %v1067, %v1127
        %v1145 = vsub.f32 %v1068, %v1128
        %v1146 = vsub.f32 %v1069, %v1129
        %v1147 = vsub.f32 %v1070, %v1130
        %v1148 = vsub.f32 %v1071, %v1131
        %v1149 = vsub.f32 %v1072, %v1132
        %v1150 = vsub.f32 %v1073, %v1133
        %v1151 = vsub.f32 %v1074, %v1134
        %v1152 = vsub.f32 %v1075, %v1135
        %v1153 = vsub.f32 %v1076, %v1136
        %v1154 = vsub.f32 %v1077, %v1137
        %v1155 = vsub.f32 %v1078, %v1138
        %v1156 = vsub.f32 %v1079, %v1139
        %v1157 = vmul.f32 %v1140, %v1140
        %v1158 = vmul.f32 %v1141, %v1141
        %v1159 = vmul.f32 %v1142, %v1142
        %v1160 = vmul.f32 %v1143, %v1143
        %v1161 = vmul.f32 %v1144, %v1144
        %v1162 = vmul.f32 %v1145, %v1145
        %v1163 = vmul.f32 %v1146, %v1146
        %v1164 = vmul.f32 %v1147, %v1147
        %v1165 = vmul.f32 %v1148, %v1148
        %v1166 = vmul.f32 %v1149, %v1149
        %v1167 = vmul.f32 %v1150, %v1150
        %v1168 = vmul.f32 %v1151, %v1151
        %v1169 = vmul.f32 %v1152, %v1152
        %v1170 = vmul.f32 %v1153, %v1153
        %v1171 = vmul.f32 %v1154, %v1154
        %v1172 = vmul.f32 %v1155, %v1155
        %v1173 = vmul.f32 %v1156, %v1156
        %1174 = vadd.xlane.f32.xlu0 %v1157
        %v1175 = vpop.xlane.xlu0 %1174
        %1176 = vadd.xlane.f32.xlu0 %v1158
        %v1177 = vpop.xlane.xlu0 %1176
        %1178 = vadd.xlane.f32.xlu0 %v1159
        %v1179 = vpop.xlane.xlu0 %1178
        %1180 = vadd.xlane.f32.xlu0 %v1160
        %v1181 = vpop.xlane.xlu0 %1180
        %1182 = vadd.xlane.f32.xlu0 %v1161
        %v1183 = vpop.xlane.xlu0 %1182
        %1184 = vadd.xlane.f32.xlu0 %v1162
        %v1185 = vpop.xlane.xlu0 %1184
        %1186 = vadd.xlane.f32.xlu0 %v1163
        %v1187 = vpop.xlane.xlu0 %1186
        %1188 = vadd.xlane.f32.xlu0 %v1164
        %v1189 = vpop.xlane.xlu0 %1188
        %1190 = vadd.xlane.f32.xlu0 %v1165
        %v1191 = vpop.xlane.xlu0 %1190
        %1192 = vadd.xlane.f32.xlu0 %v1166
        %v1193 = vpop.xlane.xlu0 %1192
        %1194 = vadd.xlane.f32.xlu0 %v1167
        %v1195 = vpop.xlane.xlu0 %1194
        %1196 = vadd.xlane.f32.xlu0 %v1168
        %v1197 = vpop.xlane.xlu0 %1196
        %1198 = vadd.xlane.f32.xlu0 %v1169
        %v1199 = vpop.xlane.xlu0 %1198
        %1200 = vadd.xlane.f32.xlu0 %v1170
        %v1201 = vpop.xlane.xlu0 %1200
        %1202 = vadd.xlane.f32.xlu0 %v1171
        %v1203 = vpop.xlane.xlu0 %1202
        %1204 = vadd.xlane.f32.xlu0 %v1172
        %v1205 = vpop.xlane.xlu0 %1204
        %1206 = vadd.xlane.f32.xlu0 %v1173
        %v1207 = vpop.xlane.xlu0 %1206
        %v1208 = vmul.f32 %v1175, %v1122
        %v1209 = vmul.f32 %v1177, %v1122
        %v1210 = vmul.f32 %v1179, %v1122
        %v1211 = vmul.f32 %v1181, %v1122
        %v1212 = vmul.f32 %v1183, %v1122
        %v1213 = vmul.f32 %v1185, %v1122
        %v1214 = vmul.f32 %v1187, %v1122
        %v1215 = vmul.f32 %v1189, %v1122
        %v1216 = vmul.f32 %v1191, %v1122
        %v1217 = vmul.f32 %v1193, %v1122
        %v1218 = vmul.f32 %v1195, %v1122
        %v1219 = vmul.f32 %v1197, %v1122
        %v1220 = vmul.f32 %v1199, %v1122
        %v1221 = vmul.f32 %v1201, %v1122
        %v1222 = vmul.f32 %v1203, %v1122
        %v1223 = vmul.f32 %v1205, %v1122
        %v1224 = vmul.f32 %v1207, %v1122
        %v1225 = vadd.f32 %v1208, 1e-05
        %v1226 = vadd.f32 %v1209, 1e-05
        %v1227 = vadd.f32 %v1210, 1e-05
        %v1228 = vadd.f32 %v1211, 1e-05
        %v1229 = vadd.f32 %v1212, 1e-05
        %v1230 = vadd.f32 %v1213, 1e-05
        %v1231 = vadd.f32 %v1214, 1e-05
        %v1232 = vadd.f32 %v1215, 1e-05
        %v1233 = vadd.f32 %v1216, 1e-05
        %v1234 = vadd.f32 %v1217, 1e-05
        %v1235 = vadd.f32 %v1218, 1e-05
        %v1236 = vadd.f32 %v1219, 1e-05
        %v1237 = vadd.f32 %v1220, 1e-05
        %v1238 = vadd.f32 %v1221, 1e-05
        %v1239 = vadd.f32 %v1222, 1e-05
        %v1240 = vadd.f32 %v1223, 1e-05
        %v1241 = vadd.f32 %v1224, 1e-05
        %v1242 = vrsqrt.pop %v1225
        %v1243 = vmul.f32 %v1242, %v1225
        %v1244 = vmul.f32 %v1243, %v1242
        %v1245 = vmul.f32 0.5, %v1244
        %v1246 = vsub.f32 1.5, %v1245
        %v1247 = vmul.f32 %v1242, %v1246
        %vm1248 = vweird.f32 %v1225
        %vm1249 = vweird.f32 %v1242
        %vm1250 = vmor %vm1248, %vm1249
        %v1251 = vsel %vm1250, %v1242, %v1247
        %v1252 = vrsqrt.pop %v1226
        %v1253 = vmul.f32 %v1252, %v1226
        %v1254 = vmul.f32 %v1253, %v1252
        %v1255 = vmul.f32 0.5, %v1254
        %v1256 = vsub.f32 1.5, %v1255
        %v1257 = vmul.f32 %v1252, %v1256
        %vm1258 = vweird.f32 %v1226
        %vm1259 = vweird.f32 %v1252
        %vm1260 = vmor %vm1258, %vm1259
        %v1261 = vsel %vm1260, %v1252, %v1257
        %v1262 = vrsqrt.pop %v1227
        %v1263 = vmul.f32 %v1262, %v1227
        %v1264 = vmul.f32 %v1263, %v1262
        %v1265 = vmul.f32 0.5, %v1264
        %v1266 = vsub.f32 1.5, %v1265
        %v1267 = vmul.f32 %v1262, %v1266
        %vm1268 = vweird.f32 %v1227
        %vm1269 = vweird.f32 %v1262
        %vm1270 = vmor %vm1268, %vm1269
        %v1271 = vsel %vm1270, %v1262, %v1267
        %v1272 = vrsqrt.pop %v1228
        %v1273 = vmul.f32 %v1272, %v1228
        %v1274 = vmul.f32 %v1273, %v1272
        %v1275 = vmul.f32 0.5, %v1274
        %v1276 = vsub.f32 1.5, %v1275
        %v1277 = vmul.f32 %v1272, %v1276
        %vm1278 = vweird.f32 %v1228
        %vm1279 = vweird.f32 %v1272
        %vm1280 = vmor %vm1278, %vm1279
        %v1281 = vsel %vm1280, %v1272, %v1277
        %v1282 = vrsqrt.pop %v1229
        %v1283 = vmul.f32 %v1282, %v1229
        %v1284 = vmul.f32 %v1283, %v1282
        %v1285 = vmul.f32 0.5, %v1284
        %v1286 = vsub.f32 1.5, %v1285
        %v1287 = vmul.f32 %v1282, %v1286
        %vm1288 = vweird.f32 %v1229
        %vm1289 = vweird.f32 %v1282
        %vm1290 = vmor %vm1288, %vm1289
        %v1291 = vsel %vm1290, %v1282, %v1287
        %v1292 = vrsqrt.pop %v1230
        %v1293 = vmul.f32 %v1292, %v1230
        %v1294 = vmul.f32 %v1293, %v1292
        %v1295 = vmul.f32 0.5, %v1294
        %v1296 = vsub.f32 1.5, %v1295
        %v1297 = vmul.f32 %v1292, %v1296
        %vm1298 = vweird.f32 %v1230
        %vm1299 = vweird.f32 %v1292
        %vm1300 = vmor %vm1298, %vm1299
        %v1301 = vsel %vm1300, %v1292, %v1297
        %v1302 = vrsqrt.pop %v1231
        %v1303 = vmul.f32 %v1302, %v1231
        %v1304 = vmul.f32 %v1303, %v1302
        %v1305 = vmul.f32 0.5, %v1304
        %v1306 = vsub.f32 1.5, %v1305
        %v1307 = vmul.f32 %v1302, %v1306
        %vm1308 = vweird.f32 %v1231
        %vm1309 = vweird.f32 %v1302
        %vm1310 = vmor %vm1308, %vm1309
        %v1311 = vsel %vm1310, %v1302, %v1307
        %v1312 = vrsqrt.pop %v1232
        %v1313 = vmul.f32 %v1312, %v1232
        %v1314 = vmul.f32 %v1313, %v1312
        %v1315 = vmul.f32 0.5, %v1314
        %v1316 = vsub.f32 1.5, %v1315
        %v1317 = vmul.f32 %v1312, %v1316
        %vm1318 = vweird.f32 %v1232
        %vm1319 = vweird.f32 %v1312
        %vm1320 = vmor %vm1318, %vm1319
        %v1321 = vsel %vm1320, %v1312, %v1317
        %v1322 = vrsqrt.pop %v1233
        %v1323 = vmul.f32 %v1322, %v1233
        %v1324 = vmul.f32 %v1323, %v1322
        %v1325 = vmul.f32 0.5, %v1324
        %v1326 = vsub.f32 1.5, %v1325
        %v1327 = vmul.f32 %v1322, %v1326
        %vm1328 = vweird.f32 %v1233
        %vm1329 = vweird.f32 %v1322
        %vm1330 = vmor %vm1328, %vm1329
        %v1331 = vsel %vm1330, %v1322, %v1327
        %v1332 = vrsqrt.pop %v1234
        %v1333 = vmul.f32 %v1332, %v1234
        %v1334 = vmul.f32 %v1333, %v1332
        %v1335 = vmul.f32 0.5, %v1334
        %v1336 = vsub.f32 1.5, %v1335
        %v1337 = vmul.f32 %v1332, %v1336
        %vm1338 = vweird.f32 %v1234
        %vm1339 = vweird.f32 %v1332
        %vm1340 = vmor %vm1338, %vm1339
        %v1341 = vsel %vm1340, %v1332, %v1337
        %v1342 = vrsqrt.pop %v1235
        %v1343 = vmul.f32 %v1342, %v1235
        %v1344 = vmul.f32 %v1343, %v1342
        %v1345 = vmul.f32 0.5, %v1344
        %v1346 = vsub.f32 1.5, %v1345
        %v1347 = vmul.f32 %v1342, %v1346
        %vm1348 = vweird.f32 %v1235
        %vm1349 = vweird.f32 %v1342
        %vm1350 = vmor %vm1348, %vm1349
        %v1351 = vsel %vm1350, %v1342, %v1347
        %v1352 = vrsqrt.pop %v1236
        %v1353 = vmul.f32 %v1352, %v1236
        %v1354 = vmul.f32 %v1353, %v1352
        %v1355 = vmul.f32 0.5, %v1354
        %v1356 = vsub.f32 1.5, %v1355
        %v1357 = vmul.f32 %v1352, %v1356
        %vm1358 = vweird.f32 %v1236
        %vm1359 = vweird.f32 %v1352
        %vm1360 = vmor %vm1358, %vm1359
        %v1361 = vsel %vm1360, %v1352, %v1357
        %v1362 = vrsqrt.pop %v1237
        %v1363 = vmul.f32 %v1362, %v1237
        %v1364 = vmul.f32 %v1363, %v1362
        %v1365 = vmul.f32 0.5, %v1364
        %v1366 = vsub.f32 1.5, %v1365
        %v1367 = vmul.f32 %v1362, %v1366
        %vm1368 = vweird.f32 %v1237
        %vm1369 = vweird.f32 %v1362
        %vm1370 = vmor %vm1368, %vm1369
        %v1371 = vsel %vm1370, %v1362, %v1367
        %v1372 = vrsqrt.pop %v1238
        %v1373 = vmul.f32 %v1372, %v1238
        %v1374 = vmul.f32 %v1373, %v1372
        %v1375 = vmul.f32 0.5, %v1374
        %v1376 = vsub.f32 1.5, %v1375
        %v1377 = vmul.f32 %v1372, %v1376
        %vm1378 = vweird.f32 %v1238
        %vm1379 = vweird.f32 %v1372
        %vm1380 = vmor %vm1378, %vm1379
        %v1381 = vsel %vm1380, %v1372, %v1377
        %v1382 = vrsqrt.pop %v1239
        %v1383 = vmul.f32 %v1382, %v1239
        %v1384 = vmul.f32 %v1383, %v1382
        %v1385 = vmul.f32 0.5, %v1384
        %v1386 = vsub.f32 1.5, %v1385
        %v1387 = vmul.f32 %v1382, %v1386
        %vm1388 = vweird.f32 %v1239
        %vm1389 = vweird.f32 %v1382
        %vm1390 = vmor %vm1388, %vm1389
        %v1391 = vsel %vm1390, %v1382, %v1387
        %v1392 = vrsqrt.pop %v1240
        %v1393 = vmul.f32 %v1392, %v1240
        %v1394 = vmul.f32 %v1393, %v1392
        %v1395 = vmul.f32 0.5, %v1394
        %v1396 = vsub.f32 1.5, %v1395
        %v1397 = vmul.f32 %v1392, %v1396
        %vm1398 = vweird.f32 %v1240
        %vm1399 = vweird.f32 %v1392
        %vm1400 = vmor %vm1398, %vm1399
        %v1401 = vsel %vm1400, %v1392, %v1397
        %v1402 = vrsqrt.pop %v1241
        %v1403 = vmul.f32 %v1402, %v1241
        %v1404 = vmul.f32 %v1403, %v1402
        %v1405 = vmul.f32 0.5, %v1404
        %v1406 = vsub.f32 1.5, %v1405
        %v1407 = vmul.f32 %v1402, %v1406
        %vm1408 = vweird.f32 %v1241
        %vm1409 = vweird.f32 %v1402
        %vm1410 = vmor %vm1408, %vm1409
        %v1411 = vsel %vm1410, %v1402, %v1407
        %v1412 = vmul.f32 %v1140, %v1251
        %v1413 = vmul.f32 %v1141, %v1261
        %v1414 = vmul.f32 %v1142, %v1271
        %v1415 = vmul.f32 %v1143, %v1281
        %v1416 = vmul.f32 %v1144, %v1291
        %v1417 = vmul.f32 %v1145, %v1301
        %v1418 = vmul.f32 %v1146, %v1311
        %v1419 = vmul.f32 %v1147, %v1321
        %v1420 = vmul.f32 %v1148, %v1331
        %v1421 = vmul.f32 %v1149, %v1341
        %v1422 = vmul.f32 %v1150, %v1351
        %v1423 = vmul.f32 %v1151, %v1361
        %v1424 = vmul.f32 %v1152, %v1371
        %v1425 = vmul.f32 %v1153, %v1381
        %v1426 = vmul.f32 %v1154, %v1391
        %v1427 = vmul.f32 %v1155, %v1401
        %v1428 = vmul.f32 %v1156, %v1411
        %v1430 = vperm.slane %v1080, 0
        %v1432 = vmul.f32 %v1412, %v1430
        %v1433 = vmul.f32 %v1413, %v1430
        %v1434 = vmul.f32 %v1414, %v1430
        %v1435 = vmul.f32 %v1415, %v1430
        %v1436 = vmul.f32 %v1416, %v1430
        %v1437 = vmul.f32 %v1417, %v1430
        %v1438 = vmul.f32 %v1418, %v1430
        %v1439 = vmul.f32 %v1419, %v1430
        %v1440 = vmul.f32 %v1420, %v1430
        %v1441 = vmul.f32 %v1421, %v1430
        %v1442 = vmul.f32 %v1422, %v1430
        %v1443 = vmul.f32 %v1423, %v1430
        %v1444 = vmul.f32 %v1424, %v1430
        %v1445 = vmul.f32 %v1425, %v1430
        %v1446 = vmul.f32 %v1426, %v1430
        %v1447 = vmul.f32 %v1427, %v1430
        %v1448 = vmul.f32 %v1428, %v1430
        %v1450 = vperm.slane %v1081, 0
        %v1452 = vadd.f32 %v1432, %v1450
        %v1453 = vadd.f32 %v1433, %v1450
        %v1454 = vadd.f32 %v1434, %v1450
        %v1455 = vadd.f32 %v1435, %v1450
        %v1456 = vadd.f32 %v1436, %v1450
        %v1457 = vadd.f32 %v1437, %v1450
        %v1458 = vadd.f32 %v1438, %v1450
        %v1459 = vadd.f32 %v1439, %v1450
        %v1460 = vadd.f32 %v1440, %v1450
        %v1461 = vadd.f32 %v1441, %v1450
        %v1462 = vadd.f32 %v1442, %v1450
        %v1463 = vadd.f32 %v1443, %v1450
        %v1464 = vadd.f32 %v1444, %v1450
        %v1465 = vadd.f32 %v1445, %v1450
        %v1466 = vadd.f32 %v1446, %v1450
        %v1467 = vadd.f32 %v1447, %v1450
        %v1468 = vadd.f32 %v1448, %v1450
        %v1469 = vpack.c.bf16 %v1453, %v1452
        %v1470 = vpack.c.bf16 %v1455, %v1454
        %v1471 = vpack.c.bf16 %v1457, %v1456
        %v1472 = vpack.c.bf16 %v1459, %v1458
        %v1473 = vpack.c.bf16 %v1461, %v1460
        %v1474 = vpack.c.bf16 %v1463, %v1462
        %v1475 = vpack.c.bf16 %v1465, %v1464
        %v1476 = vpack.c.bf16 %v1467, %v1466
        %v1477 = vpack.c.bf16 %v1468, %v1468
        %v1478 = vld [vmem:[%s714] sm:$0xff]
        %v1479 = vld [vmem:[%s714 + $0x8] sm:$0xf]
        %v1480 = vld [vmem:[%s714 + $0xc] sm:$0xff]
        %v1481 = vld [vmem:[%s714 + $0x14] sm:$0xf]
        %v1482 = vld [vmem:[%s714 + $0x18] sm:$0xff]
        %v1483 = vld [vmem:[%s714 + $0x20] sm:$0xf]
        %v1484 = vld [vmem:[%s714 + $0x24] sm:$0xff]
        %v1485 = vld [vmem:[%s714 + $0x2c] sm:$0xf]
        %v1486 = vld [vmem:[%s714 + $0x30] sm:$0xff]
        %v1487 = vld [vmem:[%s714 + $0x38] sm:$0xf]
        %v1488 = vld [vmem:[%s714 + $0x3c] sm:$0xff]
        %v1489 = vld [vmem:[%s714 + $0x44] sm:$0xf]
        %v1490 = vld [vmem:[%s714 + $0x48] sm:$0xff]
        %v1491 = vld [vmem:[%s714 + $0x50] sm:$0xf]
        %v1492 = vld [vmem:[%s714 + $0x54] sm:$0xff]
        %v1493 = vld [vmem:[%s714 + $0x5c] sm:$0xf]
        %v1494 = vld [vmem:[%s714 + $0x60] sm:$0xff]
        %v1495 = vld [vmem:[%s714 + $0x68] sm:$0xf]
        %v1496 = vld [vmem:[%s714 + $0x6c] sm:$0xff]
        %v1497 = vld [vmem:[%s714 + $0x74] sm:$0xf]
        %v1498 = vld [vmem:[%s714 + $0x78] sm:$0xff]
        %v1499 = vld [vmem:[%s714 + $0x80] sm:$0xf]
        %v1500 = vld [vmem:[%s714 + $0x84] sm:$0xff]
        %v1501 = vld [vmem:[%s714 + $0x8c] sm:$0xf]
        %v1502 = vld [vmem:[%s714 + $0x90] sm:$0xff]
        %v1503 = vld [vmem:[%s714 + $0x98] sm:$0xf]
        %v1504 = vld [vmem:[%s714 + $0x9c] sm:$0xff]
        %v1505 = vld [vmem:[%s714 + $0xa4] sm:$0xf]
        %v1506 = vld [vmem:[%s714 + $0xa8] sm:$0xff]
        %v1507 = vld [vmem:[%s714 + $0xb0] sm:$0xf]
        %v1508 = vld [vmem:[%s714 + $0xb4] sm:$0xff]
        %v1509 = vld [vmem:[%s714 + $0xbc] sm:$0xf]
        %v1542 = vunpack.c.l.b16 %v1478
        %v1543 = vunpack.c.h.b16 %v1478
        %v1544 = vunpack.c.l.b16 %v1479
        %v1545 = vunpack.c.l.b16 %v1480
        %v1546 = vunpack.c.h.b16 %v1480
        %v1547 = vunpack.c.l.b16 %v1481
        %v1548 = vunpack.c.l.b16 %v1482
        %v1549 = vunpack.c.h.b16 %v1482
        %v1550 = vunpack.c.l.b16 %v1483
        %v1551 = vunpack.c.l.b16 %v1484
        %v1552 = vunpack.c.h.b16 %v1484
        %v1553 = vunpack.c.l.b16 %v1485
        %v1554 = vunpack.c.l.b16 %v1486
        %v1555 = vunpack.c.h.b16 %v1486
        %v1556 = vunpack.c.l.b16 %v1487
        %v1557 = vunpack.c.l.b16 %v1488
        %v1558 = vunpack.c.h.b16 %v1488
        %v1559 = vunpack.c.l.b16 %v1489
        %v1560 = vunpack.c.l.b16 %v1490
        %v1561 = vunpack.c.h.b16 %v1490
        %v1562 = vunpack.c.l.b16 %v1491
        %v1563 = vunpack.c.l.b16 %v1492
        %v1564 = vunpack.c.h.b16 %v1492
        %v1565 = vunpack.c.l.b16 %v1493
        %v1566 = vunpack.c.l.b16 %v1494
        %v1567 = vunpack.c.h.b16 %v1494
        %v1568 = vunpack.c.l.b16 %v1495
        %v1569 = vunpack.c.l.b16 %v1496
        %v1570 = vunpack.c.h.b16 %v1496
        %v1571 = vunpack.c.l.b16 %v1497
        %v1572 = vunpack.c.l.b16 %v1498
        %v1573 = vunpack.c.h.b16 %v1498
        %v1574 = vunpack.c.l.b16 %v1499
        %v1575 = vunpack.c.l.b16 %v1500
        %v1576 = vunpack.c.h.b16 %v1500
        %v1577 = vunpack.c.l.b16 %v1501
        %v1578 = vunpack.c.l.b16 %v1502
        %v1579 = vunpack.c.h.b16 %v1502
        %v1580 = vunpack.c.l.b16 %v1503
        %v1581 = vunpack.c.l.b16 %v1504
        %v1582 = vunpack.c.h.b16 %v1504
        %v1583 = vunpack.c.l.b16 %v1505
        %v1584 = vunpack.c.l.b16 %v1506
        %v1585 = vunpack.c.h.b16 %v1506
        %v1586 = vunpack.c.l.b16 %v1507
        %v1587 = vunpack.c.l.b16 %v1508
        %v1588 = vunpack.c.h.b16 %v1508
        %v1589 = vunpack.c.l.b16 %v1509
        %v1590 = vpack.c.b16 %v1545, %v1542
        %v1591 = vpack.c.b16 %v1546, %v1543
        %v1592 = vpack.c.b16 %v1547, %v1544
        %v1593 = vpack.c.b16 %v1551, %v1548
        %v1594 = vpack.c.b16 %v1552, %v1549
        %v1595 = vpack.c.b16 %v1553, %v1550
        %v1596 = vpack.c.b16 %v1557, %v1554
        %v1597 = vpack.c.b16 %v1558, %v1555
        %v1598 = vpack.c.b16 %v1559, %v1556
        %v1599 = vpack.c.b16 %v1563, %v1560
        %v1600 = vpack.c.b16 %v1564, %v1561
        %v1601 = vpack.c.b16 %v1565, %v1562
        %v1602 = vpack.c.b16 %v1569, %v1566
        %v1603 = vpack.c.b16 %v1570, %v1567
        %v1604 = vpack.c.b16 %v1571, %v1568
        %v1605 = vpack.c.b16 %v1575, %v1572
        %v1606 = vpack.c.b16 %v1576, %v1573
        %v1607 = vpack.c.b16 %v1577, %v1574
        %v1608 = vpack.c.b16 %v1581, %v1578
        %v1609 = vpack.c.b16 %v1582, %v1579
        %v1610 = vpack.c.b16 %v1583, %v1580
        %v1611 = vpack.c.b16 %v1587, %v1584
        %v1612 = vpack.c.b16 %v1588, %v1585
        %v1613 = vpack.c.b16 %v1589, %v1586
        %1638 = vmatpush.bf16.msra.mxu0 %v1611
        %1639 = vmatpush.bf16.msra.mxu0 %v1608
        %1640 = vmatpush.bf16.msra.mxu0 %v1605
        %1641 = vmatpush.bf16.msra.mxu0 %v1602
        %1642 = vmatpush.bf16.msra.mxu0 %v1599
        %1643 = vmatpush.bf16.msra.mxu0 %v1596
        %1644 = vmatpush.bf16.msra.mxu0 %v1593
        %1645 = vmatpush.bf16.msra.mxu0 %v1590
        %1646 = vmatmul.bf16.gmra.mxu0 %v1469
        %v1647 = vpop.f32.mrf.mxu0
        %v1648 = vadd.f32 0.0, %v1647
        %v1649 = vpop.f32.mrf.mxu0
        %v1650 = vadd.f32 0.0, %v1649
        %1651 = vmatmul.bf16.gmra.mxu0 %v1470
        %v1652 = vpop.f32.mrf.mxu0
        %v1653 = vadd.f32 0.0, %v1652
        %v1654 = vpop.f32.mrf.mxu0
        %v1655 = vadd.f32 0.0, %v1654
        %1656 = vmatmul.bf16.gmra.mxu0 %v1471
        %v1657 = vpop.f32.mrf.mxu0
        %v1658 = vadd.f32 0.0, %v1657
        %v1659 = vpop.f32.mrf.mxu0
        %v1660 = vadd.f32 0.0, %v1659
        %1661 = vmatmul.bf16.gmra.mxu0 %v1472
        %v1662 = vpop.f32.mrf.mxu0
        %v1663 = vadd.f32 0.0, %v1662
        %v1664 = vpop.f32.mrf.mxu0
        %v1665 = vadd.f32 0.0, %v1664
        %1666 = vmatmul.bf16.gmra.mxu0 %v1473
        %v1667 = vpop.f32.mrf.mxu0
        %v1668 = vadd.f32 0.0, %v1667
        %v1669 = vpop.f32.mrf.mxu0
        %v1670 = vadd.f32 0.0, %v1669
        %1671 = vmatmul.bf16.gmra.mxu0 %v1474
        %v1672 = vpop.f32.mrf.mxu0
        %v1673 = vadd.f32 0.0, %v1672
        %v1674 = vpop.f32.mrf.mxu0
        %v1675 = vadd.f32 0.0, %v1674
        %1676 = vmatmul.bf16.gmra.mxu0 %v1475
        %v1677 = vpop.f32.mrf.mxu0
        %v1678 = vadd.f32 0.0, %v1677
        %v1679 = vpop.f32.mrf.mxu0
        %v1680 = vadd.f32 0.0, %v1679
        %1681 = vmatmul.bf16.gmra.mxu0 %v1476
        %v1682 = vpop.f32.mrf.mxu0
        %v1683 = vadd.f32 0.0, %v1682
        %v1684 = vpop.f32.mrf.mxu0
        %v1685 = vadd.f32 0.0, %v1684
        %1686 = vmatmul.bf16.gmra.mxu0 %v1477
        %v1687 = vpop.f32.mrf.mxu0
        %v1688 = vadd.f32 0.0, %v1687
        %v1689 = vpop.f32.mrf.mxu0
        %1690 = vdwg.mxu0
        %1691 = vmatpush.bf16.msra.mxu0 %v1612
        %1692 = vmatpush.bf16.msra.mxu0 %v1609
        %1693 = vmatpush.bf16.msra.mxu0 %v1606
        %1694 = vmatpush.bf16.msra.mxu0 %v1603
        %1695 = vmatpush.bf16.msra.mxu0 %v1600
        %1696 = vmatpush.bf16.msra.mxu0 %v1597
        %1697 = vmatpush.bf16.msra.mxu0 %v1594
        %1698 = vmatpush.bf16.msra.mxu0 %v1591
        %1699 = vmatmul.bf16.gmra.mxu0 %v1469
        %v1700 = vpop.f32.mrf.mxu0
        %v1701 = vadd.f32 0.0, %v1700
        %v1702 = vpop.f32.mrf.mxu0
        %v1703 = vadd.f32 0.0, %v1702
        %1704 = vmatmul.bf16.gmra.mxu0 %v1470
        %v1705 = vpop.f32.mrf.mxu0
        %v1706 = vadd.f32 0.0, %v1705
        %v1707 = vpop.f32.mrf.mxu0
        %v1708 = vadd.f32 0.0, %v1707
        %1709 = vmatmul.bf16.gmra.mxu0 %v1471
        %v1710 = vpop.f32.mrf.mxu0
        %v1711 = vadd.f32 0.0, %v1710
        %v1712 = vpop.f32.mrf.mxu0
        %v1713 = vadd.f32 0.0, %v1712
        %1714 = vmatmul.bf16.gmra.mxu0 %v1472
        %v1715 = vpop.f32.mrf.mxu0
        %v1716 = vadd.f32 0.0, %v1715
        %v1717 = vpop.f32.mrf.mxu0
        %v1718 = vadd.f32 0.0, %v1717
        %1719 = vmatmul.bf16.gmra.mxu0 %v1473
        %v1720 = vpop.f32.mrf.mxu0
        %v1721 = vadd.f32 0.0, %v1720
        %v1722 = vpop.f32.mrf.mxu0
        %v1723 = vadd.f32 0.0, %v1722
        %1724 = vmatmul.bf16.gmra.mxu0 %v1474
        %v1725 = vpop.f32.mrf.mxu0
        %v1726 = vadd.f32 0.0, %v1725
        %v1727 = vpop.f32.mrf.mxu0
        %v1728 = vadd.f32 0.0, %v1727
        %1729 = vmatmul.bf16.gmra.mxu0 %v1475
        %v1730 = vpop.f32.mrf.mxu0
        %v1731 = vadd.f32 0.0, %v1730
        %v1732 = vpop.f32.mrf.mxu0
        %v1733 = vadd.f32 0.0, %v1732
        %1734 = vmatmul.bf16.gmra.mxu0 %v1476
        %v1735 = vpop.f32.mrf.mxu0
        %v1736 = vadd.f32 0.0, %v1735
        %v1737 = vpop.f32.mrf.mxu0
        %v1738 = vadd.f32 0.0, %v1737
        %1739 = vmatmul.bf16.gmra.mxu0 %v1477
        %v1740 = vpop.f32.mrf.mxu0
        %v1741 = vadd.f32 0.0, %v1740
        %v1742 = vpop.f32.mrf.mxu0
        %1743 = vdwg.mxu0
        %1744 = vmatpush.bf16.msra.mxu0 %v1613
        %1745 = vmatpush.bf16.msra.mxu0 %v1610
        %1746 = vmatpush.bf16.msra.mxu0 %v1607
        %1747 = vmatpush.bf16.msra.mxu0 %v1604
        %1748 = vmatpush.bf16.msra.mxu0 %v1601
        %1749 = vmatpush.bf16.msra.mxu0 %v1598
        %1750 = vmatpush.bf16.msra.mxu0 %v1595
        %1751 = vmatpush.bf16.msra.mxu0 %v1592
        %1752 = vmatmul.bf16.gmra.mxu0 %v1469
        %v1753 = vpop.f32.mrf.mxu0
        %v1754 = vadd.f32 0.0, %v1753
        %v1755 = vpop.f32.mrf.mxu0
        %v1756 = vadd.f32 0.0, %v1755
        %1757 = vmatmul.bf16.gmra.mxu0 %v1470
        %v1758 = vpop.f32.mrf.mxu0
        %v1759 = vadd.f32 0.0, %v1758
        %v1760 = vpop.f32.mrf.mxu0
        %v1761 = vadd.f32 0.0, %v1760
        %1762 = vmatmul.bf16.gmra.mxu0 %v1471
        %v1763 = vpop.f32.mrf.mxu0
        %v1764 = vadd.f32 0.0, %v1763
        %v1765 = vpop.f32.mrf.mxu0
        %v1766 = vadd.f32 0.0, %v1765
        %1767 = vmatmul.bf16.gmra.mxu0 %v1472
        %v1768 = vpop.f32.mrf.mxu0
        %v1769 = vadd.f32 0.0, %v1768
        %v1770 = vpop.f32.mrf.mxu0
        %v1771 = vadd.f32 0.0, %v1770
        %1772 = vmatmul.bf16.gmra.mxu0 %v1473
        %v1773 = vpop.f32.mrf.mxu0
        %v1774 = vadd.f32 0.0, %v1773
        %v1775 = vpop.f32.mrf.mxu0
        %v1776 = vadd.f32 0.0, %v1775
        %1777 = vmatmul.bf16.gmra.mxu0 %v1474
        %v1778 = vpop.f32.mrf.mxu0
        %v1779 = vadd.f32 0.0, %v1778
        %v1780 = vpop.f32.mrf.mxu0
        %v1781 = vadd.f32 0.0, %v1780
        %1782 = vmatmul.bf16.gmra.mxu0 %v1475
        %v1783 = vpop.f32.mrf.mxu0
        %v1784 = vadd.f32 0.0, %v1783
        %v1785 = vpop.f32.mrf.mxu0
        %v1786 = vadd.f32 0.0, %v1785
        %1787 = vmatmul.bf16.gmra.mxu0 %v1476
        %v1788 = vpop.f32.mrf.mxu0
        %v1789 = vadd.f32 0.0, %v1788
        %v1790 = vpop.f32.mrf.mxu0
        %v1791 = vadd.f32 0.0, %v1790
        %1792 = vmatmul.bf16.gmra.mxu0 %v1477
        %v1793 = vpop.f32.mrf.mxu0
        %v1794 = vadd.f32 0.0, %v1793
        %v1795 = vpop.f32.mrf.mxu0
        %1796 = vdwg.mxu0
        %1797 = vst [vmem:[#allocation2] sm:$0xff] %v1648
        %1798 = vst [vmem:[#allocation2 + $0x8] sm:$0xff] %v1701
        %1799 = vst [vmem:[#allocation2 + $0x10] sm:$0xff] %v1754
        %1800 = vst [vmem:[#allocation2 + $0x18] sm:$0xff] %v1650
        %1801 = vst [vmem:[#allocation2 + $0x20] sm:$0xff] %v1703
        %1802 = vst [vmem:[#allocation2 + $0x28] sm:$0xff] %v1756
        %1803 = vst [vmem:[#allocation2 + $0x30] sm:$0xff] %v1653
        %1804 = vst [vmem:[#allocation2 + $0x38] sm:$0xff] %v1706
        %1805 = vst [vmem:[#allocation2 + $0x40] sm:$0xff] %v1759
        %1806 = vst [vmem:[#allocation2 + $0x48] sm:$0xff] %v1655
        %1807 = vst [vmem:[#allocation2 + $0x50] sm:$0xff] %v1708
        %1808 = vst [vmem:[#allocation2 + $0x58] sm:$0xff] %v1761
        %1809 = vst [vmem:[#allocation2 + $0x60] sm:$0xff] %v1658
        %1810 = vst [vmem:[#allocation2 + $0x68] sm:$0xff] %v1711
        %1811 = vst [vmem:[#allocation2 + $0x70] sm:$0xff] %v1764
        %1812 = vst [vmem:[#allocation2 + $0x78] sm:$0xff] %v1660
        %1813 = vst [vmem:[#allocation2 + $0x80] sm:$0xff] %v1713
        %1814 = vst [vmem:[#allocation2 + $0x88] sm:$0xff] %v1766
        %1815 = vst [vmem:[#allocation2 + $0x90] sm:$0xff] %v1663
        %1816 = vst [vmem:[#allocation2 + $0x98] sm:$0xff] %v1716
        %1817 = vst [vmem:[#allocation2 + $0xa0] sm:$0xff] %v1769
        %1818 = vst [vmem:[#allocation2 + $0xa8] sm:$0xff] %v1665
        %1819 = vst [vmem:[#allocation2 + $0xb0] sm:$0xff] %v1718
        %1820 = vst [vmem:[#allocation2 + $0xb8] sm:$0xff] %v1771
        %1821 = vst [vmem:[#allocation2 + $0xc0] sm:$0xff] %v1668
        %1822 = vst [vmem:[#allocation2 + $0xc8] sm:$0xff] %v1721
        %1823 = vst [vmem:[#allocation2 + $0xd0] sm:$0xff] %v1774
        %1824 = vst [vmem:[#allocation2 + $0xd8] sm:$0xff] %v1670
        %1825 = vst [vmem:[#allocation2 + $0xe0] sm:$0xff] %v1723
        %1826 = vst [vmem:[#allocation2 + $0xe8] sm:$0xff] %v1776
        %1827 = vst [vmem:[#allocation2 + $0xf0] sm:$0xff] %v1673
        %1828 = vst [vmem:[#allocation2 + $0xf8] sm:$0xff] %v1726
        %1829 = vst [vmem:[#allocation2 + $0x100] sm:$0xff] %v1779
        %1830 = vst [vmem:[#allocation2 + $0x108] sm:$0xff] %v1675
        %1831 = vst [vmem:[#allocation2 + $0x110] sm:$0xff] %v1728
        %1832 = vst [vmem:[#allocation2 + $0x118] sm:$0xff] %v1781
        %1833 = vst [vmem:[#allocation2 + $0x120] sm:$0xff] %v1678
        %1834 = vst [vmem:[#allocation2 + $0x128] sm:$0xff] %v1731
        %1835 = vst [vmem:[#allocation2 + $0x130] sm:$0xff] %v1784
        %1836 = vst [vmem:[#allocation2 + $0x138] sm:$0xff] %v1680
        %1837 = vst [vmem:[#allocation2 + $0x140] sm:$0xff] %v1733
        %1838 = vst [vmem:[#allocation2 + $0x148] sm:$0xff] %v1786
        %1839 = vst [vmem:[#allocation2 + $0x150] sm:$0xff] %v1683
        %1840 = vst [vmem:[#allocation2 + $0x158] sm:$0xff] %v1736
        %1841 = vst [vmem:[#allocation2 + $0x160] sm:$0xff] %v1789
        %1842 = vst [vmem:[#allocation2 + $0x168] sm:$0xff] %v1685
        %1843 = vst [vmem:[#allocation2 + $0x170] sm:$0xff] %v1738
        %1844 = vst [vmem:[#allocation2 + $0x178] sm:$0xff] %v1791
        %1845 = vst [vmem:[#allocation2 + $0x180] sm:$0xff] %v1688
        %1846 = vst [vmem:[#allocation2 + $0x188] sm:$0xff] %v1741
        %1847 = vst [vmem:[#allocation2 + $0x190] sm:$0xff] %v1794
        %v1848 = vld [vmem:[#allocation2] sm:$0xff]
        %v1849 = vld [vmem:[#allocation2 + $0x18] sm:$0xff]
        %v1850 = vld [vmem:[#allocation2 + $0x30] sm:$0x1]
        %v1851 = vpack.c.bf16 %v1849, %v1848
        %v1852 = vpack.c.bf16 %v1850, %v1850
        %v1853 = vld [vmem:[#allocation2 + $0x8] sm:$0xff]
        %v1854 = vld [vmem:[#allocation2 + $0x20] sm:$0xff]
        %v1855 = vld [vmem:[#allocation2 + $0x38] sm:$0x1]
        %v1856 = vpack.c.bf16 %v1854, %v1853
        %v1857 = vpack.c.bf16 %v1855, %v1855
        %v1858 = vld [vmem:[#allocation2 + $0x10] sm:$0xff]
        %v1859 = vld [vmem:[#allocation2 + $0x28] sm:$0xff]
        %v1860 = vld [vmem:[#allocation2 + $0x40] sm:$0x1]
        %v1861 = vpack.c.bf16 %v1859, %v1858
        %v1862 = vpack.c.bf16 %v1860, %v1860
        %vm1863 = vcmask 261120
        %v1865 = vsel %vm1863, %v1851, 0
        %v1868 = vsel %vm1863, %v1852, 0
        %v1871 = vsel %vm1863, %v1856, 0
        %v1874 = vsel %vm1863, %v1857, 0
        %1876 = vmatpush.bf16.xpose.msra.mxu0 0
        %1877 = vmatpush.bf16.xpose.msra.mxu0 0
        %1878 = vmatpush.bf16.xpose.msra.mxu0 0
        %1879 = vmatpush.bf16.xpose.msra.mxu0 0
        %1880 = vmatpush.bf16.xpose.msra.mxu0 0
        %1881 = vmatpush.bf16.xpose.msra.mxu0 0
        %1882 = vmatpush.bf16.xpose.msra.mxu0 %v1874
        %1883 = vmatpush.bf16.xpose.msra.mxu0 %v1871
        %1884 = vmatmul.bf16.gmra.mxu0 %v1865
        %v1885 = vpop.f32.mrf.mxu0
        %v1886 = vadd.f32 0.0, %v1885
        %v1887 = vpop.f32.mrf.mxu0
        %v1888 = vadd.f32 0.0, %v1887
        %1889 = vmatmul.bf16.gmra.mxu0 %v1868
        %v1890 = vpop.f32.mrf.mxu0
        %v1891 = vadd.f32 0.0, %v1890
        %v1892 = vpop.f32.mrf.mxu0
        %1893 = vdwg.mxu0
        %vm1894 = vcmask 138240
        %v1895 = vsel %vm1894, %v1886, -inf
        %1896 = vmax.xlane.f32.xlu0 %v1895
        %v1897 = vpop.xlane.xlu0 %1896
        %v1898 = vsel %vm1894, %v1888, -inf
        %1899 = vmax.xlane.f32.xlu0 %v1898
        %v1900 = vpop.xlane.xlu0 %1899
        %vm1901 = vcmask 131072
        %v1902 = vsel %vm1901, %v1891, -inf
        %1903 = vmax.xlane.f32.xlu0 %v1902
        %v1904 = vpop.xlane.xlu0 %1903
        %v1905 = vsub.f32 %v1886, %v1897
        %v1906 = vsub.f32 %v1888, %v1900
        %v1907 = vsub.f32 %v1891, %v1904
        %v1908 = vmul.f32 %v1905, 1.442695
        %v1909 = vpow.pop %v1908
        %v1910 = vmul.f32 %v1906, 1.442695
        %v1911 = vpow.pop %v1910
        %v1912 = vmul.f32 %v1907, 1.442695
        %v1913 = vpow.pop %v1912
        %v1914 = vsel %vm1894, %v1909, 0.0
        %1915 = vadd.xlane.f32.xlu0 %v1914
        %v1916 = vpop.xlane.xlu0 %1915
        %v1917 = vsel %vm1894, %v1911, 0.0
        %1918 = vadd.xlane.f32.xlu0 %v1917
        %v1919 = vpop.xlane.xlu0 %1918
        %v1920 = vsel %vm1901, %v1913, 0.0
        %1921 = vadd.xlane.f32.xlu0 %v1920
        %v1922 = vpop.xlane.xlu0 %1921
        %v1923 = vrcp.pop %v1916
        %v1924 = vrcp.pop %v1919
        %v1925 = vrcp.pop %v1922
        %v1926 = vmul.f32 %v1909, %v1923
        %v1927 = vmul.f32 %v1911, %v1924
        %v1928 = vmul.f32 %v1913, %v1925
        %v1929 = vpack.c.bf16 %v1927, %v1926
        %v1930 = vpack.c.bf16 %v1928, %v1928
        %v1932 = vsel %vm1894, %v1929, 0
        %v1935 = vsel %vm1894, %v1930, 0
        %vm1937 = vcmask 1040384
        %v1938 = vsel 0, 4294967295, 65535
        %v1939 = vsel %vm1937, %v1938, 0
        %v1941 = vand.u32 %v1862, %v1939
        %1943 = vmatpush.bf16.msra.mxu0 0
        %1944 = vmatpush.bf16.msra.mxu0 0
        %1945 = vmatpush.bf16.msra.mxu0 0
        %1946 = vmatpush.bf16.msra.mxu0 0
        %1947 = vmatpush.bf16.msra.mxu0 0
        %1948 = vmatpush.bf16.msra.mxu0 0
        %1949 = vmatpush.bf16.msra.mxu0 %v1941
        %1950 = vmatpush.bf16.msra.mxu0 %v1861
        %1951 = vmatmul.bf16.gmra.mxu0 %v1932
        %v1952 = vpop.f32.mrf.mxu0
        %v1953 = vadd.f32 0.0, %v1952
        %v1954 = vpop.f32.mrf.mxu0
        %v1955 = vadd.f32 0.0, %v1954
        %1956 = vmatmul.bf16.gmra.mxu0 %v1935
        %v1957 = vpop.f32.mrf.mxu0
        %v1958 = vadd.f32 0.0, %v1957
        %v1959 = vpop.f32.mrf.mxu0
        %1960 = vdwg.mxu0
        %1961 = vst.msk [vmem:[#allocation3] sm:$0xff] %vm1863, %v1953
        %1962 = vst.msk [vmem:[#allocation3 + $0x8] sm:$0xff] %vm1863, %v1955
        %vm1963 = vcmask 253952
        %1964 = vst.msk [vmem:[#allocation3 + $0x10] sm:$0x1] %vm1963, %v1958
        %v1965 = vld [vmem:[#allocation2] sm:$0xff]
        %v1966 = vld [vmem:[#allocation2 + $0x18] sm:$0xff]
        %v1967 = vld [vmem:[#allocation2 + $0x30] sm:$0x1]
        %v1968 = vpack.c.bf16 %v1966, %v1965
        %v1969 = vpack.c.bf16 %v1967, %v1967
        %v1970 = vld [vmem:[#allocation2 + $0x8] sm:$0xff]
        %v1971 = vld [vmem:[#allocation2 + $0x20] sm:$0xff]
        %v1972 = vld [vmem:[#allocation2 + $0x38] sm:$0x1]
        %v1973 = vpack.c.bf16 %v1971, %v1970
        %v1974 = vpack.c.bf16 %v1972, %v1972
        %v1975 = vld [vmem:[#allocation2 + $0x10] sm:$0xff]
        %v1976 = vld [vmem:[#allocation2 + $0x28] sm:$0xff]
        %v1977 = vld [vmem:[#allocation2 + $0x40] sm:$0x1]
        %v1978 = vpack.c.bf16 %v1976, %v1975
        %v1979 = vpack.c.bf16 %v1977, %v1977
        %1982 = vrot.lane.b32.xlu0 %v1968, 96
        %v1983 = vpop.permute.xlu0 %1982
        %1984 = vrot.lane.b32.xlu0 %v1969, 96
        %v1985 = vpop.permute.xlu0 %1984
        %1988 = vrot.lane.b32.xlu0 %v1973, 96
        %v1989 = vpop.permute.xlu0 %1988
        %1990 = vrot.lane.b32.xlu0 %v1974, 96
        %v1991 = vpop.permute.xlu0 %1990
        %v1993 = vsel %vm1863, %v1983, 0
        %v1996 = vsel %vm1863, %v1985, 0
        %v1999 = vsel %vm1863, %v1989, 0
        %v2002 = vsel %vm1863, %v1991, 0
        %2004 = vmatpush.bf16.xpose.msra.mxu0 0
        %2005 = vmatpush.bf16.xpose.msra.mxu0 0
        %2006 = vmatpush.bf16.xpose.msra.mxu0 0
        %2007 = vmatpush.bf16.xpose.msra.mxu0 0
        %2008 = vmatpush.bf16.xpose.msra.mxu0 0
        %2009 = vmatpush.bf16.xpose.msra.mxu0 0
        %2010 = vmatpush.bf16.xpose.msra.mxu0 %v2002
        %2011 = vmatpush.bf16.xpose.msra.mxu0 %v1999
        %2012 = vmatmul.bf16.gmra.mxu0 %v1993
        %v2013 = vpop.f32.mrf.mxu0
        %v2014 = vadd.f32 0.0, %v2013
        %v2015 = vpop.f32.mrf.mxu0
        %v2016 = vadd.f32 0.0, %v2015
        %2017 = vmatmul.bf16.gmra.mxu0 %v1996
        %v2018 = vpop.f32.mrf.mxu0
        %v2019 = vadd.f32 0.0, %v2018
        %v2020 = vpop.f32.mrf.mxu0
        %2021 = vdwg.mxu0
        %v2022 = vsel %vm1894, %v2014, -inf
        %2023 = vmax.xlane.f32.xlu0 %v2022
        %v2024 = vpop.xlane.xlu0 %2023
        %v2025 = vsel %vm1894, %v2016, -inf
        %2026 = vmax.xlane.f32.xlu0 %v2025
        %v2027 = vpop.xlane.xlu0 %2026
        %v2028 = vsel %vm1901, %v2019, -inf
        %2029 = vmax.xlane.f32.xlu0 %v2028
        %v2030 = vpop.xlane.xlu0 %2029
        %v2031 = vsub.f32 %v2014, %v2024
        %v2032 = vsub.f32 %v2016, %v2027
        %v2033 = vsub.f32 %v2019, %v2030
        %v2034 = vmul.f32 %v2031, 1.442695
        %v2035 = vpow.pop %v2034
        %v2036 = vmul.f32 %v2032, 1.442695
        %v2037 = vpow.pop %v2036
        %v2038 = vmul.f32 %v2033, 1.442695
        %v2039 = vpow.pop %v2038
        %v2040 = vsel %vm1894, %v2035, 0.0
        %2041 = vadd.xlane.f32.xlu0 %v2040
        %v2042 = vpop.xlane.xlu0 %2041
        %v2043 = vsel %vm1894, %v2037, 0.0
        %2044 = vadd.xlane.f32.xlu0 %v2043
        %v2045 = vpop.xlane.xlu0 %2044
        %v2046 = vsel %vm1901, %v2039, 0.0
        %2047 = vadd.xlane.f32.xlu0 %v2046
        %v2048 = vpop.xlane.xlu0 %2047
        %v2049 = vrcp.pop %v2042
        %v2050 = vrcp.pop %v2045
        %v2051 = vrcp.pop %v2048
        %v2052 = vmul.f32 %v2035, %v2049
        %v2053 = vmul.f32 %v2037, %v2050
        %v2054 = vmul.f32 %v2039, %v2051
        %v2055 = vpack.c.bf16 %v2053, %v2052
        %v2056 = vpack.c.bf16 %v2054, %v2054
        %2059 = vrot.lane.b32.xlu0 %v1978, 96
        %v2060 = vpop.permute.xlu0 %2059
        %2061 = vrot.lane.b32.xlu0 %v1979, 96
        %v2062 = vpop.permute.xlu0 %2061
        %v2065 = vsel %vm1894, %v2055, 0
        %v2068 = vsel %vm1894, %v2056, 0
        %v2071 = vand.u32 %v2062, %v1939
        %2073 = vmatpush.bf16.msra.mxu0 0
        %2074 = vmatpush.bf16.msra.mxu0 0
        %2075 = vmatpush.bf16.msra.mxu0 0
        %2076 = vmatpush.bf16.msra.mxu0 0
        %2077 = vmatpush.bf16.msra.mxu0 0
        %2078 = vmatpush.bf16.msra.mxu0 0
        %2079 = vmatpush.bf16.msra.mxu0 %v2071
        %2080 = vmatpush.bf16.msra.mxu0 %v2060
        %2081 = vmatmul.bf16.gmra.mxu0 %v2065
        %v2082 = vpop.f32.mrf.mxu0
        %v2083 = vadd.f32 0.0, %v2082
        %v2084 = vpop.f32.mrf.mxu0
        %v2085 = vadd.f32 0.0, %v2084
        %2086 = vmatmul.bf16.gmra.mxu0 %v2068
        %v2087 = vpop.f32.mrf.mxu0
        %v2088 = vadd.f32 0.0, %v2087
        %v2089 = vpop.f32.mrf.mxu0
        %2090 = vdwg.mxu0
        %2094 = vrot.lane.b32.xlu0 %v2083, 32
        %v2095 = vpop.permute.xlu0 %2094
        %2096 = vrot.lane.b32.xlu0 %v2085, 32
        %v2097 = vpop.permute.xlu0 %2096
        %2098 = vrot.lane.b32.xlu0 %v2088, 32
        %v2099 = vpop.permute.xlu0 %2098
        %vm2103 = vcmask 523520
        %2104 = vst.msk [vmem:[#allocation3] sm:$0xff] %vm2103, %v2095
        %2105 = vst.msk [vmem:[#allocation3 + $0x8] sm:$0xff] %vm2103, %v2097
        %vm2106 = vcmask 516352
        %2107 = vst.msk [vmem:[#allocation3 + $0x10] sm:$0x1] %vm2106, %v2099
        %v2108 = vld [vmem:[#allocation2] sm:$0xff]
        %v2109 = vld [vmem:[#allocation2 + $0x18] sm:$0xff]
        %v2110 = vld [vmem:[#allocation2 + $0x30] sm:$0x1]
        %v2111 = vpack.c.bf16 %v2109, %v2108
        %v2112 = vpack.c.bf16 %v2110, %v2110
        %v2113 = vld [vmem:[#allocation2 + $0x8] sm:$0xff]
        %v2114 = vld [vmem:[#allocation2 + $0x20] sm:$0xff]
        %v2115 = vld [vmem:[#allocation2 + $0x38] sm:$0x1]
        %v2116 = vpack.c.bf16 %v2114, %v2113
        %v2117 = vpack.c.bf16 %v2115, %v2115
        %v2118 = vld [vmem:[#allocation2 + $0x10] sm:$0xff]
        %v2119 = vld [vmem:[#allocation2 + $0x28] sm:$0xff]
        %v2120 = vld [vmem:[#allocation2 + $0x40] sm:$0x1]
        %v2121 = vpack.c.bf16 %v2119, %v2118
        %v2122 = vpack.c.bf16 %v2120, %v2120
        %2125 = vrot.lane.b32.xlu0 %v2111, 64
        %v2126 = vpop.permute.xlu0 %2125
        %2127 = vrot.lane.b32.xlu0 %v2112, 64
        %v2128 = vpop.permute.xlu0 %2127
        %2131 = vrot.lane.b32.xlu0 %v2116, 64
        %v2132 = vpop.permute.xlu0 %2131
        %2133 = vrot.lane.b32.xlu0 %v2117, 64
        %v2134 = vpop.permute.xlu0 %2133
        %v2136 = vsel %vm1863, %v2126, 0
        %v2139 = vsel %vm1863, %v2128, 0
        %v2142 = vsel %vm1863, %v2132, 0
        %v2145 = vsel %vm1863, %v2134, 0
        %2147 = vmatpush.bf16.xpose.msra.mxu0 0
        %2148 = vmatpush.bf16.xpose.msra.mxu0 0
        %2149 = vmatpush.bf16.xpose.msra.mxu0 0
        %2150 = vmatpush.bf16.xpose.msra.mxu0 0
        %2151 = vmatpush.bf16.xpose.msra.mxu0 0
        %2152 = vmatpush.bf16.xpose.msra.mxu0 0
        %2153 = vmatpush.bf16.xpose.msra.mxu0 %v2145
        %2154 = vmatpush.bf16.xpose.msra.mxu0 %v2142
        %2155 = vmatmul.bf16.gmra.mxu0 %v2136
        %v2156 = vpop.f32.mrf.mxu0
        %v2157 = vadd.f32 0.0, %v2156
        %v2158 = vpop.f32.mrf.mxu0
        %v2159 = vadd.f32 0.0, %v2158
        %2160 = vmatmul.bf16.gmra.mxu0 %v2139
        %v2161 = vpop.f32.mrf.mxu0
        %v2162 = vadd.f32 0.0, %v2161
        %v2163 = vpop.f32.mrf.mxu0
        %2164 = vdwg.mxu0
        %v2165 = vsel %vm1894, %v2157, -inf
        %2166 = vmax.xlane.f32.xlu0 %v2165
        %v2167 = vpop.xlane.xlu0 %2166
        %v2168 = vsel %vm1894, %v2159, -inf
        %2169 = vmax.xlane.f32.xlu0 %v2168
        %v2170 = vpop.xlane.xlu0 %2169
        %v2171 = vsel %vm1901, %v2162, -inf
        %2172 = vmax.xlane.f32.xlu0 %v2171
        %v2173 = vpop.xlane.xlu0 %2172
        %v2174 = vsub.f32 %v2157, %v2167
        %v2175 = vsub.f32 %v2159, %v2170
        %v2176 = vsub.f32 %v2162, %v2173
        %v2177 = vmul.f32 %v2174, 1.442695
        %v2178 = vpow.pop %v2177
        %v2179 = vmul.f32 %v2175, 1.442695
        %v2180 = vpow.pop %v2179
        %v2181 = vmul.f32 %v2176, 1.442695
        %v2182 = vpow.pop %v2181
        %v2183 = vsel %vm1894, %v2178, 0.0
        %2184 = vadd.xlane.f32.xlu0 %v2183
        %v2185 = vpop.xlane.xlu0 %2184
        %v2186 = vsel %vm1894, %v2180, 0.0
        %2187 = vadd.xlane.f32.xlu0 %v2186
        %v2188 = vpop.xlane.xlu0 %2187
        %v2189 = vsel %vm1901, %v2182, 0.0
        %2190 = vadd.xlane.f32.xlu0 %v2189
        %v2191 = vpop.xlane.xlu0 %2190
        %v2192 = vrcp.pop %v2185
        %v2193 = vrcp.pop %v2188
        %v2194 = vrcp.pop %v2191
        %v2195 = vmul.f32 %v2178, %v2192
        %v2196 = vmul.f32 %v2180, %v2193
        %v2197 = vmul.f32 %v2182, %v2194
        %v2198 = vpack.c.bf16 %v2196, %v2195
        %v2199 = vpack.c.bf16 %v2197, %v2197
        %2202 = vrot.lane.b32.xlu0 %v2121, 64
        %v2203 = vpop.permute.xlu0 %2202
        %2204 = vrot.lane.b32.xlu0 %v2122, 64
        %v2205 = vpop.permute.xlu0 %2204
        %v2208 = vsel %vm1894, %v2198, 0
        %v2211 = vsel %vm1894, %v2199, 0
        %v2214 = vand.u32 %v2205, %v1939
        %2216 = vmatpush.bf16.msra.mxu0 0
        %2217 = vmatpush.bf16.msra.mxu0 0
        %2218 = vmatpush.bf16.msra.mxu0 0
        %2219 = vmatpush.bf16.msra.mxu0 0
        %2220 = vmatpush.bf16.msra.mxu0 0
        %2221 = vmatpush.bf16.msra.mxu0 0
        %2222 = vmatpush.bf16.msra.mxu0 %v2214
        %2223 = vmatpush.bf16.msra.mxu0 %v2203
        %2224 = vmatmul.bf16.gmra.mxu0 %v2208
        %v2225 = vpop.f32.mrf.mxu0
        %v2226 = vadd.f32 0.0, %v2225
        %v2227 = vpop.f32.mrf.mxu0
        %v2228 = vadd.f32 0.0, %v2227
        %2229 = vmatmul.bf16.gmra.mxu0 %v2211
        %v2230 = vpop.f32.mrf.mxu0
        %v2231 = vadd.f32 0.0, %v2230
        %v2232 = vpop.f32.mrf.mxu0
        %2233 = vdwg.mxu0
        %2237 = vrot.lane.b32.xlu0 %v2226, 64
        %v2238 = vpop.permute.xlu0 %2237
        %2239 = vrot.lane.b32.xlu0 %v2228, 64
        %v2240 = vpop.permute.xlu0 %2239
        %2241 = vrot.lane.b32.xlu0 %v2231, 64
        %v2242 = vpop.permute.xlu0 %2241
        %vm2246 = vcmask 785920
        %2247 = vst.msk [vmem:[#allocation3] sm:$0xff] %vm2246, %v2238
        %2248 = vst.msk [vmem:[#allocation3 + $0x8] sm:$0xff] %vm2246, %v2240
        %vm2249 = vcmask 778752
        %2250 = vst.msk [vmem:[#allocation3 + $0x10] sm:$0x1] %vm2249, %v2242
        %v2251 = vld [vmem:[#allocation2] sm:$0xff]
        %v2252 = vld [vmem:[#allocation2 + $0x18] sm:$0xff]
        %v2253 = vld [vmem:[#allocation2 + $0x30] sm:$0x1]
        %v2254 = vpack.c.bf16 %v2252, %v2251
        %v2255 = vpack.c.bf16 %v2253, %v2253
        %v2256 = vld [vmem:[#allocation2 + $0x8] sm:$0xff]
        %v2257 = vld [vmem:[#allocation2 + $0x20] sm:$0xff]
        %v2258 = vld [vmem:[#allocation2 + $0x38] sm:$0x1]
        %v2259 = vpack.c.bf16 %v2257, %v2256
        %v2260 = vpack.c.bf16 %v2258, %v2258
        %v2261 = vld [vmem:[#allocation2 + $0x10] sm:$0xff]
        %v2262 = vld [vmem:[#allocation2 + $0x28] sm:$0xff]
        %v2263 = vld [vmem:[#allocation2 + $0x40] sm:$0x1]
        %v2264 = vpack.c.bf16 %v2262, %v2261
        %v2265 = vpack.c.bf16 %v2263, %v2263
        %2268 = vrot.lane.b32.xlu0 %v2254, 32
        %v2269 = vpop.permute.xlu0 %2268
        %2270 = vrot.lane.b32.xlu0 %v2255, 32
        %v2271 = vpop.permute.xlu0 %2270
        %2274 = vrot.lane.b32.xlu0 %v2259, 32
        %v2275 = vpop.permute.xlu0 %2274
        %2276 = vrot.lane.b32.xlu0 %v2260, 32
        %v2277 = vpop.permute.xlu0 %2276
        %v2279 = vsel %vm1863, %v2269, 0
        %v2282 = vsel %vm1863, %v2271, 0
        %v2285 = vsel %vm1863, %v2275, 0
        %v2288 = vsel %vm1863, %v2277, 0
        %2290 = vmatpush.bf16.xpose.msra.mxu0 0
        %2291 = vmatpush.bf16.xpose.msra.mxu0 0
        %2292 = vmatpush.bf16.xpose.msra.mxu0 0
        %2293 = vmatpush.bf16.xpose.msra.mxu0 0
        %2294 = vmatpush.bf16.xpose.msra.mxu0 0
        %2295 = vmatpush.bf16.xpose.msra.mxu0 0
        %2296 = vmatpush.bf16.xpose.msra.mxu0 %v2288
        %2297 = vmatpush.bf16.xpose.msra.mxu0 %v2285
        %2298 = vmatmul.bf16.gmra.mxu0 %v2279
        %v2299 = vpop.f32.mrf.mxu0
        %v2300 = vadd.f32 0.0, %v2299
        %v2301 = vpop.f32.mrf.mxu0
        %v2302 = vadd.f32 0.0, %v2301
        %2303 = vmatmul.bf16.gmra.mxu0 %v2282
        %v2304 = vpop.f32.mrf.mxu0
        %v2305 = vadd.f32 0.0, %v2304
        %v2306 = vpop.f32.mrf.mxu0
        %2307 = vdwg.mxu0
        %v2308 = vsel %vm1894, %v2300, -inf
        %2309 = vmax.xlane.f32.xlu0 %v2308
        %v2310 = vpop.xlane.xlu0 %2309
        %v2311 = vsel %vm1894, %v2302, -inf
        %2312 = vmax.xlane.f32.xlu0 %v2311
        %v2313 = vpop.xlane.xlu0 %2312
        %v2314 = vsel %vm1901, %v2305, -inf
        %2315 = vmax.xlane.f32.xlu0 %v2314
        %v2316 = vpop.xlane.xlu0 %2315
        %v2317 = vsub.f32 %v2300, %v2310
        %v2318 = vsub.f32 %v2302, %v2313
        %v2319 = vsub.f32 %v2305, %v2316
        %v2320 = vmul.f32 %v2317, 1.442695
        %v2321 = vpow.pop %v2320
        %v2322 = vmul.f32 %v2318, 1.442695
        %v2323 = vpow.pop %v2322
        %v2324 = vmul.f32 %v2319, 1.442695
        %v2325 = vpow.pop %v2324
        %v2326 = vsel %vm1894, %v2321, 0.0
        %2327 = vadd.xlane.f32.xlu0 %v2326
        %v2328 = vpop.xlane.xlu0 %2327
        %v2329 = vsel %vm1894, %v2323, 0.0
        %2330 = vadd.xlane.f32.xlu0 %v2329
        %v2331 = vpop.xlane.xlu0 %2330
        %v2332 = vsel %vm1901, %v2325, 0.0
        %2333 = vadd.xlane.f32.xlu0 %v2332
        %v2334 = vpop.xlane.xlu0 %2333
        %v2335 = vrcp.pop %v2328
        %v2336 = vrcp.pop %v2331
        %v2337 = vrcp.pop %v2334
        %v2338 = vmul.f32 %v2321, %v2335
        %v2339 = vmul.f32 %v2323, %v2336
        %v2340 = vmul.f32 %v2325, %v2337
        %v2341 = vpack.c.bf16 %v2339, %v2338
        %v2342 = vpack.c.bf16 %v2340, %v2340
        %2345 = vrot.lane.b32.xlu0 %v2264, 32
        %v2346 = vpop.permute.xlu0 %2345
        %2347 = vrot.lane.b32.xlu0 %v2265, 32
        %v2348 = vpop.permute.xlu0 %2347
        %v2351 = vsel %vm1894, %v2341, 0
        %v2354 = vsel %vm1894, %v2342, 0
        %v2357 = vand.u32 %v2348, %v1939
        %2359 = vmatpush.bf16.msra.mxu0 0
        %2360 = vmatpush.bf16.msra.mxu0 0
        %2361 = vmatpush.bf16.msra.mxu0 0
        %2362 = vmatpush.bf16.msra.mxu0 0
        %2363 = vmatpush.bf16.msra.mxu0 0
        %2364 = vmatpush.bf16.msra.mxu0 0
        %2365 = vmatpush.bf16.msra.mxu0 %v2357
        %2366 = vmatpush.bf16.msra.mxu0 %v2346
        %2367 = vmatmul.bf16.gmra.mxu0 %v2351
        %v2368 = vpop.f32.mrf.mxu0
        %v2369 = vadd.f32 0.0, %v2368
        %v2370 = vpop.f32.mrf.mxu0
        %v2371 = vadd.f32 0.0, %v2370
        %2372 = vmatmul.bf16.gmra.mxu0 %v2354
        %v2373 = vpop.f32.mrf.mxu0
        %v2374 = vadd.f32 0.0, %v2373
        %v2375 = vpop.f32.mrf.mxu0
        %2376 = vdwg.mxu0
        %2380 = vrot.lane.b32.xlu0 %v2369, 96
        %v2381 = vpop.permute.xlu0 %2380
        %2382 = vrot.lane.b32.xlu0 %v2371, 96
        %v2383 = vpop.permute.xlu0 %2382
        %2384 = vrot.lane.b32.xlu0 %v2374, 96
        %v2385 = vpop.permute.xlu0 %2384
        %vm2389 = vcmask 1048320
        %2390 = vst.msk [vmem:[#allocation3] sm:$0xff] %vm2389, %v2381
        %2391 = vst.msk [vmem:[#allocation3 + $0x8] sm:$0xff] %vm2389, %v2383
        %vm2392 = vcmask 1041152
        %2393 = vst.msk [vmem:[#allocation3 + $0x10] sm:$0x1] %vm2392, %v2385
        %v2394 = vld [vmem:[#allocation2 + $0x30] sm:$0xfe]
        %v2395 = vld [vmem:[#allocation2 + $0x48] sm:$0xff]
        %v2396 = vld [vmem:[#allocation2 + $0x60] sm:$0x3]
        %v2397 = vpack.c.bf16 %v2395, %v2394
        %v2398 = vpack.c.bf16 %v2396, %v2396
        %v2399 = vld [vmem:[#allocation2 + $0x38] sm:$0xfe]
        %v2400 = vld [vmem:[#allocation2 + $0x50] sm:$0xff]
        %v2401 = vld [vmem:[#allocation2 + $0x68] sm:$0x3]
        %v2402 = vpack.c.bf16 %v2400, %v2399
        %v2403 = vpack.c.bf16 %v2401, %v2401
        %v2404 = vld [vmem:[#allocation2 + $0x40] sm:$0xfe]
        %v2405 = vld [vmem:[#allocation2 + $0x58] sm:$0xff]
        %v2406 = vld [vmem:[#allocation2 + $0x70] sm:$0x3]
        %v2407 = vpack.c.bf16 %v2405, %v2404
        %v2408 = vpack.c.bf16 %v2406, %v2406
        %vm2409 = vsmask.f32 7424
        %v2411 = vshrl.u32 %v2397, 16
        %v2413 = vshll.u32 %v2397, 16
        %v2415 = vrot.slane %v2413, 1
        %v2416 = vor.u32 %v2411, %v2415
        %v2418 = vshll.u32 %v2398, 16
        %v2420 = vrot.slane %v2418, 1
        %v2421 = vsel %vm2409, %v2416, %v2420
        %v2422 = vshrl.u32 %v2398, 16
        %v2425 = vshrl.u32 %v2402, 16
        %v2427 = vshll.u32 %v2402, 16
        %v2429 = vrot.slane %v2427, 1
        %v2430 = vor.u32 %v2425, %v2429
        %v2432 = vshll.u32 %v2403, 16
        %v2434 = vrot.slane %v2432, 1
        %v2435 = vsel %vm2409, %v2430, %v2434
        %v2436 = vshrl.u32 %v2403, 16
        %v2439 = vsel %vm1863, %v2421, 0
        %v2442 = vsel %vm1863, %v2422, 0
        %v2445 = vsel %vm1863, %v2435, 0
        %v2448 = vsel %vm1863, %v2436, 0
        %2450 = vmatpush.bf16.xpose.msra.mxu0 0
        %2451 = vmatpush.bf16.xpose.msra.mxu0 0
        %2452 = vmatpush.bf16.xpose.msra.mxu0 0
        %2453 = vmatpush.bf16.xpose.msra.mxu0 0
        %2454 = vmatpush.bf16.xpose.msra.mxu0 0
        %2455 = vmatpush.bf16.xpose.msra.mxu0 0
        %2456 = vmatpush.bf16.xpose.msra.mxu0 %v2448
        %2457 = vmatpush.bf16.xpose.msra.mxu0 %v2445
        %2458 = vmatmul.bf16.gmra.mxu0 %v2439
        %v2459 = vpop.f32.mrf.mxu0
        %v2460 = vadd.f32 0.0, %v2459
        %v2461 = vpop.f32.mrf.mxu0
        %v2462 = vadd.f32 0.0, %v2461
        %2463 = vmatmul.bf16.gmra.mxu0 %v2442
        %v2464 = vpop.f32.mrf.mxu0
        %v2465 = vadd.f32 0.0, %v2464
        %v2466 = vpop.f32.mrf.mxu0
        %2467 = vdwg.mxu0
        %v2468 = vsel %vm1894, %v2460, -inf
        %2469 = vmax.xlane.f32.xlu0 %v2468
        %v2470 = vpop.xlane.xlu0 %2469
        %v2471 = vsel %vm1894, %v2462, -inf
        %2472 = vmax.xlane.f32.xlu0 %v2471
        %v2473 = vpop.xlane.xlu0 %2472
        %v2474 = vsel %vm1901, %v2465, -inf
        %2475 = vmax.xlane.f32.xlu0 %v2474
        %v2476 = vpop.xlane.xlu0 %2475
        %v2477 = vsub.f32 %v2460, %v2470
        %v2478 = vsub.f32 %v2462, %v2473
        %v2479 = vsub.f32 %v2465, %v2476
        %v2480 = vmul.f32 %v2477, 1.442695
        %v2481 = vpow.pop %v2480
        %v2482 = vmul.f32 %v2478, 1.442695
        %v2483 = vpow.pop %v2482
        %v2484 = vmul.f32 %v2479, 1.442695
        %v2485 = vpow.pop %v2484
        %v2486 = vsel %vm1894, %v2481, 0.0
        %2487 = vadd.xlane.f32.xlu0 %v2486
        %v2488 = vpop.xlane.xlu0 %2487
        %v2489 = vsel %vm1894, %v2483, 0.0
        %2490 = vadd.xlane.f32.xlu0 %v2489
        %v2491 = vpop.xlane.xlu0 %2490
        %v2492 = vsel %vm1901, %v2485, 0.0
        %2493 = vadd.xlane.f32.xlu0 %v2492
        %v2494 = vpop.xlane.xlu0 %2493
        %v2495 = vrcp.pop %v2488
        %v2496 = vrcp.pop %v2491
        %v2497 = vrcp.pop %v2494
        %v2498 = vmul.f32 %v2481, %v2495
        %v2499 = vmul.f32 %v2483, %v2496
        %v2500 = vmul.f32 %v2485, %v2497
        %v2501 = vpack.c.bf16 %v2499, %v2498
        %v2502 = vpack.c.bf16 %v2500, %v2500
        %v2504 = vshrl.u32 %v2407, 16
        %v2506 = vshll.u32 %v2407, 16
        %v2508 = vrot.slane %v2506, 1
        %v2509 = vor.u32 %v2504, %v2508
        %v2511 = vshll.u32 %v2408, 16
        %v2513 = vrot.slane %v2511, 1
        %v2514 = vsel %vm2409, %v2509, %v2513
        %v2515 = vshrl.u32 %v2408, 16
        %v2519 = vsel %vm1894, %v2501, 0
        %v2522 = vsel %vm1894, %v2502, 0
        %v2525 = vand.u32 %v2515, %v1939
        %2527 = vmatpush.bf16.msra.mxu0 0
        %2528 = vmatpush.bf16.msra.mxu0 0
        %2529 = vmatpush.bf16.msra.mxu0 0
        %2530 = vmatpush.bf16.msra.mxu0 0
        %2531 = vmatpush.bf16.msra.mxu0 0
        %2532 = vmatpush.bf16.msra.mxu0 0
        %2533 = vmatpush.bf16.msra.mxu0 %v2525
        %2534 = vmatpush.bf16.msra.mxu0 %v2514
        %2535 = vmatmul.bf16.gmra.mxu0 %v2519
        %v2536 = vpop.f32.mrf.mxu0
        %v2537 = vadd.f32 0.0, %v2536
        %v2538 = vpop.f32.mrf.mxu0
        %v2539 = vadd.f32 0.0, %v2538
        %2540 = vmatmul.bf16.gmra.mxu0 %v2522
        %v2541 = vpop.f32.mrf.mxu0
        %v2542 = vadd.f32 0.0, %v2541
        %v2543 = vpop.f32.mrf.mxu0
        %2544 = vdwg.mxu0
        %2545 = vst.msk [vmem:[#allocation3 + $0x11] sm:$0xff] %vm1863, %v2537
        %2546 = vst.msk [vmem:[#allocation3 + $0x19] sm:$0xff] %vm1863, %v2539
        %2547 = vst.msk [vmem:[#allocation3 + $0x21] sm:$0x1] %vm1963, %v2542
        %v2548 = vld [vmem:[#allocation2 + $0x30] sm:$0xfe]
        %v2549 = vld [vmem:[#allocation2 + $0x48] sm:$0xff]
        %v2550 = vld [vmem:[#allocation2 + $0x60] sm:$0x3]
        %v2551 = vpack.c.bf16 %v2549, %v2548
        %v2552 = vpack.c.bf16 %v2550, %v2550
        %v2553 = vld [vmem:[#allocation2 + $0x38] sm:$0xfe]
        %v2554 = vld [vmem:[#allocation2 + $0x50] sm:$0xff]
        %v2555 = vld [vmem:[#allocation2 + $0x68] sm:$0x3]
        %v2556 = vpack.c.bf16 %v2554, %v2553
        %v2557 = vpack.c.bf16 %v2555, %v2555
        %v2558 = vld [vmem:[#allocation2 + $0x40] sm:$0xfe]
        %v2559 = vld [vmem:[#allocation2 + $0x58] sm:$0xff]
        %v2560 = vld [vmem:[#allocation2 + $0x70] sm:$0x3]
        %v2561 = vpack.c.bf16 %v2559, %v2558
        %v2562 = vpack.c.bf16 %v2560, %v2560
        %v2564 = vshrl.u32 %v2551, 16
        %v2566 = vshll.u32 %v2551, 16
        %v2568 = vrot.slane %v2566, 1
        %v2569 = vor.u32 %v2564, %v2568
        %v2571 = vshll.u32 %v2552, 16
        %v2573 = vrot.slane %v2571, 1
        %v2574 = vsel %vm2409, %v2569, %v2573
        %v2575 = vshrl.u32 %v2552, 16
        %2577 = vrot.lane.b32.xlu0 %v2574, 96
        %v2578 = vpop.permute.xlu0 %2577
        %2579 = vrot.lane.b32.xlu0 %v2575, 96
        %v2580 = vpop.permute.xlu0 %2579
        %v2582 = vshrl.u32 %v2556, 16
        %v2584 = vshll.u32 %v2556, 16
        %v2586 = vrot.slane %v2584, 1
        %v2587 = vor.u32 %v2582, %v2586
        %v2589 = vshll.u32 %v2557, 16
        %v2591 = vrot.slane %v2589, 1
        %v2592 = vsel %vm2409, %v2587, %v2591
        %v2593 = vshrl.u32 %v2557, 16
        %2595 = vrot.lane.b32.xlu0 %v2592, 96
        %v2596 = vpop.permute.xlu0 %2595
        %2597 = vrot.lane.b32.xlu0 %v2593, 96
        %v2598 = vpop.permute.xlu0 %2597
        %v2600 = vsel %vm1863, %v2578, 0
        %v2603 = vsel %vm1863, %v2580, 0
        %v2606 = vsel %vm1863, %v2596, 0
        %v2609 = vsel %vm1863, %v2598, 0
        %2611 = vmatpush.bf16.xpose.msra.mxu0 0
        %2612 = vmatpush.bf16.xpose.msra.mxu0 0
        %2613 = vmatpush.bf16.xpose.msra.mxu0 0
        %2614 = vmatpush.bf16.xpose.msra.mxu0 0
        %2615 = vmatpush.bf16.xpose.msra.mxu0 0
        %2616 = vmatpush.bf16.xpose.msra.mxu0 0
        %2617 = vmatpush.bf16.xpose.msra.mxu0 %v2609
        %2618 = vmatpush.bf16.xpose.msra.mxu0 %v2606
        %2619 = vmatmul.bf16.gmra.mxu0 %v2600
        %v2620 = vpop.f32.mrf.mxu0
        %v2621 = vadd.f32 0.0, %v2620
        %v2622 = vpop.f32.mrf.mxu0
        %v2623 = vadd.f32 0.0, %v2622
        %2624 = vmatmul.bf16.gmra.mxu0 %v2603
        %v2625 = vpop.f32.mrf.mxu0
        %v2626 = vadd.f32 0.0, %v2625
        %v2627 = vpop.f32.mrf.mxu0
        %2628 = vdwg.mxu0
        %v2629 = vsel %vm1894, %v2621, -inf
        %2630 = vmax.xlane.f32.xlu0 %v2629
        %v2631 = vpop.xlane.xlu0 %2630
        %v2632 = vsel %vm1894, %v2623, -inf
        %2633 = vmax.xlane.f32.xlu0 %v2632
        %v2634 = vpop.xlane.xlu0 %2633
        %v2635 = vsel %vm1901, %v2626, -inf
        %2636 = vmax.xlane.f32.xlu0 %v2635
        %v2637 = vpop.xlane.xlu0 %2636
        %v2638 = vsub.f32 %v2621, %v2631
        %v2639 = vsub.f32 %v2623, %v2634
        %v2640 = vsub.f32 %v2626, %v2637
        %v2641 = vmul.f32 %v2638, 1.442695
        %v2642 = vpow.pop %v2641
        %v2643 = vmul.f32 %v2639, 1.442695
        %v2644 = vpow.pop %v2643
        %v2645 = vmul.f32 %v2640, 1.442695
        %v2646 = vpow.pop %v2645
        %v2647 = vsel %vm1894, %v2642, 0.0
        %2648 = vadd.xlane.f32.xlu0 %v2647
        %v2649 = vpop.xlane.xlu0 %2648
        %v2650 = vsel %vm1894, %v2644, 0.0
        %2651 = vadd.xlane.f32.xlu0 %v2650
        %v2652 = vpop.xlane.xlu0 %2651
        %v2653 = vsel %vm1901, %v2646, 0.0
        %2654 = vadd.xlane.f32.xlu0 %v2653
        %v2655 = vpop.xlane.xlu0 %2654
        %v2656 = vrcp.pop %v2649
        %v2657 = vrcp.pop %v2652
        %v2658 = vrcp.pop %v2655
        %v2659 = vmul.f32 %v2642, %v2656
        %v2660 = vmul.f32 %v2644, %v2657
        %v2661 = vmul.f32 %v2646, %v2658
        %v2662 = vpack.c.bf16 %v2660, %v2659
        %v2663 = vpack.c.bf16 %v2661, %v2661
        %v2665 = vshrl.u32 %v2561, 16
        %v2667 = vshll.u32 %v2561, 16
        %v2669 = vrot.slane %v2667, 1
        %v2670 = vor.u32 %v2665, %v2669
        %v2672 = vshll.u32 %v2562, 16
        %v2674 = vrot.slane %v2672, 1
        %v2675 = vsel %vm2409, %v2670, %v2674
        %v2676 = vshrl.u32 %v2562, 16
        %2678 = vrot.lane.b32.xlu0 %v2675, 96
        %v2679 = vpop.permute.xlu0 %2678
        %2680 = vrot.lane.b32.xlu0 %v2676, 96
        %v2681 = vpop.permute.xlu0 %2680
        %v2684 = vsel %vm1894, %v2662, 0
        %v2687 = vsel %vm1894, %v2663, 0
        %v2690 = vand.u32 %v2681, %v1939
        %2692 = vmatpush.bf16.msra.mxu0 0
        %2693 = vmatpush.bf16.msra.mxu0 0
        %2694 = vmatpush.bf16.msra.mxu0 0
        %2695 = vmatpush.bf16.msra.mxu0 0
        %2696 = vmatpush.bf16.msra.mxu0 0
        %2697 = vmatpush.bf16.msra.mxu0 0
        %2698 = vmatpush.bf16.msra.mxu0 %v2690
        %2699 = vmatpush.bf16.msra.mxu0 %v2679
        %2700 = vmatmul.bf16.gmra.mxu0 %v2684
        %v2701 = vpop.f32.mrf.mxu0
        %v2702 = vadd.f32 0.0, %v2701
        %v2703 = vpop.f32.mrf.mxu0
        %v2704 = vadd.f32 0.0, %v2703
        %2705 = vmatmul.bf16.gmra.mxu0 %v2687
        %v2706 = vpop.f32.mrf.mxu0
        %v2707 = vadd.f32 0.0, %v2706
        %v2708 = vpop.f32.mrf.mxu0
        %2709 = vdwg.mxu0
        %2713 = vrot.lane.b32.xlu0 %v2702, 32
        %v2714 = vpop.permute.xlu0 %2713
        %2715 = vrot.lane.b32.xlu0 %v2704, 32
        %v2716 = vpop.permute.xlu0 %2715
        %2717 = vrot.lane.b32.xlu0 %v2707, 32
        %v2718 = vpop.permute.xlu0 %2717
        %2722 = vst.msk [vmem:[#allocation3 + $0x11] sm:$0xff] %vm2103, %v2714
        %2723 = vst.msk [vmem:[#allocation3 + $0x19] sm:$0xff] %vm2103, %v2716
        %2724 = vst.msk [vmem:[#allocation3 + $0x21] sm:$0x1] %vm2106, %v2718
        %v2725 = vld [vmem:[#allocation2 + $0x30] sm:$0xfe]
        %v2726 = vld [vmem:[#allocation2 + $0x48] sm:$0xff]
        %v2727 = vld [vmem:[#allocation2 + $0x60] sm:$0x3]
        %v2728 = vpack.c.bf16 %v2726, %v2725
        %v2729 = vpack.c.bf16 %v2727, %v2727
        %v2730 = vld [vmem:[#allocation2 + $0x38] sm:$0xfe]
        %v2731 = vld [vmem:[#allocation2 + $0x50] sm:$0xff]
        %v2732 = vld [vmem:[#allocation2 + $0x68] sm:$0x3]
        %v2733 = vpack.c.bf16 %v2731, %v2730
        %v2734 = vpack.c.bf16 %v2732, %v2732
        %v2735 = vld [vmem:[#allocation2 + $0x40] sm:$0xfe]
        %v2736 = vld [vmem:[#allocation2 + $0x58] sm:$0xff]
        %v2737 = vld [vmem:[#allocation2 + $0x70] sm:$0x3]
        %v2738 = vpack.c.bf16 %v2736, %v2735
        %v2739 = vpack.c.bf16 %v2737, %v2737
        %v2741 = vshrl.u32 %v2728, 16
        %v2743 = vshll.u32 %v2728, 16
        %v2745 = vrot.slane %v2743, 1
        %v2746 = vor.u32 %v2741, %v2745
        %v2748 = vshll.u32 %v2729, 16
        %v2750 = vrot.slane %v2748, 1
        %v2751 = vsel %vm2409, %v2746, %v2750
        %v2752 = vshrl.u32 %v2729, 16
        %2754 = vrot.lane.b32.xlu0 %v2751, 64
        %v2755 = vpop.permute.xlu0 %2754
        %2756 = vrot.lane.b32.xlu0 %v2752, 64
        %v2757 = vpop.permute.xlu0 %2756
        %v2759 = vshrl.u32 %v2733, 16
        %v2761 = vshll.u32 %v2733, 16
        %v2763 = vrot.slane %v2761, 1
        %v2764 = vor.u32 %v2759, %v2763
        %v2766 = vshll.u32 %v2734, 16
        %v2768 = vrot.slane %v2766, 1
        %v2769 = vsel %vm2409, %v2764, %v2768
        %v2770 = vshrl.u32 %v2734, 16
        %2772 = vrot.lane.b32.xlu0 %v2769, 64
        %v2773 = vpop.permute.xlu0 %2772
        %2774 = vrot.lane.b32.xlu0 %v2770, 64
        %v2775 = vpop.permute.xlu0 %2774
        %v2777 = vsel %vm1863, %v2755, 0
        %v2780 = vsel %vm1863, %v2757, 0
        %v2783 = vsel %vm1863, %v2773, 0
        %v2786 = vsel %vm1863, %v2775, 0
        %2788 = vmatpush.bf16.xpose.msra.mxu0 0
        %2789 = vmatpush.bf16.xpose.msra.mxu0 0
        %2790 = vmatpush.bf16.xpose.msra.mxu0 0
        %2791 = vmatpush.bf16.xpose.msra.mxu0 0
        %2792 = vmatpush.bf16.xpose.msra.mxu0 0
        %2793 = vmatpush.bf16.xpose.msra.mxu0 0
        %2794 = vmatpush.bf16.xpose.msra.mxu0 %v2786
        %2795 = vmatpush.bf16.xpose.msra.mxu0 %v2783
        %2796 = vmatmul.bf16.gmra.mxu0 %v2777
        %v2797 = vpop.f32.mrf.mxu0
        %v2798 = vadd.f32 0.0, %v2797
        %v2799 = vpop.f32.mrf.mxu0
        %v2800 = vadd.f32 0.0, %v2799
        %2801 = vmatmul.bf16.gmra.mxu0 %v2780
        %v2802 = vpop.f32.mrf.mxu0
        %v2803 = vadd.f32 0.0, %v2802
        %v2804 = vpop.f32.mrf.mxu0
        %2805 = vdwg.mxu0
        %v2806 = vsel %vm1894, %v2798, -inf
        %2807 = vmax.xlane.f32.xlu0 %v2806
        %v2808 = vpop.xlane.xlu0 %2807
        %v2809 = vsel %vm1894, %v2800, -inf
        %2810 = vmax.xlane.f32.xlu0 %v2809
        %v2811 = vpop.xlane.xlu0 %2810
        %v2812 = vsel %vm1901, %v2803, -inf
        %2813 = vmax.xlane.f32.xlu0 %v2812
        %v2814 = vpop.xlane.xlu0 %2813
        %v2815 = vsub.f32 %v2798, %v2808
        %v2816 = vsub.f32 %v2800, %v2811
        %v2817 = vsub.f32 %v2803, %v2814
        %v2818 = vmul.f32 %v2815, 1.442695
        %v2819 = vpow.pop %v2818
        %v2820 = vmul.f32 %v2816, 1.442695
        %v2821 = vpow.pop %v2820
        %v2822 = vmul.f32 %v2817, 1.442695
        %v2823 = vpow.pop %v2822
        %v2824 = vsel %vm1894, %v2819, 0.0
        %2825 = vadd.xlane.f32.xlu0 %v2824
        %v2826 = vpop.xlane.xlu0 %2825
        %v2827 = vsel %vm1894, %v2821, 0.0
        %2828 = vadd.xlane.f32.xlu0 %v2827
        %v2829 = vpop.xlane.xlu0 %2828
        %v2830 = vsel %vm1901, %v2823, 0.0
        %2831 = vadd.xlane.f32.xlu0 %v2830
        %v2832 = vpop.xlane.xlu0 %2831
        %v2833 = vrcp.pop %v2826
        %v2834 = vrcp.pop %v2829
        %v2835 = vrcp.pop %v2832
        %v2836 = vmul.f32 %v2819, %v2833
        %v2837 = vmul.f32 %v2821, %v2834
        %v2838 = vmul.f32 %v2823, %v2835
        %v2839 = vpack.c.bf16 %v2837, %v2836
        %v2840 = vpack.c.bf16 %v2838, %v2838
        %v2842 = vshrl.u32 %v2738, 16
        %v2844 = vshll.u32 %v2738, 16
        %v2846 = vrot.slane %v2844, 1
        %v2847 = vor.u32 %v2842, %v2846
        %v2849 = vshll.u32 %v2739, 16
        %v2851 = vrot.slane %v2849, 1
        %v2852 = vsel %vm2409, %v2847, %v2851
        %v2853 = vshrl.u32 %v2739, 16
        %2855 = vrot.lane.b32.xlu0 %v2852, 64
        %v2856 = vpop.permute.xlu0 %2855
        %2857 = vrot.lane.b32.xlu0 %v2853, 64
        %v2858 = vpop.permute.xlu0 %2857
        %v2861 = vsel %vm1894, %v2839, 0
        %v2864 = vsel %vm1894, %v2840, 0
        %v2867 = vand.u32 %v2858, %v1939
        %2869 = vmatpush.bf16.msra.mxu0 0
        %2870 = vmatpush.bf16.msra.mxu0 0
        %2871 = vmatpush.bf16.msra.mxu0 0
        %2872 = vmatpush.bf16.msra.mxu0 0
        %2873 = vmatpush.bf16.msra.mxu0 0
        %2874 = vmatpush.bf16.msra.mxu0 0
        %2875 = vmatpush.bf16.msra.mxu0 %v2867
        %2876 = vmatpush.bf16.msra.mxu0 %v2856
        %2877 = vmatmul.bf16.gmra.mxu0 %v2861
        %v2878 = vpop.f32.mrf.mxu0
        %v2879 = vadd.f32 0.0, %v2878
        %v2880 = vpop.f32.mrf.mxu0
        %v2881 = vadd.f32 0.0, %v2880
        %2882 = vmatmul.bf16.gmra.mxu0 %v2864
        %v2883 = vpop.f32.mrf.mxu0
        %v2884 = vadd.f32 0.0, %v2883
        %v2885 = vpop.f32.mrf.mxu0
        %2886 = vdwg.mxu0
        %2890 = vrot.lane.b32.xlu0 %v2879, 64
        %v2891 = vpop.permute.xlu0 %2890
        %2892 = vrot.lane.b32.xlu0 %v2881, 64
        %v2893 = vpop.permute.xlu0 %2892
        %2894 = vrot.lane.b32.xlu0 %v2884, 64
        %v2895 = vpop.permute.xlu0 %2894
        %2899 = vst.msk [vmem:[#allocation3 + $0x11] sm:$0xff] %vm2246, %v2891
        %2900 = vst.msk [vmem:[#allocation3 + $0x19] sm:$0xff] %vm2246, %v2893
        %2901 = vst.msk [vmem:[#allocation3 + $0x21] sm:$0x1] %vm2249, %v2895
        %v2902 = vld [vmem:[#allocation2 + $0x30] sm:$0xfe]
        %v2903 = vld [vmem:[#allocation2 + $0x48] sm:$0xff]
        %v2904 = vld [vmem:[#allocation2 + $0x60] sm:$0x3]
        %v2905 = vpack.c.bf16 %v2903, %v2902
        %v2906 = vpack.c.bf16 %v2904, %v2904
        %v2907 = vld [vmem:[#allocation2 + $0x38] sm:$0xfe]
        %v2908 = vld [vmem:[#allocation2 + $0x50] sm:$0xff]
        %v2909 = vld [vmem:[#allocation2 + $0x68] sm:$0x3]
        %v2910 = vpack.c.bf16 %v2908, %v2907
        %v2911 = vpack.c.bf16 %v2909, %v2909
        %v2912 = vld [vmem:[#allocation2 + $0x40] sm:$0xfe]
        %v2913 = vld [vmem:[#allocation2 + $0x58] sm:$0xff]
        %v2914 = vld [vmem:[#allocation2 + $0x70] sm:$0x3]
        %v2915 = vpack.c.bf16 %v2913, %v2912
        %v2916 = vpack.c.bf16 %v2914, %v2914
        %v2918 = vshrl.u32 %v2905, 16
        %v2920 = vshll.u32 %v2905, 16
        %v2922 = vrot.slane %v2920, 1
        %v2923 = vor.u32 %v2918, %v2922
        %v2925 = vshll.u32 %v2906, 16
        %v2927 = vrot.slane %v2925, 1
        %v2928 = vsel %vm2409, %v2923, %v2927
        %v2929 = vshrl.u32 %v2906, 16
        %2931 = vrot.lane.b32.xlu0 %v2928, 32
        %v2932 = vpop.permute.xlu0 %2931
        %2933 = vrot.lane.b32.xlu0 %v2929, 32
        %v2934 = vpop.permute.xlu0 %2933
        %v2936 = vshrl.u32 %v2910, 16
        %v2938 = vshll.u32 %v2910, 16
        %v2940 = vrot.slane %v2938, 1
        %v2941 = vor.u32 %v2936, %v2940
        %v2943 = vshll.u32 %v2911, 16
        %v2945 = vrot.slane %v2943, 1
        %v2946 = vsel %vm2409, %v2941, %v2945
        %v2947 = vshrl.u32 %v2911, 16
        %2949 = vrot.lane.b32.xlu0 %v2946, 32
        %v2950 = vpop.permute.xlu0 %2949
        %2951 = vrot.lane.b32.xlu0 %v2947, 32
        %v2952 = vpop.permute.xlu0 %2951
        %v2954 = vsel %vm1863, %v2932, 0
        %v2957 = vsel %vm1863, %v2934, 0
        %v2960 = vsel %vm1863, %v2950, 0
        %v2963 = vsel %vm1863, %v2952, 0
        %2965 = vmatpush.bf16.xpose.msra.mxu0 0
        %2966 = vmatpush.bf16.xpose.msra.mxu0 0
        %2967 = vmatpush.bf16.xpose.msra.mxu0 0
        %2968 = vmatpush.bf16.xpose.msra.mxu0 0
        %2969 = vmatpush.bf16.xpose.msra.mxu0 0
        %2970 = vmatpush.bf16.xpose.msra.mxu0 0
        %2971 = vmatpush.bf16.xpose.msra.mxu0 %v2963
        %2972 = vmatpush.bf16.xpose.msra.mxu0 %v2960
        %2973 = vmatmul.bf16.gmra.mxu0 %v2954
        %v2974 = vpop.f32.mrf.mxu0
        %v2975 = vadd.f32 0.0, %v2974
        %v2976 = vpop.f32.mrf.mxu0
        %v2977 = vadd.f32 0.0, %v2976
        %2978 = vmatmul.bf16.gmra.mxu0 %v2957
        %v2979 = vpop.f32.mrf.mxu0
        %v2980 = vadd.f32 0.0, %v2979
        %v2981 = vpop.f32.mrf.mxu0
        %2982 = vdwg.mxu0
        %v2983 = vsel %vm1894, %v2975, -inf
        %2984 = vmax.xlane.f32.xlu0 %v2983
        %v2985 = vpop.xlane.xlu0 %2984
        %v2986 = vsel %vm1894, %v2977, -inf
        %2987 = vmax.xlane.f32.xlu0 %v2986
        %v2988 = vpop.xlane.xlu0 %2987
        %v2989 = vsel %vm1901, %v2980, -inf
        %2990 = vmax.xlane.f32.xlu0 %v2989
        %v2991 = vpop.xlane.xlu0 %2990
        %v2992 = vsub.f32 %v2975, %v2985
        %v2993 = vsub.f32 %v2977, %v2988
        %v2994 = vsub.f32 %v2980, %v2991
        %v2995 = vmul.f32 %v2992, 1.442695
        %v2996 = vpow.pop %v2995
        %v2997 = vmul.f32 %v2993, 1.442695
        %v2998 = vpow.pop %v2997
        %v2999 = vmul.f32 %v2994, 1.442695
        %v3000 = vpow.pop %v2999
        %v3001 = vsel %vm1894, %v2996, 0.0
        %3002 = vadd.xlane.f32.xlu0 %v3001
        %v3003 = vpop.xlane.xlu0 %3002
        %v3004 = vsel %vm1894, %v2998, 0.0
        %3005 = vadd.xlane.f32.xlu0 %v3004
        %v3006 = vpop.xlane.xlu0 %3005
        %v3007 = vsel %vm1901, %v3000, 0.0
        %3008 = vadd.xlane.f32.xlu0 %v3007
        %v3009 = vpop.xlane.xlu0 %3008
        %v3010 = vrcp.pop %v3003
        %v3011 = vrcp.pop %v3006
        %v3012 = vrcp.pop %v3009
        %v3013 = vmul.f32 %v2996, %v3010
        %v3014 = vmul.f32 %v2998, %v3011
        %v3015 = vmul.f32 %v3000, %v3012
        %v3016 = vpack.c.bf16 %v3014, %v3013
        %v3017 = vpack.c.bf16 %v3015, %v3015
        %v3019 = vshrl.u32 %v2915, 16
        %v3021 = vshll.u32 %v2915, 16
        %v3023 = vrot.slane %v3021, 1
        %v3024 = vor.u32 %v3019, %v3023
        %v3026 = vshll.u32 %v2916, 16
        %v3028 = vrot.slane %v3026, 1
        %v3029 = vsel %vm2409, %v3024, %v3028
        %v3030 = vshrl.u32 %v2916, 16
        %3032 = vrot.lane.b32.xlu0 %v3029, 32
        %v3033 = vpop.permute.xlu0 %3032
        %3034 = vrot.lane.b32.xlu0 %v3030, 32
        %v3035 = vpop.permute.xlu0 %3034
        %v3038 = vsel %vm1894, %v3016, 0
        %v3041 = vsel %vm1894, %v3017, 0
        %v3044 = vand.u32 %v3035, %v1939
        %3046 = vmatpush.bf16.msra.mxu0 0
        %3047 = vmatpush.bf16.msra.mxu0 0
        %3048 = vmatpush.bf16.msra.mxu0 0
        %3049 = vmatpush.bf16.msra.mxu0 0
        %3050 = vmatpush.bf16.msra.mxu0 0
        %3051 = vmatpush.bf16.msra.mxu0 0
        %3052 = vmatpush.bf16.msra.mxu0 %v3044
        %3053 = vmatpush.bf16.msra.mxu0 %v3033
        %3054 = vmatmul.bf16.gmra.mxu0 %v3038
        %v3055 = vpop.f32.mrf.mxu0
        %v3056 = vadd.f32 0.0, %v3055
        %v3057 = vpop.f32.mrf.mxu0
        %v3058 = vadd.f32 0.0, %v3057
        %3059 = vmatmul.bf16.gmra.mxu0 %v3041
        %v3060 = vpop.f32.mrf.mxu0
        %v3061 = vadd.f32 0.0, %v3060
        %v3062 = vpop.f32.mrf.mxu0
        %3063 = vdwg.mxu0
        %3067 = vrot.lane.b32.xlu0 %v3056, 96
        %v3068 = vpop.permute.xlu0 %3067
        %3069 = vrot.lane.b32.xlu0 %v3058, 96
        %v3070 = vpop.permute.xlu0 %3069
        %3071 = vrot.lane.b32.xlu0 %v3061, 96
        %v3072 = vpop.permute.xlu0 %3071
        %3076 = vst.msk [vmem:[#allocation3 + $0x11] sm:$0xff] %vm2389, %v3068
        %3077 = vst.msk [vmem:[#allocation3 + $0x19] sm:$0xff] %vm2389, %v3070
        %3078 = vst.msk [vmem:[#allocation3 + $0x21] sm:$0x1] %vm2392, %v3072
        %v3079 = vld [vmem:[#allocation2 + $0x60] sm:$0xfc]
        %v3080 = vld [vmem:[#allocation2 + $0x78] sm:$0xff]
        %v3081 = vld [vmem:[#allocation2 + $0x90] sm:$0x7]
        %v3082 = vpack.c.bf16 %v3080, %v3079
        %v3083 = vpack.c.bf16 %v3081, %v3081
        %v3084 = vld [vmem:[#allocation2 + $0x68] sm:$0xfc]
        %v3085 = vld [vmem:[#allocation2 + $0x80] sm:$0xff]
        %v3086 = vld [vmem:[#allocation2 + $0x98] sm:$0x7]
        %v3087 = vpack.c.bf16 %v3085, %v3084
        %v3088 = vpack.c.bf16 %v3086, %v3086
        %v3089 = vld [vmem:[#allocation2 + $0x70] sm:$0xfc]
        %v3090 = vld [vmem:[#allocation2 + $0x88] sm:$0xff]
        %v3091 = vld [vmem:[#allocation2 + $0xa0] sm:$0x7]
        %v3092 = vpack.c.bf16 %v3090, %v3089
        %v3093 = vpack.c.bf16 %v3091, %v3091
        %vm3096 = vcmask 1046528
        %v3097 = vrot.slane %v3082, 1
        %v3098 = vrot.slane %v3083, 1
        %v3099 = vsel %vm3096, %v3097, %v3098
        %v3102 = vrot.slane %v3087, 1
        %v3103 = vrot.slane %v3088, 1
        %v3104 = vsel %vm3096, %v3102, %v3103
        %v3106 = vsel %vm1863, %v3099, 0
        %v3109 = vsel %vm1863, %v3098, 0
        %v3112 = vsel %vm1863, %v3104, 0
        %v3115 = vsel %vm1863, %v3103, 0
        %3117 = vmatpush.bf16.xpose.msra.mxu0 0
        %3118 = vmatpush.bf16.xpose.msra.mxu0 0
        %3119 = vmatpush.bf16.xpose.msra.mxu0 0
        %3120 = vmatpush.bf16.xpose.msra.mxu0 0
        %3121 = vmatpush.bf16.xpose.msra.mxu0 0
        %3122 = vmatpush.bf16.xpose.msra.mxu0 0
        %3123 = vmatpush.bf16.xpose.msra.mxu0 %v3115
        %3124 = vmatpush.bf16.xpose.msra.mxu0 %v3112
        %3125 = vmatmul.bf16.gmra.mxu0 %v3106
        %v3126 = vpop.f32.mrf.mxu0
        %v3127 = vadd.f32 0.0, %v3126
        %v3128 = vpop.f32.mrf.mxu0
        %v3129 = vadd.f32 0.0, %v3128
        %3130 = vmatmul.bf16.gmra.mxu0 %v3109
        %v3131 = vpop.f32.mrf.mxu0
        %v3132 = vadd.f32 0.0, %v3131
        %v3133 = vpop.f32.mrf.mxu0
        %3134 = vdwg.mxu0
        %v3135 = vsel %vm1894, %v3127, -inf
        %3136 = vmax.xlane.f32.xlu0 %v3135
        %v3137 = vpop.xlane.xlu0 %3136
        %v3138 = vsel %vm1894, %v3129, -inf
        %3139 = vmax.xlane.f32.xlu0 %v3138
        %v3140 = vpop.xlane.xlu0 %3139
        %v3141 = vsel %vm1901, %v3132, -inf
        %3142 = vmax.xlane.f32.xlu0 %v3141
        %v3143 = vpop.xlane.xlu0 %3142
        %v3144 = vsub.f32 %v3127, %v3137
        %v3145 = vsub.f32 %v3129, %v3140
        %v3146 = vsub.f32 %v3132, %v3143
        %v3147 = vmul.f32 %v3144, 1.442695
        %v3148 = vpow.pop %v3147
        %v3149 = vmul.f32 %v3145, 1.442695
        %v3150 = vpow.pop %v3149
        %v3151 = vmul.f32 %v3146, 1.442695
        %v3152 = vpow.pop %v3151
        %v3153 = vsel %vm1894, %v3148, 0.0
        %3154 = vadd.xlane.f32.xlu0 %v3153
        %v3155 = vpop.xlane.xlu0 %3154
        %v3156 = vsel %vm1894, %v3150, 0.0
        %3157 = vadd.xlane.f32.xlu0 %v3156
        %v3158 = vpop.xlane.xlu0 %3157
        %v3159 = vsel %vm1901, %v3152, 0.0
        %3160 = vadd.xlane.f32.xlu0 %v3159
        %v3161 = vpop.xlane.xlu0 %3160
        %v3162 = vrcp.pop %v3155
        %v3163 = vrcp.pop %v3158
        %v3164 = vrcp.pop %v3161
        %v3165 = vmul.f32 %v3148, %v3162
        %v3166 = vmul.f32 %v3150, %v3163
        %v3167 = vmul.f32 %v3152, %v3164
        %v3168 = vpack.c.bf16 %v3166, %v3165
        %v3169 = vpack.c.bf16 %v3167, %v3167
        %v3172 = vrot.slane %v3092, 1
        %v3173 = vrot.slane %v3093, 1
        %v3174 = vsel %vm3096, %v3172, %v3173
        %v3177 = vsel %vm1894, %v3168, 0
        %v3180 = vsel %vm1894, %v3169, 0
        %v3183 = vand.u32 %v3173, %v1939
        %3185 = vmatpush.bf16.msra.mxu0 0
        %3186 = vmatpush.bf16.msra.mxu0 0
        %3187 = vmatpush.bf16.msra.mxu0 0
        %3188 = vmatpush.bf16.msra.mxu0 0
        %3189 = vmatpush.bf16.msra.mxu0 0
        %3190 = vmatpush.bf16.msra.mxu0 0
        %3191 = vmatpush.bf16.msra.mxu0 %v3183
        %3192 = vmatpush.bf16.msra.mxu0 %v3174
        %3193 = vmatmul.bf16.gmra.mxu0 %v3177
        %v3194 = vpop.f32.mrf.mxu0
        %v3195 = vadd.f32 0.0, %v3194
        %v3196 = vpop.f32.mrf.mxu0
        %v3197 = vadd.f32 0.0, %v3196
        %3198 = vmatmul.bf16.gmra.mxu0 %v3180
        %v3199 = vpop.f32.mrf.mxu0
        %v3200 = vadd.f32 0.0, %v3199
        %v3201 = vpop.f32.mrf.mxu0
        %3202 = vdwg.mxu0
        %3203 = vst.msk [vmem:[#allocation3 + $0x22] sm:$0xff] %vm1863, %v3195
        %3204 = vst.msk [vmem:[#allocation3 + $0x2a] sm:$0xff] %vm1863, %v3197
        %3205 = vst.msk [vmem:[#allocation3 + $0x32] sm:$0x1] %vm1963, %v3200
        %v3206 = vld [vmem:[#allocation2 + $0x60] sm:$0xfc]
        %v3207 = vld [vmem:[#allocation2 + $0x78] sm:$0xff]
        %v3208 = vld [vmem:[#allocation2 + $0x90] sm:$0x7]
        %v3209 = vpack.c.bf16 %v3207, %v3206
        %v3210 = vpack.c.bf16 %v3208, %v3208
        %v3211 = vld [vmem:[#allocation2 + $0x68] sm:$0xfc]
        %v3212 = vld [vmem:[#allocation2 + $0x80] sm:$0xff]
        %v3213 = vld [vmem:[#allocation2 + $0x98] sm:$0x7]
        %v3214 = vpack.c.bf16 %v3212, %v3211
        %v3215 = vpack.c.bf16 %v3213, %v3213
        %v3216 = vld [vmem:[#allocation2 + $0x70] sm:$0xfc]
        %v3217 = vld [vmem:[#allocation2 + $0x88] sm:$0xff]
        %v3218 = vld [vmem:[#allocation2 + $0xa0] sm:$0x7]
        %v3219 = vpack.c.bf16 %v3217, %v3216
        %v3220 = vpack.c.bf16 %v3218, %v3218
        %v3223 = vrot.slane %v3209, 1
        %v3224 = vrot.slane %v3210, 1
        %v3225 = vsel %vm3096, %v3223, %v3224
        %3226 = vrot.lane.b32.xlu0 %v3225, 96
        %v3227 = vpop.permute.xlu0 %3226
        %3228 = vrot.lane.b32.xlu0 %v3224, 96
        %v3229 = vpop.permute.xlu0 %3228
        %v3232 = vrot.slane %v3214, 1
        %v3233 = vrot.slane %v3215, 1
        %v3234 = vsel %vm3096, %v3232, %v3233
        %3235 = vrot.lane.b32.xlu0 %v3234, 96
        %v3236 = vpop.permute.xlu0 %3235
        %3237 = vrot.lane.b32.xlu0 %v3233, 96
        %v3238 = vpop.permute.xlu0 %3237
        %v3240 = vsel %vm1863, %v3227, 0
        %v3243 = vsel %vm1863, %v3229, 0
        %v3246 = vsel %vm1863, %v3236, 0
        %v3249 = vsel %vm1863, %v3238, 0
        %3251 = vmatpush.bf16.xpose.msra.mxu0 0
        %3252 = vmatpush.bf16.xpose.msra.mxu0 0
        %3253 = vmatpush.bf16.xpose.msra.mxu0 0
        %3254 = vmatpush.bf16.xpose.msra.mxu0 0
        %3255 = vmatpush.bf16.xpose.msra.mxu0 0
        %3256 = vmatpush.bf16.xpose.msra.mxu0 0
        %3257 = vmatpush.bf16.xpose.msra.mxu0 %v3249
        %3258 = vmatpush.bf16.xpose.msra.mxu0 %v3246
        %3259 = vmatmul.bf16.gmra.mxu0 %v3240
        %v3260 = vpop.f32.mrf.mxu0
        %v3261 = vadd.f32 0.0, %v3260
        %v3262 = vpop.f32.mrf.mxu0
        %v3263 = vadd.f32 0.0, %v3262
        %3264 = vmatmul.bf16.gmra.mxu0 %v3243
        %v3265 = vpop.f32.mrf.mxu0
        %v3266 = vadd.f32 0.0, %v3265
        %v3267 = vpop.f32.mrf.mxu0
        %3268 = vdwg.mxu0
        %v3269 = vsel %vm1894, %v3261, -inf
        %3270 = vmax.xlane.f32.xlu0 %v3269
        %v3271 = vpop.xlane.xlu0 %3270
        %v3272 = vsel %vm1894, %v3263, -inf
        %3273 = vmax.xlane.f32.xlu0 %v3272
        %v3274 = vpop.xlane.xlu0 %3273
        %v3275 = vsel %vm1901, %v3266, -inf
        %3276 = vmax.xlane.f32.xlu0 %v3275
        %v3277 = vpop.xlane.xlu0 %3276
        %v3278 = vsub.f32 %v3261, %v3271
        %v3279 = vsub.f32 %v3263, %v3274
        %v3280 = vsub.f32 %v3266, %v3277
        %v3281 = vmul.f32 %v3278, 1.442695
        %v3282 = vpow.pop %v3281
        %v3283 = vmul.f32 %v3279, 1.442695
        %v3284 = vpow.pop %v3283
        %v3285 = vmul.f32 %v3280, 1.442695
        %v3286 = vpow.pop %v3285
        %v3287 = vsel %vm1894, %v3282, 0.0
        %3288 = vadd.xlane.f32.xlu0 %v3287
        %v3289 = vpop.xlane.xlu0 %3288
        %v3290 = vsel %vm1894, %v3284, 0.0
        %3291 = vadd.xlane.f32.xlu0 %v3290
        %v3292 = vpop.xlane.xlu0 %3291
        %v3293 = vsel %vm1901, %v3286, 0.0
        %3294 = vadd.xlane.f32.xlu0 %v3293
        %v3295 = vpop.xlane.xlu0 %3294
        %v3296 = vrcp.pop %v3289
        %v3297 = vrcp.pop %v3292
        %v3298 = vrcp.pop %v3295
        %v3299 = vmul.f32 %v3282, %v3296
        %v3300 = vmul.f32 %v3284, %v3297
        %v3301 = vmul.f32 %v3286, %v3298
        %v3302 = vpack.c.bf16 %v3300, %v3299
        %v3303 = vpack.c.bf16 %v3301, %v3301
        %v3306 = vrot.slane %v3219, 1
        %v3307 = vrot.slane %v3220, 1
        %v3308 = vsel %vm3096, %v3306, %v3307
        %3309 = vrot.lane.b32.xlu0 %v3308, 96
        %v3310 = vpop.permute.xlu0 %3309
        %3311 = vrot.lane.b32.xlu0 %v3307, 96
        %v3312 = vpop.permute.xlu0 %3311
        %v3315 = vsel %vm1894, %v3302, 0
        %v3318 = vsel %vm1894, %v3303, 0
        %v3321 = vand.u32 %v3312, %v1939
        %3323 = vmatpush.bf16.msra.mxu0 0
        %3324 = vmatpush.bf16.msra.mxu0 0
        %3325 = vmatpush.bf16.msra.mxu0 0
        %3326 = vmatpush.bf16.msra.mxu0 0
        %3327 = vmatpush.bf16.msra.mxu0 0
        %3328 = vmatpush.bf16.msra.mxu0 0
        %3329 = vmatpush.bf16.msra.mxu0 %v3321
        %3330 = vmatpush.bf16.msra.mxu0 %v3310
        %3331 = vmatmul.bf16.gmra.mxu0 %v3315
        %v3332 = vpop.f32.mrf.mxu0
        %v3333 = vadd.f32 0.0, %v3332
        %v3334 = vpop.f32.mrf.mxu0
        %v3335 = vadd.f32 0.0, %v3334
        %3336 = vmatmul.bf16.gmra.mxu0 %v3318
        %v3337 = vpop.f32.mrf.mxu0
        %v3338 = vadd.f32 0.0, %v3337
        %v3339 = vpop.f32.mrf.mxu0
        %3340 = vdwg.mxu0
        %3344 = vrot.lane.b32.xlu0 %v3333, 32
        %v3345 = vpop.permute.xlu0 %3344
        %3346 = vrot.lane.b32.xlu0 %v3335, 32
        %v3347 = vpop.permute.xlu0 %3346
        %3348 = vrot.lane.b32.xlu0 %v3338, 32
        %v3349 = vpop.permute.xlu0 %3348
        %3353 = vst.msk [vmem:[#allocation3 + $0x22] sm:$0xff] %vm2103, %v3345
        %3354 = vst.msk [vmem:[#allocation3 + $0x2a] sm:$0xff] %vm2103, %v3347
        %3355 = vst.msk [vmem:[#allocation3 + $0x32] sm:$0x1] %vm2106, %v3349
        %v3356 = vld [vmem:[#allocation2 + $0x60] sm:$0xfc]
        %v3357 = vld [vmem:[#allocation2 + $0x78] sm:$0xff]
        %v3358 = vld [vmem:[#allocation2 + $0x90] sm:$0x7]
        %v3359 = vpack.c.bf16 %v3357, %v3356
        %v3360 = vpack.c.bf16 %v3358, %v3358
        %v3361 = vld [vmem:[#allocation2 + $0x68] sm:$0xfc]
        %v3362 = vld [vmem:[#allocation2 + $0x80] sm:$0xff]
        %v3363 = vld [vmem:[#allocation2 + $0x98] sm:$0x7]
        %v3364 = vpack.c.bf16 %v3362, %v3361
        %v3365 = vpack.c.bf16 %v3363, %v3363
        %v3366 = vld [vmem:[#allocation2 + $0x70] sm:$0xfc]
        %v3367 = vld [vmem:[#allocation2 + $0x88] sm:$0xff]
        %v3368 = vld [vmem:[#allocation2 + $0xa0] sm:$0x7]
        %v3369 = vpack.c.bf16 %v3367, %v3366
        %v3370 = vpack.c.bf16 %v3368, %v3368
        %v3373 = vrot.slane %v3359, 1
        %v3374 = vrot.slane %v3360, 1
        %v3375 = vsel %vm3096, %v3373, %v3374
        %3376 = vrot.lane.b32.xlu0 %v3375, 64
        %v3377 = vpop.permute.xlu0 %3376
        %3378 = vrot.lane.b32.xlu0 %v3374, 64
        %v3379 = vpop.permute.xlu0 %3378
        %v3382 = vrot.slane %v3364, 1
        %v3383 = vrot.slane %v3365, 1
        %v3384 = vsel %vm3096, %v3382, %v3383
        %3385 = vrot.lane.b32.xlu0 %v3384, 64
        %v3386 = vpop.permute.xlu0 %3385
        %3387 = vrot.lane.b32.xlu0 %v3383, 64
        %v3388 = vpop.permute.xlu0 %3387
        %v3390 = vsel %vm1863, %v3377, 0
        %v3393 = vsel %vm1863, %v3379, 0
        %v3396 = vsel %vm1863, %v3386, 0
        %v3399 = vsel %vm1863, %v3388, 0
        %3401 = vmatpush.bf16.xpose.msra.mxu0 0
        %3402 = vmatpush.bf16.xpose.msra.mxu0 0
        %3403 = vmatpush.bf16.xpose.msra.mxu0 0
        %3404 = vmatpush.bf16.xpose.msra.mxu0 0
        %3405 = vmatpush.bf16.xpose.msra.mxu0 0
        %3406 = vmatpush.bf16.xpose.msra.mxu0 0
        %3407 = vmatpush.bf16.xpose.msra.mxu0 %v3399
        %3408 = vmatpush.bf16.xpose.msra.mxu0 %v3396
        %3409 = vmatmul.bf16.gmra.mxu0 %v3390
        %v3410 = vpop.f32.mrf.mxu0
        %v3411 = vadd.f32 0.0, %v3410
        %v3412 = vpop.f32.mrf.mxu0
        %v3413 = vadd.f32 0.0, %v3412
        %3414 = vmatmul.bf16.gmra.mxu0 %v3393
        %v3415 = vpop.f32.mrf.mxu0
        %v3416 = vadd.f32 0.0, %v3415
        %v3417 = vpop.f32.mrf.mxu0
        %3418 = vdwg.mxu0
        %v3419 = vsel %vm1894, %v3411, -inf
        %3420 = vmax.xlane.f32.xlu0 %v3419
        %v3421 = vpop.xlane.xlu0 %3420
        %v3422 = vsel %vm1894, %v3413, -inf
        %3423 = vmax.xlane.f32.xlu0 %v3422
        %v3424 = vpop.xlane.xlu0 %3423
        %v3425 = vsel %vm1901, %v3416, -inf
        %3426 = vmax.xlane.f32.xlu0 %v3425
        %v3427 = vpop.xlane.xlu0 %3426
        %v3428 = vsub.f32 %v3411, %v3421
        %v3429 = vsub.f32 %v3413, %v3424
        %v3430 = vsub.f32 %v3416, %v3427
        %v3431 = vmul.f32 %v3428, 1.442695
        %v3432 = vpow.pop %v3431
        %v3433 = vmul.f32 %v3429, 1.442695
        %v3434 = vpow.pop %v3433
        %v3435 = vmul.f32 %v3430, 1.442695
        %v3436 = vpow.pop %v3435
        %v3437 = vsel %vm1894, %v3432, 0.0
        %3438 = vadd.xlane.f32.xlu0 %v3437
        %v3439 = vpop.xlane.xlu0 %3438
        %v3440 = vsel %vm1894, %v3434, 0.0
        %3441 = vadd.xlane.f32.xlu0 %v3440
        %v3442 = vpop.xlane.xlu0 %3441
        %v3443 = vsel %vm1901, %v3436, 0.0
        %3444 = vadd.xlane.f32.xlu0 %v3443
        %v3445 = vpop.xlane.xlu0 %3444
        %v3446 = vrcp.pop %v3439
        %v3447 = vrcp.pop %v3442
        %v3448 = vrcp.pop %v3445
        %v3449 = vmul.f32 %v3432, %v3446
        %v3450 = vmul.f32 %v3434, %v3447
        %v3451 = vmul.f32 %v3436, %v3448
        %v3452 = vpack.c.bf16 %v3450, %v3449
        %v3453 = vpack.c.bf16 %v3451, %v3451
        %v3456 = vrot.slane %v3369, 1
        %v3457 = vrot.slane %v3370, 1
        %v3458 = vsel %vm3096, %v3456, %v3457
        %3459 = vrot.lane.b32.xlu0 %v3458, 64
        %v3460 = vpop.permute.xlu0 %3459
        %3461 = vrot.lane.b32.xlu0 %v3457, 64
        %v3462 = vpop.permute.xlu0 %3461
        %v3465 = vsel %vm1894, %v3452, 0
        %v3468 = vsel %vm1894, %v3453, 0
        %v3471 = vand.u32 %v3462, %v1939
        %3473 = vmatpush.bf16.msra.mxu0 0
        %3474 = vmatpush.bf16.msra.mxu0 0
        %3475 = vmatpush.bf16.msra.mxu0 0
        %3476 = vmatpush.bf16.msra.mxu0 0
        %3477 = vmatpush.bf16.msra.mxu0 0
        %3478 = vmatpush.bf16.msra.mxu0 0
        %3479 = vmatpush.bf16.msra.mxu0 %v3471
        %3480 = vmatpush.bf16.msra.mxu0 %v3460
        %3481 = vmatmul.bf16.gmra.mxu0 %v3465
        %v3482 = vpop.f32.mrf.mxu0
        %v3483 = vadd.f32 0.0, %v3482
        %v3484 = vpop.f32.mrf.mxu0
        %v3485 = vadd.f32 0.0, %v3484
        %3486 = vmatmul.bf16.gmra.mxu0 %v3468
        %v3487 = vpop.f32.mrf.mxu0
        %v3488 = vadd.f32 0.0, %v3487
        %v3489 = vpop.f32.mrf.mxu0
        %3490 = vdwg.mxu0
        %3494 = vrot.lane.b32.xlu0 %v3483, 64
        %v3495 = vpop.permute.xlu0 %3494
        %3496 = vrot.lane.b32.xlu0 %v3485, 64
        %v3497 = vpop.permute.xlu0 %3496
        %3498 = vrot.lane.b32.xlu0 %v3488, 64
        %v3499 = vpop.permute.xlu0 %3498
        %3503 = vst.msk [vmem:[#allocation3 + $0x22] sm:$0xff] %vm2246, %v3495
        %3504 = vst.msk [vmem:[#allocation3 + $0x2a] sm:$0xff] %vm2246, %v3497
        %3505 = vst.msk [vmem:[#allocation3 + $0x32] sm:$0x1] %vm2249, %v3499
        %v3506 = vld [vmem:[#allocation2 + $0x60] sm:$0xfc]
        %v3507 = vld [vmem:[#allocation2 + $0x78] sm:$0xff]
        %v3508 = vld [vmem:[#allocation2 + $0x90] sm:$0x7]
        %v3509 = vpack.c.bf16 %v3507, %v3506
        %v3510 = vpack.c.bf16 %v3508, %v3508
        %v3511 = vld [vmem:[#allocation2 + $0x68] sm:$0xfc]
        %v3512 = vld [vmem:[#allocation2 + $0x80] sm:$0xff]
        %v3513 = vld [vmem:[#allocation2 + $0x98] sm:$0x7]
        %v3514 = vpack.c.bf16 %v3512, %v3511
        %v3515 = vpack.c.bf16 %v3513, %v3513
        %v3516 = vld [vmem:[#allocation2 + $0x70] sm:$0xfc]
        %v3517 = vld [vmem:[#allocation2 + $0x88] sm:$0xff]
        %v3518 = vld [vmem:[#allocation2 + $0xa0] sm:$0x7]
        %v3519 = vpack.c.bf16 %v3517, %v3516
        %v3520 = vpack.c.bf16 %v3518, %v3518
        %v3523 = vrot.slane %v3509, 1
        %v3524 = vrot.slane %v3510, 1
        %v3525 = vsel %vm3096, %v3523, %v3524
        %3526 = vrot.lane.b32.xlu0 %v3525, 32
        %v3527 = vpop.permute.xlu0 %3526
        %3528 = vrot.lane.b32.xlu0 %v3524, 32
        %v3529 = vpop.permute.xlu0 %3528
        %v3532 = vrot.slane %v3514, 1
        %v3533 = vrot.slane %v3515, 1
        %v3534 = vsel %vm3096, %v3532, %v3533
        %3535 = vrot.lane.b32.xlu0 %v3534, 32
        %v3536 = vpop.permute.xlu0 %3535
        %3537 = vrot.lane.b32.xlu0 %v3533, 32
        %v3538 = vpop.permute.xlu0 %3537
        %v3540 = vsel %vm1863, %v3527, 0
        %v3543 = vsel %vm1863, %v3529, 0
        %v3546 = vsel %vm1863, %v3536, 0
        %v3549 = vsel %vm1863, %v3538, 0
        %3551 = vmatpush.bf16.xpose.msra.mxu0 0
        %3552 = vmatpush.bf16.xpose.msra.mxu0 0
        %3553 = vmatpush.bf16.xpose.msra.mxu0 0
        %3554 = vmatpush.bf16.xpose.msra.mxu0 0
        %3555 = vmatpush.bf16.xpose.msra.mxu0 0
        %3556 = vmatpush.bf16.xpose.msra.mxu0 0
        %3557 = vmatpush.bf16.xpose.msra.mxu0 %v3549
        %3558 = vmatpush.bf16.xpose.msra.mxu0 %v3546
        %3559 = vmatmul.bf16.gmra.mxu0 %v3540
        %v3560 = vpop.f32.mrf.mxu0
        %v3561 = vadd.f32 0.0, %v3560
        %v3562 = vpop.f32.mrf.mxu0
        %v3563 = vadd.f32 0.0, %v3562
        %3564 = vmatmul.bf16.gmra.mxu0 %v3543
        %v3565 = vpop.f32.mrf.mxu0
        %v3566 = vadd.f32 0.0, %v3565
        %v3567 = vpop.f32.mrf.mxu0
        %3568 = vdwg.mxu0
        %v3569 = vsel %vm1894, %v3561, -inf
        %3570 = vmax.xlane.f32.xlu0 %v3569
        %v3571 = vpop.xlane.xlu0 %3570
        %v3572 = vsel %vm1894, %v3563, -inf
        %3573 = vmax.xlane.f32.xlu0 %v3572
        %v3574 = vpop.xlane.xlu0 %3573
        %v3575 = vsel %vm1901, %v3566, -inf
        %3576 = vmax.xlane.f32.xlu0 %v3575
        %v3577 = vpop.xlane.xlu0 %3576
        %v3578 = vsub.f32 %v3561, %v3571
        %v3579 = vsub.f32 %v3563, %v3574
        %v3580 = vsub.f32 %v3566, %v3577
        %v3581 = vmul.f32 %v3578, 1.442695
        %v3582 = vpow.pop %v3581
        %v3583 = vmul.f32 %v3579, 1.442695
        %v3584 = vpow.pop %v3583
        %v3585 = vmul.f32 %v3580, 1.442695
        %v3586 = vpow.pop %v3585
        %v3587 = vsel %vm1894, %v3582, 0.0
        %3588 = vadd.xlane.f32.xlu0 %v3587
        %v3589 = vpop.xlane.xlu0 %3588
        %v3590 = vsel %vm1894, %v3584, 0.0
        %3591 = vadd.xlane.f32.xlu0 %v3590
        %v3592 = vpop.xlane.xlu0 %3591
        %v3593 = vsel %vm1901, %v3586, 0.0
        %3594 = vadd.xlane.f32.xlu0 %v3593
        %v3595 = vpop.xlane.xlu0 %3594
        %v3596 = vrcp.pop %v3589
        %v3597 = vrcp.pop %v3592
        %v3598 = vrcp.pop %v3595
        %v3599 = vmul.f32 %v3582, %v3596
        %v3600 = vmul.f32 %v3584, %v3597
        %v3601 = vmul.f32 %v3586, %v3598
        %v3602 = vpack.c.bf16 %v3600, %v3599
        %v3603 = vpack.c.bf16 %v3601, %v3601
        %v3606 = vrot.slane %v3519, 1
        %v3607 = vrot.slane %v3520, 1
        %v3608 = vsel %vm3096, %v3606, %v3607
        %3609 = vrot.lane.b32.xlu0 %v3608, 32
        %v3610 = vpop.permute.xlu0 %3609
        %3611 = vrot.lane.b32.xlu0 %v3607, 32
        %v3612 = vpop.permute.xlu0 %3611
        %v3615 = vsel %vm1894, %v3602, 0
        %v3618 = vsel %vm1894, %v3603, 0
        %v3621 = vand.u32 %v3612, %v1939
        %3623 = vmatpush.bf16.msra.mxu0 0
        %3624 = vmatpush.bf16.msra.mxu0 0
        %3625 = vmatpush.bf16.msra.mxu0 0
        %3626 = vmatpush.bf16.msra.mxu0 0
        %3627 = vmatpush.bf16.msra.mxu0 0
        %3628 = vmatpush.bf16.msra.mxu0 0
        %3629 = vmatpush.bf16.msra.mxu0 %v3621
        %3630 = vmatpush.bf16.msra.mxu0 %v3610
        %3631 = vmatmul.bf16.gmra.mxu0 %v3615
        %v3632 = vpop.f32.mrf.mxu0
        %v3633 = vadd.f32 0.0, %v3632
        %v3634 = vpop.f32.mrf.mxu0
        %v3635 = vadd.f32 0.0, %v3634
        %3636 = vmatmul.bf16.gmra.mxu0 %v3618
        %v3637 = vpop.f32.mrf.mxu0
        %v3638 = vadd.f32 0.0, %v3637
        %v3639 = vpop.f32.mrf.mxu0
        %3640 = vdwg.mxu0
        %3644 = vrot.lane.b32.xlu0 %v3633, 96
        %v3645 = vpop.permute.xlu0 %3644
        %3646 = vrot.lane.b32.xlu0 %v3635, 96
        %v3647 = vpop.permute.xlu0 %3646
        %3648 = vrot.lane.b32.xlu0 %v3638, 96
        %v3649 = vpop.permute.xlu0 %3648
        %3653 = vst.msk [vmem:[#allocation3 + $0x22] sm:$0xff] %vm2389, %v3645
        %3654 = vst.msk [vmem:[#allocation3 + $0x2a] sm:$0xff] %vm2389, %v3647
        %3655 = vst.msk [vmem:[#allocation3 + $0x32] sm:$0x1] %vm2392, %v3649
        %v3656 = vld [vmem:[#allocation2 + $0x90] sm:$0xf8]
        %v3657 = vld [vmem:[#allocation2 + $0xa8] sm:$0xff]
        %v3658 = vld [vmem:[#allocation2 + $0xc0] sm:$0xf]
        %v3659 = vpack.c.bf16 %v3657, %v3656
        %v3660 = vpack.c.bf16 %v3658, %v3658
        %v3661 = vld [vmem:[#allocation2 + $0x98] sm:$0xf8]
        %v3662 = vld [vmem:[#allocation2 + $0xb0] sm:$0xff]
        %v3663 = vld [vmem:[#allocation2 + $0xc8] sm:$0xf]
        %v3664 = vpack.c.bf16 %v3662, %v3661
        %v3665 = vpack.c.bf16 %v3663, %v3663
        %v3666 = vld [vmem:[#allocation2 + $0xa0] sm:$0xf8]
        %v3667 = vld [vmem:[#allocation2 + $0xb8] sm:$0xff]
        %v3668 = vld [vmem:[#allocation2 + $0xd0] sm:$0xf]
        %v3669 = vpack.c.bf16 %v3667, %v3666
        %v3670 = vpack.c.bf16 %v3668, %v3668
        %vm3671 = vsmask.f32 6400
        %v3673 = vshrl.u32 %v3659, 16
        %v3675 = vrot.slane %v3673, 1
        %v3676 = vshll.u32 %v3659, 16
        %v3678 = vrot.slane %v3676, 2
        %v3679 = vor.u32 %v3675, %v3678
        %v3681 = vshrl.u32 %v3660, 16
        %v3683 = vrot.slane %v3681, 1
        %v3684 = vshll.u32 %v3660, 16
        %v3686 = vrot.slane %v3684, 2
        %v3687 = vor.u32 %v3683, %v3686
        %v3688 = vsel %vm3671, %v3679, %v3687
        %v3690 = vshrl.u32 %v3664, 16
        %v3692 = vrot.slane %v3690, 1
        %v3693 = vshll.u32 %v3664, 16
        %v3695 = vrot.slane %v3693, 2
        %v3696 = vor.u32 %v3692, %v3695
        %v3698 = vshrl.u32 %v3665, 16
        %v3700 = vrot.slane %v3698, 1
        %v3701 = vshll.u32 %v3665, 16
        %v3703 = vrot.slane %v3701, 2
        %v3704 = vor.u32 %v3700, %v3703
        %v3705 = vsel %vm3671, %v3696, %v3704
        %v3707 = vsel %vm1863, %v3688, 0
        %v3710 = vsel %vm1863, %v3683, 0
        %v3713 = vsel %vm1863, %v3705, 0
        %v3716 = vsel %vm1863, %v3700, 0
        %3718 = vmatpush.bf16.xpose.msra.mxu0 0
        %3719 = vmatpush.bf16.xpose.msra.mxu0 0
        %3720 = vmatpush.bf16.xpose.msra.mxu0 0
        %3721 = vmatpush.bf16.xpose.msra.mxu0 0
        %3722 = vmatpush.bf16.xpose.msra.mxu0 0
        %3723 = vmatpush.bf16.xpose.msra.mxu0 0
        %3724 = vmatpush.bf16.xpose.msra.mxu0 %v3716
        %3725 = vmatpush.bf16.xpose.msra.mxu0 %v3713
        %3726 = vmatmul.bf16.gmra.mxu0 %v3707
        %v3727 = vpop.f32.mrf.mxu0
        %v3728 = vadd.f32 0.0, %v3727
        %v3729 = vpop.f32.mrf.mxu0
        %v3730 = vadd.f32 0.0, %v3729
        %3731 = vmatmul.bf16.gmra.mxu0 %v3710
        %v3732 = vpop.f32.mrf.mxu0
        %v3733 = vadd.f32 0.0, %v3732
        %v3734 = vpop.f32.mrf.mxu0
        %3735 = vdwg.mxu0
        %v3736 = vsel %vm1894, %v3728, -inf
        %3737 = vmax.xlane.f32.xlu0 %v3736
        %v3738 = vpop.xlane.xlu0 %3737
        %v3739 = vsel %vm1894, %v3730, -inf
        %3740 = vmax.xlane.f32.xlu0 %v3739
        %v3741 = vpop.xlane.xlu0 %3740
        %v3742 = vsel %vm1901, %v3733, -inf
        %3743 = vmax.xlane.f32.xlu0 %v3742
        %v3744 = vpop.xlane.xlu0 %3743
        %v3745 = vsub.f32 %v3728, %v3738
        %v3746 = vsub.f32 %v3730, %v3741
        %v3747 = vsub.f32 %v3733, %v3744
        %v3748 = vmul.f32 %v3745, 1.442695
        %v3749 = vpow.pop %v3748
        %v3750 = vmul.f32 %v3746, 1.442695
        %v3751 = vpow.pop %v3750
        %v3752 = vmul.f32 %v3747, 1.442695
        %v3753 = vpow.pop %v3752
        %v3754 = vsel %vm1894, %v3749, 0.0
        %3755 = vadd.xlane.f32.xlu0 %v3754
        %v3756 = vpop.xlane.xlu0 %3755
        %v3757 = vsel %vm1894, %v3751, 0.0
        %3758 = vadd.xlane.f32.xlu0 %v3757
        %v3759 = vpop.xlane.xlu0 %3758
        %v3760 = vsel %vm1901, %v3753, 0.0
        %3761 = vadd.xlane.f32.xlu0 %v3760
        %v3762 = vpop.xlane.xlu0 %3761
        %v3763 = vrcp.pop %v3756
        %v3764 = vrcp.pop %v3759
        %v3765 = vrcp.pop %v3762
        %v3766 = vmul.f32 %v3749, %v3763
        %v3767 = vmul.f32 %v3751, %v3764
        %v3768 = vmul.f32 %v3753, %v3765
        %v3769 = vpack.c.bf16 %v3767, %v3766
        %v3770 = vpack.c.bf16 %v3768, %v3768
        %v3772 = vshrl.u32 %v3669, 16
        %v3774 = vrot.slane %v3772, 1
        %v3775 = vshll.u32 %v3669, 16
        %v3777 = vrot.slane %v3775, 2
        %v3778 = vor.u32 %v3774, %v3777
        %v3780 = vshrl.u32 %v3670, 16
        %v3782 = vrot.slane %v3780, 1
        %v3783 = vshll.u32 %v3670, 16
        %v3785 = vrot.slane %v3783, 2
        %v3786 = vor.u32 %v3782, %v3785
        %v3787 = vsel %vm3671, %v3778, %v3786
        %v3790 = vsel %vm1894, %v3769, 0
        %v3793 = vsel %vm1894, %v3770, 0
        %v3796 = vand.u32 %v3782, %v1939
        %3798 = vmatpush.bf16.msra.mxu0 0
        %3799 = vmatpush.bf16.msra.mxu0 0
        %3800 = vmatpush.bf16.msra.mxu0 0
        %3801 = vmatpush.bf16.msra.mxu0 0
        %3802 = vmatpush.bf16.msra.mxu0 0
        %3803 = vmatpush.bf16.msra.mxu0 0
        %3804 = vmatpush.bf16.msra.mxu0 %v3796
        %3805 = vmatpush.bf16.msra.mxu0 %v3787
        %3806 = vmatmul.bf16.gmra.mxu0 %v3790
        %v3807 = vpop.f32.mrf.mxu0
        %v3808 = vadd.f32 0.0, %v3807
        %v3809 = vpop.f32.mrf.mxu0
        %v3810 = vadd.f32 0.0, %v3809
        %3811 = vmatmul.bf16.gmra.mxu0 %v3793
        %v3812 = vpop.f32.mrf.mxu0
        %v3813 = vadd.f32 0.0, %v3812
        %v3814 = vpop.f32.mrf.mxu0
        %3815 = vdwg.mxu0
        %3816 = vst.msk [vmem:[#allocation3 + $0x33] sm:$0xff] %vm1863, %v3808
        %3817 = vst.msk [vmem:[#allocation3 + $0x3b] sm:$0xff] %vm1863, %v3810
        %3818 = vst.msk [vmem:[#allocation3 + $0x43] sm:$0x1] %vm1963, %v3813
        %v3819 = vld [vmem:[#allocation2 + $0x90] sm:$0xf8]
        %v3820 = vld [vmem:[#allocation2 + $0xa8] sm:$0xff]
        %v3821 = vld [vmem:[#allocation2 + $0xc0] sm:$0xf]
        %v3822 = vpack.c.bf16 %v3820, %v3819
        %v3823 = vpack.c.bf16 %v3821, %v3821
        %v3824 = vld [vmem:[#allocation2 + $0x98] sm:$0xf8]
        %v3825 = vld [vmem:[#allocation2 + $0xb0] sm:$0xff]
        %v3826 = vld [vmem:[#allocation2 + $0xc8] sm:$0xf]
        %v3827 = vpack.c.bf16 %v3825, %v3824
        %v3828 = vpack.c.bf16 %v3826, %v3826
        %v3829 = vld [vmem:[#allocation2 + $0xa0] sm:$0xf8]
        %v3830 = vld [vmem:[#allocation2 + $0xb8] sm:$0xff]
        %v3831 = vld [vmem:[#allocation2 + $0xd0] sm:$0xf]
        %v3832 = vpack.c.bf16 %v3830, %v3829
        %v3833 = vpack.c.bf16 %v3831, %v3831
        %v3835 = vshrl.u32 %v3822, 16
        %v3837 = vrot.slane %v3835, 1
        %v3838 = vshll.u32 %v3822, 16
        %v3840 = vrot.slane %v3838, 2
        %v3841 = vor.u32 %v3837, %v3840
        %v3843 = vshrl.u32 %v3823, 16
        %v3845 = vrot.slane %v3843, 1
        %v3846 = vshll.u32 %v3823, 16
        %v3848 = vrot.slane %v3846, 2
        %v3849 = vor.u32 %v3845, %v3848
        %v3850 = vsel %vm3671, %v3841, %v3849
        %3851 = vrot.lane.b32.xlu0 %v3850, 96
        %v3852 = vpop.permute.xlu0 %3851
        %3853 = vrot.lane.b32.xlu0 %v3845, 96
        %v3854 = vpop.permute.xlu0 %3853
        %v3856 = vshrl.u32 %v3827, 16
        %v3858 = vrot.slane %v3856, 1
        %v3859 = vshll.u32 %v3827, 16
        %v3861 = vrot.slane %v3859, 2
        %v3862 = vor.u32 %v3858, %v3861
        %v3864 = vshrl.u32 %v3828, 16
        %v3866 = vrot.slane %v3864, 1
        %v3867 = vshll.u32 %v3828, 16
        %v3869 = vrot.slane %v3867, 2
        %v3870 = vor.u32 %v3866, %v3869
        %v3871 = vsel %vm3671, %v3862, %v3870
        %3872 = vrot.lane.b32.xlu0 %v3871, 96
        %v3873 = vpop.permute.xlu0 %3872
        %3874 = vrot.lane.b32.xlu0 %v3866, 96
        %v3875 = vpop.permute.xlu0 %3874
        %v3877 = vsel %vm1863, %v3852, 0
        %v3880 = vsel %vm1863, %v3854, 0
        %v3883 = vsel %vm1863, %v3873, 0
        %v3886 = vsel %vm1863, %v3875, 0
        %3888 = vmatpush.bf16.xpose.msra.mxu0 0
        %3889 = vmatpush.bf16.xpose.msra.mxu0 0
        %3890 = vmatpush.bf16.xpose.msra.mxu0 0
        %3891 = vmatpush.bf16.xpose.msra.mxu0 0
        %3892 = vmatpush.bf16.xpose.msra.mxu0 0
        %3893 = vmatpush.bf16.xpose.msra.mxu0 0
        %3894 = vmatpush.bf16.xpose.msra.mxu0 %v3886
        %3895 = vmatpush.bf16.xpose.msra.mxu0 %v3883
        %3896 = vmatmul.bf16.gmra.mxu0 %v3877
        %v3897 = vpop.f32.mrf.mxu0
        %v3898 = vadd.f32 0.0, %v3897
        %v3899 = vpop.f32.mrf.mxu0
        %v3900 = vadd.f32 0.0, %v3899
        %3901 = vmatmul.bf16.gmra.mxu0 %v3880
        %v3902 = vpop.f32.mrf.mxu0
        %v3903 = vadd.f32 0.0, %v3902
        %v3904 = vpop.f32.mrf.mxu0
        %3905 = vdwg.mxu0
        %v3906 = vsel %vm1894, %v3898, -inf
        %3907 = vmax.xlane.f32.xlu0 %v3906
        %v3908 = vpop.xlane.xlu0 %3907
        %v3909 = vsel %vm1894, %v3900, -inf
        %3910 = vmax.xlane.f32.xlu0 %v3909
        %v3911 = vpop.xlane.xlu0 %3910
        %v3912 = vsel %vm1901, %v3903, -inf
        %3913 = vmax.xlane.f32.xlu0 %v3912
        %v3914 = vpop.xlane.xlu0 %3913
        %v3915 = vsub.f32 %v3898, %v3908
        %v3916 = vsub.f32 %v3900, %v3911
        %v3917 = vsub.f32 %v3903, %v3914
        %v3918 = vmul.f32 %v3915, 1.442695
        %v3919 = vpow.pop %v3918
        %v3920 = vmul.f32 %v3916, 1.442695
        %v3921 = vpow.pop %v3920
        %v3922 = vmul.f32 %v3917, 1.442695
        %v3923 = vpow.pop %v3922
        %v3924 = vsel %vm1894, %v3919, 0.0
        %3925 = vadd.xlane.f32.xlu0 %v3924
        %v3926 = vpop.xlane.xlu0 %3925
        %v3927 = vsel %vm1894, %v3921, 0.0
        %3928 = vadd.xlane.f32.xlu0 %v3927
        %v3929 = vpop.xlane.xlu0 %3928
        %v3930 = vsel %vm1901, %v3923, 0.0
        %3931 = vadd.xlane.f32.xlu0 %v3930
        %v3932 = vpop.xlane.xlu0 %3931
        %v3933 = vrcp.pop %v3926
        %v3934 = vrcp.pop %v3929
        %v3935 = vrcp.pop %v3932
        %v3936 = vmul.f32 %v3919, %v3933
        %v3937 = vmul.f32 %v3921, %v3934
        %v3938 = vmul.f32 %v3923, %v3935
        %v3939 = vpack.c.bf16 %v3937, %v3936
        %v3940 = vpack.c.bf16 %v3938, %v3938
        %v3942 = vshrl.u32 %v3832, 16
        %v3944 = vrot.slane %v3942, 1
        %v3945 = vshll.u32 %v3832, 16
        %v3947 = vrot.slane %v3945, 2
        %v3948 = vor.u32 %v3944, %v3947
        %v3950 = vshrl.u32 %v3833, 16
        %v3952 = vrot.slane %v3950, 1
        %v3953 = vshll.u32 %v3833, 16
        %v3955 = vrot.slane %v3953, 2
        %v3956 = vor.u32 %v3952, %v3955
        %v3957 = vsel %vm3671, %v3948, %v3956
        %3958 = vrot.lane.b32.xlu0 %v3957, 96
        %v3959 = vpop.permute.xlu0 %3958
        %3960 = vrot.lane.b32.xlu0 %v3952, 96
        %v3961 = vpop.permute.xlu0 %3960
        %v3964 = vsel %vm1894, %v3939, 0
        %v3967 = vsel %vm1894, %v3940, 0
        %v3970 = vand.u32 %v3961, %v1939
        %3972 = vmatpush.bf16.msra.mxu0 0
        %3973 = vmatpush.bf16.msra.mxu0 0
        %3974 = vmatpush.bf16.msra.mxu0 0
        %3975 = vmatpush.bf16.msra.mxu0 0
        %3976 = vmatpush.bf16.msra.mxu0 0
        %3977 = vmatpush.bf16.msra.mxu0 0
        %3978 = vmatpush.bf16.msra.mxu0 %v3970
        %3979 = vmatpush.bf16.msra.mxu0 %v3959
        %3980 = vmatmul.bf16.gmra.mxu0 %v3964
        %v3981 = vpop.f32.mrf.mxu0
        %v3982 = vadd.f32 0.0, %v3981
        %v3983 = vpop.f32.mrf.mxu0
        %v3984 = vadd.f32 0.0, %v3983
        %3985 = vmatmul.bf16.gmra.mxu0 %v3967
        %v3986 = vpop.f32.mrf.mxu0
        %v3987 = vadd.f32 0.0, %v3986
        %v3988 = vpop.f32.mrf.mxu0
        %3989 = vdwg.mxu0
        %3993 = vrot.lane.b32.xlu0 %v3982, 32
        %v3994 = vpop.permute.xlu0 %3993
        %3995 = vrot.lane.b32.xlu0 %v3984, 32
        %v3996 = vpop.permute.xlu0 %3995
        %3997 = vrot.lane.b32.xlu0 %v3987, 32
        %v3998 = vpop.permute.xlu0 %3997
        %4002 = vst.msk [vmem:[#allocation3 + $0x33] sm:$0xff] %vm2103, %v3994
        %4003 = vst.msk [vmem:[#allocation3 + $0x3b] sm:$0xff] %vm2103, %v3996
        %4004 = vst.msk [vmem:[#allocation3 + $0x43] sm:$0x1] %vm2106, %v3998
        %v4005 = vld [vmem:[#allocation2 + $0x90] sm:$0xf8]
        %v4006 = vld [vmem:[#allocation2 + $0xa8] sm:$0xff]
        %v4007 = vld [vmem:[#allocation2 + $0xc0] sm:$0xf]
        %v4008 = vpack.c.bf16 %v4006, %v4005
        %v4009 = vpack.c.bf16 %v4007, %v4007
        %v4010 = vld [vmem:[#allocation2 + $0x98] sm:$0xf8]
        %v4011 = vld [vmem:[#allocation2 + $0xb0] sm:$0xff]
        %v4012 = vld [vmem:[#allocation2 + $0xc8] sm:$0xf]
        %v4013 = vpack.c.bf16 %v4011, %v4010
        %v4014 = vpack.c.bf16 %v4012, %v4012
        %v4015 = vld [vmem:[#allocation2 + $0xa0] sm:$0xf8]
        %v4016 = vld [vmem:[#allocation2 + $0xb8] sm:$0xff]
        %v4017 = vld [vmem:[#allocation2 + $0xd0] sm:$0xf]
        %v4018 = vpack.c.bf16 %v4016, %v4015
        %v4019 = vpack.c.bf16 %v4017, %v4017
        %v4021 = vshrl.u32 %v4008, 16
        %v4023 = vrot.slane %v4021, 1
        %v4024 = vshll.u32 %v4008, 16
        %v4026 = vrot.slane %v4024, 2
        %v4027 = vor.u32 %v4023, %v4026
        %v4029 = vshrl.u32 %v4009, 16
        %v4031 = vrot.slane %v4029, 1
        %v4032 = vshll.u32 %v4009, 16
        %v4034 = vrot.slane %v4032, 2
        %v4035 = vor.u32 %v4031, %v4034
        %v4036 = vsel %vm3671, %v4027, %v4035
        %4037 = vrot.lane.b32.xlu0 %v4036, 64
        %v4038 = vpop.permute.xlu0 %4037
        %4039 = vrot.lane.b32.xlu0 %v4031, 64
        %v4040 = vpop.permute.xlu0 %4039
        %v4042 = vshrl.u32 %v4013, 16
        %v4044 = vrot.slane %v4042, 1
        %v4045 = vshll.u32 %v4013, 16
        %v4047 = vrot.slane %v4045, 2
        %v4048 = vor.u32 %v4044, %v4047
        %v4050 = vshrl.u32 %v4014, 16
        %v4052 = vrot.slane %v4050, 1
        %v4053 = vshll.u32 %v4014, 16
        %v4055 = vrot.slane %v4053, 2
        %v4056 = vor.u32 %v4052, %v4055
        %v4057 = vsel %vm3671, %v4048, %v4056
        %4058 = vrot.lane.b32.xlu0 %v4057, 64
        %v4059 = vpop.permute.xlu0 %4058
        %4060 = vrot.lane.b32.xlu0 %v4052, 64
        %v4061 = vpop.permute.xlu0 %4060
        %v4063 = vsel %vm1863, %v4038, 0
        %v4066 = vsel %vm1863, %v4040, 0
        %v4069 = vsel %vm1863, %v4059, 0
        %v4072 = vsel %vm1863, %v4061, 0
        %4074 = vmatpush.bf16.xpose.msra.mxu0 0
        %4075 = vmatpush.bf16.xpose.msra.mxu0 0
        %4076 = vmatpush.bf16.xpose.msra.mxu0 0
        %4077 = vmatpush.bf16.xpose.msra.mxu0 0
        %4078 = vmatpush.bf16.xpose.msra.mxu0 0
        %4079 = vmatpush.bf16.xpose.msra.mxu0 0
        %4080 = vmatpush.bf16.xpose.msra.mxu0 %v4072
        %4081 = vmatpush.bf16.xpose.msra.mxu0 %v4069
        %4082 = vmatmul.bf16.gmra.mxu0 %v4063
        %v4083 = vpop.f32.mrf.mxu0
        %v4084 = vadd.f32 0.0, %v4083
        %v4085 = vpop.f32.mrf.mxu0
        %v4086 = vadd.f32 0.0, %v4085
        %4087 = vmatmul.bf16.gmra.mxu0 %v4066
        %v4088 = vpop.f32.mrf.mxu0
        %v4089 = vadd.f32 0.0, %v4088
        %v4090 = vpop.f32.mrf.mxu0
        %4091 = vdwg.mxu0
        %v4092 = vsel %vm1894, %v4084, -inf
        %4093 = vmax.xlane.f32.xlu0 %v4092
        %v4094 = vpop.xlane.xlu0 %4093
        %v4095 = vsel %vm1894, %v4086, -inf
        %4096 = vmax.xlane.f32.xlu0 %v4095
        %v4097 = vpop.xlane.xlu0 %4096
        %v4098 = vsel %vm1901, %v4089, -inf
        %4099 = vmax.xlane.f32.xlu0 %v4098
        %v4100 = vpop.xlane.xlu0 %4099
        %v4101 = vsub.f32 %v4084, %v4094
        %v4102 = vsub.f32 %v4086, %v4097
        %v4103 = vsub.f32 %v4089, %v4100
        %v4104 = vmul.f32 %v4101, 1.442695
        %v4105 = vpow.pop %v4104
        %v4106 = vmul.f32 %v4102, 1.442695
        %v4107 = vpow.pop %v4106
        %v4108 = vmul.f32 %v4103, 1.442695
        %v4109 = vpow.pop %v4108
        %v4110 = vsel %vm1894, %v4105, 0.0
        %4111 = vadd.xlane.f32.xlu0 %v4110
        %v4112 = vpop.xlane.xlu0 %4111
        %v4113 = vsel %vm1894, %v4107, 0.0
        %4114 = vadd.xlane.f32.xlu0 %v4113
        %v4115 = vpop.xlane.xlu0 %4114
        %v4116 = vsel %vm1901, %v4109, 0.0
        %4117 = vadd.xlane.f32.xlu0 %v4116
        %v4118 = vpop.xlane.xlu0 %4117
        %v4119 = vrcp.pop %v4112
        %v4120 = vrcp.pop %v4115
        %v4121 = vrcp.pop %v4118
        %v4122 = vmul.f32 %v4105, %v4119
        %v4123 = vmul.f32 %v4107, %v4120
        %v4124 = vmul.f32 %v4109, %v4121
        %v4125 = vpack.c.bf16 %v4123, %v4122
        %v4126 = vpack.c.bf16 %v4124, %v4124
        %v4128 = vshrl.u32 %v4018, 16
        %v4130 = vrot.slane %v4128, 1
        %v4131 = vshll.u32 %v4018, 16
        %v4133 = vrot.slane %v4131, 2
        %v4134 = vor.u32 %v4130, %v4133
        %v4136 = vshrl.u32 %v4019, 16
        %v4138 = vrot.slane %v4136, 1
        %v4139 = vshll.u32 %v4019, 16
        %v4141 = vrot.slane %v4139, 2
        %v4142 = vor.u32 %v4138, %v4141
        %v4143 = vsel %vm3671, %v4134, %v4142
        %4144 = vrot.lane.b32.xlu0 %v4143, 64
        %v4145 = vpop.permute.xlu0 %4144
        %4146 = vrot.lane.b32.xlu0 %v4138, 64
        %v4147 = vpop.permute.xlu0 %4146
        %v4150 = vsel %vm1894, %v4125, 0
        %v4153 = vsel %vm1894, %v4126, 0
        %v4156 = vand.u32 %v4147, %v1939
        %4158 = vmatpush.bf16.msra.mxu0 0
        %4159 = vmatpush.bf16.msra.mxu0 0
        %4160 = vmatpush.bf16.msra.mxu0 0
        %4161 = vmatpush.bf16.msra.mxu0 0
        %4162 = vmatpush.bf16.msra.mxu0 0
        %4163 = vmatpush.bf16.msra.mxu0 0
        %4164 = vmatpush.bf16.msra.mxu0 %v4156
        %4165 = vmatpush.bf16.msra.mxu0 %v4145
        %4166 = vmatmul.bf16.gmra.mxu0 %v4150
        %v4167 = vpop.f32.mrf.mxu0
        %v4168 = vadd.f32 0.0, %v4167
        %v4169 = vpop.f32.mrf.mxu0
        %v4170 = vadd.f32 0.0, %v4169
        %4171 = vmatmul.bf16.gmra.mxu0 %v4153
        %v4172 = vpop.f32.mrf.mxu0
        %v4173 = vadd.f32 0.0, %v4172
        %v4174 = vpop.f32.mrf.mxu0
        %4175 = vdwg.mxu0
        %4179 = vrot.lane.b32.xlu0 %v4168, 64
        %v4180 = vpop.permute.xlu0 %4179
        %4181 = vrot.lane.b32.xlu0 %v4170, 64
        %v4182 = vpop.permute.xlu0 %4181
        %4183 = vrot.lane.b32.xlu0 %v4173, 64
        %v4184 = vpop.permute.xlu0 %4183
        %4188 = vst.msk [vmem:[#allocation3 + $0x33] sm:$0xff] %vm2246, %v4180
        %4189 = vst.msk [vmem:[#allocation3 + $0x3b] sm:$0xff] %vm2246, %v4182
        %4190 = vst.msk [vmem:[#allocation3 + $0x43] sm:$0x1] %vm2249, %v4184
        %v4191 = vld [vmem:[#allocation2 + $0x90] sm:$0xf8]
        %v4192 = vld [vmem:[#allocation2 + $0xa8] sm:$0xff]
        %v4193 = vld [vmem:[#allocation2 + $0xc0] sm:$0xf]
        %v4194 = vpack.c.bf16 %v4192, %v4191
        %v4195 = vpack.c.bf16 %v4193, %v4193
        %v4196 = vld [vmem:[#allocation2 + $0x98] sm:$0xf8]
        %v4197 = vld [vmem:[#allocation2 + $0xb0] sm:$0xff]
        %v4198 = vld [vmem:[#allocation2 + $0xc8] sm:$0xf]
        %v4199 = vpack.c.bf16 %v4197, %v4196
        %v4200 = vpack.c.bf16 %v4198, %v4198
        %v4201 = vld [vmem:[#allocation2 + $0xa0] sm:$0xf8]
        %v4202 = vld [vmem:[#allocation2 + $0xb8] sm:$0xff]
        %v4203 = vld [vmem:[#allocation2 + $0xd0] sm:$0xf]
        %v4204 = vpack.c.bf16 %v4202, %v4201
        %v4205 = vpack.c.bf16 %v4203, %v4203
        %v4207 = vshrl.u32 %v4194, 16
        %v4209 = vrot.slane %v4207, 1
        %v4210 = vshll.u32 %v4194, 16
        %v4212 = vrot.slane %v4210, 2
        %v4213 = vor.u32 %v4209, %v4212
        %v4215 = vshrl.u32 %v4195, 16
        %v4217 = vrot.slane %v4215, 1
        %v4218 = vshll.u32 %v4195, 16
        %v4220 = vrot.slane %v4218, 2
        %v4221 = vor.u32 %v4217, %v4220
        %v4222 = vsel %vm3671, %v4213, %v4221
        %4223 = vrot.lane.b32.xlu0 %v4222, 32
        %v4224 = vpop.permute.xlu0 %4223
        %4225 = vrot.lane.b32.xlu0 %v4217, 32
        %v4226 = vpop.permute.xlu0 %4225
        %v4228 = vshrl.u32 %v4199, 16
        %v4230 = vrot.slane %v4228, 1
        %v4231 = vshll.u32 %v4199, 16
        %v4233 = vrot.slane %v4231, 2
        %v4234 = vor.u32 %v4230, %v4233
        %v4236 = vshrl.u32 %v4200, 16
        %v4238 = vrot.slane %v4236, 1
        %v4239 = vshll.u32 %v4200, 16
        %v4241 = vrot.slane %v4239, 2
        %v4242 = vor.u32 %v4238, %v4241
        %v4243 = vsel %vm3671, %v4234, %v4242
        %4244 = vrot.lane.b32.xlu0 %v4243, 32
        %v4245 = vpop.permute.xlu0 %4244
        %4246 = vrot.lane.b32.xlu0 %v4238, 32
        %v4247 = vpop.permute.xlu0 %4246
        %v4249 = vsel %vm1863, %v4224, 0
        %v4252 = vsel %vm1863, %v4226, 0
        %v4255 = vsel %vm1863, %v4245, 0
        %v4258 = vsel %vm1863, %v4247, 0
        %4260 = vmatpush.bf16.xpose.msra.mxu0 0
        %4261 = vmatpush.bf16.xpose.msra.mxu0 0
        %4262 = vmatpush.bf16.xpose.msra.mxu0 0
        %4263 = vmatpush.bf16.xpose.msra.mxu0 0
        %4264 = vmatpush.bf16.xpose.msra.mxu0 0
        %4265 = vmatpush.bf16.xpose.msra.mxu0 0
        %4266 = vmatpush.bf16.xpose.msra.mxu0 %v4258
        %4267 = vmatpush.bf16.xpose.msra.mxu0 %v4255
        %4268 = vmatmul.bf16.gmra.mxu0 %v4249
        %v4269 = vpop.f32.mrf.mxu0
        %v4270 = vadd.f32 0.0, %v4269
        %v4271 = vpop.f32.mrf.mxu0
        %v4272 = vadd.f32 0.0, %v4271
        %4273 = vmatmul.bf16.gmra.mxu0 %v4252
        %v4274 = vpop.f32.mrf.mxu0
        %v4275 = vadd.f32 0.0, %v4274
        %v4276 = vpop.f32.mrf.mxu0
        %4277 = vdwg.mxu0
        %v4278 = vsel %vm1894, %v4270, -inf
        %4279 = vmax.xlane.f32.xlu0 %v4278
        %v4280 = vpop.xlane.xlu0 %4279
        %v4281 = vsel %vm1894, %v4272, -inf
        %4282 = vmax.xlane.f32.xlu0 %v4281
        %v4283 = vpop.xlane.xlu0 %4282
        %v4284 = vsel %vm1901, %v4275, -inf
        %4285 = vmax.xlane.f32.xlu0 %v4284
        %v4286 = vpop.xlane.xlu0 %4285
        %v4287 = vsub.f32 %v4270, %v4280
        %v4288 = vsub.f32 %v4272, %v4283
        %v4289 = vsub.f32 %v4275, %v4286
        %v4290 = vmul.f32 %v4287, 1.442695
        %v4291 = vpow.pop %v4290
        %v4292 = vmul.f32 %v4288, 1.442695
        %v4293 = vpow.pop %v4292
        %v4294 = vmul.f32 %v4289, 1.442695
        %v4295 = vpow.pop %v4294
        %v4296 = vsel %vm1894, %v4291, 0.0
        %4297 = vadd.xlane.f32.xlu0 %v4296
        %v4298 = vpop.xlane.xlu0 %4297
        %v4299 = vsel %vm1894, %v4293, 0.0
        %4300 = vadd.xlane.f32.xlu0 %v4299
        %v4301 = vpop.xlane.xlu0 %4300
        %v4302 = vsel %vm1901, %v4295, 0.0
        %4303 = vadd.xlane.f32.xlu0 %v4302
        %v4304 = vpop.xlane.xlu0 %4303
        %v4305 = vrcp.pop %v4298
        %v4306 = vrcp.pop %v4301
        %v4307 = vrcp.pop %v4304
        %v4308 = vmul.f32 %v4291, %v4305
        %v4309 = vmul.f32 %v4293, %v4306
        %v4310 = vmul.f32 %v4295, %v4307
        %v4311 = vpack.c.bf16 %v4309, %v4308
        %v4312 = vpack.c.bf16 %v4310, %v4310
        %v4314 = vshrl.u32 %v4204, 16
        %v4316 = vrot.slane %v4314, 1
        %v4317 = vshll.u32 %v4204, 16
        %v4319 = vrot.slane %v4317, 2
        %v4320 = vor.u32 %v4316, %v4319
        %v4322 = vshrl.u32 %v4205, 16
        %v4324 = vrot.slane %v4322, 1
        %v4325 = vshll.u32 %v4205, 16
        %v4327 = vrot.slane %v4325, 2
        %v4328 = vor.u32 %v4324, %v4327
        %v4329 = vsel %vm3671, %v4320, %v4328
        %4330 = vrot.lane.b32.xlu0 %v4329, 32
        %v4331 = vpop.permute.xlu0 %4330
        %4332 = vrot.lane.b32.xlu0 %v4324, 32
        %v4333 = vpop.permute.xlu0 %4332
        %v4336 = vsel %vm1894, %v4311, 0
        %v4339 = vsel %vm1894, %v4312, 0
        %v4342 = vand.u32 %v4333, %v1939
        %4344 = vmatpush.bf16.msra.mxu0 0
        %4345 = vmatpush.bf16.msra.mxu0 0
        %4346 = vmatpush.bf16.msra.mxu0 0
        %4347 = vmatpush.bf16.msra.mxu0 0
        %4348 = vmatpush.bf16.msra.mxu0 0
        %4349 = vmatpush.bf16.msra.mxu0 0
        %4350 = vmatpush.bf16.msra.mxu0 %v4342
        %4351 = vmatpush.bf16.msra.mxu0 %v4331
        %4352 = vmatmul.bf16.gmra.mxu0 %v4336
        %v4353 = vpop.f32.mrf.mxu0
        %v4354 = vadd.f32 0.0, %v4353
        %v4355 = vpop.f32.mrf.mxu0
        %v4356 = vadd.f32 0.0, %v4355
        %4357 = vmatmul.bf16.gmra.mxu0 %v4339
        %v4358 = vpop.f32.mrf.mxu0
        %v4359 = vadd.f32 0.0, %v4358
        %v4360 = vpop.f32.mrf.mxu0
        %4361 = vdwg.mxu0
        %4365 = vrot.lane.b32.xlu0 %v4354, 96
        %v4366 = vpop.permute.xlu0 %4365
        %4367 = vrot.lane.b32.xlu0 %v4356, 96
        %v4368 = vpop.permute.xlu0 %4367
        %4369 = vrot.lane.b32.xlu0 %v4359, 96
        %v4370 = vpop.permute.xlu0 %4369
        %4374 = vst.msk [vmem:[#allocation3 + $0x33] sm:$0xff] %vm2389, %v4366
        %4375 = vst.msk [vmem:[#allocation3 + $0x3b] sm:$0xff] %vm2389, %v4368
        %4376 = vst.msk [vmem:[#allocation3 + $0x43] sm:$0x1] %vm2392, %v4370
        %v4377 = vld [vmem:[#allocation2 + $0xc0] sm:$0xf0]
        %v4378 = vld [vmem:[#allocation2 + $0xd8] sm:$0xff]
        %v4379 = vld [vmem:[#allocation2 + $0xf0] sm:$0x1f]
        %v4380 = vpack.c.bf16 %v4378, %v4377
        %v4381 = vpack.c.bf16 %v4379, %v4379
        %v4382 = vld [vmem:[#allocation2 + $0xc8] sm:$0xf0]
        %v4383 = vld [vmem:[#allocation2 + $0xe0] sm:$0xff]
        %v4384 = vld [vmem:[#allocation2 + $0xf8] sm:$0x1f]
        %v4385 = vpack.c.bf16 %v4383, %v4382
        %v4386 = vpack.c.bf16 %v4384, %v4384
        %v4387 = vld [vmem:[#allocation2 + $0xd0] sm:$0xf0]
        %v4388 = vld [vmem:[#allocation2 + $0xe8] sm:$0xff]
        %v4389 = vld [vmem:[#allocation2 + $0x100] sm:$0x1f]
        %v4390 = vpack.c.bf16 %v4388, %v4387
        %v4391 = vpack.c.bf16 %v4389, %v4389
        %vm4394 = vcmask 1045504
        %v4395 = vrot.slane %v4380, 2
        %v4396 = vrot.slane %v4381, 2
        %v4397 = vsel %vm4394, %v4395, %v4396
        %v4400 = vrot.slane %v4385, 2
        %v4401 = vrot.slane %v4386, 2
        %v4402 = vsel %vm4394, %v4400, %v4401
        %v4404 = vsel %vm1863, %v4397, 0
        %v4407 = vsel %vm1863, %v4396, 0
        %v4410 = vsel %vm1863, %v4402, 0
        %v4413 = vsel %vm1863, %v4401, 0
        %4415 = vmatpush.bf16.xpose.msra.mxu0 0
        %4416 = vmatpush.bf16.xpose.msra.mxu0 0
        %4417 = vmatpush.bf16.xpose.msra.mxu0 0
        %4418 = vmatpush.bf16.xpose.msra.mxu0 0
        %4419 = vmatpush.bf16.xpose.msra.mxu0 0
        %4420 = vmatpush.bf16.xpose.msra.mxu0 0
        %4421 = vmatpush.bf16.xpose.msra.mxu0 %v4413
        %4422 = vmatpush.bf16.xpose.msra.mxu0 %v4410
        %4423 = vmatmul.bf16.gmra.mxu0 %v4404
        %v4424 = vpop.f32.mrf.mxu0
        %v4425 = vadd.f32 0.0, %v4424
        %v4426 = vpop.f32.mrf.mxu0
        %v4427 = vadd.f32 0.0, %v4426
        %4428 = vmatmul.bf16.gmra.mxu0 %v4407
        %v4429 = vpop.f32.mrf.mxu0
        %v4430 = vadd.f32 0.0, %v4429
        %v4431 = vpop.f32.mrf.mxu0
        %4432 = vdwg.mxu0
        %v4433 = vsel %vm1894, %v4425, -inf
        %4434 = vmax.xlane.f32.xlu0 %v4433
        %v4435 = vpop.xlane.xlu0 %4434
        %v4436 = vsel %vm1894, %v4427, -inf
        %4437 = vmax.xlane.f32.xlu0 %v4436
        %v4438 = vpop.xlane.xlu0 %4437
        %v4439 = vsel %vm1901, %v4430, -inf
        %4440 = vmax.xlane.f32.xlu0 %v4439
        %v4441 = vpop.xlane.xlu0 %4440
        %v4442 = vsub.f32 %v4425, %v4435
        %v4443 = vsub.f32 %v4427, %v4438
        %v4444 = vsub.f32 %v4430, %v4441
        %v4445 = vmul.f32 %v4442, 1.442695
        %v4446 = vpow.pop %v4445
        %v4447 = vmul.f32 %v4443, 1.442695
        %v4448 = vpow.pop %v4447
        %v4449 = vmul.f32 %v4444, 1.442695
        %v4450 = vpow.pop %v4449
        %v4451 = vsel %vm1894, %v4446, 0.0
        %4452 = vadd.xlane.f32.xlu0 %v4451
        %v4453 = vpop.xlane.xlu0 %4452
        %v4454 = vsel %vm1894, %v4448, 0.0
        %4455 = vadd.xlane.f32.xlu0 %v4454
        %v4456 = vpop.xlane.xlu0 %4455
        %v4457 = vsel %vm1901, %v4450, 0.0
        %4458 = vadd.xlane.f32.xlu0 %v4457
        %v4459 = vpop.xlane.xlu0 %4458
        %v4460 = vrcp.pop %v4453
        %v4461 = vrcp.pop %v4456
        %v4462 = vrcp.pop %v4459
        %v4463 = vmul.f32 %v4446, %v4460
        %v4464 = vmul.f32 %v4448, %v4461
        %v4465 = vmul.f32 %v4450, %v4462
        %v4466 = vpack.c.bf16 %v4464, %v4463
        %v4467 = vpack.c.bf16 %v4465, %v4465
        %v4470 = vrot.slane %v4390, 2
        %v4471 = vrot.slane %v4391, 2
        %v4472 = vsel %vm4394, %v4470, %v4471
        %v4475 = vsel %vm1894, %v4466, 0
        %v4478 = vsel %vm1894, %v4467, 0
        %v4481 = vand.u32 %v4471, %v1939
        %4483 = vmatpush.bf16.msra.mxu0 0
        %4484 = vmatpush.bf16.msra.mxu0 0
        %4485 = vmatpush.bf16.msra.mxu0 0
        %4486 = vmatpush.bf16.msra.mxu0 0
        %4487 = vmatpush.bf16.msra.mxu0 0
        %4488 = vmatpush.bf16.msra.mxu0 0
        %4489 = vmatpush.bf16.msra.mxu0 %v4481
        %4490 = vmatpush.bf16.msra.mxu0 %v4472
        %4491 = vmatmul.bf16.gmra.mxu0 %v4475
        %v4492 = vpop.f32.mrf.mxu0
        %v4493 = vadd.f32 0.0, %v4492
        %v4494 = vpop.f32.mrf.mxu0
        %v4495 = vadd.f32 0.0, %v4494
        %4496 = vmatmul.bf16.gmra.mxu0 %v4478
        %v4497 = vpop.f32.mrf.mxu0
        %v4498 = vadd.f32 0.0, %v4497
        %v4499 = vpop.f32.mrf.mxu0
        %4500 = vdwg.mxu0
        %4501 = vst.msk [vmem:[#allocation3 + $0x44] sm:$0xff] %vm1863, %v4493
        %4502 = vst.msk [vmem:[#allocation3 + $0x4c] sm:$0xff] %vm1863, %v4495
        %4503 = vst.msk [vmem:[#allocation3 + $0x54] sm:$0x1] %vm1963, %v4498
        %v4504 = vld [vmem:[#allocation2 + $0xc0] sm:$0xf0]
        %v4505 = vld [vmem:[#allocation2 + $0xd8] sm:$0xff]
        %v4506 = vld [vmem:[#allocation2 + $0xf0] sm:$0x1f]
        %v4507 = vpack.c.bf16 %v4505, %v4504
        %v4508 = vpack.c.bf16 %v4506, %v4506
        %v4509 = vld [vmem:[#allocation2 + $0xc8] sm:$0xf0]
        %v4510 = vld [vmem:[#allocation2 + $0xe0] sm:$0xff]
        %v4511 = vld [vmem:[#allocation2 + $0xf8] sm:$0x1f]
        %v4512 = vpack.c.bf16 %v4510, %v4509
        %v4513 = vpack.c.bf16 %v4511, %v4511
        %v4514 = vld [vmem:[#allocation2 + $0xd0] sm:$0xf0]
        %v4515 = vld [vmem:[#allocation2 + $0xe8] sm:$0xff]
        %v4516 = vld [vmem:[#allocation2 + $0x100] sm:$0x1f]
        %v4517 = vpack.c.bf16 %v4515, %v4514
        %v4518 = vpack.c.bf16 %v4516, %v4516
        %v4521 = vrot.slane %v4507, 2
        %v4522 = vrot.slane %v4508, 2
        %v4523 = vsel %vm4394, %v4521, %v4522
        %4524 = vrot.lane.b32.xlu0 %v4523, 96
        %v4525 = vpop.permute.xlu0 %4524
        %4526 = vrot.lane.b32.xlu0 %v4522, 96
        %v4527 = vpop.permute.xlu0 %4526
        %v4530 = vrot.slane %v4512, 2
        %v4531 = vrot.slane %v4513, 2
        %v4532 = vsel %vm4394, %v4530, %v4531
        %4533 = vrot.lane.b32.xlu0 %v4532, 96
        %v4534 = vpop.permute.xlu0 %4533
        %4535 = vrot.lane.b32.xlu0 %v4531, 96
        %v4536 = vpop.permute.xlu0 %4535
        %v4538 = vsel %vm1863, %v4525, 0
        %v4541 = vsel %vm1863, %v4527, 0
        %v4544 = vsel %vm1863, %v4534, 0
        %v4547 = vsel %vm1863, %v4536, 0
        %4549 = vmatpush.bf16.xpose.msra.mxu0 0
        %4550 = vmatpush.bf16.xpose.msra.mxu0 0
        %4551 = vmatpush.bf16.xpose.msra.mxu0 0
        %4552 = vmatpush.bf16.xpose.msra.mxu0 0
        %4553 = vmatpush.bf16.xpose.msra.mxu0 0
        %4554 = vmatpush.bf16.xpose.msra.mxu0 0
        %4555 = vmatpush.bf16.xpose.msra.mxu0 %v4547
        %4556 = vmatpush.bf16.xpose.msra.mxu0 %v4544
        %4557 = vmatmul.bf16.gmra.mxu0 %v4538
        %v4558 = vpop.f32.mrf.mxu0
        %v4559 = vadd.f32 0.0, %v4558
        %v4560 = vpop.f32.mrf.mxu0
        %v4561 = vadd.f32 0.0, %v4560
        %4562 = vmatmul.bf16.gmra.mxu0 %v4541
        %v4563 = vpop.f32.mrf.mxu0
        %v4564 = vadd.f32 0.0, %v4563
        %v4565 = vpop.f32.mrf.mxu0
        %4566 = vdwg.mxu0
        %v4567 = vsel %vm1894, %v4559, -inf
        %4568 = vmax.xlane.f32.xlu0 %v4567
        %v4569 = vpop.xlane.xlu0 %4568
        %v4570 = vsel %vm1894, %v4561, -inf
        %4571 = vmax.xlane.f32.xlu0 %v4570
        %v4572 = vpop.xlane.xlu0 %4571
        %v4573 = vsel %vm1901, %v4564, -inf
        %4574 = vmax.xlane.f32.xlu0 %v4573
        %v4575 = vpop.xlane.xlu0 %4574
        %v4576 = vsub.f32 %v4559, %v4569
        %v4577 = vsub.f32 %v4561, %v4572
        %v4578 = vsub.f32 %v4564, %v4575
        %v4579 = vmul.f32 %v4576, 1.442695
        %v4580 = vpow.pop %v4579
        %v4581 = vmul.f32 %v4577, 1.442695
        %v4582 = vpow.pop %v4581
        %v4583 = vmul.f32 %v4578, 1.442695
        %v4584 = vpow.pop %v4583
        %v4585 = vsel %vm1894, %v4580, 0.0
        %4586 = vadd.xlane.f32.xlu0 %v4585
        %v4587 = vpop.xlane.xlu0 %4586
        %v4588 = vsel %vm1894, %v4582, 0.0
        %4589 = vadd.xlane.f32.xlu0 %v4588
        %v4590 = vpop.xlane.xlu0 %4589
        %v4591 = vsel %vm1901, %v4584, 0.0
        %4592 = vadd.xlane.f32.xlu0 %v4591
        %v4593 = vpop.xlane.xlu0 %4592
        %v4594 = vrcp.pop %v4587
        %v4595 = vrcp.pop %v4590
        %v4596 = vrcp.pop %v4593
        %v4597 = vmul.f32 %v4580, %v4594
        %v4598 = vmul.f32 %v4582, %v4595
        %v4599 = vmul.f32 %v4584, %v4596
        %v4600 = vpack.c.bf16 %v4598, %v4597
        %v4601 = vpack.c.bf16 %v4599, %v4599
        %v4604 = vrot.slane %v4517, 2
        %v4605 = vrot.slane %v4518, 2
        %v4606 = vsel %vm4394, %v4604, %v4605
        %4607 = vrot.lane.b32.xlu0 %v4606, 96
        %v4608 = vpop.permute.xlu0 %4607
        %4609 = vrot.lane.b32.xlu0 %v4605, 96
        %v4610 = vpop.permute.xlu0 %4609
        %v4613 = vsel %vm1894, %v4600, 0
        %v4616 = vsel %vm1894, %v4601, 0
        %v4619 = vand.u32 %v4610, %v1939
        %4621 = vmatpush.bf16.msra.mxu0 0
        %4622 = vmatpush.bf16.msra.mxu0 0
        %4623 = vmatpush.bf16.msra.mxu0 0
        %4624 = vmatpush.bf16.msra.mxu0 0
        %4625 = vmatpush.bf16.msra.mxu0 0
        %4626 = vmatpush.bf16.msra.mxu0 0
        %4627 = vmatpush.bf16.msra.mxu0 %v4619
        %4628 = vmatpush.bf16.msra.mxu0 %v4608
        %4629 = vmatmul.bf16.gmra.mxu0 %v4613
        %v4630 = vpop.f32.mrf.mxu0
        %v4631 = vadd.f32 0.0, %v4630
        %v4632 = vpop.f32.mrf.mxu0
        %v4633 = vadd.f32 0.0, %v4632
        %4634 = vmatmul.bf16.gmra.mxu0 %v4616
        %v4635 = vpop.f32.mrf.mxu0
        %v4636 = vadd.f32 0.0, %v4635
        %v4637 = vpop.f32.mrf.mxu0
        %4638 = vdwg.mxu0
        %4642 = vrot.lane.b32.xlu0 %v4631, 32
        %v4643 = vpop.permute.xlu0 %4642
        %4644 = vrot.lane.b32.xlu0 %v4633, 32
        %v4645 = vpop.permute.xlu0 %4644
        %4646 = vrot.lane.b32.xlu0 %v4636, 32
        %v4647 = vpop.permute.xlu0 %4646
        %4651 = vst.msk [vmem:[#allocation3 + $0x44] sm:$0xff] %vm2103, %v4643
        %4652 = vst.msk [vmem:[#allocation3 + $0x4c] sm:$0xff] %vm2103, %v4645
        %4653 = vst.msk [vmem:[#allocation3 + $0x54] sm:$0x1] %vm2106, %v4647
        %v4654 = vld [vmem:[#allocation2 + $0xc0] sm:$0xf0]
        %v4655 = vld [vmem:[#allocation2 + $0xd8] sm:$0xff]
        %v4656 = vld [vmem:[#allocation2 + $0xf0] sm:$0x1f]
        %v4657 = vpack.c.bf16 %v4655, %v4654
        %v4658 = vpack.c.bf16 %v4656, %v4656
        %v4659 = vld [vmem:[#allocation2 + $0xc8] sm:$0xf0]
        %v4660 = vld [vmem:[#allocation2 + $0xe0] sm:$0xff]
        %v4661 = vld [vmem:[#allocation2 + $0xf8] sm:$0x1f]
        %v4662 = vpack.c.bf16 %v4660, %v4659
        %v4663 = vpack.c.bf16 %v4661, %v4661
        %v4664 = vld [vmem:[#allocation2 + $0xd0] sm:$0xf0]
        %v4665 = vld [vmem:[#allocation2 + $0xe8] sm:$0xff]
        %v4666 = vld [vmem:[#allocation2 + $0x100] sm:$0x1f]
        %v4667 = vpack.c.bf16 %v4665, %v4664
        %v4668 = vpack.c.bf16 %v4666, %v4666
        %v4671 = vrot.slane %v4657, 2
        %v4672 = vrot.slane %v4658, 2
        %v4673 = vsel %vm4394, %v4671, %v4672
        %4674 = vrot.lane.b32.xlu0 %v4673, 64
        %v4675 = vpop.permute.xlu0 %4674
        %4676 = vrot.lane.b32.xlu0 %v4672, 64
        %v4677 = vpop.permute.xlu0 %4676
        %v4680 = vrot.slane %v4662, 2
        %v4681 = vrot.slane %v4663, 2
        %v4682 = vsel %vm4394, %v4680, %v4681
        %4683 = vrot.lane.b32.xlu0 %v4682, 64
        %v4684 = vpop.permute.xlu0 %4683
        %4685 = vrot.lane.b32.xlu0 %v4681, 64
        %v4686 = vpop.permute.xlu0 %4685
        %v4688 = vsel %vm1863, %v4675, 0
        %v4691 = vsel %vm1863, %v4677, 0
        %v4694 = vsel %vm1863, %v4684, 0
        %v4697 = vsel %vm1863, %v4686, 0
        %4699 = vmatpush.bf16.xpose.msra.mxu0 0
        %4700 = vmatpush.bf16.xpose.msra.mxu0 0
        %4701 = vmatpush.bf16.xpose.msra.mxu0 0
        %4702 = vmatpush.bf16.xpose.msra.mxu0 0
        %4703 = vmatpush.bf16.xpose.msra.mxu0 0
        %4704 = vmatpush.bf16.xpose.msra.mxu0 0
        %4705 = vmatpush.bf16.xpose.msra.mxu0 %v4697
        %4706 = vmatpush.bf16.xpose.msra.mxu0 %v4694
        %4707 = vmatmul.bf16.gmra.mxu0 %v4688
        %v4708 = vpop.f32.mrf.mxu0
        %v4709 = vadd.f32 0.0, %v4708
        %v4710 = vpop.f32.mrf.mxu0
        %v4711 = vadd.f32 0.0, %v4710
        %4712 = vmatmul.bf16.gmra.mxu0 %v4691
        %v4713 = vpop.f32.mrf.mxu0
        %v4714 = vadd.f32 0.0, %v4713
        %v4715 = vpop.f32.mrf.mxu0
        %4716 = vdwg.mxu0
        %v4717 = vsel %vm1894, %v4709, -inf
        %4718 = vmax.xlane.f32.xlu0 %v4717
        %v4719 = vpop.xlane.xlu0 %4718
        %v4720 = vsel %vm1894, %v4711, -inf
        %4721 = vmax.xlane.f32.xlu0 %v4720
        %v4722 = vpop.xlane.xlu0 %4721
        %v4723 = vsel %vm1901, %v4714, -inf
        %4724 = vmax.xlane.f32.xlu0 %v4723
        %v4725 = vpop.xlane.xlu0 %4724
        %v4726 = vsub.f32 %v4709, %v4719
        %v4727 = vsub.f32 %v4711, %v4722
        %v4728 = vsub.f32 %v4714, %v4725
        %v4729 = vmul.f32 %v4726, 1.442695
        %v4730 = vpow.pop %v4729
        %v4731 = vmul.f32 %v4727, 1.442695
        %v4732 = vpow.pop %v4731
        %v4733 = vmul.f32 %v4728, 1.442695
        %v4734 = vpow.pop %v4733
        %v4735 = vsel %vm1894, %v4730, 0.0
        %4736 = vadd.xlane.f32.xlu0 %v4735
        %v4737 = vpop.xlane.xlu0 %4736
        %v4738 = vsel %vm1894, %v4732, 0.0
        %4739 = vadd.xlane.f32.xlu0 %v4738
        %v4740 = vpop.xlane.xlu0 %4739
        %v4741 = vsel %vm1901, %v4734, 0.0
        %4742 = vadd.xlane.f32.xlu0 %v4741
        %v4743 = vpop.xlane.xlu0 %4742
        %v4744 = vrcp.pop %v4737
        %v4745 = vrcp.pop %v4740
        %v4746 = vrcp.pop %v4743
        %v4747 = vmul.f32 %v4730, %v4744
        %v4748 = vmul.f32 %v4732, %v4745
        %v4749 = vmul.f32 %v4734, %v4746
        %v4750 = vpack.c.bf16 %v4748, %v4747
        %v4751 = vpack.c.bf16 %v4749, %v4749
        %v4754 = vrot.slane %v4667, 2
        %v4755 = vrot.slane %v4668, 2
        %v4756 = vsel %vm4394, %v4754, %v4755
        %4757 = vrot.lane.b32.xlu0 %v4756, 64
        %v4758 = vpop.permute.xlu0 %4757
        %4759 = vrot.lane.b32.xlu0 %v4755, 64
        %v4760 = vpop.permute.xlu0 %4759
        %v4763 = vsel %vm1894, %v4750, 0
        %v4766 = vsel %vm1894, %v4751, 0
        %v4769 = vand.u32 %v4760, %v1939
        %4771 = vmatpush.bf16.msra.mxu0 0
        %4772 = vmatpush.bf16.msra.mxu0 0
        %4773 = vmatpush.bf16.msra.mxu0 0
        %4774 = vmatpush.bf16.msra.mxu0 0
        %4775 = vmatpush.bf16.msra.mxu0 0
        %4776 = vmatpush.bf16.msra.mxu0 0
        %4777 = vmatpush.bf16.msra.mxu0 %v4769
        %4778 = vmatpush.bf16.msra.mxu0 %v4758
        %4779 = vmatmul.bf16.gmra.mxu0 %v4763
        %v4780 = vpop.f32.mrf.mxu0
        %v4781 = vadd.f32 0.0, %v4780
        %v4782 = vpop.f32.mrf.mxu0
        %v4783 = vadd.f32 0.0, %v4782
        %4784 = vmatmul.bf16.gmra.mxu0 %v4766
        %v4785 = vpop.f32.mrf.mxu0
        %v4786 = vadd.f32 0.0, %v4785
        %v4787 = vpop.f32.mrf.mxu0
        %4788 = vdwg.mxu0
        %4792 = vrot.lane.b32.xlu0 %v4781, 64
        %v4793 = vpop.permute.xlu0 %4792
        %4794 = vrot.lane.b32.xlu0 %v4783, 64
        %v4795 = vpop.permute.xlu0 %4794
        %4796 = vrot.lane.b32.xlu0 %v4786, 64
        %v4797 = vpop.permute.xlu0 %4796
        %4801 = vst.msk [vmem:[#allocation3 + $0x44] sm:$0xff] %vm2246, %v4793
        %4802 = vst.msk [vmem:[#allocation3 + $0x4c] sm:$0xff] %vm2246, %v4795
        %4803 = vst.msk [vmem:[#allocation3 + $0x54] sm:$0x1] %vm2249, %v4797
        %v4804 = vld [vmem:[#allocation2 + $0xc0] sm:$0xf0]
        %v4805 = vld [vmem:[#allocation2 + $0xd8] sm:$0xff]
        %v4806 = vld [vmem:[#allocation2 + $0xf0] sm:$0x1f]
        %v4807 = vpack.c.bf16 %v4805, %v4804
        %v4808 = vpack.c.bf16 %v4806, %v4806
        %v4809 = vld [vmem:[#allocation2 + $0xc8] sm:$0xf0]
        %v4810 = vld [vmem:[#allocation2 + $0xe0] sm:$0xff]
        %v4811 = vld [vmem:[#allocation2 + $0xf8] sm:$0x1f]
        %v4812 = vpack.c.bf16 %v4810, %v4809
        %v4813 = vpack.c.bf16 %v4811, %v4811
        %v4814 = vld [vmem:[#allocation2 + $0xd0] sm:$0xf0]
        %v4815 = vld [vmem:[#allocation2 + $0xe8] sm:$0xff]
        %v4816 = vld [vmem:[#allocation2 + $0x100] sm:$0x1f]
        %v4817 = vpack.c.bf16 %v4815, %v4814
        %v4818 = vpack.c.bf16 %v4816, %v4816
        %v4821 = vrot.slane %v4807, 2
        %v4822 = vrot.slane %v4808, 2
        %v4823 = vsel %vm4394, %v4821, %v4822
        %4824 = vrot.lane.b32.xlu0 %v4823, 32
        %v4825 = vpop.permute.xlu0 %4824
        %4826 = vrot.lane.b32.xlu0 %v4822, 32
        %v4827 = vpop.permute.xlu0 %4826
        %v4830 = vrot.slane %v4812, 2
        %v4831 = vrot.slane %v4813, 2
        %v4832 = vsel %vm4394, %v4830, %v4831
        %4833 = vrot.lane.b32.xlu0 %v4832, 32
        %v4834 = vpop.permute.xlu0 %4833
        %4835 = vrot.lane.b32.xlu0 %v4831, 32
        %v4836 = vpop.permute.xlu0 %4835
        %v4838 = vsel %vm1863, %v4825, 0
        %v4841 = vsel %vm1863, %v4827, 0
        %v4844 = vsel %vm1863, %v4834, 0
        %v4847 = vsel %vm1863, %v4836, 0
        %4849 = vmatpush.bf16.xpose.msra.mxu0 0
        %4850 = vmatpush.bf16.xpose.msra.mxu0 0
        %4851 = vmatpush.bf16.xpose.msra.mxu0 0
        %4852 = vmatpush.bf16.xpose.msra.mxu0 0
        %4853 = vmatpush.bf16.xpose.msra.mxu0 0
        %4854 = vmatpush.bf16.xpose.msra.mxu0 0
        %4855 = vmatpush.bf16.xpose.msra.mxu0 %v4847
        %4856 = vmatpush.bf16.xpose.msra.mxu0 %v4844
        %4857 = vmatmul.bf16.gmra.mxu0 %v4838
        %v4858 = vpop.f32.mrf.mxu0
        %v4859 = vadd.f32 0.0, %v4858
        %v4860 = vpop.f32.mrf.mxu0
        %v4861 = vadd.f32 0.0, %v4860
        %4862 = vmatmul.bf16.gmra.mxu0 %v4841
        %v4863 = vpop.f32.mrf.mxu0
        %v4864 = vadd.f32 0.0, %v4863
        %v4865 = vpop.f32.mrf.mxu0
        %4866 = vdwg.mxu0
        %v4867 = vsel %vm1894, %v4859, -inf
        %4868 = vmax.xlane.f32.xlu0 %v4867
        %v4869 = vpop.xlane.xlu0 %4868
        %v4870 = vsel %vm1894, %v4861, -inf
        %4871 = vmax.xlane.f32.xlu0 %v4870
        %v4872 = vpop.xlane.xlu0 %4871
        %v4873 = vsel %vm1901, %v4864, -inf
        %4874 = vmax.xlane.f32.xlu0 %v4873
        %v4875 = vpop.xlane.xlu0 %4874
        %v4876 = vsub.f32 %v4859, %v4869
        %v4877 = vsub.f32 %v4861, %v4872
        %v4878 = vsub.f32 %v4864, %v4875
        %v4879 = vmul.f32 %v4876, 1.442695
        %v4880 = vpow.pop %v4879
        %v4881 = vmul.f32 %v4877, 1.442695
        %v4882 = vpow.pop %v4881
        %v4883 = vmul.f32 %v4878, 1.442695
        %v4884 = vpow.pop %v4883
        %v4885 = vsel %vm1894, %v4880, 0.0
        %4886 = vadd.xlane.f32.xlu0 %v4885
        %v4887 = vpop.xlane.xlu0 %4886
        %v4888 = vsel %vm1894, %v4882, 0.0
        %4889 = vadd.xlane.f32.xlu0 %v4888
        %v4890 = vpop.xlane.xlu0 %4889
        %v4891 = vsel %vm1901, %v4884, 0.0
        %4892 = vadd.xlane.f32.xlu0 %v4891
        %v4893 = vpop.xlane.xlu0 %4892
        %v4894 = vrcp.pop %v4887
        %v4895 = vrcp.pop %v4890
        %v4896 = vrcp.pop %v4893
        %v4897 = vmul.f32 %v4880, %v4894
        %v4898 = vmul.f32 %v4882, %v4895
        %v4899 = vmul.f32 %v4884, %v4896
        %v4900 = vpack.c.bf16 %v4898, %v4897
        %v4901 = vpack.c.bf16 %v4899, %v4899
        %v4904 = vrot.slane %v4817, 2
        %v4905 = vrot.slane %v4818, 2
        %v4906 = vsel %vm4394, %v4904, %v4905
        %4907 = vrot.lane.b32.xlu0 %v4906, 32
        %v4908 = vpop.permute.xlu0 %4907
        %4909 = vrot.lane.b32.xlu0 %v4905, 32
        %v4910 = vpop.permute.xlu0 %4909
        %v4913 = vsel %vm1894, %v4900, 0
        %v4916 = vsel %vm1894, %v4901, 0
        %v4919 = vand.u32 %v4910, %v1939
        %4921 = vmatpush.bf16.msra.mxu0 0
        %4922 = vmatpush.bf16.msra.mxu0 0
        %4923 = vmatpush.bf16.msra.mxu0 0
        %4924 = vmatpush.bf16.msra.mxu0 0
        %4925 = vmatpush.bf16.msra.mxu0 0
        %4926 = vmatpush.bf16.msra.mxu0 0
        %4927 = vmatpush.bf16.msra.mxu0 %v4919
        %4928 = vmatpush.bf16.msra.mxu0 %v4908
        %4929 = vmatmul.bf16.gmra.mxu0 %v4913
        %v4930 = vpop.f32.mrf.mxu0
        %v4931 = vadd.f32 0.0, %v4930
        %v4932 = vpop.f32.mrf.mxu0
        %v4933 = vadd.f32 0.0, %v4932
        %4934 = vmatmul.bf16.gmra.mxu0 %v4916
        %v4935 = vpop.f32.mrf.mxu0
        %v4936 = vadd.f32 0.0, %v4935
        %v4937 = vpop.f32.mrf.mxu0
        %4938 = vdwg.mxu0
        %4942 = vrot.lane.b32.xlu0 %v4931, 96
        %v4943 = vpop.permute.xlu0 %4942
        %4944 = vrot.lane.b32.xlu0 %v4933, 96
        %v4945 = vpop.permute.xlu0 %4944
        %4946 = vrot.lane.b32.xlu0 %v4936, 96
        %v4947 = vpop.permute.xlu0 %4946
        %4951 = vst.msk [vmem:[#allocation3 + $0x44] sm:$0xff] %vm2389, %v4943
        %4952 = vst.msk [vmem:[#allocation3 + $0x4c] sm:$0xff] %vm2389, %v4945
        %4953 = vst.msk [vmem:[#allocation3 + $0x54] sm:$0x1] %vm2392, %v4947
        %v4954 = vld [vmem:[#allocation2 + $0xf0] sm:$0xe0]
        %v4955 = vld [vmem:[#allocation2 + $0x108] sm:$0xff]
        %v4956 = vld [vmem:[#allocation2 + $0x120] sm:$0x3f]
        %v4957 = vpack.c.bf16 %v4955, %v4954
        %v4958 = vpack.c.bf16 %v4956, %v4956
        %v4959 = vld [vmem:[#allocation2 + $0xf8] sm:$0xe0]
        %v4960 = vld [vmem:[#allocation2 + $0x110] sm:$0xff]
        %v4961 = vld [vmem:[#allocation2 + $0x128] sm:$0x3f]
        %v4962 = vpack.c.bf16 %v4960, %v4959
        %v4963 = vpack.c.bf16 %v4961, %v4961
        %v4964 = vld [vmem:[#allocation2 + $0x100] sm:$0xe0]
        %v4965 = vld [vmem:[#allocation2 + $0x118] sm:$0xff]
        %v4966 = vld [vmem:[#allocation2 + $0x130] sm:$0x3f]
        %v4967 = vpack.c.bf16 %v4965, %v4964
        %v4968 = vpack.c.bf16 %v4966, %v4966
        %vm4969 = vsmask.f32 5376
        %v4971 = vshrl.u32 %v4957, 16
        %v4973 = vrot.slane %v4971, 2
        %v4974 = vshll.u32 %v4957, 16
        %v4976 = vrot.slane %v4974, 3
        %v4977 = vor.u32 %v4973, %v4976
        %v4979 = vshrl.u32 %v4958, 16
        %v4981 = vrot.slane %v4979, 2
        %v4982 = vshll.u32 %v4958, 16
        %v4984 = vrot.slane %v4982, 3
        %v4985 = vor.u32 %v4981, %v4984
        %v4986 = vsel %vm4969, %v4977, %v4985
        %v4988 = vshrl.u32 %v4962, 16
        %v4990 = vrot.slane %v4988, 2
        %v4991 = vshll.u32 %v4962, 16
        %v4993 = vrot.slane %v4991, 3
        %v4994 = vor.u32 %v4990, %v4993
        %v4996 = vshrl.u32 %v4963, 16
        %v4998 = vrot.slane %v4996, 2
        %v4999 = vshll.u32 %v4963, 16
        %v5001 = vrot.slane %v4999, 3
        %v5002 = vor.u32 %v4998, %v5001
        %v5003 = vsel %vm4969, %v4994, %v5002
        %v5005 = vsel %vm1863, %v4986, 0
        %v5008 = vsel %vm1863, %v4981, 0
        %v5011 = vsel %vm1863, %v5003, 0
        %v5014 = vsel %vm1863, %v4998, 0
        %5016 = vmatpush.bf16.xpose.msra.mxu0 0
        %5017 = vmatpush.bf16.xpose.msra.mxu0 0
        %5018 = vmatpush.bf16.xpose.msra.mxu0 0
        %5019 = vmatpush.bf16.xpose.msra.mxu0 0
        %5020 = vmatpush.bf16.xpose.msra.mxu0 0
        %5021 = vmatpush.bf16.xpose.msra.mxu0 0
        %5022 = vmatpush.bf16.xpose.msra.mxu0 %v5014
        %5023 = vmatpush.bf16.xpose.msra.mxu0 %v5011
        %5024 = vmatmul.bf16.gmra.mxu0 %v5005
        %v5025 = vpop.f32.mrf.mxu0
        %v5026 = vadd.f32 0.0, %v5025
        %v5027 = vpop.f32.mrf.mxu0
        %v5028 = vadd.f32 0.0, %v5027
        %5029 = vmatmul.bf16.gmra.mxu0 %v5008
        %v5030 = vpop.f32.mrf.mxu0
        %v5031 = vadd.f32 0.0, %v5030
        %v5032 = vpop.f32.mrf.mxu0
        %5033 = vdwg.mxu0
        %v5034 = vsel %vm1894, %v5026, -inf
        %5035 = vmax.xlane.f32.xlu0 %v5034
        %v5036 = vpop.xlane.xlu0 %5035
        %v5037 = vsel %vm1894, %v5028, -inf
        %5038 = vmax.xlane.f32.xlu0 %v5037
        %v5039 = vpop.xlane.xlu0 %5038
        %v5040 = vsel %vm1901, %v5031, -inf
        %5041 = vmax.xlane.f32.xlu0 %v5040
        %v5042 = vpop.xlane.xlu0 %5041
        %v5043 = vsub.f32 %v5026, %v5036
        %v5044 = vsub.f32 %v5028, %v5039
        %v5045 = vsub.f32 %v5031, %v5042
        %v5046 = vmul.f32 %v5043, 1.442695
        %v5047 = vpow.pop %v5046
        %v5048 = vmul.f32 %v5044, 1.442695
        %v5049 = vpow.pop %v5048
        %v5050 = vmul.f32 %v5045, 1.442695
        %v5051 = vpow.pop %v5050
        %v5052 = vsel %vm1894, %v5047, 0.0
        %5053 = vadd.xlane.f32.xlu0 %v5052
        %v5054 = vpop.xlane.xlu0 %5053
        %v5055 = vsel %vm1894, %v5049, 0.0
        %5056 = vadd.xlane.f32.xlu0 %v5055
        %v5057 = vpop.xlane.xlu0 %5056
        %v5058 = vsel %vm1901, %v5051, 0.0
        %5059 = vadd.xlane.f32.xlu0 %v5058
        %v5060 = vpop.xlane.xlu0 %5059
        %v5061 = vrcp.pop %v5054
        %v5062 = vrcp.pop %v5057
        %v5063 = vrcp.pop %v5060
        %v5064 = vmul.f32 %v5047, %v5061
        %v5065 = vmul.f32 %v5049, %v5062
        %v5066 = vmul.f32 %v5051, %v5063
        %v5067 = vpack.c.bf16 %v5065, %v5064
        %v5068 = vpack.c.bf16 %v5066, %v5066
        %v5070 = vshrl.u32 %v4967, 16
        %v5072 = vrot.slane %v5070, 2
        %v5073 = vshll.u32 %v4967, 16
        %v5075 = vrot.slane %v5073, 3
        %v5076 = vor.u32 %v5072, %v5075
        %v5078 = vshrl.u32 %v4968, 16
        %v5080 = vrot.slane %v5078, 2
        %v5081 = vshll.u32 %v4968, 16
        %v5083 = vrot.slane %v5081, 3
        %v5084 = vor.u32 %v5080, %v5083
        %v5085 = vsel %vm4969, %v5076, %v5084
        %v5088 = vsel %vm1894, %v5067, 0
        %v5091 = vsel %vm1894, %v5068, 0
        %v5094 = vand.u32 %v5080, %v1939
        %5096 = vmatpush.bf16.msra.mxu0 0
        %5097 = vmatpush.bf16.msra.mxu0 0
        %5098 = vmatpush.bf16.msra.mxu0 0
        %5099 = vmatpush.bf16.msra.mxu0 0
        %5100 = vmatpush.bf16.msra.mxu0 0
        %5101 = vmatpush.bf16.msra.mxu0 0
        %5102 = vmatpush.bf16.msra.mxu0 %v5094
        %5103 = vmatpush.bf16.msra.mxu0 %v5085
        %5104 = vmatmul.bf16.gmra.mxu0 %v5088
        %v5105 = vpop.f32.mrf.mxu0
        %v5106 = vadd.f32 0.0, %v5105
        %v5107 = vpop.f32.mrf.mxu0
        %v5108 = vadd.f32 0.0, %v5107
        %5109 = vmatmul.bf16.gmra.mxu0 %v5091
        %v5110 = vpop.f32.mrf.mxu0
        %v5111 = vadd.f32 0.0, %v5110
        %v5112 = vpop.f32.mrf.mxu0
        %5113 = vdwg.mxu0
        %5114 = vst.msk [vmem:[#allocation3 + $0x55] sm:$0xff] %vm1863, %v5106
        %5115 = vst.msk [vmem:[#allocation3 + $0x5d] sm:$0xff] %vm1863, %v5108
        %5116 = vst.msk [vmem:[#allocation3 + $0x65] sm:$0x1] %vm1963, %v5111
        %v5117 = vld [vmem:[#allocation2 + $0xf0] sm:$0xe0]
        %v5118 = vld [vmem:[#allocation2 + $0x108] sm:$0xff]
        %v5119 = vld [vmem:[#allocation2 + $0x120] sm:$0x3f]
        %v5120 = vpack.c.bf16 %v5118, %v5117
        %v5121 = vpack.c.bf16 %v5119, %v5119
        %v5122 = vld [vmem:[#allocation2 + $0xf8] sm:$0xe0]
        %v5123 = vld [vmem:[#allocation2 + $0x110] sm:$0xff]
        %v5124 = vld [vmem:[#allocation2 + $0x128] sm:$0x3f]
        %v5125 = vpack.c.bf16 %v5123, %v5122
        %v5126 = vpack.c.bf16 %v5124, %v5124
        %v5127 = vld [vmem:[#allocation2 + $0x100] sm:$0xe0]
        %v5128 = vld [vmem:[#allocation2 + $0x118] sm:$0xff]
        %v5129 = vld [vmem:[#allocation2 + $0x130] sm:$0x3f]
        %v5130 = vpack.c.bf16 %v5128, %v5127
        %v5131 = vpack.c.bf16 %v5129, %v5129
        %v5133 = vshrl.u32 %v5120, 16
        %v5135 = vrot.slane %v5133, 2
        %v5136 = vshll.u32 %v5120, 16
        %v5138 = vrot.slane %v5136, 3
        %v5139 = vor.u32 %v5135, %v5138
        %v5141 = vshrl.u32 %v5121, 16
        %v5143 = vrot.slane %v5141, 2
        %v5144 = vshll.u32 %v5121, 16
        %v5146 = vrot.slane %v5144, 3
        %v5147 = vor.u32 %v5143, %v5146
        %v5148 = vsel %vm4969, %v5139, %v5147
        %5149 = vrot.lane.b32.xlu0 %v5148, 96
        %v5150 = vpop.permute.xlu0 %5149
        %5151 = vrot.lane.b32.xlu0 %v5143, 96
        %v5152 = vpop.permute.xlu0 %5151
        %v5154 = vshrl.u32 %v5125, 16
        %v5156 = vrot.slane %v5154, 2
        %v5157 = vshll.u32 %v5125, 16
        %v5159 = vrot.slane %v5157, 3
        %v5160 = vor.u32 %v5156, %v5159
        %v5162 = vshrl.u32 %v5126, 16
        %v5164 = vrot.slane %v5162, 2
        %v5165 = vshll.u32 %v5126, 16
        %v5167 = vrot.slane %v5165, 3
        %v5168 = vor.u32 %v5164, %v5167
        %v5169 = vsel %vm4969, %v5160, %v5168
        %5170 = vrot.lane.b32.xlu0 %v5169, 96
        %v5171 = vpop.permute.xlu0 %5170
        %5172 = vrot.lane.b32.xlu0 %v5164, 96
        %v5173 = vpop.permute.xlu0 %5172
        %v5175 = vsel %vm1863, %v5150, 0
        %v5178 = vsel %vm1863, %v5152, 0
        %v5181 = vsel %vm1863, %v5171, 0
        %v5184 = vsel %vm1863, %v5173, 0
        %5186 = vmatpush.bf16.xpose.msra.mxu0 0
        %5187 = vmatpush.bf16.xpose.msra.mxu0 0
        %5188 = vmatpush.bf16.xpose.msra.mxu0 0
        %5189 = vmatpush.bf16.xpose.msra.mxu0 0
        %5190 = vmatpush.bf16.xpose.msra.mxu0 0
        %5191 = vmatpush.bf16.xpose.msra.mxu0 0
        %5192 = vmatpush.bf16.xpose.msra.mxu0 %v5184
        %5193 = vmatpush.bf16.xpose.msra.mxu0 %v5181
        %5194 = vmatmul.bf16.gmra.mxu0 %v5175
        %v5195 = vpop.f32.mrf.mxu0
        %v5196 = vadd.f32 0.0, %v5195
        %v5197 = vpop.f32.mrf.mxu0
        %v5198 = vadd.f32 0.0, %v5197
        %5199 = vmatmul.bf16.gmra.mxu0 %v5178
        %v5200 = vpop.f32.mrf.mxu0
        %v5201 = vadd.f32 0.0, %v5200
        %v5202 = vpop.f32.mrf.mxu0
        %5203 = vdwg.mxu0
        %v5204 = vsel %vm1894, %v5196, -inf
        %5205 = vmax.xlane.f32.xlu0 %v5204
        %v5206 = vpop.xlane.xlu0 %5205
        %v5207 = vsel %vm1894, %v5198, -inf
        %5208 = vmax.xlane.f32.xlu0 %v5207
        %v5209 = vpop.xlane.xlu0 %5208
        %v5210 = vsel %vm1901, %v5201, -inf
        %5211 = vmax.xlane.f32.xlu0 %v5210
        %v5212 = vpop.xlane.xlu0 %5211
        %v5213 = vsub.f32 %v5196, %v5206
        %v5214 = vsub.f32 %v5198, %v5209
        %v5215 = vsub.f32 %v5201, %v5212
        %v5216 = vmul.f32 %v5213, 1.442695
        %v5217 = vpow.pop %v5216
        %v5218 = vmul.f32 %v5214, 1.442695
        %v5219 = vpow.pop %v5218
        %v5220 = vmul.f32 %v5215, 1.442695
        %v5221 = vpow.pop %v5220
        %v5222 = vsel %vm1894, %v5217, 0.0
        %5223 = vadd.xlane.f32.xlu0 %v5222
        %v5224 = vpop.xlane.xlu0 %5223
        %v5225 = vsel %vm1894, %v5219, 0.0
        %5226 = vadd.xlane.f32.xlu0 %v5225
        %v5227 = vpop.xlane.xlu0 %5226
        %v5228 = vsel %vm1901, %v5221, 0.0
        %5229 = vadd.xlane.f32.xlu0 %v5228
        %v5230 = vpop.xlane.xlu0 %5229
        %v5231 = vrcp.pop %v5224
        %v5232 = vrcp.pop %v5227
        %v5233 = vrcp.pop %v5230
        %v5234 = vmul.f32 %v5217, %v5231
        %v5235 = vmul.f32 %v5219, %v5232
        %v5236 = vmul.f32 %v5221, %v5233
        %v5237 = vpack.c.bf16 %v5235, %v5234
        %v5238 = vpack.c.bf16 %v5236, %v5236
        %v5240 = vshrl.u32 %v5130, 16
        %v5242 = vrot.slane %v5240, 2
        %v5243 = vshll.u32 %v5130, 16
        %v5245 = vrot.slane %v5243, 3
        %v5246 = vor.u32 %v5242, %v5245
        %v5248 = vshrl.u32 %v5131, 16
        %v5250 = vrot.slane %v5248, 2
        %v5251 = vshll.u32 %v5131, 16
        %v5253 = vrot.slane %v5251, 3
        %v5254 = vor.u32 %v5250, %v5253
        %v5255 = vsel %vm4969, %v5246, %v5254
        %5256 = vrot.lane.b32.xlu0 %v5255, 96
        %v5257 = vpop.permute.xlu0 %5256
        %5258 = vrot.lane.b32.xlu0 %v5250, 96
        %v5259 = vpop.permute.xlu0 %5258
        %v5262 = vsel %vm1894, %v5237, 0
        %v5265 = vsel %vm1894, %v5238, 0
        %v5268 = vand.u32 %v5259, %v1939
        %5270 = vmatpush.bf16.msra.mxu0 0
        %5271 = vmatpush.bf16.msra.mxu0 0
        %5272 = vmatpush.bf16.msra.mxu0 0
        %5273 = vmatpush.bf16.msra.mxu0 0
        %5274 = vmatpush.bf16.msra.mxu0 0
        %5275 = vmatpush.bf16.msra.mxu0 0
        %5276 = vmatpush.bf16.msra.mxu0 %v5268
        %5277 = vmatpush.bf16.msra.mxu0 %v5257
        %5278 = vmatmul.bf16.gmra.mxu0 %v5262
        %v5279 = vpop.f32.mrf.mxu0
        %v5280 = vadd.f32 0.0, %v5279
        %v5281 = vpop.f32.mrf.mxu0
        %v5282 = vadd.f32 0.0, %v5281
        %5283 = vmatmul.bf16.gmra.mxu0 %v5265
        %v5284 = vpop.f32.mrf.mxu0
        %v5285 = vadd.f32 0.0, %v5284
        %v5286 = vpop.f32.mrf.mxu0
        %5287 = vdwg.mxu0
        %5291 = vrot.lane.b32.xlu0 %v5280, 32
        %v5292 = vpop.permute.xlu0 %5291
        %5293 = vrot.lane.b32.xlu0 %v5282, 32
        %v5294 = vpop.permute.xlu0 %5293
        %5295 = vrot.lane.b32.xlu0 %v5285, 32
        %v5296 = vpop.permute.xlu0 %5295
        %5300 = vst.msk [vmem:[#allocation3 + $0x55] sm:$0xff] %vm2103, %v5292
        %5301 = vst.msk [vmem:[#allocation3 + $0x5d] sm:$0xff] %vm2103, %v5294
        %5302 = vst.msk [vmem:[#allocation3 + $0x65] sm:$0x1] %vm2106, %v5296
        %v5303 = vld [vmem:[#allocation2 + $0xf0] sm:$0xe0]
        %v5304 = vld [vmem:[#allocation2 + $0x108] sm:$0xff]
        %v5305 = vld [vmem:[#allocation2 + $0x120] sm:$0x3f]
        %v5306 = vpack.c.bf16 %v5304, %v5303
        %v5307 = vpack.c.bf16 %v5305, %v5305
        %v5308 = vld [vmem:[#allocation2 + $0xf8] sm:$0xe0]
        %v5309 = vld [vmem:[#allocation2 + $0x110] sm:$0xff]
        %v5310 = vld [vmem:[#allocation2 + $0x128] sm:$0x3f]
        %v5311 = vpack.c.bf16 %v5309, %v5308
        %v5312 = vpack.c.bf16 %v5310, %v5310
        %v5313 = vld [vmem:[#allocation2 + $0x100] sm:$0xe0]
        %v5314 = vld [vmem:[#allocation2 + $0x118] sm:$0xff]
        %v5315 = vld [vmem:[#allocation2 + $0x130] sm:$0x3f]
        %v5316 = vpack.c.bf16 %v5314, %v5313
        %v5317 = vpack.c.bf16 %v5315, %v5315
        %v5319 = vshrl.u32 %v5306, 16
        %v5321 = vrot.slane %v5319, 2
        %v5322 = vshll.u32 %v5306, 16
        %v5324 = vrot.slane %v5322, 3
        %v5325 = vor.u32 %v5321, %v5324
        %v5327 = vshrl.u32 %v5307, 16
        %v5329 = vrot.slane %v5327, 2
        %v5330 = vshll.u32 %v5307, 16
        %v5332 = vrot.slane %v5330, 3
        %v5333 = vor.u32 %v5329, %v5332
        %v5334 = vsel %vm4969, %v5325, %v5333
        %5335 = vrot.lane.b32.xlu0 %v5334, 64
        %v5336 = vpop.permute.xlu0 %5335
        %5337 = vrot.lane.b32.xlu0 %v5329, 64
        %v5338 = vpop.permute.xlu0 %5337
        %v5340 = vshrl.u32 %v5311, 16
        %v5342 = vrot.slane %v5340, 2
        %v5343 = vshll.u32 %v5311, 16
        %v5345 = vrot.slane %v5343, 3
        %v5346 = vor.u32 %v5342, %v5345
        %v5348 = vshrl.u32 %v5312, 16
        %v5350 = vrot.slane %v5348, 2
        %v5351 = vshll.u32 %v5312, 16
        %v5353 = vrot.slane %v5351, 3
        %v5354 = vor.u32 %v5350, %v5353
        %v5355 = vsel %vm4969, %v5346, %v5354
        %5356 = vrot.lane.b32.xlu0 %v5355, 64
        %v5357 = vpop.permute.xlu0 %5356
        %5358 = vrot.lane.b32.xlu0 %v5350, 64
        %v5359 = vpop.permute.xlu0 %5358
        %v5361 = vsel %vm1863, %v5336, 0
        %v5364 = vsel %vm1863, %v5338, 0
        %v5367 = vsel %vm1863, %v5357, 0
        %v5370 = vsel %vm1863, %v5359, 0
        %5372 = vmatpush.bf16.xpose.msra.mxu0 0
        %5373 = vmatpush.bf16.xpose.msra.mxu0 0
        %5374 = vmatpush.bf16.xpose.msra.mxu0 0
        %5375 = vmatpush.bf16.xpose.msra.mxu0 0
        %5376 = vmatpush.bf16.xpose.msra.mxu0 0
        %5377 = vmatpush.bf16.xpose.msra.mxu0 0
        %5378 = vmatpush.bf16.xpose.msra.mxu0 %v5370
        %5379 = vmatpush.bf16.xpose.msra.mxu0 %v5367
        %5380 = vmatmul.bf16.gmra.mxu0 %v5361
        %v5381 = vpop.f32.mrf.mxu0
        %v5382 = vadd.f32 0.0, %v5381
        %v5383 = vpop.f32.mrf.mxu0
        %v5384 = vadd.f32 0.0, %v5383
        %5385 = vmatmul.bf16.gmra.mxu0 %v5364
        %v5386 = vpop.f32.mrf.mxu0
        %v5387 = vadd.f32 0.0, %v5386
        %v5388 = vpop.f32.mrf.mxu0
        %5389 = vdwg.mxu0
        %v5390 = vsel %vm1894, %v5382, -inf
        %5391 = vmax.xlane.f32.xlu0 %v5390
        %v5392 = vpop.xlane.xlu0 %5391
        %v5393 = vsel %vm1894, %v5384, -inf
        %5394 = vmax.xlane.f32.xlu0 %v5393
        %v5395 = vpop.xlane.xlu0 %5394
        %v5396 = vsel %vm1901, %v5387, -inf
        %5397 = vmax.xlane.f32.xlu0 %v5396
        %v5398 = vpop.xlane.xlu0 %5397
        %v5399 = vsub.f32 %v5382, %v5392
        %v5400 = vsub.f32 %v5384, %v5395
        %v5401 = vsub.f32 %v5387, %v5398
        %v5402 = vmul.f32 %v5399, 1.442695
        %v5403 = vpow.pop %v5402
        %v5404 = vmul.f32 %v5400, 1.442695
        %v5405 = vpow.pop %v5404
        %v5406 = vmul.f32 %v5401, 1.442695
        %v5407 = vpow.pop %v5406
        %v5408 = vsel %vm1894, %v5403, 0.0
        %5409 = vadd.xlane.f32.xlu0 %v5408
        %v5410 = vpop.xlane.xlu0 %5409
        %v5411 = vsel %vm1894, %v5405, 0.0
        %5412 = vadd.xlane.f32.xlu0 %v5411
        %v5413 = vpop.xlane.xlu0 %5412
        %v5414 = vsel %vm1901, %v5407, 0.0
        %5415 = vadd.xlane.f32.xlu0 %v5414
        %v5416 = vpop.xlane.xlu0 %5415
        %v5417 = vrcp.pop %v5410
        %v5418 = vrcp.pop %v5413
        %v5419 = vrcp.pop %v5416
        %v5420 = vmul.f32 %v5403, %v5417
        %v5421 = vmul.f32 %v5405, %v5418
        %v5422 = vmul.f32 %v5407, %v5419
        %v5423 = vpack.c.bf16 %v5421, %v5420
        %v5424 = vpack.c.bf16 %v5422, %v5422
        %v5426 = vshrl.u32 %v5316, 16
        %v5428 = vrot.slane %v5426, 2
        %v5429 = vshll.u32 %v5316, 16
        %v5431 = vrot.slane %v5429, 3
        %v5432 = vor.u32 %v5428, %v5431
        %v5434 = vshrl.u32 %v5317, 16
        %v5436 = vrot.slane %v5434, 2
        %v5437 = vshll.u32 %v5317, 16
        %v5439 = vrot.slane %v5437, 3
        %v5440 = vor.u32 %v5436, %v5439
        %v5441 = vsel %vm4969, %v5432, %v5440
        %5442 = vrot.lane.b32.xlu0 %v5441, 64
        %v5443 = vpop.permute.xlu0 %5442
        %5444 = vrot.lane.b32.xlu0 %v5436, 64
        %v5445 = vpop.permute.xlu0 %5444
        %v5448 = vsel %vm1894, %v5423, 0
        %v5451 = vsel %vm1894, %v5424, 0
        %v5454 = vand.u32 %v5445, %v1939
        %5456 = vmatpush.bf16.msra.mxu0 0
        %5457 = vmatpush.bf16.msra.mxu0 0
        %5458 = vmatpush.bf16.msra.mxu0 0
        %5459 = vmatpush.bf16.msra.mxu0 0
        %5460 = vmatpush.bf16.msra.mxu0 0
        %5461 = vmatpush.bf16.msra.mxu0 0
        %5462 = vmatpush.bf16.msra.mxu0 %v5454
        %5463 = vmatpush.bf16.msra.mxu0 %v5443
        %5464 = vmatmul.bf16.gmra.mxu0 %v5448
        %v5465 = vpop.f32.mrf.mxu0
        %v5466 = vadd.f32 0.0, %v5465
        %v5467 = vpop.f32.mrf.mxu0
        %v5468 = vadd.f32 0.0, %v5467
        %5469 = vmatmul.bf16.gmra.mxu0 %v5451
        %v5470 = vpop.f32.mrf.mxu0
        %v5471 = vadd.f32 0.0, %v5470
        %v5472 = vpop.f32.mrf.mxu0
        %5473 = vdwg.mxu0
        %5477 = vrot.lane.b32.xlu0 %v5466, 64
        %v5478 = vpop.permute.xlu0 %5477
        %5479 = vrot.lane.b32.xlu0 %v5468, 64
        %v5480 = vpop.permute.xlu0 %5479
        %5481 = vrot.lane.b32.xlu0 %v5471, 64
        %v5482 = vpop.permute.xlu0 %5481
        %5486 = vst.msk [vmem:[#allocation3 + $0x55] sm:$0xff] %vm2246, %v5478
        %5487 = vst.msk [vmem:[#allocation3 + $0x5d] sm:$0xff] %vm2246, %v5480
        %5488 = vst.msk [vmem:[#allocation3 + $0x65] sm:$0x1] %vm2249, %v5482
        %v5489 = vld [vmem:[#allocation2 + $0xf0] sm:$0xe0]
        %v5490 = vld [vmem:[#allocation2 + $0x108] sm:$0xff]
        %v5491 = vld [vmem:[#allocation2 + $0x120] sm:$0x3f]
        %v5492 = vpack.c.bf16 %v5490, %v5489
        %v5493 = vpack.c.bf16 %v5491, %v5491
        %v5494 = vld [vmem:[#allocation2 + $0xf8] sm:$0xe0]
        %v5495 = vld [vmem:[#allocation2 + $0x110] sm:$0xff]
        %v5496 = vld [vmem:[#allocation2 + $0x128] sm:$0x3f]
        %v5497 = vpack.c.bf16 %v5495, %v5494
        %v5498 = vpack.c.bf16 %v5496, %v5496
        %v5499 = vld [vmem:[#allocation2 + $0x100] sm:$0xe0]
        %v5500 = vld [vmem:[#allocation2 + $0x118] sm:$0xff]
        %v5501 = vld [vmem:[#allocation2 + $0x130] sm:$0x3f]
        %v5502 = vpack.c.bf16 %v5500, %v5499
        %v5503 = vpack.c.bf16 %v5501, %v5501
        %v5505 = vshrl.u32 %v5492, 16
        %v5507 = vrot.slane %v5505, 2
        %v5508 = vshll.u32 %v5492, 16
        %v5510 = vrot.slane %v5508, 3
        %v5511 = vor.u32 %v5507, %v5510
        %v5513 = vshrl.u32 %v5493, 16
        %v5515 = vrot.slane %v5513, 2
        %v5516 = vshll.u32 %v5493, 16
        %v5518 = vrot.slane %v5516, 3
        %v5519 = vor.u32 %v5515, %v5518
        %v5520 = vsel %vm4969, %v5511, %v5519
        %5521 = vrot.lane.b32.xlu0 %v5520, 32
        %v5522 = vpop.permute.xlu0 %5521
        %5523 = vrot.lane.b32.xlu0 %v5515, 32
        %v5524 = vpop.permute.xlu0 %5523
        %v5526 = vshrl.u32 %v5497, 16
        %v5528 = vrot.slane %v5526, 2
        %v5529 = vshll.u32 %v5497, 16
        %v5531 = vrot.slane %v5529, 3
        %v5532 = vor.u32 %v5528, %v5531
        %v5534 = vshrl.u32 %v5498, 16
        %v5536 = vrot.slane %v5534, 2
        %v5537 = vshll.u32 %v5498, 16
        %v5539 = vrot.slane %v5537, 3
        %v5540 = vor.u32 %v5536, %v5539
        %v5541 = vsel %vm4969, %v5532, %v5540
        %5542 = vrot.lane.b32.xlu0 %v5541, 32
        %v5543 = vpop.permute.xlu0 %5542
        %5544 = vrot.lane.b32.xlu0 %v5536, 32
        %v5545 = vpop.permute.xlu0 %5544
        %v5547 = vsel %vm1863, %v5522, 0
        %v5550 = vsel %vm1863, %v5524, 0
        %v5553 = vsel %vm1863, %v5543, 0
        %v5556 = vsel %vm1863, %v5545, 0
        %5558 = vmatpush.bf16.xpose.msra.mxu0 0
        %5559 = vmatpush.bf16.xpose.msra.mxu0 0
        %5560 = vmatpush.bf16.xpose.msra.mxu0 0
        %5561 = vmatpush.bf16.xpose.msra.mxu0 0
        %5562 = vmatpush.bf16.xpose.msra.mxu0 0
        %5563 = vmatpush.bf16.xpose.msra.mxu0 0
        %5564 = vmatpush.bf16.xpose.msra.mxu0 %v5556
        %5565 = vmatpush.bf16.xpose.msra.mxu0 %v5553
        %5566 = vmatmul.bf16.gmra.mxu0 %v5547
        %v5567 = vpop.f32.mrf.mxu0
        %v5568 = vadd.f32 0.0, %v5567
        %v5569 = vpop.f32.mrf.mxu0
        %v5570 = vadd.f32 0.0, %v5569
        %5571 = vmatmul.bf16.gmra.mxu0 %v5550
        %v5572 = vpop.f32.mrf.mxu0
        %v5573 = vadd.f32 0.0, %v5572
        %v5574 = vpop.f32.mrf.mxu0
        %5575 = vdwg.mxu0
        %v5576 = vsel %vm1894, %v5568, -inf
        %5577 = vmax.xlane.f32.xlu0 %v5576
        %v5578 = vpop.xlane.xlu0 %5577
        %v5579 = vsel %vm1894, %v5570, -inf
        %5580 = vmax.xlane.f32.xlu0 %v5579
        %v5581 = vpop.xlane.xlu0 %5580
        %v5582 = vsel %vm1901, %v5573, -inf
        %5583 = vmax.xlane.f32.xlu0 %v5582
        %v5584 = vpop.xlane.xlu0 %5583
        %v5585 = vsub.f32 %v5568, %v5578
        %v5586 = vsub.f32 %v5570, %v5581
        %v5587 = vsub.f32 %v5573, %v5584
        %v5588 = vmul.f32 %v5585, 1.442695
        %v5589 = vpow.pop %v5588
        %v5590 = vmul.f32 %v5586, 1.442695
        %v5591 = vpow.pop %v5590
        %v5592 = vmul.f32 %v5587, 1.442695
        %v5593 = vpow.pop %v5592
        %v5594 = vsel %vm1894, %v5589, 0.0
        %5595 = vadd.xlane.f32.xlu0 %v5594
        %v5596 = vpop.xlane.xlu0 %5595
        %v5597 = vsel %vm1894, %v5591, 0.0
        %5598 = vadd.xlane.f32.xlu0 %v5597
        %v5599 = vpop.xlane.xlu0 %5598
        %v5600 = vsel %vm1901, %v5593, 0.0
        %5601 = vadd.xlane.f32.xlu0 %v5600
        %v5602 = vpop.xlane.xlu0 %5601
        %v5603 = vrcp.pop %v5596
        %v5604 = vrcp.pop %v5599
        %v5605 = vrcp.pop %v5602
        %v5606 = vmul.f32 %v5589, %v5603
        %v5607 = vmul.f32 %v5591, %v5604
        %v5608 = vmul.f32 %v5593, %v5605
        %v5609 = vpack.c.bf16 %v5607, %v5606
        %v5610 = vpack.c.bf16 %v5608, %v5608
        %v5612 = vshrl.u32 %v5502, 16
        %v5614 = vrot.slane %v5612, 2
        %v5615 = vshll.u32 %v5502, 16
        %v5617 = vrot.slane %v5615, 3
        %v5618 = vor.u32 %v5614, %v5617
        %v5620 = vshrl.u32 %v5503, 16
        %v5622 = vrot.slane %v5620, 2
        %v5623 = vshll.u32 %v5503, 16
        %v5625 = vrot.slane %v5623, 3
        %v5626 = vor.u32 %v5622, %v5625
        %v5627 = vsel %vm4969, %v5618, %v5626
        %5628 = vrot.lane.b32.xlu0 %v5627, 32
        %v5629 = vpop.permute.xlu0 %5628
        %5630 = vrot.lane.b32.xlu0 %v5622, 32
        %v5631 = vpop.permute.xlu0 %5630
        %v5634 = vsel %vm1894, %v5609, 0
        %v5637 = vsel %vm1894, %v5610, 0
        %v5640 = vand.u32 %v5631, %v1939
        %5642 = vmatpush.bf16.msra.mxu0 0
        %5643 = vmatpush.bf16.msra.mxu0 0
        %5644 = vmatpush.bf16.msra.mxu0 0
        %5645 = vmatpush.bf16.msra.mxu0 0
        %5646 = vmatpush.bf16.msra.mxu0 0
        %5647 = vmatpush.bf16.msra.mxu0 0
        %5648 = vmatpush.bf16.msra.mxu0 %v5640
        %5649 = vmatpush.bf16.msra.mxu0 %v5629
        %5650 = vmatmul.bf16.gmra.mxu0 %v5634
        %v5651 = vpop.f32.mrf.mxu0
        %v5652 = vadd.f32 0.0, %v5651
        %v5653 = vpop.f32.mrf.mxu0
        %v5654 = vadd.f32 0.0, %v5653
        %5655 = vmatmul.bf16.gmra.mxu0 %v5637
        %v5656 = vpop.f32.mrf.mxu0
        %v5657 = vadd.f32 0.0, %v5656
        %v5658 = vpop.f32.mrf.mxu0
        %5659 = vdwg.mxu0
        %5663 = vrot.lane.b32.xlu0 %v5652, 96
        %v5664 = vpop.permute.xlu0 %5663
        %5665 = vrot.lane.b32.xlu0 %v5654, 96
        %v5666 = vpop.permute.xlu0 %5665
        %5667 = vrot.lane.b32.xlu0 %v5657, 96
        %v5668 = vpop.permute.xlu0 %5667
        %5672 = vst.msk [vmem:[#allocation3 + $0x55] sm:$0xff] %vm2389, %v5664
        %5673 = vst.msk [vmem:[#allocation3 + $0x5d] sm:$0xff] %vm2389, %v5666
        %5674 = vst.msk [vmem:[#allocation3 + $0x65] sm:$0x1] %vm2392, %v5668
        %v5675 = vld [vmem:[#allocation2 + $0x120] sm:$0xc0]
        %v5676 = vld [vmem:[#allocation2 + $0x138] sm:$0xff]
        %v5677 = vld [vmem:[#allocation2 + $0x150] sm:$0x7f]
        %v5678 = vpack.c.bf16 %v5676, %v5675
        %v5679 = vpack.c.bf16 %v5677, %v5677
        %v5680 = vld [vmem:[#allocation2 + $0x128] sm:$0xc0]
        %v5681 = vld [vmem:[#allocation2 + $0x140] sm:$0xff]
        %v5682 = vld [vmem:[#allocation2 + $0x158] sm:$0x7f]
        %v5683 = vpack.c.bf16 %v5681, %v5680
        %v5684 = vpack.c.bf16 %v5682, %v5682
        %v5685 = vld [vmem:[#allocation2 + $0x130] sm:$0xc0]
        %v5686 = vld [vmem:[#allocation2 + $0x148] sm:$0xff]
        %v5687 = vld [vmem:[#allocation2 + $0x160] sm:$0x7f]
        %v5688 = vpack.c.bf16 %v5686, %v5685
        %v5689 = vpack.c.bf16 %v5687, %v5687
        %vm5692 = vcmask 1044480
        %v5693 = vrot.slane %v5678, 3
        %v5694 = vrot.slane %v5679, 3
        %v5695 = vsel %vm5692, %v5693, %v5694
        %v5698 = vrot.slane %v5683, 3
        %v5699 = vrot.slane %v5684, 3
        %v5700 = vsel %vm5692, %v5698, %v5699
        %v5702 = vsel %vm1863, %v5695, 0
        %v5705 = vsel %vm1863, %v5694, 0
        %v5708 = vsel %vm1863, %v5700, 0
        %v5711 = vsel %vm1863, %v5699, 0
        %5713 = vmatpush.bf16.xpose.msra.mxu0 0
        %5714 = vmatpush.bf16.xpose.msra.mxu0 0
        %5715 = vmatpush.bf16.xpose.msra.mxu0 0
        %5716 = vmatpush.bf16.xpose.msra.mxu0 0
        %5717 = vmatpush.bf16.xpose.msra.mxu0 0
        %5718 = vmatpush.bf16.xpose.msra.mxu0 0
        %5719 = vmatpush.bf16.xpose.msra.mxu0 %v5711
        %5720 = vmatpush.bf16.xpose.msra.mxu0 %v5708
        %5721 = vmatmul.bf16.gmra.mxu0 %v5702
        %v5722 = vpop.f32.mrf.mxu0
        %v5723 = vadd.f32 0.0, %v5722
        %v5724 = vpop.f32.mrf.mxu0
        %v5725 = vadd.f32 0.0, %v5724
        %5726 = vmatmul.bf16.gmra.mxu0 %v5705
        %v5727 = vpop.f32.mrf.mxu0
        %v5728 = vadd.f32 0.0, %v5727
        %v5729 = vpop.f32.mrf.mxu0
        %5730 = vdwg.mxu0
        %v5731 = vsel %vm1894, %v5723, -inf
        %5732 = vmax.xlane.f32.xlu0 %v5731
        %v5733 = vpop.xlane.xlu0 %5732
        %v5734 = vsel %vm1894, %v5725, -inf
        %5735 = vmax.xlane.f32.xlu0 %v5734
        %v5736 = vpop.xlane.xlu0 %5735
        %v5737 = vsel %vm1901, %v5728, -inf
        %5738 = vmax.xlane.f32.xlu0 %v5737
        %v5739 = vpop.xlane.xlu0 %5738
        %v5740 = vsub.f32 %v5723, %v5733
        %v5741 = vsub.f32 %v5725, %v5736
        %v5742 = vsub.f32 %v5728, %v5739
        %v5743 = vmul.f32 %v5740, 1.442695
        %v5744 = vpow.pop %v5743
        %v5745 = vmul.f32 %v5741, 1.442695
        %v5746 = vpow.pop %v5745
        %v5747 = vmul.f32 %v5742, 1.442695
        %v5748 = vpow.pop %v5747
        %v5749 = vsel %vm1894, %v5744, 0.0
        %5750 = vadd.xlane.f32.xlu0 %v5749
        %v5751 = vpop.xlane.xlu0 %5750
        %v5752 = vsel %vm1894, %v5746, 0.0
        %5753 = vadd.xlane.f32.xlu0 %v5752
        %v5754 = vpop.xlane.xlu0 %5753
        %v5755 = vsel %vm1901, %v5748, 0.0
        %5756 = vadd.xlane.f32.xlu0 %v5755
        %v5757 = vpop.xlane.xlu0 %5756
        %v5758 = vrcp.pop %v5751
        %v5759 = vrcp.pop %v5754
        %v5760 = vrcp.pop %v5757
        %v5761 = vmul.f32 %v5744, %v5758
        %v5762 = vmul.f32 %v5746, %v5759
        %v5763 = vmul.f32 %v5748, %v5760
        %v5764 = vpack.c.bf16 %v5762, %v5761
        %v5765 = vpack.c.bf16 %v5763, %v5763
        %v5768 = vrot.slane %v5688, 3
        %v5769 = vrot.slane %v5689, 3
        %v5770 = vsel %vm5692, %v5768, %v5769
        %v5773 = vsel %vm1894, %v5764, 0
        %v5776 = vsel %vm1894, %v5765, 0
        %v5779 = vand.u32 %v5769, %v1939
        %5781 = vmatpush.bf16.msra.mxu0 0
        %5782 = vmatpush.bf16.msra.mxu0 0
        %5783 = vmatpush.bf16.msra.mxu0 0
        %5784 = vmatpush.bf16.msra.mxu0 0
        %5785 = vmatpush.bf16.msra.mxu0 0
        %5786 = vmatpush.bf16.msra.mxu0 0
        %5787 = vmatpush.bf16.msra.mxu0 %v5779
        %5788 = vmatpush.bf16.msra.mxu0 %v5770
        %5789 = vmatmul.bf16.gmra.mxu0 %v5773
        %v5790 = vpop.f32.mrf.mxu0
        %v5791 = vadd.f32 0.0, %v5790
        %v5792 = vpop.f32.mrf.mxu0
        %v5793 = vadd.f32 0.0, %v5792
        %5794 = vmatmul.bf16.gmra.mxu0 %v5776
        %v5795 = vpop.f32.mrf.mxu0
        %v5796 = vadd.f32 0.0, %v5795
        %v5797 = vpop.f32.mrf.mxu0
        %5798 = vdwg.mxu0
        %5799 = vst.msk [vmem:[#allocation3 + $0x66] sm:$0xff] %vm1863, %v5791
        %5800 = vst.msk [vmem:[#allocation3 + $0x6e] sm:$0xff] %vm1863, %v5793
        %5801 = vst.msk [vmem:[#allocation3 + $0x76] sm:$0x1] %vm1963, %v5796
        %v5802 = vld [vmem:[#allocation2 + $0x120] sm:$0xc0]
        %v5803 = vld [vmem:[#allocation2 + $0x138] sm:$0xff]
        %v5804 = vld [vmem:[#allocation2 + $0x150] sm:$0x7f]
        %v5805 = vpack.c.bf16 %v5803, %v5802
        %v5806 = vpack.c.bf16 %v5804, %v5804
        %v5807 = vld [vmem:[#allocation2 + $0x128] sm:$0xc0]
        %v5808 = vld [vmem:[#allocation2 + $0x140] sm:$0xff]
        %v5809 = vld [vmem:[#allocation2 + $0x158] sm:$0x7f]
        %v5810 = vpack.c.bf16 %v5808, %v5807
        %v5811 = vpack.c.bf16 %v5809, %v5809
        %v5812 = vld [vmem:[#allocation2 + $0x130] sm:$0xc0]
        %v5813 = vld [vmem:[#allocation2 + $0x148] sm:$0xff]
        %v5814 = vld [vmem:[#allocation2 + $0x160] sm:$0x7f]
        %v5815 = vpack.c.bf16 %v5813, %v5812
        %v5816 = vpack.c.bf16 %v5814, %v5814
        %v5819 = vrot.slane %v5805, 3
        %v5820 = vrot.slane %v5806, 3
        %v5821 = vsel %vm5692, %v5819, %v5820
        %5822 = vrot.lane.b32.xlu0 %v5821, 96
        %v5823 = vpop.permute.xlu0 %5822
        %5824 = vrot.lane.b32.xlu0 %v5820, 96
        %v5825 = vpop.permute.xlu0 %5824
        %v5828 = vrot.slane %v5810, 3
        %v5829 = vrot.slane %v5811, 3
        %v5830 = vsel %vm5692, %v5828, %v5829
        %5831 = vrot.lane.b32.xlu0 %v5830, 96
        %v5832 = vpop.permute.xlu0 %5831
        %5833 = vrot.lane.b32.xlu0 %v5829, 96
        %v5834 = vpop.permute.xlu0 %5833
        %v5836 = vsel %vm1863, %v5823, 0
        %v5839 = vsel %vm1863, %v5825, 0
        %v5842 = vsel %vm1863, %v5832, 0
        %v5845 = vsel %vm1863, %v5834, 0
        %5847 = vmatpush.bf16.xpose.msra.mxu0 0
        %5848 = vmatpush.bf16.xpose.msra.mxu0 0
        %5849 = vmatpush.bf16.xpose.msra.mxu0 0
        %5850 = vmatpush.bf16.xpose.msra.mxu0 0
        %5851 = vmatpush.bf16.xpose.msra.mxu0 0
        %5852 = vmatpush.bf16.xpose.msra.mxu0 0
        %5853 = vmatpush.bf16.xpose.msra.mxu0 %v5845
        %5854 = vmatpush.bf16.xpose.msra.mxu0 %v5842
        %5855 = vmatmul.bf16.gmra.mxu0 %v5836
        %v5856 = vpop.f32.mrf.mxu0
        %v5857 = vadd.f32 0.0, %v5856
        %v5858 = vpop.f32.mrf.mxu0
        %v5859 = vadd.f32 0.0, %v5858
        %5860 = vmatmul.bf16.gmra.mxu0 %v5839
        %v5861 = vpop.f32.mrf.mxu0
        %v5862 = vadd.f32 0.0, %v5861
        %v5863 = vpop.f32.mrf.mxu0
        %5864 = vdwg.mxu0
        %v5865 = vsel %vm1894, %v5857, -inf
        %5866 = vmax.xlane.f32.xlu0 %v5865
        %v5867 = vpop.xlane.xlu0 %5866
        %v5868 = vsel %vm1894, %v5859, -inf
        %5869 = vmax.xlane.f32.xlu0 %v5868
        %v5870 = vpop.xlane.xlu0 %5869
        %v5871 = vsel %vm1901, %v5862, -inf
        %5872 = vmax.xlane.f32.xlu0 %v5871
        %v5873 = vpop.xlane.xlu0 %5872
        %v5874 = vsub.f32 %v5857, %v5867
        %v5875 = vsub.f32 %v5859, %v5870
        %v5876 = vsub.f32 %v5862, %v5873
        %v5877 = vmul.f32 %v5874, 1.442695
        %v5878 = vpow.pop %v5877
        %v5879 = vmul.f32 %v5875, 1.442695
        %v5880 = vpow.pop %v5879
        %v5881 = vmul.f32 %v5876, 1.442695
        %v5882 = vpow.pop %v5881
        %v5883 = vsel %vm1894, %v5878, 0.0
        %5884 = vadd.xlane.f32.xlu0 %v5883
        %v5885 = vpop.xlane.xlu0 %5884
        %v5886 = vsel %vm1894, %v5880, 0.0
        %5887 = vadd.xlane.f32.xlu0 %v5886
        %v5888 = vpop.xlane.xlu0 %5887
        %v5889 = vsel %vm1901, %v5882, 0.0
        %5890 = vadd.xlane.f32.xlu0 %v5889
        %v5891 = vpop.xlane.xlu0 %5890
        %v5892 = vrcp.pop %v5885
        %v5893 = vrcp.pop %v5888
        %v5894 = vrcp.pop %v5891
        %v5895 = vmul.f32 %v5878, %v5892
        %v5896 = vmul.f32 %v5880, %v5893
        %v5897 = vmul.f32 %v5882, %v5894
        %v5898 = vpack.c.bf16 %v5896, %v5895
        %v5899 = vpack.c.bf16 %v5897, %v5897
        %v5902 = vrot.slane %v5815, 3
        %v5903 = vrot.slane %v5816, 3
        %v5904 = vsel %vm5692, %v5902, %v5903
        %5905 = vrot.lane.b32.xlu0 %v5904, 96
        %v5906 = vpop.permute.xlu0 %5905
        %5907 = vrot.lane.b32.xlu0 %v5903, 96
        %v5908 = vpop.permute.xlu0 %5907
        %v5911 = vsel %vm1894, %v5898, 0
        %v5914 = vsel %vm1894, %v5899, 0
        %v5917 = vand.u32 %v5908, %v1939
        %5919 = vmatpush.bf16.msra.mxu0 0
        %5920 = vmatpush.bf16.msra.mxu0 0
        %5921 = vmatpush.bf16.msra.mxu0 0
        %5922 = vmatpush.bf16.msra.mxu0 0
        %5923 = vmatpush.bf16.msra.mxu0 0
        %5924 = vmatpush.bf16.msra.mxu0 0
        %5925 = vmatpush.bf16.msra.mxu0 %v5917
        %5926 = vmatpush.bf16.msra.mxu0 %v5906
        %5927 = vmatmul.bf16.gmra.mxu0 %v5911
        %v5928 = vpop.f32.mrf.mxu0
        %v5929 = vadd.f32 0.0, %v5928
        %v5930 = vpop.f32.mrf.mxu0
        %v5931 = vadd.f32 0.0, %v5930
        %5932 = vmatmul.bf16.gmra.mxu0 %v5914
        %v5933 = vpop.f32.mrf.mxu0
        %v5934 = vadd.f32 0.0, %v5933
        %v5935 = vpop.f32.mrf.mxu0
        %5936 = vdwg.mxu0
        %5940 = vrot.lane.b32.xlu0 %v5929, 32
        %v5941 = vpop.permute.xlu0 %5940
        %5942 = vrot.lane.b32.xlu0 %v5931, 32
        %v5943 = vpop.permute.xlu0 %5942
        %5944 = vrot.lane.b32.xlu0 %v5934, 32
        %v5945 = vpop.permute.xlu0 %5944
        %5949 = vst.msk [vmem:[#allocation3 + $0x66] sm:$0xff] %vm2103, %v5941
        %5950 = vst.msk [vmem:[#allocation3 + $0x6e] sm:$0xff] %vm2103, %v5943
        %5951 = vst.msk [vmem:[#allocation3 + $0x76] sm:$0x1] %vm2106, %v5945
        %v5952 = vld [vmem:[#allocation2 + $0x120] sm:$0xc0]
        %v5953 = vld [vmem:[#allocation2 + $0x138] sm:$0xff]
        %v5954 = vld [vmem:[#allocation2 + $0x150] sm:$0x7f]
        %v5955 = vpack.c.bf16 %v5953, %v5952
        %v5956 = vpack.c.bf16 %v5954, %v5954
        %v5957 = vld [vmem:[#allocation2 + $0x128] sm:$0xc0]
        %v5958 = vld [vmem:[#allocation2 + $0x140] sm:$0xff]
        %v5959 = vld [vmem:[#allocation2 + $0x158] sm:$0x7f]
        %v5960 = vpack.c.bf16 %v5958, %v5957
        %v5961 = vpack.c.bf16 %v5959, %v5959
        %v5962 = vld [vmem:[#allocation2 + $0x130] sm:$0xc0]
        %v5963 = vld [vmem:[#allocation2 + $0x148] sm:$0xff]
        %v5964 = vld [vmem:[#allocation2 + $0x160] sm:$0x7f]
        %v5965 = vpack.c.bf16 %v5963, %v5962
        %v5966 = vpack.c.bf16 %v5964, %v5964
        %v5969 = vrot.slane %v5955, 3
        %v5970 = vrot.slane %v5956, 3
        %v5971 = vsel %vm5692, %v5969, %v5970
        %5972 = vrot.lane.b32.xlu0 %v5971, 64
        %v5973 = vpop.permute.xlu0 %5972
        %5974 = vrot.lane.b32.xlu0 %v5970, 64
        %v5975 = vpop.permute.xlu0 %5974
        %v5978 = vrot.slane %v5960, 3
        %v5979 = vrot.slane %v5961, 3
        %v5980 = vsel %vm5692, %v5978, %v5979
        %5981 = vrot.lane.b32.xlu0 %v5980, 64
        %v5982 = vpop.permute.xlu0 %5981
        %5983 = vrot.lane.b32.xlu0 %v5979, 64
        %v5984 = vpop.permute.xlu0 %5983
        %v5986 = vsel %vm1863, %v5973, 0
        %v5989 = vsel %vm1863, %v5975, 0
        %v5992 = vsel %vm1863, %v5982, 0
        %v5995 = vsel %vm1863, %v5984, 0
        %5997 = vmatpush.bf16.xpose.msra.mxu0 0
        %5998 = vmatpush.bf16.xpose.msra.mxu0 0
        %5999 = vmatpush.bf16.xpose.msra.mxu0 0
        %6000 = vmatpush.bf16.xpose.msra.mxu0 0
        %6001 = vmatpush.bf16.xpose.msra.mxu0 0
        %6002 = vmatpush.bf16.xpose.msra.mxu0 0
        %6003 = vmatpush.bf16.xpose.msra.mxu0 %v5995
        %6004 = vmatpush.bf16.xpose.msra.mxu0 %v5992
        %6005 = vmatmul.bf16.gmra.mxu0 %v5986
        %v6006 = vpop.f32.mrf.mxu0
        %v6007 = vadd.f32 0.0, %v6006
        %v6008 = vpop.f32.mrf.mxu0
        %v6009 = vadd.f32 0.0, %v6008
        %6010 = vmatmul.bf16.gmra.mxu0 %v5989
        %v6011 = vpop.f32.mrf.mxu0
        %v6012 = vadd.f32 0.0, %v6011
        %v6013 = vpop.f32.mrf.mxu0
        %6014 = vdwg.mxu0
        %v6015 = vsel %vm1894, %v6007, -inf
        %6016 = vmax.xlane.f32.xlu0 %v6015
        %v6017 = vpop.xlane.xlu0 %6016
        %v6018 = vsel %vm1894, %v6009, -inf
        %6019 = vmax.xlane.f32.xlu0 %v6018
        %v6020 = vpop.xlane.xlu0 %6019
        %v6021 = vsel %vm1901, %v6012, -inf
        %6022 = vmax.xlane.f32.xlu0 %v6021
        %v6023 = vpop.xlane.xlu0 %6022
        %v6024 = vsub.f32 %v6007, %v6017
        %v6025 = vsub.f32 %v6009, %v6020
        %v6026 = vsub.f32 %v6012, %v6023
        %v6027 = vmul.f32 %v6024, 1.442695
        %v6028 = vpow.pop %v6027
        %v6029 = vmul.f32 %v6025, 1.442695
        %v6030 = vpow.pop %v6029
        %v6031 = vmul.f32 %v6026, 1.442695
        %v6032 = vpow.pop %v6031
        %v6033 = vsel %vm1894, %v6028, 0.0
        %6034 = vadd.xlane.f32.xlu0 %v6033
        %v6035 = vpop.xlane.xlu0 %6034
        %v6036 = vsel %vm1894, %v6030, 0.0
        %6037 = vadd.xlane.f32.xlu0 %v6036
        %v6038 = vpop.xlane.xlu0 %6037
        %v6039 = vsel %vm1901, %v6032, 0.0
        %6040 = vadd.xlane.f32.xlu0 %v6039
        %v6041 = vpop.xlane.xlu0 %6040
        %v6042 = vrcp.pop %v6035
        %v6043 = vrcp.pop %v6038
        %v6044 = vrcp.pop %v6041
        %v6045 = vmul.f32 %v6028, %v6042
        %v6046 = vmul.f32 %v6030, %v6043
        %v6047 = vmul.f32 %v6032, %v6044
        %v6048 = vpack.c.bf16 %v6046, %v6045
        %v6049 = vpack.c.bf16 %v6047, %v6047
        %v6052 = vrot.slane %v5965, 3
        %v6053 = vrot.slane %v5966, 3
        %v6054 = vsel %vm5692, %v6052, %v6053
        %6055 = vrot.lane.b32.xlu0 %v6054, 64
        %v6056 = vpop.permute.xlu0 %6055
        %6057 = vrot.lane.b32.xlu0 %v6053, 64
        %v6058 = vpop.permute.xlu0 %6057
        %v6061 = vsel %vm1894, %v6048, 0
        %v6064 = vsel %vm1894, %v6049, 0
        %v6067 = vand.u32 %v6058, %v1939
        %6069 = vmatpush.bf16.msra.mxu0 0
        %6070 = vmatpush.bf16.msra.mxu0 0
        %6071 = vmatpush.bf16.msra.mxu0 0
        %6072 = vmatpush.bf16.msra.mxu0 0
        %6073 = vmatpush.bf16.msra.mxu0 0
        %6074 = vmatpush.bf16.msra.mxu0 0
        %6075 = vmatpush.bf16.msra.mxu0 %v6067
        %6076 = vmatpush.bf16.msra.mxu0 %v6056
        %6077 = vmatmul.bf16.gmra.mxu0 %v6061
        %v6078 = vpop.f32.mrf.mxu0
        %v6079 = vadd.f32 0.0, %v6078
        %v6080 = vpop.f32.mrf.mxu0
        %v6081 = vadd.f32 0.0, %v6080
        %6082 = vmatmul.bf16.gmra.mxu0 %v6064
        %v6083 = vpop.f32.mrf.mxu0
        %v6084 = vadd.f32 0.0, %v6083
        %v6085 = vpop.f32.mrf.mxu0
        %6086 = vdwg.mxu0
        %6090 = vrot.lane.b32.xlu0 %v6079, 64
        %v6091 = vpop.permute.xlu0 %6090
        %6092 = vrot.lane.b32.xlu0 %v6081, 64
        %v6093 = vpop.permute.xlu0 %6092
        %6094 = vrot.lane.b32.xlu0 %v6084, 64
        %v6095 = vpop.permute.xlu0 %6094
        %6099 = vst.msk [vmem:[#allocation3 + $0x66] sm:$0xff] %vm2246, %v6091
        %6100 = vst.msk [vmem:[#allocation3 + $0x6e] sm:$0xff] %vm2246, %v6093
        %6101 = vst.msk [vmem:[#allocation3 + $0x76] sm:$0x1] %vm2249, %v6095
        %v6102 = vld [vmem:[#allocation2 + $0x120] sm:$0xc0]
        %v6103 = vld [vmem:[#allocation2 + $0x138] sm:$0xff]
        %v6104 = vld [vmem:[#allocation2 + $0x150] sm:$0x7f]
        %v6105 = vpack.c.bf16 %v6103, %v6102
        %v6106 = vpack.c.bf16 %v6104, %v6104
        %v6107 = vld [vmem:[#allocation2 + $0x128] sm:$0xc0]
        %v6108 = vld [vmem:[#allocation2 + $0x140] sm:$0xff]
        %v6109 = vld [vmem:[#allocation2 + $0x158] sm:$0x7f]
        %v6110 = vpack.c.bf16 %v6108, %v6107
        %v6111 = vpack.c.bf16 %v6109, %v6109
        %v6112 = vld [vmem:[#allocation2 + $0x130] sm:$0xc0]
        %v6113 = vld [vmem:[#allocation2 + $0x148] sm:$0xff]
        %v6114 = vld [vmem:[#allocation2 + $0x160] sm:$0x7f]
        %v6115 = vpack.c.bf16 %v6113, %v6112
        %v6116 = vpack.c.bf16 %v6114, %v6114
        %v6119 = vrot.slane %v6105, 3
        %v6120 = vrot.slane %v6106, 3
        %v6121 = vsel %vm5692, %v6119, %v6120
        %6122 = vrot.lane.b32.xlu0 %v6121, 32
        %v6123 = vpop.permute.xlu0 %6122
        %6124 = vrot.lane.b32.xlu0 %v6120, 32
        %v6125 = vpop.permute.xlu0 %6124
        %v6128 = vrot.slane %v6110, 3
        %v6129 = vrot.slane %v6111, 3
        %v6130 = vsel %vm5692, %v6128, %v6129
        %6131 = vrot.lane.b32.xlu0 %v6130, 32
        %v6132 = vpop.permute.xlu0 %6131
        %6133 = vrot.lane.b32.xlu0 %v6129, 32
        %v6134 = vpop.permute.xlu0 %6133
        %v6136 = vsel %vm1863, %v6123, 0
        %v6139 = vsel %vm1863, %v6125, 0
        %v6142 = vsel %vm1863, %v6132, 0
        %v6145 = vsel %vm1863, %v6134, 0
        %6147 = vmatpush.bf16.xpose.msra.mxu0 0
        %6148 = vmatpush.bf16.xpose.msra.mxu0 0
        %6149 = vmatpush.bf16.xpose.msra.mxu0 0
        %6150 = vmatpush.bf16.xpose.msra.mxu0 0
        %6151 = vmatpush.bf16.xpose.msra.mxu0 0
        %6152 = vmatpush.bf16.xpose.msra.mxu0 0
        %6153 = vmatpush.bf16.xpose.msra.mxu0 %v6145
        %6154 = vmatpush.bf16.xpose.msra.mxu0 %v6142
        %6155 = vmatmul.bf16.gmra.mxu0 %v6136
        %v6156 = vpop.f32.mrf.mxu0
        %v6157 = vadd.f32 0.0, %v6156
        %v6158 = vpop.f32.mrf.mxu0
        %v6159 = vadd.f32 0.0, %v6158
        %6160 = vmatmul.bf16.gmra.mxu0 %v6139
        %v6161 = vpop.f32.mrf.mxu0
        %v6162 = vadd.f32 0.0, %v6161
        %v6163 = vpop.f32.mrf.mxu0
        %6164 = vdwg.mxu0
        %v6165 = vsel %vm1894, %v6157, -inf
        %6166 = vmax.xlane.f32.xlu0 %v6165
        %v6167 = vpop.xlane.xlu0 %6166
        %v6168 = vsel %vm1894, %v6159, -inf
        %6169 = vmax.xlane.f32.xlu0 %v6168
        %v6170 = vpop.xlane.xlu0 %6169
        %v6171 = vsel %vm1901, %v6162, -inf
        %6172 = vmax.xlane.f32.xlu0 %v6171
        %v6173 = vpop.xlane.xlu0 %6172
        %v6174 = vsub.f32 %v6157, %v6167
        %v6175 = vsub.f32 %v6159, %v6170
        %v6176 = vsub.f32 %v6162, %v6173
        %v6177 = vmul.f32 %v6174, 1.442695
        %v6178 = vpow.pop %v6177
        %v6179 = vmul.f32 %v6175, 1.442695
        %v6180 = vpow.pop %v6179
        %v6181 = vmul.f32 %v6176, 1.442695
        %v6182 = vpow.pop %v6181
        %v6183 = vsel %vm1894, %v6178, 0.0
        %6184 = vadd.xlane.f32.xlu0 %v6183
        %v6185 = vpop.xlane.xlu0 %6184
        %v6186 = vsel %vm1894, %v6180, 0.0
        %6187 = vadd.xlane.f32.xlu0 %v6186
        %v6188 = vpop.xlane.xlu0 %6187
        %v6189 = vsel %vm1901, %v6182, 0.0
        %6190 = vadd.xlane.f32.xlu0 %v6189
        %v6191 = vpop.xlane.xlu0 %6190
        %v6192 = vrcp.pop %v6185
        %v6193 = vrcp.pop %v6188
        %v6194 = vrcp.pop %v6191
        %v6195 = vmul.f32 %v6178, %v6192
        %v6196 = vmul.f32 %v6180, %v6193
        %v6197 = vmul.f32 %v6182, %v6194
        %v6198 = vpack.c.bf16 %v6196, %v6195
        %v6199 = vpack.c.bf16 %v6197, %v6197
        %v6202 = vrot.slane %v6115, 3
        %v6203 = vrot.slane %v6116, 3
        %v6204 = vsel %vm5692, %v6202, %v6203
        %6205 = vrot.lane.b32.xlu0 %v6204, 32
        %v6206 = vpop.permute.xlu0 %6205
        %6207 = vrot.lane.b32.xlu0 %v6203, 32
        %v6208 = vpop.permute.xlu0 %6207
        %v6211 = vsel %vm1894, %v6198, 0
        %v6214 = vsel %vm1894, %v6199, 0
        %v6217 = vand.u32 %v6208, %v1939
        %6219 = vmatpush.bf16.msra.mxu0 0
        %6220 = vmatpush.bf16.msra.mxu0 0
        %6221 = vmatpush.bf16.msra.mxu0 0
        %6222 = vmatpush.bf16.msra.mxu0 0
        %6223 = vmatpush.bf16.msra.mxu0 0
        %6224 = vmatpush.bf16.msra.mxu0 0
        %6225 = vmatpush.bf16.msra.mxu0 %v6217
        %6226 = vmatpush.bf16.msra.mxu0 %v6206
        %6227 = vmatmul.bf16.gmra.mxu0 %v6211
        %v6228 = vpop.f32.mrf.mxu0
        %v6229 = vadd.f32 0.0, %v6228
        %v6230 = vpop.f32.mrf.mxu0
        %v6231 = vadd.f32 0.0, %v6230
        %6232 = vmatmul.bf16.gmra.mxu0 %v6214
        %v6233 = vpop.f32.mrf.mxu0
        %v6234 = vadd.f32 0.0, %v6233
        %v6235 = vpop.f32.mrf.mxu0
        %6236 = vdwg.mxu0
        %6240 = vrot.lane.b32.xlu0 %v6229, 96
        %v6241 = vpop.permute.xlu0 %6240
        %6242 = vrot.lane.b32.xlu0 %v6231, 96
        %v6243 = vpop.permute.xlu0 %6242
        %6244 = vrot.lane.b32.xlu0 %v6234, 96
        %v6245 = vpop.permute.xlu0 %6244
        %6249 = vst.msk [vmem:[#allocation3 + $0x66] sm:$0xff] %vm2389, %v6241
        %6250 = vst.msk [vmem:[#allocation3 + $0x6e] sm:$0xff] %vm2389, %v6243
        %6251 = vst.msk [vmem:[#allocation3 + $0x76] sm:$0x1] %vm2392, %v6245
        %v6252 = vld [vmem:[#allocation2 + $0x150] sm:$0x80]
        %v6253 = vld [vmem:[#allocation2 + $0x168] sm:$0xff]
        %v6254 = vld [vmem:[#allocation2 + $0x180] sm:$0xff]
        %v6255 = vpack.c.bf16 %v6253, %v6252
        %v6256 = vpack.c.bf16 %v6254, %v6254
        %v6257 = vld [vmem:[#allocation2 + $0x158] sm:$0x80]
        %v6258 = vld [vmem:[#allocation2 + $0x170] sm:$0xff]
        %v6259 = vld [vmem:[#allocation2 + $0x188] sm:$0xff]
        %v6260 = vpack.c.bf16 %v6258, %v6257
        %v6261 = vpack.c.bf16 %v6259, %v6259
        %v6262 = vld [vmem:[#allocation2 + $0x160] sm:$0x80]
        %v6263 = vld [vmem:[#allocation2 + $0x178] sm:$0xff]
        %v6264 = vld [vmem:[#allocation2 + $0x190] sm:$0xff]
        %v6265 = vpack.c.bf16 %v6263, %v6262
        %v6266 = vpack.c.bf16 %v6264, %v6264
        %vm6267 = vsmask.f32 4352
        %v6269 = vshrl.u32 %v6255, 16
        %v6271 = vrot.slane %v6269, 3
        %v6272 = vshll.u32 %v6255, 16
        %v6274 = vrot.slane %v6272, 4
        %v6275 = vor.u32 %v6271, %v6274
        %v6277 = vshrl.u32 %v6256, 16
        %v6279 = vrot.slane %v6277, 3
        %v6280 = vshll.u32 %v6256, 16
        %v6282 = vrot.slane %v6280, 4
        %v6283 = vor.u32 %v6279, %v6282
        %v6284 = vsel %vm6267, %v6275, %v6283
        %v6286 = vshrl.u32 %v6260, 16
        %v6288 = vrot.slane %v6286, 3
        %v6289 = vshll.u32 %v6260, 16
        %v6291 = vrot.slane %v6289, 4
        %v6292 = vor.u32 %v6288, %v6291
        %v6294 = vshrl.u32 %v6261, 16
        %v6296 = vrot.slane %v6294, 3
        %v6297 = vshll.u32 %v6261, 16
        %v6299 = vrot.slane %v6297, 4
        %v6300 = vor.u32 %v6296, %v6299
        %v6301 = vsel %vm6267, %v6292, %v6300
        %v6303 = vsel %vm1863, %v6284, 0
        %v6306 = vsel %vm1863, %v6279, 0
        %v6309 = vsel %vm1863, %v6301, 0
        %v6312 = vsel %vm1863, %v6296, 0
        %6314 = vmatpush.bf16.xpose.msra.mxu0 0
        %6315 = vmatpush.bf16.xpose.msra.mxu0 0
        %6316 = vmatpush.bf16.xpose.msra.mxu0 0
        %6317 = vmatpush.bf16.xpose.msra.mxu0 0
        %6318 = vmatpush.bf16.xpose.msra.mxu0 0
        %6319 = vmatpush.bf16.xpose.msra.mxu0 0
        %6320 = vmatpush.bf16.xpose.msra.mxu0 %v6312
        %6321 = vmatpush.bf16.xpose.msra.mxu0 %v6309
        %6322 = vmatmul.bf16.gmra.mxu0 %v6303
        %v6323 = vpop.f32.mrf.mxu0
        %v6324 = vadd.f32 0.0, %v6323
        %v6325 = vpop.f32.mrf.mxu0
        %v6326 = vadd.f32 0.0, %v6325
        %6327 = vmatmul.bf16.gmra.mxu0 %v6306
        %v6328 = vpop.f32.mrf.mxu0
        %v6329 = vadd.f32 0.0, %v6328
        %v6330 = vpop.f32.mrf.mxu0
        %6331 = vdwg.mxu0
        %v6332 = vsel %vm1894, %v6324, -inf
        %6333 = vmax.xlane.f32.xlu0 %v6332
        %v6334 = vpop.xlane.xlu0 %6333
        %v6335 = vsel %vm1894, %v6326, -inf
        %6336 = vmax.xlane.f32.xlu0 %v6335
        %v6337 = vpop.xlane.xlu0 %6336
        %v6338 = vsel %vm1901, %v6329, -inf
        %6339 = vmax.xlane.f32.xlu0 %v6338
        %v6340 = vpop.xlane.xlu0 %6339
        %v6341 = vsub.f32 %v6324, %v6334
        %v6342 = vsub.f32 %v6326, %v6337
        %v6343 = vsub.f32 %v6329, %v6340
        %v6344 = vmul.f32 %v6341, 1.442695
        %v6345 = vpow.pop %v6344
        %v6346 = vmul.f32 %v6342, 1.442695
        %v6347 = vpow.pop %v6346
        %v6348 = vmul.f32 %v6343, 1.442695
        %v6349 = vpow.pop %v6348
        %v6350 = vsel %vm1894, %v6345, 0.0
        %6351 = vadd.xlane.f32.xlu0 %v6350
        %v6352 = vpop.xlane.xlu0 %6351
        %v6353 = vsel %vm1894, %v6347, 0.0
        %6354 = vadd.xlane.f32.xlu0 %v6353
        %v6355 = vpop.xlane.xlu0 %6354
        %v6356 = vsel %vm1901, %v6349, 0.0
        %6357 = vadd.xlane.f32.xlu0 %v6356
        %v6358 = vpop.xlane.xlu0 %6357
        %v6359 = vrcp.pop %v6352
        %v6360 = vrcp.pop %v6355
        %v6361 = vrcp.pop %v6358
        %v6362 = vmul.f32 %v6345, %v6359
        %v6363 = vmul.f32 %v6347, %v6360
        %v6364 = vmul.f32 %v6349, %v6361
        %v6365 = vpack.c.bf16 %v6363, %v6362
        %v6366 = vpack.c.bf16 %v6364, %v6364
        %v6368 = vshrl.u32 %v6265, 16
        %v6370 = vrot.slane %v6368, 3
        %v6371 = vshll.u32 %v6265, 16
        %v6373 = vrot.slane %v6371, 4
        %v6374 = vor.u32 %v6370, %v6373
        %v6376 = vshrl.u32 %v6266, 16
        %v6378 = vrot.slane %v6376, 3
        %v6379 = vshll.u32 %v6266, 16
        %v6381 = vrot.slane %v6379, 4
        %v6382 = vor.u32 %v6378, %v6381
        %v6383 = vsel %vm6267, %v6374, %v6382
        %v6386 = vsel %vm1894, %v6365, 0
        %v6389 = vsel %vm1894, %v6366, 0
        %v6392 = vand.u32 %v6378, %v1939
        %6394 = vmatpush.bf16.msra.mxu0 0
        %6395 = vmatpush.bf16.msra.mxu0 0
        %6396 = vmatpush.bf16.msra.mxu0 0
        %6397 = vmatpush.bf16.msra.mxu0 0
        %6398 = vmatpush.bf16.msra.mxu0 0
        %6399 = vmatpush.bf16.msra.mxu0 0
        %6400 = vmatpush.bf16.msra.mxu0 %v6392
        %6401 = vmatpush.bf16.msra.mxu0 %v6383
        %6402 = vmatmul.bf16.gmra.mxu0 %v6386
        %v6403 = vpop.f32.mrf.mxu0
        %v6404 = vadd.f32 0.0, %v6403
        %v6405 = vpop.f32.mrf.mxu0
        %v6406 = vadd.f32 0.0, %v6405
        %6407 = vmatmul.bf16.gmra.mxu0 %v6389
        %v6408 = vpop.f32.mrf.mxu0
        %v6409 = vadd.f32 0.0, %v6408
        %v6410 = vpop.f32.mrf.mxu0
        %6411 = vdwg.mxu0
        %6412 = vst.msk [vmem:[#allocation3 + $0x77] sm:$0xff] %vm1863, %v6404
        %6413 = vst.msk [vmem:[#allocation3 + $0x7f] sm:$0xff] %vm1863, %v6406
        %6414 = vst.msk [vmem:[#allocation3 + $0x87] sm:$0x1] %vm1963, %v6409
        %v6415 = vld [vmem:[#allocation2 + $0x150] sm:$0x80]
        %v6416 = vld [vmem:[#allocation2 + $0x168] sm:$0xff]
        %v6417 = vld [vmem:[#allocation2 + $0x180] sm:$0xff]
        %v6418 = vpack.c.bf16 %v6416, %v6415
        %v6419 = vpack.c.bf16 %v6417, %v6417
        %v6420 = vld [vmem:[#allocation2 + $0x158] sm:$0x80]
        %v6421 = vld [vmem:[#allocation2 + $0x170] sm:$0xff]
        %v6422 = vld [vmem:[#allocation2 + $0x188] sm:$0xff]
        %v6423 = vpack.c.bf16 %v6421, %v6420
        %v6424 = vpack.c.bf16 %v6422, %v6422
        %v6425 = vld [vmem:[#allocation2 + $0x160] sm:$0x80]
        %v6426 = vld [vmem:[#allocation2 + $0x178] sm:$0xff]
        %v6427 = vld [vmem:[#allocation2 + $0x190] sm:$0xff]
        %v6428 = vpack.c.bf16 %v6426, %v6425
        %v6429 = vpack.c.bf16 %v6427, %v6427
        %v6431 = vshrl.u32 %v6418, 16
        %v6433 = vrot.slane %v6431, 3
        %v6434 = vshll.u32 %v6418, 16
        %v6436 = vrot.slane %v6434, 4
        %v6437 = vor.u32 %v6433, %v6436
        %v6439 = vshrl.u32 %v6419, 16
        %v6441 = vrot.slane %v6439, 3
        %v6442 = vshll.u32 %v6419, 16
        %v6444 = vrot.slane %v6442, 4
        %v6445 = vor.u32 %v6441, %v6444
        %v6446 = vsel %vm6267, %v6437, %v6445
        %6447 = vrot.lane.b32.xlu0 %v6446, 96
        %v6448 = vpop.permute.xlu0 %6447
        %6449 = vrot.lane.b32.xlu0 %v6441, 96
        %v6450 = vpop.permute.xlu0 %6449
        %v6452 = vshrl.u32 %v6423, 16
        %v6454 = vrot.slane %v6452, 3
        %v6455 = vshll.u32 %v6423, 16
        %v6457 = vrot.slane %v6455, 4
        %v6458 = vor.u32 %v6454, %v6457
        %v6460 = vshrl.u32 %v6424, 16
        %v6462 = vrot.slane %v6460, 3
        %v6463 = vshll.u32 %v6424, 16
        %v6465 = vrot.slane %v6463, 4
        %v6466 = vor.u32 %v6462, %v6465
        %v6467 = vsel %vm6267, %v6458, %v6466
        %6468 = vrot.lane.b32.xlu0 %v6467, 96
        %v6469 = vpop.permute.xlu0 %6468
        %6470 = vrot.lane.b32.xlu0 %v6462, 96
        %v6471 = vpop.permute.xlu0 %6470
        %v6473 = vsel %vm1863, %v6448, 0
        %v6476 = vsel %vm1863, %v6450, 0
        %v6479 = vsel %vm1863, %v6469, 0
        %v6482 = vsel %vm1863, %v6471, 0
        %6484 = vmatpush.bf16.xpose.msra.mxu0 0
        %6485 = vmatpush.bf16.xpose.msra.mxu0 0
        %6486 = vmatpush.bf16.xpose.msra.mxu0 0
        %6487 = vmatpush.bf16.xpose.msra.mxu0 0
        %6488 = vmatpush.bf16.xpose.msra.mxu0 0
        %6489 = vmatpush.bf16.xpose.msra.mxu0 0
        %6490 = vmatpush.bf16.xpose.msra.mxu0 %v6482
        %6491 = vmatpush.bf16.xpose.msra.mxu0 %v6479
        %6492 = vmatmul.bf16.gmra.mxu0 %v6473
        %v6493 = vpop.f32.mrf.mxu0
        %v6494 = vadd.f32 0.0, %v6493
        %v6495 = vpop.f32.mrf.mxu0
        %v6496 = vadd.f32 0.0, %v6495
        %6497 = vmatmul.bf16.gmra.mxu0 %v6476
        %v6498 = vpop.f32.mrf.mxu0
        %v6499 = vadd.f32 0.0, %v6498
        %v6500 = vpop.f32.mrf.mxu0
        %6501 = vdwg.mxu0
        %v6502 = vsel %vm1894, %v6494, -inf
        %6503 = vmax.xlane.f32.xlu0 %v6502
        %v6504 = vpop.xlane.xlu0 %6503
        %v6505 = vsel %vm1894, %v6496, -inf
        %6506 = vmax.xlane.f32.xlu0 %v6505
        %v6507 = vpop.xlane.xlu0 %6506
        %v6508 = vsel %vm1901, %v6499, -inf
        %6509 = vmax.xlane.f32.xlu0 %v6508
        %v6510 = vpop.xlane.xlu0 %6509
        %v6511 = vsub.f32 %v6494, %v6504
        %v6512 = vsub.f32 %v6496, %v6507
        %v6513 = vsub.f32 %v6499, %v6510
        %v6514 = vmul.f32 %v6511, 1.442695
        %v6515 = vpow.pop %v6514
        %v6516 = vmul.f32 %v6512, 1.442695
        %v6517 = vpow.pop %v6516
        %v6518 = vmul.f32 %v6513, 1.442695
        %v6519 = vpow.pop %v6518
        %v6520 = vsel %vm1894, %v6515, 0.0
        %6521 = vadd.xlane.f32.xlu0 %v6520
        %v6522 = vpop.xlane.xlu0 %6521
        %v6523 = vsel %vm1894, %v6517, 0.0
        %6524 = vadd.xlane.f32.xlu0 %v6523
        %v6525 = vpop.xlane.xlu0 %6524
        %v6526 = vsel %vm1901, %v6519, 0.0
        %6527 = vadd.xlane.f32.xlu0 %v6526
        %v6528 = vpop.xlane.xlu0 %6527
        %v6529 = vrcp.pop %v6522
        %v6530 = vrcp.pop %v6525
        %v6531 = vrcp.pop %v6528
        %v6532 = vmul.f32 %v6515, %v6529
        %v6533 = vmul.f32 %v6517, %v6530
        %v6534 = vmul.f32 %v6519, %v6531
        %v6535 = vpack.c.bf16 %v6533, %v6532
        %v6536 = vpack.c.bf16 %v6534, %v6534
        %v6538 = vshrl.u32 %v6428, 16
        %v6540 = vrot.slane %v6538, 3
        %v6541 = vshll.u32 %v6428, 16
        %v6543 = vrot.slane %v6541, 4
        %v6544 = vor.u32 %v6540, %v6543
        %v6546 = vshrl.u32 %v6429, 16
        %v6548 = vrot.slane %v6546, 3
        %v6549 = vshll.u32 %v6429, 16
        %v6551 = vrot.slane %v6549, 4
        %v6552 = vor.u32 %v6548, %v6551
        %v6553 = vsel %vm6267, %v6544, %v6552
        %6554 = vrot.lane.b32.xlu0 %v6553, 96
        %v6555 = vpop.permute.xlu0 %6554
        %6556 = vrot.lane.b32.xlu0 %v6548, 96
        %v6557 = vpop.permute.xlu0 %6556
        %v6560 = vsel %vm1894, %v6535, 0
        %v6563 = vsel %vm1894, %v6536, 0
        %v6566 = vand.u32 %v6557, %v1939
        %6568 = vmatpush.bf16.msra.mxu0 0
        %6569 = vmatpush.bf16.msra.mxu0 0
        %6570 = vmatpush.bf16.msra.mxu0 0
        %6571 = vmatpush.bf16.msra.mxu0 0
        %6572 = vmatpush.bf16.msra.mxu0 0
        %6573 = vmatpush.bf16.msra.mxu0 0
        %6574 = vmatpush.bf16.msra.mxu0 %v6566
        %6575 = vmatpush.bf16.msra.mxu0 %v6555
        %6576 = vmatmul.bf16.gmra.mxu0 %v6560
        %v6577 = vpop.f32.mrf.mxu0
        %v6578 = vadd.f32 0.0, %v6577
        %v6579 = vpop.f32.mrf.mxu0
        %v6580 = vadd.f32 0.0, %v6579
        %6581 = vmatmul.bf16.gmra.mxu0 %v6563
        %v6582 = vpop.f32.mrf.mxu0
        %v6583 = vadd.f32 0.0, %v6582
        %v6584 = vpop.f32.mrf.mxu0
        %6585 = vdwg.mxu0
        %6589 = vrot.lane.b32.xlu0 %v6578, 32
        %v6590 = vpop.permute.xlu0 %6589
        %6591 = vrot.lane.b32.xlu0 %v6580, 32
        %v6592 = vpop.permute.xlu0 %6591
        %6593 = vrot.lane.b32.xlu0 %v6583, 32
        %v6594 = vpop.permute.xlu0 %6593
        %6598 = vst.msk [vmem:[#allocation3 + $0x77] sm:$0xff] %vm2103, %v6590
        %6599 = vst.msk [vmem:[#allocation3 + $0x7f] sm:$0xff] %vm2103, %v6592
        %6600 = vst.msk [vmem:[#allocation3 + $0x87] sm:$0x1] %vm2106, %v6594
        %v6601 = vld [vmem:[#allocation2 + $0x150] sm:$0x80]
        %v6602 = vld [vmem:[#allocation2 + $0x168] sm:$0xff]
        %v6603 = vld [vmem:[#allocation2 + $0x180] sm:$0xff]
        %v6604 = vpack.c.bf16 %v6602, %v6601
        %v6605 = vpack.c.bf16 %v6603, %v6603
        %v6606 = vld [vmem:[#allocation2 + $0x158] sm:$0x80]
        %v6607 = vld [vmem:[#allocation2 + $0x170] sm:$0xff]
        %v6608 = vld [vmem:[#allocation2 + $0x188] sm:$0xff]
        %v6609 = vpack.c.bf16 %v6607, %v6606
        %v6610 = vpack.c.bf16 %v6608, %v6608
        %v6611 = vld [vmem:[#allocation2 + $0x160] sm:$0x80]
        %v6612 = vld [vmem:[#allocation2 + $0x178] sm:$0xff]
        %v6613 = vld [vmem:[#allocation2 + $0x190] sm:$0xff]
        %v6614 = vpack.c.bf16 %v6612, %v6611
        %v6615 = vpack.c.bf16 %v6613, %v6613
        %v6617 = vshrl.u32 %v6604, 16
        %v6619 = vrot.slane %v6617, 3
        %v6620 = vshll.u32 %v6604, 16
        %v6622 = vrot.slane %v6620, 4
        %v6623 = vor.u32 %v6619, %v6622
        %v6625 = vshrl.u32 %v6605, 16
        %v6627 = vrot.slane %v6625, 3
        %v6628 = vshll.u32 %v6605, 16
        %v6630 = vrot.slane %v6628, 4
        %v6631 = vor.u32 %v6627, %v6630
        %v6632 = vsel %vm6267, %v6623, %v6631
        %6633 = vrot.lane.b32.xlu0 %v6632, 64
        %v6634 = vpop.permute.xlu0 %6633
        %6635 = vrot.lane.b32.xlu0 %v6627, 64
        %v6636 = vpop.permute.xlu0 %6635
        %v6638 = vshrl.u32 %v6609, 16
        %v6640 = vrot.slane %v6638, 3
        %v6641 = vshll.u32 %v6609, 16
        %v6643 = vrot.slane %v6641, 4
        %v6644 = vor.u32 %v6640, %v6643
        %v6646 = vshrl.u32 %v6610, 16
        %v6648 = vrot.slane %v6646, 3
        %v6649 = vshll.u32 %v6610, 16
        %v6651 = vrot.slane %v6649, 4
        %v6652 = vor.u32 %v6648, %v6651
        %v6653 = vsel %vm6267, %v6644, %v6652
        %6654 = vrot.lane.b32.xlu0 %v6653, 64
        %v6655 = vpop.permute.xlu0 %6654
        %6656 = vrot.lane.b32.xlu0 %v6648, 64
        %v6657 = vpop.permute.xlu0 %6656
        %v6659 = vsel %vm1863, %v6634, 0
        %v6662 = vsel %vm1863, %v6636, 0
        %v6665 = vsel %vm1863, %v6655, 0
        %v6668 = vsel %vm1863, %v6657, 0
        %6670 = vmatpush.bf16.xpose.msra.mxu0 0
        %6671 = vmatpush.bf16.xpose.msra.mxu0 0
        %6672 = vmatpush.bf16.xpose.msra.mxu0 0
        %6673 = vmatpush.bf16.xpose.msra.mxu0 0
        %6674 = vmatpush.bf16.xpose.msra.mxu0 0
        %6675 = vmatpush.bf16.xpose.msra.mxu0 0
        %6676 = vmatpush.bf16.xpose.msra.mxu0 %v6668
        %6677 = vmatpush.bf16.xpose.msra.mxu0 %v6665
        %6678 = vmatmul.bf16.gmra.mxu0 %v6659
        %v6679 = vpop.f32.mrf.mxu0
        %v6680 = vadd.f32 0.0, %v6679
        %v6681 = vpop.f32.mrf.mxu0
        %v6682 = vadd.f32 0.0, %v6681
        %6683 = vmatmul.bf16.gmra.mxu0 %v6662
        %v6684 = vpop.f32.mrf.mxu0
        %v6685 = vadd.f32 0.0, %v6684
        %v6686 = vpop.f32.mrf.mxu0
        %6687 = vdwg.mxu0
        %v6688 = vsel %vm1894, %v6680, -inf
        %6689 = vmax.xlane.f32.xlu0 %v6688
        %v6690 = vpop.xlane.xlu0 %6689
        %v6691 = vsel %vm1894, %v6682, -inf
        %6692 = vmax.xlane.f32.xlu0 %v6691
        %v6693 = vpop.xlane.xlu0 %6692
        %v6694 = vsel %vm1901, %v6685, -inf
        %6695 = vmax.xlane.f32.xlu0 %v6694
        %v6696 = vpop.xlane.xlu0 %6695
        %v6697 = vsub.f32 %v6680, %v6690
        %v6698 = vsub.f32 %v6682, %v6693
        %v6699 = vsub.f32 %v6685, %v6696
        %v6700 = vmul.f32 %v6697, 1.442695
        %v6701 = vpow.pop %v6700
        %v6702 = vmul.f32 %v6698, 1.442695
        %v6703 = vpow.pop %v6702
        %v6704 = vmul.f32 %v6699, 1.442695
        %v6705 = vpow.pop %v6704
        %v6706 = vsel %vm1894, %v6701, 0.0
        %6707 = vadd.xlane.f32.xlu0 %v6706
        %v6708 = vpop.xlane.xlu0 %6707
        %v6709 = vsel %vm1894, %v6703, 0.0
        %6710 = vadd.xlane.f32.xlu0 %v6709
        %v6711 = vpop.xlane.xlu0 %6710
        %v6712 = vsel %vm1901, %v6705, 0.0
        %6713 = vadd.xlane.f32.xlu0 %v6712
        %v6714 = vpop.xlane.xlu0 %6713
        %v6715 = vrcp.pop %v6708
        %v6716 = vrcp.pop %v6711
        %v6717 = vrcp.pop %v6714
        %v6718 = vmul.f32 %v6701, %v6715
        %v6719 = vmul.f32 %v6703, %v6716
        %v6720 = vmul.f32 %v6705, %v6717
        %v6721 = vpack.c.bf16 %v6719, %v6718
        %v6722 = vpack.c.bf16 %v6720, %v6720
        %v6724 = vshrl.u32 %v6614, 16
        %v6726 = vrot.slane %v6724, 3
        %v6727 = vshll.u32 %v6614, 16
        %v6729 = vrot.slane %v6727, 4
        %v6730 = vor.u32 %v6726, %v6729
        %v6732 = vshrl.u32 %v6615, 16
        %v6734 = vrot.slane %v6732, 3
        %v6735 = vshll.u32 %v6615, 16
        %v6737 = vrot.slane %v6735, 4
        %v6738 = vor.u32 %v6734, %v6737
        %v6739 = vsel %vm6267, %v6730, %v6738
        %6740 = vrot.lane.b32.xlu0 %v6739, 64
        %v6741 = vpop.permute.xlu0 %6740
        %6742 = vrot.lane.b32.xlu0 %v6734, 64
        %v6743 = vpop.permute.xlu0 %6742
        %v6746 = vsel %vm1894, %v6721, 0
        %v6749 = vsel %vm1894, %v6722, 0
        %v6752 = vand.u32 %v6743, %v1939
        %6754 = vmatpush.bf16.msra.mxu0 0
        %6755 = vmatpush.bf16.msra.mxu0 0
        %6756 = vmatpush.bf16.msra.mxu0 0
        %6757 = vmatpush.bf16.msra.mxu0 0
        %6758 = vmatpush.bf16.msra.mxu0 0
        %6759 = vmatpush.bf16.msra.mxu0 0
        %6760 = vmatpush.bf16.msra.mxu0 %v6752
        %6761 = vmatpush.bf16.msra.mxu0 %v6741
        %6762 = vmatmul.bf16.gmra.mxu0 %v6746
        %v6763 = vpop.f32.mrf.mxu0
        %v6764 = vadd.f32 0.0, %v6763
        %v6765 = vpop.f32.mrf.mxu0
        %v6766 = vadd.f32 0.0, %v6765
        %6767 = vmatmul.bf16.gmra.mxu0 %v6749
        %v6768 = vpop.f32.mrf.mxu0
        %v6769 = vadd.f32 0.0, %v6768
        %v6770 = vpop.f32.mrf.mxu0
        %6771 = vdwg.mxu0
        %6775 = vrot.lane.b32.xlu0 %v6764, 64
        %v6776 = vpop.permute.xlu0 %6775
        %6777 = vrot.lane.b32.xlu0 %v6766, 64
        %v6778 = vpop.permute.xlu0 %6777
        %6779 = vrot.lane.b32.xlu0 %v6769, 64
        %v6780 = vpop.permute.xlu0 %6779
        %6784 = vst.msk [vmem:[#allocation3 + $0x77] sm:$0xff] %vm2246, %v6776
        %6785 = vst.msk [vmem:[#allocation3 + $0x7f] sm:$0xff] %vm2246, %v6778
        %6786 = vst.msk [vmem:[#allocation3 + $0x87] sm:$0x1] %vm2249, %v6780
        %v6787 = vld [vmem:[#allocation2 + $0x150] sm:$0x80]
        %v6788 = vld [vmem:[#allocation2 + $0x168] sm:$0xff]
        %v6789 = vld [vmem:[#allocation2 + $0x180] sm:$0xff]
        %v6790 = vpack.c.bf16 %v6788, %v6787
        %v6791 = vpack.c.bf16 %v6789, %v6789
        %v6792 = vld [vmem:[#allocation2 + $0x158] sm:$0x80]
        %v6793 = vld [vmem:[#allocation2 + $0x170] sm:$0xff]
        %v6794 = vld [vmem:[#allocation2 + $0x188] sm:$0xff]
        %v6795 = vpack.c.bf16 %v6793, %v6792
        %v6796 = vpack.c.bf16 %v6794, %v6794
        %v6797 = vld [vmem:[#allocation2 + $0x160] sm:$0x80]
        %v6798 = vld [vmem:[#allocation2 + $0x178] sm:$0xff]
        %v6799 = vld [vmem:[#allocation2 + $0x190] sm:$0xff]
        %v6800 = vpack.c.bf16 %v6798, %v6797
        %v6801 = vpack.c.bf16 %v6799, %v6799
        %v6803 = vshrl.u32 %v6790, 16
        %v6805 = vrot.slane %v6803, 3
        %v6806 = vshll.u32 %v6790, 16
        %v6808 = vrot.slane %v6806, 4
        %v6809 = vor.u32 %v6805, %v6808
        %v6811 = vshrl.u32 %v6791, 16
        %v6813 = vrot.slane %v6811, 3
        %v6814 = vshll.u32 %v6791, 16
        %v6816 = vrot.slane %v6814, 4
        %v6817 = vor.u32 %v6813, %v6816
        %v6818 = vsel %vm6267, %v6809, %v6817
        %6819 = vrot.lane.b32.xlu0 %v6818, 32
        %v6820 = vpop.permute.xlu0 %6819
        %6821 = vrot.lane.b32.xlu0 %v6813, 32
        %v6822 = vpop.permute.xlu0 %6821
        %v6824 = vshrl.u32 %v6795, 16
        %v6826 = vrot.slane %v6824, 3
        %v6827 = vshll.u32 %v6795, 16
        %v6829 = vrot.slane %v6827, 4
        %v6830 = vor.u32 %v6826, %v6829
        %v6832 = vshrl.u32 %v6796, 16
        %v6834 = vrot.slane %v6832, 3
        %v6835 = vshll.u32 %v6796, 16
        %v6837 = vrot.slane %v6835, 4
        %v6838 = vor.u32 %v6834, %v6837
        %v6839 = vsel %vm6267, %v6830, %v6838
        %6840 = vrot.lane.b32.xlu0 %v6839, 32
        %v6841 = vpop.permute.xlu0 %6840
        %6842 = vrot.lane.b32.xlu0 %v6834, 32
        %v6843 = vpop.permute.xlu0 %6842
        %v6845 = vsel %vm1863, %v6820, 0
        %v6848 = vsel %vm1863, %v6822, 0
        %v6851 = vsel %vm1863, %v6841, 0
        %v6854 = vsel %vm1863, %v6843, 0
        %6856 = vmatpush.bf16.xpose.msra.mxu0 0
        %6857 = vmatpush.bf16.xpose.msra.mxu0 0
        %6858 = vmatpush.bf16.xpose.msra.mxu0 0
        %6859 = vmatpush.bf16.xpose.msra.mxu0 0
        %6860 = vmatpush.bf16.xpose.msra.mxu0 0
        %6861 = vmatpush.bf16.xpose.msra.mxu0 0
        %6862 = vmatpush.bf16.xpose.msra.mxu0 %v6854
        %6863 = vmatpush.bf16.xpose.msra.mxu0 %v6851
        %6864 = vmatmul.bf16.gmra.mxu0 %v6845
        %v6865 = vpop.f32.mrf.mxu0
        %v6866 = vadd.f32 0.0, %v6865
        %v6867 = vpop.f32.mrf.mxu0
        %v6868 = vadd.f32 0.0, %v6867
        %6869 = vmatmul.bf16.gmra.mxu0 %v6848
        %v6870 = vpop.f32.mrf.mxu0
        %v6871 = vadd.f32 0.0, %v6870
        %v6872 = vpop.f32.mrf.mxu0
        %6873 = vdwg.mxu0
        %v6874 = vsel %vm1894, %v6866, -inf
        %6875 = vmax.xlane.f32.xlu0 %v6874
        %v6876 = vpop.xlane.xlu0 %6875
        %v6877 = vsel %vm1894, %v6868, -inf
        %6878 = vmax.xlane.f32.xlu0 %v6877
        %v6879 = vpop.xlane.xlu0 %6878
        %v6880 = vsel %vm1901, %v6871, -inf
        %6881 = vmax.xlane.f32.xlu0 %v6880
        %v6882 = vpop.xlane.xlu0 %6881
        %v6883 = vsub.f32 %v6866, %v6876
        %v6884 = vsub.f32 %v6868, %v6879
        %v6885 = vsub.f32 %v6871, %v6882
        %v6886 = vmul.f32 %v6883, 1.442695
        %v6887 = vpow.pop %v6886
        %v6888 = vmul.f32 %v6884, 1.442695
        %v6889 = vpow.pop %v6888
        %v6890 = vmul.f32 %v6885, 1.442695
        %v6891 = vpow.pop %v6890
        %v6892 = vsel %vm1894, %v6887, 0.0
        %6893 = vadd.xlane.f32.xlu0 %v6892
        %v6894 = vpop.xlane.xlu0 %6893
        %v6895 = vsel %vm1894, %v6889, 0.0
        %6896 = vadd.xlane.f32.xlu0 %v6895
        %v6897 = vpop.xlane.xlu0 %6896
        %v6898 = vsel %vm1901, %v6891, 0.0
        %6899 = vadd.xlane.f32.xlu0 %v6898
        %v6900 = vpop.xlane.xlu0 %6899
        %v6901 = vrcp.pop %v6894
        %v6902 = vrcp.pop %v6897
        %v6903 = vrcp.pop %v6900
        %v6904 = vmul.f32 %v6887, %v6901
        %v6905 = vmul.f32 %v6889, %v6902
        %v6906 = vmul.f32 %v6891, %v6903
        %v6907 = vpack.c.bf16 %v6905, %v6904
        %v6908 = vpack.c.bf16 %v6906, %v6906
        %v6910 = vshrl.u32 %v6800, 16
        %v6912 = vrot.slane %v6910, 3
        %v6913 = vshll.u32 %v6800, 16
        %v6915 = vrot.slane %v6913, 4
        %v6916 = vor.u32 %v6912, %v6915
        %v6918 = vshrl.u32 %v6801, 16
        %v6920 = vrot.slane %v6918, 3
        %v6921 = vshll.u32 %v6801, 16
        %v6923 = vrot.slane %v6921, 4
        %v6924 = vor.u32 %v6920, %v6923
        %v6925 = vsel %vm6267, %v6916, %v6924
        %6926 = vrot.lane.b32.xlu0 %v6925, 32
        %v6927 = vpop.permute.xlu0 %6926
        %6928 = vrot.lane.b32.xlu0 %v6920, 32
        %v6929 = vpop.permute.xlu0 %6928
        %v6932 = vsel %vm1894, %v6907, 0
        %v6935 = vsel %vm1894, %v6908, 0
        %v6938 = vand.u32 %v6929, %v1939
        %6940 = vmatpush.bf16.msra.mxu0 0
        %6941 = vmatpush.bf16.msra.mxu0 0
        %6942 = vmatpush.bf16.msra.mxu0 0
        %6943 = vmatpush.bf16.msra.mxu0 0
        %6944 = vmatpush.bf16.msra.mxu0 0
        %6945 = vmatpush.bf16.msra.mxu0 0
        %6946 = vmatpush.bf16.msra.mxu0 %v6938
        %6947 = vmatpush.bf16.msra.mxu0 %v6927
        %6948 = vmatmul.bf16.gmra.mxu0 %v6932
        %v6949 = vpop.f32.mrf.mxu0
        %v6950 = vadd.f32 0.0, %v6949
        %v6951 = vpop.f32.mrf.mxu0
        %v6952 = vadd.f32 0.0, %v6951
        %6953 = vmatmul.bf16.gmra.mxu0 %v6935
        %v6954 = vpop.f32.mrf.mxu0
        %v6955 = vadd.f32 0.0, %v6954
        %v6956 = vpop.f32.mrf.mxu0
        %6957 = vdwg.mxu0
        %6961 = vrot.lane.b32.xlu0 %v6950, 96
        %v6962 = vpop.permute.xlu0 %6961
        %6963 = vrot.lane.b32.xlu0 %v6952, 96
        %v6964 = vpop.permute.xlu0 %6963
        %6965 = vrot.lane.b32.xlu0 %v6955, 96
        %v6966 = vpop.permute.xlu0 %6965
        %6970 = vst.msk [vmem:[#allocation3 + $0x77] sm:$0xff] %vm2389, %v6962
        %6971 = vst.msk [vmem:[#allocation3 + $0x7f] sm:$0xff] %vm2389, %v6964
        %6972 = vst.msk [vmem:[#allocation3 + $0x87] sm:$0x1] %vm2392, %v6966
        %v6973 = vld [vmem:[#allocation3] sm:$0xff]
        %v6974 = vld [vmem:[#allocation3 + $0x8] sm:$0xff]
        %v6975 = vld [vmem:[#allocation3 + $0x10] sm:$0xff]
        %v6976 = vld [vmem:[#allocation3 + $0x18] sm:$0xff]
        %v6977 = vld [vmem:[#allocation3 + $0x20] sm:$0xff]
        %v6978 = vld [vmem:[#allocation3 + $0x28] sm:$0xff]
        %v6979 = vld [vmem:[#allocation3 + $0x30] sm:$0xff]
        %v6980 = vld [vmem:[#allocation3 + $0x38] sm:$0xff]
        %v6981 = vld [vmem:[#allocation3 + $0x40] sm:$0xff]
        %v6982 = vld [vmem:[#allocation3 + $0x48] sm:$0xff]
        %v6983 = vld [vmem:[#allocation3 + $0x50] sm:$0xff]
        %v6984 = vld [vmem:[#allocation3 + $0x58] sm:$0xff]
        %v6985 = vld [vmem:[#allocation3 + $0x60] sm:$0xff]
        %v6986 = vld [vmem:[#allocation3 + $0x68] sm:$0xff]
        %v6987 = vld [vmem:[#allocation3 + $0x70] sm:$0xff]
        %v6988 = vld [vmem:[#allocation3 + $0x78] sm:$0xff]
        %v6989 = vld [vmem:[#allocation3 + $0x80] sm:$0xff]
        %v6990 = vpack.c.bf16 %v6974, %v6973
        %v6991 = vpack.c.bf16 %v6976, %v6975
        %v6992 = vpack.c.bf16 %v6978, %v6977
        %v6993 = vpack.c.bf16 %v6980, %v6979
        %v6994 = vpack.c.bf16 %v6982, %v6981
        %v6995 = vpack.c.bf16 %v6984, %v6983
        %v6996 = vpack.c.bf16 %v6986, %v6985
        %v6997 = vpack.c.bf16 %v6988, %v6987
        %v6998 = vpack.c.bf16 %v6989, %v6989
        %v6999 = vld [vmem:[%s724] sm:$0xf]
        %v7000 = vld [vmem:[%s724 + $0x4] sm:$0xf]
        %v7001 = vld [vmem:[%s724 + $0x8] sm:$0xf]
        %v7002 = vld [vmem:[%s724 + $0xc] sm:$0xf]
        %v7003 = vld [vmem:[%s724 + $0x10] sm:$0xf]
        %v7004 = vld [vmem:[%s724 + $0x14] sm:$0xf]
        %v7005 = vld [vmem:[%s724 + $0x18] sm:$0xf]
        %v7006 = vld [vmem:[%s724 + $0x1c] sm:$0xf]
        %v7007 = vld [vmem:[%s724 + $0x20] sm:$0xf]
        %v7008 = vld [vmem:[%s724 + $0x24] sm:$0xf]
        %v7009 = vld [vmem:[%s724 + $0x28] sm:$0xf]
        %v7010 = vld [vmem:[%s724 + $0x2c] sm:$0xf]
        %v7011 = vld [vmem:[%s724 + $0x30] sm:$0xf]
        %v7012 = vld [vmem:[%s724 + $0x34] sm:$0xf]
        %v7013 = vld [vmem:[%s724 + $0x38] sm:$0xf]
        %v7014 = vld [vmem:[%s724 + $0x3c] sm:$0xf]
        %v7015 = vld [vmem:[%s733] sm:$0x1]
        %v7017 = vperm.slane %v7015, 0
        %v7035 = vunpack.c.l.b16 %v6999
        %v7036 = vunpack.c.l.b16 %v7000
        %v7037 = vunpack.c.l.b16 %v7001
        %v7038 = vunpack.c.l.b16 %v7002
        %v7039 = vunpack.c.l.b16 %v7003
        %v7040 = vunpack.c.l.b16 %v7004
        %v7041 = vunpack.c.l.b16 %v7005
        %v7042 = vunpack.c.l.b16 %v7006
        %v7043 = vunpack.c.l.b16 %v7007
        %v7044 = vunpack.c.l.b16 %v7008
        %v7045 = vunpack.c.l.b16 %v7009
        %v7046 = vunpack.c.l.b16 %v7010
        %v7047 = vunpack.c.l.b16 %v7011
        %v7048 = vunpack.c.l.b16 %v7012
        %v7049 = vunpack.c.l.b16 %v7013
        %v7050 = vunpack.c.l.b16 %v7014
        %v7051 = vpack.c.b16 %v7036, %v7035
        %v7052 = vpack.c.b16 %v7038, %v7037
        %v7053 = vpack.c.b16 %v7040, %v7039
        %v7054 = vpack.c.b16 %v7042, %v7041
        %v7055 = vpack.c.b16 %v7044, %v7043
        %v7056 = vpack.c.b16 %v7046, %v7045
        %v7057 = vpack.c.b16 %v7048, %v7047
        %v7058 = vpack.c.b16 %v7050, %v7049
        %7067 = vmatpush.bf16.msra.mxu0 %v7058
        %7068 = vmatpush.bf16.msra.mxu0 %v7057
        %7069 = vmatpush.bf16.msra.mxu0 %v7056
        %7070 = vmatpush.bf16.msra.mxu0 %v7055
        %7071 = vmatpush.bf16.msra.mxu0 %v7054
        %7072 = vmatpush.bf16.msra.mxu0 %v7053
        %7073 = vmatpush.bf16.msra.mxu0 %v7052
        %7074 = vmatpush.bf16.msra.mxu0 %v7051
        %7075 = vmatmul.bf16.gmra.mxu0 %v6990
        %v7076 = vpop.f32.mrf.mxu0
        %v7077 = vadd.f32 %v7017, %v7076
        %v7078 = vpop.f32.mrf.mxu0
        %v7079 = vadd.f32 %v7017, %v7078
        %7080 = vmatmul.bf16.gmra.mxu0 %v6991
        %v7081 = vpop.f32.mrf.mxu0
        %v7082 = vadd.f32 %v7017, %v7081
        %v7083 = vpop.f32.mrf.mxu0
        %v7084 = vadd.f32 %v7017, %v7083
        %7085 = vmatmul.bf16.gmra.mxu0 %v6992
        %v7086 = vpop.f32.mrf.mxu0
        %v7087 = vadd.f32 %v7017, %v7086
        %v7088 = vpop.f32.mrf.mxu0
        %v7089 = vadd.f32 %v7017, %v7088
        %7090 = vmatmul.bf16.gmra.mxu0 %v6993
        %v7091 = vpop.f32.mrf.mxu0
        %v7092 = vadd.f32 %v7017, %v7091
        %v7093 = vpop.f32.mrf.mxu0
        %v7094 = vadd.f32 %v7017, %v7093
        %7095 = vmatmul.bf16.gmra.mxu0 %v6994
        %v7096 = vpop.f32.mrf.mxu0
        %v7097 = vadd.f32 %v7017, %v7096
        %v7098 = vpop.f32.mrf.mxu0
        %v7099 = vadd.f32 %v7017, %v7098
        %7100 = vmatmul.bf16.gmra.mxu0 %v6995
        %v7101 = vpop.f32.mrf.mxu0
        %v7102 = vadd.f32 %v7017, %v7101
        %v7103 = vpop.f32.mrf.mxu0
        %v7104 = vadd.f32 %v7017, %v7103
        %7105 = vmatmul.bf16.gmra.mxu0 %v6996
        %v7106 = vpop.f32.mrf.mxu0
        %v7107 = vadd.f32 %v7017, %v7106
        %v7108 = vpop.f32.mrf.mxu0
        %v7109 = vadd.f32 %v7017, %v7108
        %7110 = vmatmul.bf16.gmra.mxu0 %v6997
        %v7111 = vpop.f32.mrf.mxu0
        %v7112 = vadd.f32 %v7017, %v7111
        %v7113 = vpop.f32.mrf.mxu0
        %v7114 = vadd.f32 %v7017, %v7113
        %7115 = vmatmul.bf16.gmra.mxu0 %v6998
        %v7116 = vpop.f32.mrf.mxu0
        %v7117 = vadd.f32 %v7017, %v7116
        %v7118 = vpop.f32.mrf.mxu0
        %7119 = vdwg.mxu0
        %v7120 = vadd.f32 %v1063, %v7077
        %v7121 = vadd.f32 %v1064, %v7079
        %v7122 = vadd.f32 %v1065, %v7082
        %v7123 = vadd.f32 %v1066, %v7084
        %v7124 = vadd.f32 %v1067, %v7087
        %v7125 = vadd.f32 %v1068, %v7089
        %v7126 = vadd.f32 %v1069, %v7092
        %v7127 = vadd.f32 %v1070, %v7094
        %v7128 = vadd.f32 %v1071, %v7097
        %v7129 = vadd.f32 %v1072, %v7099
        %v7130 = vadd.f32 %v1073, %v7102
        %v7131 = vadd.f32 %v1074, %v7104
        %v7132 = vadd.f32 %v1075, %v7107
        %v7133 = vadd.f32 %v1076, %v7109
        %v7134 = vadd.f32 %v1077, %v7112
        %v7135 = vadd.f32 %v1078, %v7114
        %v7136 = vadd.f32 %v1079, %v7117
        %v7137 = vld [vmem:[%s742] sm:$0x1]
        %v7138 = vld [vmem:[%s751] sm:$0x1]
        %7139 = vadd.xlane.f32.xlu0 %v7120
        %v7140 = vpop.xlane.xlu0 %7139
        %7141 = vadd.xlane.f32.xlu0 %v7121
        %v7142 = vpop.xlane.xlu0 %7141
        %7143 = vadd.xlane.f32.xlu0 %v7122
        %v7144 = vpop.xlane.xlu0 %7143
        %7145 = vadd.xlane.f32.xlu0 %v7123
        %v7146 = vpop.xlane.xlu0 %7145
        %7147 = vadd.xlane.f32.xlu0 %v7124
        %v7148 = vpop.xlane.xlu0 %7147
        %7149 = vadd.xlane.f32.xlu0 %v7125
        %v7150 = vpop.xlane.xlu0 %7149
        %7151 = vadd.xlane.f32.xlu0 %v7126
        %v7152 = vpop.xlane.xlu0 %7151
        %7153 = vadd.xlane.f32.xlu0 %v7127
        %v7154 = vpop.xlane.xlu0 %7153
        %7155 = vadd.xlane.f32.xlu0 %v7128
        %v7156 = vpop.xlane.xlu0 %7155
        %7157 = vadd.xlane.f32.xlu0 %v7129
        %v7158 = vpop.xlane.xlu0 %7157
        %7159 = vadd.xlane.f32.xlu0 %v7130
        %v7160 = vpop.xlane.xlu0 %7159
        %7161 = vadd.xlane.f32.xlu0 %v7131
        %v7162 = vpop.xlane.xlu0 %7161
        %7163 = vadd.xlane.f32.xlu0 %v7132
        %v7164 = vpop.xlane.xlu0 %7163
        %7165 = vadd.xlane.f32.xlu0 %v7133
        %v7166 = vpop.xlane.xlu0 %7165
        %7167 = vadd.xlane.f32.xlu0 %v7134
        %v7168 = vpop.xlane.xlu0 %7167
        %7169 = vadd.xlane.f32.xlu0 %v7135
        %v7170 = vpop.xlane.xlu0 %7169
        %7171 = vadd.xlane.f32.xlu0 %v7136
        %v7172 = vpop.xlane.xlu0 %7171
        %v7173 = vmul.f32 %v7140, %v1122
        %v7174 = vmul.f32 %v7142, %v1122
        %v7175 = vmul.f32 %v7144, %v1122
        %v7176 = vmul.f32 %v7146, %v1122
        %v7177 = vmul.f32 %v7148, %v1122
        %v7178 = vmul.f32 %v7150, %v1122
        %v7179 = vmul.f32 %v7152, %v1122
        %v7180 = vmul.f32 %v7154, %v1122
        %v7181 = vmul.f32 %v7156, %v1122
        %v7182 = vmul.f32 %v7158, %v1122
        %v7183 = vmul.f32 %v7160, %v1122
        %v7184 = vmul.f32 %v7162, %v1122
        %v7185 = vmul.f32 %v7164, %v1122
        %v7186 = vmul.f32 %v7166, %v1122
        %v7187 = vmul.f32 %v7168, %v1122
        %v7188 = vmul.f32 %v7170, %v1122
        %v7189 = vmul.f32 %v7172, %v1122
        %v7190 = vsub.f32 %v7120, %v7173
        %v7191 = vsub.f32 %v7121, %v7174
        %v7192 = vsub.f32 %v7122, %v7175
        %v7193 = vsub.f32 %v7123, %v7176
        %v7194 = vsub.f32 %v7124, %v7177
        %v7195 = vsub.f32 %v7125, %v7178
        %v7196 = vsub.f32 %v7126, %v7179
        %v7197 = vsub.f32 %v7127, %v7180
        %v7198 = vsub.f32 %v7128, %v7181
        %v7199 = vsub.f32 %v7129, %v7182
        %v7200 = vsub.f32 %v7130, %v7183
        %v7201 = vsub.f32 %v7131, %v7184
        %v7202 = vsub.f32 %v7132, %v7185
        %v7203 = vsub.f32 %v7133, %v7186
        %v7204 = vsub.f32 %v7134, %v7187
        %v7205 = vsub.f32 %v7135, %v7188
        %v7206 = vsub.f32 %v7136, %v7189
        %v7207 = vmul.f32 %v7190, %v7190
        %v7208 = vmul.f32 %v7191, %v7191
        %v7209 = vmul.f32 %v7192, %v7192
        %v7210 = vmul.f32 %v7193, %v7193
        %v7211 = vmul.f32 %v7194, %v7194
        %v7212 = vmul.f32 %v7195, %v7195
        %v7213 = vmul.f32 %v7196, %v7196
        %v7214 = vmul.f32 %v7197, %v7197
        %v7215 = vmul.f32 %v7198, %v7198
        %v7216 = vmul.f32 %v7199, %v7199
        %v7217 = vmul.f32 %v7200, %v7200
        %v7218 = vmul.f32 %v7201, %v7201
        %v7219 = vmul.f32 %v7202, %v7202
        %v7220 = vmul.f32 %v7203, %v7203
        %v7221 = vmul.f32 %v7204, %v7204
        %v7222 = vmul.f32 %v7205, %v7205
        %v7223 = vmul.f32 %v7206, %v7206
        %7224 = vadd.xlane.f32.xlu0 %v7207
        %v7225 = vpop.xlane.xlu0 %7224
        %7226 = vadd.xlane.f32.xlu0 %v7208
        %v7227 = vpop.xlane.xlu0 %7226
        %7228 = vadd.xlane.f32.xlu0 %v7209
        %v7229 = vpop.xlane.xlu0 %7228
        %7230 = vadd.xlane.f32.xlu0 %v7210
        %v7231 = vpop.xlane.xlu0 %7230
        %7232 = vadd.xlane.f32.xlu0 %v7211
        %v7233 = vpop.xlane.xlu0 %7232
        %7234 = vadd.xlane.f32.xlu0 %v7212
        %v7235 = vpop.xlane.xlu0 %7234
        %7236 = vadd.xlane.f32.xlu0 %v7213
        %v7237 = vpop.xlane.xlu0 %7236
        %7238 = vadd.xlane.f32.xlu0 %v7214
        %v7239 = vpop.xlane.xlu0 %7238
        %7240 = vadd.xlane.f32.xlu0 %v7215
        %v7241 = vpop.xlane.xlu0 %7240
        %7242 = vadd.xlane.f32.xlu0 %v7216
        %v7243 = vpop.xlane.xlu0 %7242
        %7244 = vadd.xlane.f32.xlu0 %v7217
        %v7245 = vpop.xlane.xlu0 %7244
        %7246 = vadd.xlane.f32.xlu0 %v7218
        %v7247 = vpop.xlane.xlu0 %7246
        %7248 = vadd.xlane.f32.xlu0 %v7219
        %v7249 = vpop.xlane.xlu0 %7248
        %7250 = vadd.xlane.f32.xlu0 %v7220
        %v7251 = vpop.xlane.xlu0 %7250
        %7252 = vadd.xlane.f32.xlu0 %v7221
        %v7253 = vpop.xlane.xlu0 %7252
        %7254 = vadd.xlane.f32.xlu0 %v7222
        %v7255 = vpop.xlane.xlu0 %7254
        %7256 = vadd.xlane.f32.xlu0 %v7223
        %v7257 = vpop.xlane.xlu0 %7256
        %v7258 = vmul.f32 %v7225, %v1122
        %v7259 = vmul.f32 %v7227, %v1122
        %v7260 = vmul.f32 %v7229, %v1122
        %v7261 = vmul.f32 %v7231, %v1122
        %v7262 = vmul.f32 %v7233, %v1122
        %v7263 = vmul.f32 %v7235, %v1122
        %v7264 = vmul.f32 %v7237, %v1122
        %v7265 = vmul.f32 %v7239, %v1122
        %v7266 = vmul.f32 %v7241, %v1122
        %v7267 = vmul.f32 %v7243, %v1122
        %v7268 = vmul.f32 %v7245, %v1122
        %v7269 = vmul.f32 %v7247, %v1122
        %v7270 = vmul.f32 %v7249, %v1122
        %v7271 = vmul.f32 %v7251, %v1122
        %v7272 = vmul.f32 %v7253, %v1122
        %v7273 = vmul.f32 %v7255, %v1122
        %v7274 = vmul.f32 %v7257, %v1122
        %v7275 = vadd.f32 %v7258, 1e-05
        %v7276 = vadd.f32 %v7259, 1e-05
        %v7277 = vadd.f32 %v7260, 1e-05
        %v7278 = vadd.f32 %v7261, 1e-05
        %v7279 = vadd.f32 %v7262, 1e-05
        %v7280 = vadd.f32 %v7263, 1e-05
        %v7281 = vadd.f32 %v7264, 1e-05
        %v7282 = vadd.f32 %v7265, 1e-05
        %v7283 = vadd.f32 %v7266, 1e-05
        %v7284 = vadd.f32 %v7267, 1e-05
        %v7285 = vadd.f32 %v7268, 1e-05
        %v7286 = vadd.f32 %v7269, 1e-05
        %v7287 = vadd.f32 %v7270, 1e-05
        %v7288 = vadd.f32 %v7271, 1e-05
        %v7289 = vadd.f32 %v7272, 1e-05
        %v7290 = vadd.f32 %v7273, 1e-05
        %v7291 = vadd.f32 %v7274, 1e-05
        %v7292 = vrsqrt.pop %v7275
        %v7293 = vmul.f32 %v7292, %v7275
        %v7294 = vmul.f32 %v7293, %v7292
        %v7295 = vmul.f32 0.5, %v7294
        %v7296 = vsub.f32 1.5, %v7295
        %v7297 = vmul.f32 %v7292, %v7296
        %vm7298 = vweird.f32 %v7275
        %vm7299 = vweird.f32 %v7292
        %vm7300 = vmor %vm7298, %vm7299
        %v7301 = vsel %vm7300, %v7292, %v7297
        %v7302 = vrsqrt.pop %v7276
        %v7303 = vmul.f32 %v7302, %v7276
        %v7304 = vmul.f32 %v7303, %v7302
        %v7305 = vmul.f32 0.5, %v7304
        %v7306 = vsub.f32 1.5, %v7305
        %v7307 = vmul.f32 %v7302, %v7306
        %vm7308 = vweird.f32 %v7276
        %vm7309 = vweird.f32 %v7302
        %vm7310 = vmor %vm7308, %vm7309
        %v7311 = vsel %vm7310, %v7302, %v7307
        %v7312 = vrsqrt.pop %v7277
        %v7313 = vmul.f32 %v7312, %v7277
        %v7314 = vmul.f32 %v7313, %v7312
        %v7315 = vmul.f32 0.5, %v7314
        %v7316 = vsub.f32 1.5, %v7315
        %v7317 = vmul.f32 %v7312, %v7316
        %vm7318 = vweird.f32 %v7277
        %vm7319 = vweird.f32 %v7312
        %vm7320 = vmor %vm7318, %vm7319
        %v7321 = vsel %vm7320, %v7312, %v7317
        %v7322 = vrsqrt.pop %v7278
        %v7323 = vmul.f32 %v7322, %v7278
        %v7324 = vmul.f32 %v7323, %v7322
        %v7325 = vmul.f32 0.5, %v7324
        %v7326 = vsub.f32 1.5, %v7325
        %v7327 = vmul.f32 %v7322, %v7326
        %vm7328 = vweird.f32 %v7278
        %vm7329 = vweird.f32 %v7322
        %vm7330 = vmor %vm7328, %vm7329
        %v7331 = vsel %vm7330, %v7322, %v7327
        %v7332 = vrsqrt.pop %v7279
        %v7333 = vmul.f32 %v7332, %v7279
        %v7334 = vmul.f32 %v7333, %v7332
        %v7335 = vmul.f32 0.5, %v7334
        %v7336 = vsub.f32 1.5, %v7335
        %v7337 = vmul.f32 %v7332, %v7336
        %vm7338 = vweird.f32 %v7279
        %vm7339 = vweird.f32 %v7332
        %vm7340 = vmor %vm7338, %vm7339
        %v7341 = vsel %vm7340, %v7332, %v7337
        %v7342 = vrsqrt.pop %v7280
        %v7343 = vmul.f32 %v7342, %v7280
        %v7344 = vmul.f32 %v7343, %v7342
        %v7345 = vmul.f32 0.5, %v7344
        %v7346 = vsub.f32 1.5, %v7345
        %v7347 = vmul.f32 %v7342, %v7346
        %vm7348 = vweird.f32 %v7280
        %vm7349 = vweird.f32 %v7342
        %vm7350 = vmor %vm7348, %vm7349
        %v7351 = vsel %vm7350, %v7342, %v7347
        %v7352 = vrsqrt.pop %v7281
        %v7353 = vmul.f32 %v7352, %v7281
        %v7354 = vmul.f32 %v7353, %v7352
        %v7355 = vmul.f32 0.5, %v7354
        %v7356 = vsub.f32 1.5, %v7355
        %v7357 = vmul.f32 %v7352, %v7356
        %vm7358 = vweird.f32 %v7281
        %vm7359 = vweird.f32 %v7352
        %vm7360 = vmor %vm7358, %vm7359
        %v7361 = vsel %vm7360, %v7352, %v7357
        %v7362 = vrsqrt.pop %v7282
        %v7363 = vmul.f32 %v7362, %v7282
        %v7364 = vmul.f32 %v7363, %v7362
        %v7365 = vmul.f32 0.5, %v7364
        %v7366 = vsub.f32 1.5, %v7365
        %v7367 = vmul.f32 %v7362, %v7366
        %vm7368 = vweird.f32 %v7282
        %vm7369 = vweird.f32 %v7362
        %vm7370 = vmor %vm7368, %vm7369
        %v7371 = vsel %vm7370, %v7362, %v7367
        %v7372 = vrsqrt.pop %v7283
        %v7373 = vmul.f32 %v7372, %v7283
        %v7374 = vmul.f32 %v7373, %v7372
        %v7375 = vmul.f32 0.5, %v7374
        %v7376 = vsub.f32 1.5, %v7375
        %v7377 = vmul.f32 %v7372, %v7376
        %vm7378 = vweird.f32 %v7283
        %vm7379 = vweird.f32 %v7372
        %vm7380 = vmor %vm7378, %vm7379
        %v7381 = vsel %vm7380, %v7372, %v7377
        %v7382 = vrsqrt.pop %v7284
        %v7383 = vmul.f32 %v7382, %v7284
        %v7384 = vmul.f32 %v7383, %v7382
        %v7385 = vmul.f32 0.5, %v7384
        %v7386 = vsub.f32 1.5, %v7385
        %v7387 = vmul.f32 %v7382, %v7386
        %vm7388 = vweird.f32 %v7284
        %vm7389 = vweird.f32 %v7382
        %vm7390 = vmor %vm7388, %vm7389
        %v7391 = vsel %vm7390, %v7382, %v7387
        %v7392 = vrsqrt.pop %v7285
        %v7393 = vmul.f32 %v7392, %v7285
        %v7394 = vmul.f32 %v7393, %v7392
        %v7395 = vmul.f32 0.5, %v7394
        %v7396 = vsub.f32 1.5, %v7395
        %v7397 = vmul.f32 %v7392, %v7396
        %vm7398 = vweird.f32 %v7285
        %vm7399 = vweird.f32 %v7392
        %vm7400 = vmor %vm7398, %vm7399
        %v7401 = vsel %vm7400, %v7392, %v7397
        %v7402 = vrsqrt.pop %v7286
        %v7403 = vmul.f32 %v7402, %v7286
        %v7404 = vmul.f32 %v7403, %v7402
        %v7405 = vmul.f32 0.5, %v7404
        %v7406 = vsub.f32 1.5, %v7405
        %v7407 = vmul.f32 %v7402, %v7406
        %vm7408 = vweird.f32 %v7286
        %vm7409 = vweird.f32 %v7402
        %vm7410 = vmor %vm7408, %vm7409
        %v7411 = vsel %vm7410, %v7402, %v7407
        %v7412 = vrsqrt.pop %v7287
        %v7413 = vmul.f32 %v7412, %v7287
        %v7414 = vmul.f32 %v7413, %v7412
        %v7415 = vmul.f32 0.5, %v7414
        %v7416 = vsub.f32 1.5, %v7415
        %v7417 = vmul.f32 %v7412, %v7416
        %vm7418 = vweird.f32 %v7287
        %vm7419 = vweird.f32 %v7412
        %vm7420 = vmor %vm7418, %vm7419
        %v7421 = vsel %vm7420, %v7412, %v7417
        %v7422 = vrsqrt.pop %v7288
        %v7423 = vmul.f32 %v7422, %v7288
        %v7424 = vmul.f32 %v7423, %v7422
        %v7425 = vmul.f32 0.5, %v7424
        %v7426 = vsub.f32 1.5, %v7425
        %v7427 = vmul.f32 %v7422, %v7426
        %vm7428 = vweird.f32 %v7288
        %vm7429 = vweird.f32 %v7422
        %vm7430 = vmor %vm7428, %vm7429
        %v7431 = vsel %vm7430, %v7422, %v7427
        %v7432 = vrsqrt.pop %v7289
        %v7433 = vmul.f32 %v7432, %v7289
        %v7434 = vmul.f32 %v7433, %v7432
        %v7435 = vmul.f32 0.5, %v7434
        %v7436 = vsub.f32 1.5, %v7435
        %v7437 = vmul.f32 %v7432, %v7436
        %vm7438 = vweird.f32 %v7289
        %vm7439 = vweird.f32 %v7432
        %vm7440 = vmor %vm7438, %vm7439
        %v7441 = vsel %vm7440, %v7432, %v7437
        %v7442 = vrsqrt.pop %v7290
        %v7443 = vmul.f32 %v7442, %v7290
        %v7444 = vmul.f32 %v7443, %v7442
        %v7445 = vmul.f32 0.5, %v7444
        %v7446 = vsub.f32 1.5, %v7445
        %v7447 = vmul.f32 %v7442, %v7446
        %vm7448 = vweird.f32 %v7290
        %vm7449 = vweird.f32 %v7442
        %vm7450 = vmor %vm7448, %vm7449
        %v7451 = vsel %vm7450, %v7442, %v7447
        %v7452 = vrsqrt.pop %v7291
        %v7453 = vmul.f32 %v7452, %v7291
        %v7454 = vmul.f32 %v7453, %v7452
        %v7455 = vmul.f32 0.5, %v7454
        %v7456 = vsub.f32 1.5, %v7455
        %v7457 = vmul.f32 %v7452, %v7456
        %vm7458 = vweird.f32 %v7291
        %vm7459 = vweird.f32 %v7452
        %vm7460 = vmor %vm7458, %vm7459
        %v7461 = vsel %vm7460, %v7452, %v7457
        %v7462 = vmul.f32 %v7190, %v7301
        %v7463 = vmul.f32 %v7191, %v7311
        %v7464 = vmul.f32 %v7192, %v7321
        %v7465 = vmul.f32 %v7193, %v7331
        %v7466 = vmul.f32 %v7194, %v7341
        %v7467 = vmul.f32 %v7195, %v7351
        %v7468 = vmul.f32 %v7196, %v7361
        %v7469 = vmul.f32 %v7197, %v7371
        %v7470 = vmul.f32 %v7198, %v7381
        %v7471 = vmul.f32 %v7199, %v7391
        %v7472 = vmul.f32 %v7200, %v7401
        %v7473 = vmul.f32 %v7201, %v7411
        %v7474 = vmul.f32 %v7202, %v7421
        %v7475 = vmul.f32 %v7203, %v7431
        %v7476 = vmul.f32 %v7204, %v7441
        %v7477 = vmul.f32 %v7205, %v7451
        %v7478 = vmul.f32 %v7206, %v7461
        %v7480 = vperm.slane %v7137, 0
        %v7482 = vmul.f32 %v7462, %v7480
        %v7483 = vmul.f32 %v7463, %v7480
        %v7484 = vmul.f32 %v7464, %v7480
        %v7485 = vmul.f32 %v7465, %v7480
        %v7486 = vmul.f32 %v7466, %v7480
        %v7487 = vmul.f32 %v7467, %v7480
        %v7488 = vmul.f32 %v7468, %v7480
        %v7489 = vmul.f32 %v7469, %v7480
        %v7490 = vmul.f32 %v7470, %v7480
        %v7491 = vmul.f32 %v7471, %v7480
        %v7492 = vmul.f32 %v7472, %v7480
        %v7493 = vmul.f32 %v7473, %v7480
        %v7494 = vmul.f32 %v7474, %v7480
        %v7495 = vmul.f32 %v7475, %v7480
        %v7496 = vmul.f32 %v7476, %v7480
        %v7497 = vmul.f32 %v7477, %v7480
        %v7498 = vmul.f32 %v7478, %v7480
        %v7500 = vperm.slane %v7138, 0
        %v7502 = vadd.f32 %v7482, %v7500
        %v7503 = vadd.f32 %v7483, %v7500
        %v7504 = vadd.f32 %v7484, %v7500
        %v7505 = vadd.f32 %v7485, %v7500
        %v7506 = vadd.f32 %v7486, %v7500
        %v7507 = vadd.f32 %v7487, %v7500
        %v7508 = vadd.f32 %v7488, %v7500
        %v7509 = vadd.f32 %v7489, %v7500
        %v7510 = vadd.f32 %v7490, %v7500
        %v7511 = vadd.f32 %v7491, %v7500
        %v7512 = vadd.f32 %v7492, %v7500
        %v7513 = vadd.f32 %v7493, %v7500
        %v7514 = vadd.f32 %v7494, %v7500
        %v7515 = vadd.f32 %v7495, %v7500
        %v7516 = vadd.f32 %v7496, %v7500
        %v7517 = vadd.f32 %v7497, %v7500
        %v7518 = vadd.f32 %v7498, %v7500
        %v7519 = vpack.c.bf16 %v7503, %v7502
        %v7520 = vpack.c.bf16 %v7505, %v7504
        %v7521 = vpack.c.bf16 %v7507, %v7506
        %v7522 = vpack.c.bf16 %v7509, %v7508
        %v7523 = vpack.c.bf16 %v7511, %v7510
        %v7524 = vpack.c.bf16 %v7513, %v7512
        %v7525 = vpack.c.bf16 %v7515, %v7514
        %v7526 = vpack.c.bf16 %v7517, %v7516
        %v7527 = vpack.c.bf16 %v7518, %v7518
        %v7528 = vld [vmem:[%s870] sm:$0xff]
        %v7529 = vld [vmem:[%s870 + $0x8] sm:$0xff]
        %v7530 = vld [vmem:[%s870 + $0x10] sm:$0xff]
        %v7531 = vld [vmem:[%s870 + $0x18] sm:$0xff]
        %v7532 = vld [vmem:[%s870 + $0x20] sm:$0xff]
        %v7533 = vld [vmem:[%s870 + $0x28] sm:$0xff]
        %v7534 = vld [vmem:[%s870 + $0x30] sm:$0xff]
        %v7535 = vld [vmem:[%s870 + $0x38] sm:$0xff]
        %v7536 = vld [vmem:[%s870 + $0x40] sm:$0xff]
        %v7537 = vld [vmem:[%s870 + $0x48] sm:$0xff]
        %v7538 = vld [vmem:[%s870 + $0x50] sm:$0xff]
        %v7539 = vld [vmem:[%s870 + $0x58] sm:$0xff]
        %v7540 = vld [vmem:[%s870 + $0x60] sm:$0xff]
        %v7541 = vld [vmem:[%s870 + $0x68] sm:$0xff]
        %v7542 = vld [vmem:[%s870 + $0x70] sm:$0xff]
        %v7543 = vld [vmem:[%s870 + $0x78] sm:$0xff]
        %v7544 = vld [vmem:[%s874] sm:$0x3]
        %v7546 = vperm.slane %v7544, 0
        %v7547 = vperm.slane %v7544, 1
        %v7566 = vunpack.c.l.b16 %v7528
        %v7567 = vunpack.c.h.b16 %v7528
        %v7568 = vunpack.c.l.b16 %v7529
        %v7569 = vunpack.c.h.b16 %v7529
        %v7570 = vunpack.c.l.b16 %v7530
        %v7571 = vunpack.c.h.b16 %v7530
        %v7572 = vunpack.c.l.b16 %v7531
        %v7573 = vunpack.c.h.b16 %v7531
        %v7574 = vunpack.c.l.b16 %v7532
        %v7575 = vunpack.c.h.b16 %v7532
        %v7576 = vunpack.c.l.b16 %v7533
        %v7577 = vunpack.c.h.b16 %v7533
        %v7578 = vunpack.c.l.b16 %v7534
        %v7579 = vunpack.c.h.b16 %v7534
        %v7580 = vunpack.c.l.b16 %v7535
        %v7581 = vunpack.c.h.b16 %v7535
        %v7582 = vunpack.c.l.b16 %v7536
        %v7583 = vunpack.c.h.b16 %v7536
        %v7584 = vunpack.c.l.b16 %v7537
        %v7585 = vunpack.c.h.b16 %v7537
        %v7586 = vunpack.c.l.b16 %v7538
        %v7587 = vunpack.c.h.b16 %v7538
        %v7588 = vunpack.c.l.b16 %v7539
        %v7589 = vunpack.c.h.b16 %v7539
        %v7590 = vunpack.c.l.b16 %v7540
        %v7591 = vunpack.c.h.b16 %v7540
        %v7592 = vunpack.c.l.b16 %v7541
        %v7593 = vunpack.c.h.b16 %v7541
        %v7594 = vunpack.c.l.b16 %v7542
        %v7595 = vunpack.c.h.b16 %v7542
        %v7596 = vunpack.c.l.b16 %v7543
        %v7597 = vunpack.c.h.b16 %v7543
        %v7598 = vpack.c.b16 %v7568, %v7566
        %v7599 = vpack.c.b16 %v7569, %v7567
        %v7600 = vpack.c.b16 %v7572, %v7570
        %v7601 = vpack.c.b16 %v7573, %v7571
        %v7602 = vpack.c.b16 %v7576, %v7574
        %v7603 = vpack.c.b16 %v7577, %v7575
        %v7604 = vpack.c.b16 %v7580, %v7578
        %v7605 = vpack.c.b16 %v7581, %v7579
        %v7606 = vpack.c.b16 %v7584, %v7582
        %v7607 = vpack.c.b16 %v7585, %v7583
        %v7608 = vpack.c.b16 %v7588, %v7586
        %v7609 = vpack.c.b16 %v7589, %v7587
        %v7610 = vpack.c.b16 %v7592, %v7590
        %v7611 = vpack.c.b16 %v7593, %v7591
        %v7612 = vpack.c.b16 %v7596, %v7594
        %v7613 = vpack.c.b16 %v7597, %v7595
        %7630 = vmatpush.bf16.msra.mxu0 %v7612
        %7631 = vmatpush.bf16.msra.mxu0 %v7610
        %7632 = vmatpush.bf16.msra.mxu0 %v7608
        %7633 = vmatpush.bf16.msra.mxu0 %v7606
        %7634 = vmatpush.bf16.msra.mxu0 %v7604
        %7635 = vmatpush.bf16.msra.mxu0 %v7602
        %7636 = vmatpush.bf16.msra.mxu0 %v7600
        %7637 = vmatpush.bf16.msra.mxu0 %v7598
        %7638 = vmatmul.bf16.gmra.mxu0 %v7519
        %v7639 = vpop.f32.mrf.mxu0
        %v7640 = vadd.f32 %v7546, %v7639
        %v7641 = vpop.f32.mrf.mxu0
        %v7642 = vadd.f32 %v7546, %v7641
        %7643 = vmatmul.bf16.gmra.mxu0 %v7520
        %v7644 = vpop.f32.mrf.mxu0
        %v7645 = vadd.f32 %v7546, %v7644
        %v7646 = vpop.f32.mrf.mxu0
        %v7647 = vadd.f32 %v7546, %v7646
        %7648 = vmatmul.bf16.gmra.mxu0 %v7521
        %v7649 = vpop.f32.mrf.mxu0
        %v7650 = vadd.f32 %v7546, %v7649
        %v7651 = vpop.f32.mrf.mxu0
        %v7652 = vadd.f32 %v7546, %v7651
        %7653 = vmatmul.bf16.gmra.mxu0 %v7522
        %v7654 = vpop.f32.mrf.mxu0
        %v7655 = vadd.f32 %v7546, %v7654
        %v7656 = vpop.f32.mrf.mxu0
        %v7657 = vadd.f32 %v7546, %v7656
        %7658 = vmatmul.bf16.gmra.mxu0 %v7523
        %v7659 = vpop.f32.mrf.mxu0
        %v7660 = vadd.f32 %v7546, %v7659
        %v7661 = vpop.f32.mrf.mxu0
        %v7662 = vadd.f32 %v7546, %v7661
        %7663 = vmatmul.bf16.gmra.mxu0 %v7524
        %v7664 = vpop.f32.mrf.mxu0
        %v7665 = vadd.f32 %v7546, %v7664
        %v7666 = vpop.f32.mrf.mxu0
        %v7667 = vadd.f32 %v7546, %v7666
        %7668 = vmatmul.bf16.gmra.mxu0 %v7525
        %v7669 = vpop.f32.mrf.mxu0
        %v7670 = vadd.f32 %v7546, %v7669
        %v7671 = vpop.f32.mrf.mxu0
        %v7672 = vadd.f32 %v7546, %v7671
        %7673 = vmatmul.bf16.gmra.mxu0 %v7526
        %v7674 = vpop.f32.mrf.mxu0
        %v7675 = vadd.f32 %v7546, %v7674
        %v7676 = vpop.f32.mrf.mxu0
        %v7677 = vadd.f32 %v7546, %v7676
        %7678 = vmatmul.bf16.gmra.mxu0 %v7527
        %v7679 = vpop.f32.mrf.mxu0
        %v7680 = vadd.f32 %v7546, %v7679
        %v7681 = vpop.f32.mrf.mxu0
        %7682 = vdwg.mxu0
        %7683 = vmatpush.bf16.msra.mxu0 %v7613
        %7684 = vmatpush.bf16.msra.mxu0 %v7611
        %7685 = vmatpush.bf16.msra.mxu0 %v7609
        %7686 = vmatpush.bf16.msra.mxu0 %v7607
        %7687 = vmatpush.bf16.msra.mxu0 %v7605
        %7688 = vmatpush.bf16.msra.mxu0 %v7603
        %7689 = vmatpush.bf16.msra.mxu0 %v7601
        %7690 = vmatpush.bf16.msra.mxu0 %v7599
        %7691 = vmatmul.bf16.gmra.mxu0 %v7519
        %v7692 = vpop.f32.mrf.mxu0
        %v7693 = vadd.f32 %v7547, %v7692
        %v7694 = vpop.f32.mrf.mxu0
        %v7695 = vadd.f32 %v7547, %v7694
        %7696 = vmatmul.bf16.gmra.mxu0 %v7520
        %v7697 = vpop.f32.mrf.mxu0
        %v7698 = vadd.f32 %v7547, %v7697
        %v7699 = vpop.f32.mrf.mxu0
        %v7700 = vadd.f32 %v7547, %v7699
        %7701 = vmatmul.bf16.gmra.mxu0 %v7521
        %v7702 = vpop.f32.mrf.mxu0
        %v7703 = vadd.f32 %v7547, %v7702
        %v7704 = vpop.f32.mrf.mxu0
        %v7705 = vadd.f32 %v7547, %v7704
        %7706 = vmatmul.bf16.gmra.mxu0 %v7522
        %v7707 = vpop.f32.mrf.mxu0
        %v7708 = vadd.f32 %v7547, %v7707
        %v7709 = vpop.f32.mrf.mxu0
        %v7710 = vadd.f32 %v7547, %v7709
        %7711 = vmatmul.bf16.gmra.mxu0 %v7523
        %v7712 = vpop.f32.mrf.mxu0
        %v7713 = vadd.f32 %v7547, %v7712
        %v7714 = vpop.f32.mrf.mxu0
        %v7715 = vadd.f32 %v7547, %v7714
        %7716 = vmatmul.bf16.gmra.mxu0 %v7524
        %v7717 = vpop.f32.mrf.mxu0
        %v7718 = vadd.f32 %v7547, %v7717
        %v7719 = vpop.f32.mrf.mxu0
        %v7720 = vadd.f32 %v7547, %v7719
        %7721 = vmatmul.bf16.gmra.mxu0 %v7525
        %v7722 = vpop.f32.mrf.mxu0
        %v7723 = vadd.f32 %v7547, %v7722
        %v7724 = vpop.f32.mrf.mxu0
        %v7725 = vadd.f32 %v7547, %v7724
        %7726 = vmatmul.bf16.gmra.mxu0 %v7526
        %v7727 = vpop.f32.mrf.mxu0
        %v7728 = vadd.f32 %v7547, %v7727
        %v7729 = vpop.f32.mrf.mxu0
        %v7730 = vadd.f32 %v7547, %v7729
        %7731 = vmatmul.bf16.gmra.mxu0 %v7527
        %v7732 = vpop.f32.mrf.mxu0
        %v7733 = vadd.f32 %v7547, %v7732
        %v7734 = vpop.f32.mrf.mxu0
        %7735 = vdwg.mxu0
        %v7736 = vmul.f32 %v7640, 0.5
        %v7737 = vmul.f32 %v7693, 0.5
        %v7738 = vmul.f32 %v7642, 0.5
        %v7739 = vmul.f32 %v7695, 0.5
        %v7740 = vmul.f32 %v7645, 0.5
        %v7741 = vmul.f32 %v7698, 0.5
        %v7742 = vmul.f32 %v7647, 0.5
        %v7743 = vmul.f32 %v7700, 0.5
        %v7744 = vmul.f32 %v7650, 0.5
        %v7745 = vmul.f32 %v7703, 0.5
        %v7746 = vmul.f32 %v7652, 0.5
        %v7747 = vmul.f32 %v7705, 0.5
        %v7748 = vmul.f32 %v7655, 0.5
        %v7749 = vmul.f32 %v7708, 0.5
        %v7750 = vmul.f32 %v7657, 0.5
        %v7751 = vmul.f32 %v7710, 0.5
        %v7752 = vmul.f32 %v7660, 0.5
        %v7753 = vmul.f32 %v7713, 0.5
        %v7754 = vmul.f32 %v7662, 0.5
        %v7755 = vmul.f32 %v7715, 0.5
        %v7756 = vmul.f32 %v7665, 0.5
        %v7757 = vmul.f32 %v7718, 0.5
        %v7758 = vmul.f32 %v7667, 0.5
        %v7759 = vmul.f32 %v7720, 0.5
        %v7760 = vmul.f32 %v7670, 0.5
        %v7761 = vmul.f32 %v7723, 0.5
        %v7762 = vmul.f32 %v7672, 0.5
        %v7763 = vmul.f32 %v7725, 0.5
        %v7764 = vmul.f32 %v7675, 0.5
        %v7765 = vmul.f32 %v7728, 0.5
        %v7766 = vmul.f32 %v7677, 0.5
        %v7767 = vmul.f32 %v7730, 0.5
        %v7768 = vmul.f32 %v7680, 0.5
        %v7769 = vmul.f32 %v7733, 0.5
        %v7770 = vmul.f32 %v7640, %v7640
        %v7771 = vmul.f32 %v7693, %v7693
        %v7772 = vmul.f32 %v7642, %v7642
        %v7773 = vmul.f32 %v7695, %v7695
        %v7774 = vmul.f32 %v7645, %v7645
        %v7775 = vmul.f32 %v7698, %v7698
        %v7776 = vmul.f32 %v7647, %v7647
        %v7777 = vmul.f32 %v7700, %v7700
        %v7778 = vmul.f32 %v7650, %v7650
        %v7779 = vmul.f32 %v7703, %v7703
        %v7780 = vmul.f32 %v7652, %v7652
        %v7781 = vmul.f32 %v7705, %v7705
        %v7782 = vmul.f32 %v7655, %v7655
        %v7783 = vmul.f32 %v7708, %v7708
        %v7784 = vmul.f32 %v7657, %v7657
        %v7785 = vmul.f32 %v7710, %v7710
        %v7786 = vmul.f32 %v7660, %v7660
        %v7787 = vmul.f32 %v7713, %v7713
        %v7788 = vmul.f32 %v7662, %v7662
        %v7789 = vmul.f32 %v7715, %v7715
        %v7790 = vmul.f32 %v7665, %v7665
        %v7791 = vmul.f32 %v7718, %v7718
        %v7792 = vmul.f32 %v7667, %v7667
        %v7793 = vmul.f32 %v7720, %v7720
        %v7794 = vmul.f32 %v7670, %v7670
        %v7795 = vmul.f32 %v7723, %v7723
        %v7796 = vmul.f32 %v7672, %v7672
        %v7797 = vmul.f32 %v7725, %v7725
        %v7798 = vmul.f32 %v7675, %v7675
        %v7799 = vmul.f32 %v7728, %v7728
        %v7800 = vmul.f32 %v7677, %v7677
        %v7801 = vmul.f32 %v7730, %v7730
        %v7802 = vmul.f32 %v7680, %v7680
        %v7803 = vmul.f32 %v7733, %v7733
        %v7804 = vmul.f32 %v7640, %v7770
        %v7805 = vmul.f32 %v7693, %v7771
        %v7806 = vmul.f32 %v7642, %v7772
        %v7807 = vmul.f32 %v7695, %v7773
        %v7808 = vmul.f32 %v7645, %v7774
        %v7809 = vmul.f32 %v7698, %v7775
        %v7810 = vmul.f32 %v7647, %v7776
        %v7811 = vmul.f32 %v7700, %v7777
        %v7812 = vmul.f32 %v7650, %v7778
        %v7813 = vmul.f32 %v7703, %v7779
        %v7814 = vmul.f32 %v7652, %v7780
        %v7815 = vmul.f32 %v7705, %v7781
        %v7816 = vmul.f32 %v7655, %v7782
        %v7817 = vmul.f32 %v7708, %v7783
        %v7818 = vmul.f32 %v7657, %v7784
        %v7819 = vmul.f32 %v7710, %v7785
        %v7820 = vmul.f32 %v7660, %v7786
        %v7821 = vmul.f32 %v7713, %v7787
        %v7822 = vmul.f32 %v7662, %v7788
        %v7823 = vmul.f32 %v7715, %v7789
        %v7824 = vmul.f32 %v7665, %v7790
        %v7825 = vmul.f32 %v7718, %v7791
        %v7826 = vmul.f32 %v7667, %v7792
        %v7827 = vmul.f32 %v7720, %v7793
        %v7828 = vmul.f32 %v7670, %v7794
        %v7829 = vmul.f32 %v7723, %v7795
        %v7830 = vmul.f32 %v7672, %v7796
        %v7831 = vmul.f32 %v7725, %v7797
        %v7832 = vmul.f32 %v7675, %v7798
        %v7833 = vmul.f32 %v7728, %v7799
        %v7834 = vmul.f32 %v7677, %v7800
        %v7835 = vmul.f32 %v7730, %v7801
        %v7836 = vmul.f32 %v7680, %v7802
        %v7837 = vmul.f32 %v7733, %v7803
        %v7838 = vmul.f32 %v7804, 0.044715
        %v7839 = vmul.f32 %v7805, 0.044715
        %v7840 = vmul.f32 %v7806, 0.044715
        %v7841 = vmul.f32 %v7807, 0.044715
        %v7842 = vmul.f32 %v7808, 0.044715
        %v7843 = vmul.f32 %v7809, 0.044715
        %v7844 = vmul.f32 %v7810, 0.044715
        %v7845 = vmul.f32 %v7811, 0.044715
        %v7846 = vmul.f32 %v7812, 0.044715
        %v7847 = vmul.f32 %v7813, 0.044715
        %v7848 = vmul.f32 %v7814, 0.044715
        %v7849 = vmul.f32 %v7815, 0.044715
        %v7850 = vmul.f32 %v7816, 0.044715
        %v7851 = vmul.f32 %v7817, 0.044715
        %v7852 = vmul.f32 %v7818, 0.044715
        %v7853 = vmul.f32 %v7819, 0.044715
        %v7854 = vmul.f32 %v7820, 0.044715
        %v7855 = vmul.f32 %v7821, 0.044715
        %v7856 = vmul.f32 %v7822, 0.044715
        %v7857 = vmul.f32 %v7823, 0.044715
        %v7858 = vmul.f32 %v7824, 0.044715
        %v7859 = vmul.f32 %v7825, 0.044715
        %v7860 = vmul.f32 %v7826, 0.044715
        %v7861 = vmul.f32 %v7827, 0.044715
        %v7862 = vmul.f32 %v7828, 0.044715
        %v7863 = vmul.f32 %v7829, 0.044715
        %v7864 = vmul.f32 %v7830, 0.044715
        %v7865 = vmul.f32 %v7831, 0.044715
        %v7866 = vmul.f32 %v7832, 0.044715
        %v7867 = vmul.f32 %v7833, 0.044715
        %v7868 = vmul.f32 %v7834, 0.044715
        %v7869 = vmul.f32 %v7835, 0.044715
        %v7870 = vmul.f32 %v7836, 0.044715
        %v7871 = vmul.f32 %v7837, 0.044715
        %v7872 = vadd.f32 %v7640, %v7838
        %v7873 = vadd.f32 %v7693, %v7839
        %v7874 = vadd.f32 %v7642, %v7840
        %v7875 = vadd.f32 %v7695, %v7841
        %v7876 = vadd.f32 %v7645, %v7842
        %v7877 = vadd.f32 %v7698, %v7843
        %v7878 = vadd.f32 %v7647, %v7844
        %v7879 = vadd.f32 %v7700, %v7845
        %v7880 = vadd.f32 %v7650, %v7846
        %v7881 = vadd.f32 %v7703, %v7847
        %v7882 = vadd.f32 %v7652, %v7848
        %v7883 = vadd.f32 %v7705, %v7849
        %v7884 = vadd.f32 %v7655, %v7850
        %v7885 = vadd.f32 %v7708, %v7851
        %v7886 = vadd.f32 %v7657, %v7852
        %v7887 = vadd.f32 %v7710, %v7853
        %v7888 = vadd.f32 %v7660, %v7854
        %v7889 = vadd.f32 %v7713, %v7855
        %v7890 = vadd.f32 %v7662, %v7856
        %v7891 = vadd.f32 %v7715, %v7857
        %v7892 = vadd.f32 %v7665, %v7858
        %v7893 = vadd.f32 %v7718, %v7859
        %v7894 = vadd.f32 %v7667, %v7860
        %v7895 = vadd.f32 %v7720, %v7861
        %v7896 = vadd.f32 %v7670, %v7862
        %v7897 = vadd.f32 %v7723, %v7863
        %v7898 = vadd.f32 %v7672, %v7864
        %v7899 = vadd.f32 %v7725, %v7865
        %v7900 = vadd.f32 %v7675, %v7866
        %v7901 = vadd.f32 %v7728, %v7867
        %v7902 = vadd.f32 %v7677, %v7868
        %v7903 = vadd.f32 %v7730, %v7869
        %v7904 = vadd.f32 %v7680, %v7870
        %v7905 = vadd.f32 %v7733, %v7871
        %v7906 = vmul.f32 %v7872, 0.7978845
        %v7907 = vmul.f32 %v7873, 0.7978845
        %v7908 = vmul.f32 %v7874, 0.7978845
        %v7909 = vmul.f32 %v7875, 0.7978845
        %v7910 = vmul.f32 %v7876, 0.7978845
        %v7911 = vmul.f32 %v7877, 0.7978845
        %v7912 = vmul.f32 %v7878, 0.7978845
        %v7913 = vmul.f32 %v7879, 0.7978845
        %v7914 = vmul.f32 %v7880, 0.7978845
        %v7915 = vmul.f32 %v7881, 0.7978845
        %v7916 = vmul.f32 %v7882, 0.7978845
        %v7917 = vmul.f32 %v7883, 0.7978845
        %v7918 = vmul.f32 %v7884, 0.7978845
        %v7919 = vmul.f32 %v7885, 0.7978845
        %v7920 = vmul.f32 %v7886, 0.7978845
        %v7921 = vmul.f32 %v7887, 0.7978845
        %v7922 = vmul.f32 %v7888, 0.7978845
        %v7923 = vmul.f32 %v7889, 0.7978845
        %v7924 = vmul.f32 %v7890, 0.7978845
        %v7925 = vmul.f32 %v7891, 0.7978845
        %v7926 = vmul.f32 %v7892, 0.7978845
        %v7927 = vmul.f32 %v7893, 0.7978845
        %v7928 = vmul.f32 %v7894, 0.7978845
        %v7929 = vmul.f32 %v7895, 0.7978845
        %v7930 = vmul.f32 %v7896, 0.7978845
        %v7931 = vmul.f32 %v7897, 0.7978845
        %v7932 = vmul.f32 %v7898, 0.7978845
        %v7933 = vmul.f32 %v7899, 0.7978845
        %v7934 = vmul.f32 %v7900, 0.7978845
        %v7935 = vmul.f32 %v7901, 0.7978845
        %v7936 = vmul.f32 %v7902, 0.7978845
        %v7937 = vmul.f32 %v7903, 0.7978845
        %v7938 = vmul.f32 %v7904, 0.7978845
        %v7939 = vmul.f32 %v7905, 0.7978845
        %v7940 = vtanh.pop %v7906
        %v7941 = vtanh.pop %v7907
        %v7942 = vtanh.pop %v7908
        %v7943 = vtanh.pop %v7909
        %v7944 = vtanh.pop %v7910
        %v7945 = vtanh.pop %v7911
        %v7946 = vtanh.pop %v7912
        %v7947 = vtanh.pop %v7913
        %v7948 = vtanh.pop %v7914
        %v7949 = vtanh.pop %v7915
        %v7950 = vtanh.pop %v7916
        %v7951 = vtanh.pop %v7917
        %v7952 = vtanh.pop %v7918
        %v7953 = vtanh.pop %v7919
        %v7954 = vtanh.pop %v7920
        %v7955 = vtanh.pop %v7921
        %v7956 = vtanh.pop %v7922
        %v7957 = vtanh.pop %v7923
        %v7958 = vtanh.pop %v7924
        %v7959 = vtanh.pop %v7925
        %v7960 = vtanh.pop %v7926
        %v7961 = vtanh.pop %v7927
        %v7962 = vtanh.pop %v7928
        %v7963 = vtanh.pop %v7929
        %v7964 = vtanh.pop %v7930
        %v7965 = vtanh.pop %v7931
        %v7966 = vtanh.pop %v7932
        %v7967 = vtanh.pop %v7933
        %v7968 = vtanh.pop %v7934
        %v7969 = vtanh.pop %v7935
        %v7970 = vtanh.pop %v7936
        %v7971 = vtanh.pop %v7937
        %v7972 = vtanh.pop %v7938
        %v7973 = vtanh.pop %v7939
        %v7974 = vadd.f32 %v7940, 1.0
        %v7975 = vadd.f32 %v7941, 1.0
        %v7976 = vadd.f32 %v7942, 1.0
        %v7977 = vadd.f32 %v7943, 1.0
        %v7978 = vadd.f32 %v7944, 1.0
        %v7979 = vadd.f32 %v7945, 1.0
        %v7980 = vadd.f32 %v7946, 1.0
        %v7981 = vadd.f32 %v7947, 1.0
        %v7982 = vadd.f32 %v7948, 1.0
        %v7983 = vadd.f32 %v7949, 1.0
        %v7984 = vadd.f32 %v7950, 1.0
        %v7985 = vadd.f32 %v7951, 1.0
        %v7986 = vadd.f32 %v7952, 1.0
        %v7987 = vadd.f32 %v7953, 1.0
        %v7988 = vadd.f32 %v7954, 1.0
        %v7989 = vadd.f32 %v7955, 1.0
        %v7990 = vadd.f32 %v7956, 1.0
        %v7991 = vadd.f32 %v7957, 1.0
        %v7992 = vadd.f32 %v7958, 1.0
        %v7993 = vadd.f32 %v7959, 1.0
        %v7994 = vadd.f32 %v7960, 1.0
        %v7995 = vadd.f32 %v7961, 1.0
        %v7996 = vadd.f32 %v7962, 1.0
        %v7997 = vadd.f32 %v7963, 1.0
        %v7998 = vadd.f32 %v7964, 1.0
        %v7999 = vadd.f32 %v7965, 1.0
        %v8000 = vadd.f32 %v7966, 1.0
        %v8001 = vadd.f32 %v7967, 1.0
        %v8002 = vadd.f32 %v7968, 1.0
        %v8003 = vadd.f32 %v7969, 1.0
        %v8004 = vadd.f32 %v7970, 1.0
        %v8005 = vadd.f32 %v7971, 1.0
        %v8006 = vadd.f32 %v7972, 1.0
        %v8007 = vadd.f32 %v7973, 1.0
        %v8008 = vmul.f32 %v7736, %v7974
        %v8009 = vmul.f32 %v7737, %v7975
        %v8010 = vmul.f32 %v7738, %v7976
        %v8011 = vmul.f32 %v7739, %v7977
        %v8012 = vmul.f32 %v7740, %v7978
        %v8013 = vmul.f32 %v7741, %v7979
        %v8014 = vmul.f32 %v7742, %v7980
        %v8015 = vmul.f32 %v7743, %v7981
        %v8016 = vmul.f32 %v7744, %v7982
        %v8017 = vmul.f32 %v7745, %v7983
        %v8018 = vmul.f32 %v7746, %v7984
        %v8019 = vmul.f32 %v7747, %v7985
        %v8020 = vmul.f32 %v7748, %v7986
        %v8021 = vmul.f32 %v7749, %v7987
        %v8022 = vmul.f32 %v7750, %v7988
        %v8023 = vmul.f32 %v7751, %v7989
        %v8024 = vmul.f32 %v7752, %v7990
        %v8025 = vmul.f32 %v7753, %v7991
        %v8026 = vmul.f32 %v7754, %v7992
        %v8027 = vmul.f32 %v7755, %v7993
        %v8028 = vmul.f32 %v7756, %v7994
        %v8029 = vmul.f32 %v7757, %v7995
        %v8030 = vmul.f32 %v7758, %v7996
        %v8031 = vmul.f32 %v7759, %v7997
        %v8032 = vmul.f32 %v7760, %v7998
        %v8033 = vmul.f32 %v7761, %v7999
        %v8034 = vmul.f32 %v7762, %v8000
        %v8035 = vmul.f32 %v7763, %v8001
        %v8036 = vmul.f32 %v7764, %v8002
        %v8037 = vmul.f32 %v7765, %v8003
        %v8038 = vmul.f32 %v7766, %v8004
        %v8039 = vmul.f32 %v7767, %v8005
        %v8040 = vmul.f32 %v7768, %v8006
        %v8041 = vmul.f32 %v7769, %v8007
        %v8042 = vpack.c.bf16 %v8010, %v8008
        %v8043 = vpack.c.bf16 %v8011, %v8009
        %v8044 = vpack.c.bf16 %v8014, %v8012
        %v8045 = vpack.c.bf16 %v8015, %v8013
        %v8046 = vpack.c.bf16 %v8018, %v8016
        %v8047 = vpack.c.bf16 %v8019, %v8017
        %v8048 = vpack.c.bf16 %v8022, %v8020
        %v8049 = vpack.c.bf16 %v8023, %v8021
        %v8050 = vpack.c.bf16 %v8026, %v8024
        %v8051 = vpack.c.bf16 %v8027, %v8025
        %v8052 = vpack.c.bf16 %v8030, %v8028
        %v8053 = vpack.c.bf16 %v8031, %v8029
        %v8054 = vpack.c.bf16 %v8034, %v8032
        %v8055 = vpack.c.bf16 %v8035, %v8033
        %v8056 = vpack.c.bf16 %v8038, %v8036
        %v8057 = vpack.c.bf16 %v8039, %v8037
        %v8058 = vpack.c.bf16 %v8040, %v8040
        %v8059 = vpack.c.bf16 %v8041, %v8041
        %v8060 = vld [vmem:[%s761] sm:$0xf]
        %v8061 = vld [vmem:[%s761 + $0x4] sm:$0xf]
        %v8062 = vld [vmem:[%s761 + $0x8] sm:$0xf]
        %v8063 = vld [vmem:[%s761 + $0xc] sm:$0xf]
        %v8064 = vld [vmem:[%s761 + $0x10] sm:$0xf]
        %v8065 = vld [vmem:[%s761 + $0x14] sm:$0xf]
        %v8066 = vld [vmem:[%s761 + $0x18] sm:$0xf]
        %v8067 = vld [vmem:[%s761 + $0x1c] sm:$0xf]
        %v8068 = vld [vmem:[%s761 + $0x20] sm:$0xf]
        %v8069 = vld [vmem:[%s761 + $0x24] sm:$0xf]
        %v8070 = vld [vmem:[%s761 + $0x28] sm:$0xf]
        %v8071 = vld [vmem:[%s761 + $0x2c] sm:$0xf]
        %v8072 = vld [vmem:[%s761 + $0x30] sm:$0xf]
        %v8073 = vld [vmem:[%s761 + $0x34] sm:$0xf]
        %v8074 = vld [vmem:[%s761 + $0x38] sm:$0xf]
        %v8075 = vld [vmem:[%s761 + $0x3c] sm:$0xf]
        %v8076 = vld [vmem:[%s761 + $0x40] sm:$0xf]
        %v8077 = vld [vmem:[%s761 + $0x44] sm:$0xf]
        %v8078 = vld [vmem:[%s761 + $0x48] sm:$0xf]
        %v8079 = vld [vmem:[%s761 + $0x4c] sm:$0xf]
        %v8080 = vld [vmem:[%s761 + $0x50] sm:$0xf]
        %v8081 = vld [vmem:[%s761 + $0x54] sm:$0xf]
        %v8082 = vld [vmem:[%s761 + $0x58] sm:$0xf]
        %v8083 = vld [vmem:[%s761 + $0x5c] sm:$0xf]
        %v8084 = vld [vmem:[%s761 + $0x60] sm:$0xf]
        %v8085 = vld [vmem:[%s761 + $0x64] sm:$0xf]
        %v8086 = vld [vmem:[%s761 + $0x68] sm:$0xf]
        %v8087 = vld [vmem:[%s761 + $0x6c] sm:$0xf]
        %v8088 = vld [vmem:[%s761 + $0x70] sm:$0xf]
        %v8089 = vld [vmem:[%s761 + $0x74] sm:$0xf]
        %v8090 = vld [vmem:[%s761 + $0x78] sm:$0xf]
        %v8091 = vld [vmem:[%s761 + $0x7c] sm:$0xf]
        %v8092 = vld [vmem:[%s877] sm:$0x1]
        %v8094 = vperm.slane %v8092, 0
        %v8128 = vunpack.c.l.b16 %v8060
        %v8129 = vunpack.c.l.b16 %v8061
        %v8130 = vunpack.c.l.b16 %v8062
        %v8131 = vunpack.c.l.b16 %v8063
        %v8132 = vunpack.c.l.b16 %v8064
        %v8133 = vunpack.c.l.b16 %v8065
        %v8134 = vunpack.c.l.b16 %v8066
        %v8135 = vunpack.c.l.b16 %v8067
        %v8136 = vunpack.c.l.b16 %v8068
        %v8137 = vunpack.c.l.b16 %v8069
        %v8138 = vunpack.c.l.b16 %v8070
        %v8139 = vunpack.c.l.b16 %v8071
        %v8140 = vunpack.c.l.b16 %v8072
        %v8141 = vunpack.c.l.b16 %v8073
        %v8142 = vunpack.c.l.b16 %v8074
        %v8143 = vunpack.c.l.b16 %v8075
        %v8144 = vunpack.c.l.b16 %v8076
        %v8145 = vunpack.c.l.b16 %v8077
        %v8146 = vunpack.c.l.b16 %v8078
        %v8147 = vunpack.c.l.b16 %v8079
        %v8148 = vunpack.c.l.b16 %v8080
        %v8149 = vunpack.c.l.b16 %v8081
        %v8150 = vunpack.c.l.b16 %v8082
        %v8151 = vunpack.c.l.b16 %v8083
        %v8152 = vunpack.c.l.b16 %v8084
        %v8153 = vunpack.c.l.b16 %v8085
        %v8154 = vunpack.c.l.b16 %v8086
        %v8155 = vunpack.c.l.b16 %v8087
        %v8156 = vunpack.c.l.b16 %v8088
        %v8157 = vunpack.c.l.b16 %v8089
        %v8158 = vunpack.c.l.b16 %v8090
        %v8159 = vunpack.c.l.b16 %v8091
        %v8160 = vpack.c.b16 %v8129, %v8128
        %v8161 = vpack.c.b16 %v8131, %v8130
        %v8162 = vpack.c.b16 %v8133, %v8132
        %v8163 = vpack.c.b16 %v8135, %v8134
        %v8164 = vpack.c.b16 %v8137, %v8136
        %v8165 = vpack.c.b16 %v8139, %v8138
        %v8166 = vpack.c.b16 %v8141, %v8140
        %v8167 = vpack.c.b16 %v8143, %v8142
        %v8168 = vpack.c.b16 %v8145, %v8144
        %v8169 = vpack.c.b16 %v8147, %v8146
        %v8170 = vpack.c.b16 %v8149, %v8148
        %v8171 = vpack.c.b16 %v8151, %v8150
        %v8172 = vpack.c.b16 %v8153, %v8152
        %v8173 = vpack.c.b16 %v8155, %v8154
        %v8174 = vpack.c.b16 %v8157, %v8156
        %v8175 = vpack.c.b16 %v8159, %v8158
        %8192 = vmatpush.bf16.msra.mxu0 %v8167
        %8193 = vmatpush.bf16.msra.mxu0 %v8166
        %8194 = vmatpush.bf16.msra.mxu0 %v8165
        %8195 = vmatpush.bf16.msra.mxu0 %v8164
        %8196 = vmatpush.bf16.msra.mxu0 %v8163
        %8197 = vmatpush.bf16.msra.mxu0 %v8162
        %8198 = vmatpush.bf16.msra.mxu0 %v8161
        %8199 = vmatpush.bf16.msra.mxu0 %v8160
        %8200 = vmatmul.bf16.gmra.mxu0 %v8042
        %v8201 = vpop.f32.mrf.mxu0
        %v8202 = vadd.f32 %v8094, %v8201
        %v8203 = vpop.f32.mrf.mxu0
        %v8204 = vadd.f32 %v8094, %v8203
        %8205 = vmatmul.bf16.gmra.mxu0 %v8044
        %v8206 = vpop.f32.mrf.mxu0
        %v8207 = vadd.f32 %v8094, %v8206
        %v8208 = vpop.f32.mrf.mxu0
        %v8209 = vadd.f32 %v8094, %v8208
        %8210 = vmatmul.bf16.gmra.mxu0 %v8046
        %v8211 = vpop.f32.mrf.mxu0
        %v8212 = vadd.f32 %v8094, %v8211
        %v8213 = vpop.f32.mrf.mxu0
        %v8214 = vadd.f32 %v8094, %v8213
        %8215 = vmatmul.bf16.gmra.mxu0 %v8048
        %v8216 = vpop.f32.mrf.mxu0
        %v8217 = vadd.f32 %v8094, %v8216
        %v8218 = vpop.f32.mrf.mxu0
        %v8219 = vadd.f32 %v8094, %v8218
        %8220 = vmatmul.bf16.gmra.mxu0 %v8050
        %v8221 = vpop.f32.mrf.mxu0
        %v8222 = vadd.f32 %v8094, %v8221
        %v8223 = vpop.f32.mrf.mxu0
        %v8224 = vadd.f32 %v8094, %v8223
        %8225 = vmatmul.bf16.gmra.mxu0 %v8052
        %v8226 = vpop.f32.mrf.mxu0
        %v8227 = vadd.f32 %v8094, %v8226
        %v8228 = vpop.f32.mrf.mxu0
        %v8229 = vadd.f32 %v8094, %v8228
        %8230 = vmatmul.bf16.gmra.mxu0 %v8054
        %v8231 = vpop.f32.mrf.mxu0
        %v8232 = vadd.f32 %v8094, %v8231
        %v8233 = vpop.f32.mrf.mxu0
        %v8234 = vadd.f32 %v8094, %v8233
        %8235 = vmatmul.bf16.gmra.mxu0 %v8056
        %v8236 = vpop.f32.mrf.mxu0
        %v8237 = vadd.f32 %v8094, %v8236
        %v8238 = vpop.f32.mrf.mxu0
        %v8239 = vadd.f32 %v8094, %v8238
        %8240 = vmatmul.bf16.gmra.mxu0 %v8058
        %v8241 = vpop.f32.mrf.mxu0
        %v8242 = vadd.f32 %v8094, %v8241
        %v8243 = vpop.f32.mrf.mxu0
        %8244 = vdwg.mxu0
        %8245 = vmatpush.bf16.msra.mxu0 %v8175
        %8246 = vmatpush.bf16.msra.mxu0 %v8174
        %8247 = vmatpush.bf16.msra.mxu0 %v8173
        %8248 = vmatpush.bf16.msra.mxu0 %v8172
        %8249 = vmatpush.bf16.msra.mxu0 %v8171
        %8250 = vmatpush.bf16.msra.mxu0 %v8170
        %8251 = vmatpush.bf16.msra.mxu0 %v8169
        %8252 = vmatpush.bf16.msra.mxu0 %v8168
        %8253 = vmatmul.bf16.gmra.mxu0 %v8043
        %v8254 = vpop.f32.mrf.mxu0
        %v8255 = vadd.f32 %v8202, %v8254
        %v8256 = vpop.f32.mrf.mxu0
        %v8257 = vadd.f32 %v8204, %v8256
        %8258 = vmatmul.bf16.gmra.mxu0 %v8045
        %v8259 = vpop.f32.mrf.mxu0
        %v8260 = vadd.f32 %v8207, %v8259
        %v8261 = vpop.f32.mrf.mxu0
        %v8262 = vadd.f32 %v8209, %v8261
        %8263 = vmatmul.bf16.gmra.mxu0 %v8047
        %v8264 = vpop.f32.mrf.mxu0
        %v8265 = vadd.f32 %v8212, %v8264
        %v8266 = vpop.f32.mrf.mxu0
        %v8267 = vadd.f32 %v8214, %v8266
        %8268 = vmatmul.bf16.gmra.mxu0 %v8049
        %v8269 = vpop.f32.mrf.mxu0
        %v8270 = vadd.f32 %v8217, %v8269
        %v8271 = vpop.f32.mrf.mxu0
        %v8272 = vadd.f32 %v8219, %v8271
        %8273 = vmatmul.bf16.gmra.mxu0 %v8051
        %v8274 = vpop.f32.mrf.mxu0
        %v8275 = vadd.f32 %v8222, %v8274
        %v8276 = vpop.f32.mrf.mxu0
        %v8277 = vadd.f32 %v8224, %v8276
        %8278 = vmatmul.bf16.gmra.mxu0 %v8053
        %v8279 = vpop.f32.mrf.mxu0
        %v8280 = vadd.f32 %v8227, %v8279
        %v8281 = vpop.f32.mrf.mxu0
        %v8282 = vadd.f32 %v8229, %v8281
        %8283 = vmatmul.bf16.gmra.mxu0 %v8055
        %v8284 = vpop.f32.mrf.mxu0
        %v8285 = vadd.f32 %v8232, %v8284
        %v8286 = vpop.f32.mrf.mxu0
        %v8287 = vadd.f32 %v8234, %v8286
        %8288 = vmatmul.bf16.gmra.mxu0 %v8057
        %v8289 = vpop.f32.mrf.mxu0
        %v8290 = vadd.f32 %v8237, %v8289
        %v8291 = vpop.f32.mrf.mxu0
        %v8292 = vadd.f32 %v8239, %v8291
        %8293 = vmatmul.bf16.gmra.mxu0 %v8059
        %v8294 = vpop.f32.mrf.mxu0
        %v8295 = vadd.f32 %v8242, %v8294
        %v8296 = vpop.f32.mrf.mxu0
        %8297 = vdwg.mxu0
        %v8298 = vadd.f32 %v7120, %v8255
        %v8299 = vadd.f32 %v7121, %v8257
        %v8300 = vadd.f32 %v7122, %v8260
        %v8301 = vadd.f32 %v7123, %v8262
        %v8302 = vadd.f32 %v7124, %v8265
        %v8303 = vadd.f32 %v7125, %v8267
        %v8304 = vadd.f32 %v7126, %v8270
        %v8305 = vadd.f32 %v7127, %v8272
        %v8306 = vadd.f32 %v7128, %v8275
        %v8307 = vadd.f32 %v7129, %v8277
        %v8308 = vadd.f32 %v7130, %v8280
        %v8309 = vadd.f32 %v7131, %v8282
        %v8310 = vadd.f32 %v7132, %v8285
        %v8311 = vadd.f32 %v7133, %v8287
        %v8312 = vadd.f32 %v7134, %v8290
        %v8313 = vadd.f32 %v7135, %v8292
        %v8314 = vadd.f32 %v7136, %v8295
        %8315 = vst [vmem:[%s856] sm:$0xff] %v8298
        %8316 = vst [vmem:[%s856 + $0x8] sm:$0xff] %v8299
        %8317 = vst [vmem:[%s856 + $0x10] sm:$0xff] %v8300
        %8318 = vst [vmem:[%s856 + $0x18] sm:$0xff] %v8301
        %8319 = vst [vmem:[%s856 + $0x20] sm:$0xff] %v8302
        %8320 = vst [vmem:[%s856 + $0x28] sm:$0xff] %v8303
        %8321 = vst [vmem:[%s856 + $0x30] sm:$0xff] %v8304
        %8322 = vst [vmem:[%s856 + $0x38] sm:$0xff] %v8305
        %8323 = vst [vmem:[%s856 + $0x40] sm:$0xff] %v8306
        %8324 = vst [vmem:[%s856 + $0x48] sm:$0xff] %v8307
        %8325 = vst [vmem:[%s856 + $0x50] sm:$0xff] %v8308
        %8326 = vst [vmem:[%s856 + $0x58] sm:$0xff] %v8309
        %8327 = vst [vmem:[%s856 + $0x60] sm:$0xff] %v8310
        %8328 = vst [vmem:[%s856 + $0x68] sm:$0xff] %v8311
        %8329 = vst [vmem:[%s856 + $0x70] sm:$0xff] %v8312
        %8330 = vst [vmem:[%s856 + $0x78] sm:$0xff] %v8313
        %8331 = vst [vmem:[%s856 + $0x80] sm:$0xff] %v8314
        %s8332 = sand.u32 %s448, 1
        %s8333 = scalar_lea.sflag [#allocation6], %s8332
        %s8334 = sand.u32 %s448, 1
        %s8335 = smul.addr %s8334, 136
        %s8336 = scalar_lea.vmem [#allocation16], %s8335
        // Predicated region
        $region125: #{tpu_custom_call.1} parent=83 // pred_check
          %p8337 = pneg %p458
        $region126: #{tpu_custom_call.1} parent=83 // pred_check_branch
          %8339 = sbr.rel (%p8337) target = $region128
        $region127: #{tpu_custom_call.1} parent=83 // pred_region
          %s8340 = smul.u32 17, %s36
          %8342 = vsyncadd %s8333, 0
          %s8343 = smul.addr %s8340, 8
          %s8344 = scalar_lea.hbm %s16, %s8343
          %s8345 = sshll.u32 %s8336, 4
          %s8346 = int_to_ptr.vmem [resolvable:$true] %s8345
          %s8347 = sshll.u32 %s8344, 4
          %s8348 = int_to_ptr.hbm [resolvable:$true] %s8347
          %8353 = dma.vmem_to_hbm [thread:$0]  %s8346, 2176, %s8348, %s8333, 128, 128, 8
        $region128: #{tpu_custom_call.1} parent=83 // pred_fallthru
          _
      $region84: #{tpu_custom_call.1} parent=5 // pred_fallthru
        _
      %p8354 = scmp.le.s32.totalorder 2, %s27
      // Predicated region
      $region129: #{tpu_custom_call.1} parent=5 // pred_check
        %p8355 = pneg %p8354
      $region130: #{tpu_custom_call.1} parent=5 // pred_check_branch
        %8357 = sbr.rel (%p8355) target = $region132
      $region131: #{tpu_custom_call.1} parent=5 // pred_region
        %s8358 = ssub.s32 %s27, 2
        // Predicated region
        $region133: #{tpu_custom_call.1} parent=131 // pred_check
          %p8359 = pneg %p464
        $region134: #{tpu_custom_call.1} parent=131 // pred_check_branch
          %8361 = sbr.rel (%p8359) target = $region136
        $region135: #{tpu_custom_call.1} parent=131 // pred_region
          %s8362 = sand.u32 %s449, 1
          %s8363 = scalar_lea.sflag [#allocation6], %s8362
          %s8364 = sand.u32 %s449, 1
          %s8365 = smul.addr %s8364, 136
          %s8366 = scalar_lea.vmem [#allocation16], %s8365
          %8368 = dma.done %s8363, 2176
        $region136: #{tpu_custom_call.1} parent=131 // pred_fallthru
          _
      $region132: #{tpu_custom_call.1} parent=5 // pred_fallthru
        _
    $region6: #{tpu_custom_call.1} parent=1 // loop_footer
      %s31 = sadd.s32 1, %s27
    $region7: #{tpu_custom_call.1} parent=1 // loop_footer_branch
      %26 = sbr.rel target = $region3
    $region8: #{tpu_custom_call.1} parent=1 // loop_exit
      _
    %8369 = vsyncpa [#allocation5], 1
    %s8370 = scalar_lea.sflag [#allocation5], 1
    %8371 = vsyncpa %s8370, 1
    %8372 = vsyncpa [#allocation8], 1
    %8373 = vsyncpa [#allocation6], 1
    %s8374 = scalar_lea.sflag [#allocation6], 1
    %8375 = vsyncpa %s8374, 1

</llo_original>
